<compile_context>
chip_gen: v7x
topology: tpu7x:2x2x1
jax: 0.10.0
libtpu: 0.0.40
codegen_flags: <defaults>
</compile_context>

<pallas_src>
import jax
import jax.numpy as jnp
from jax.experimental import pallas as pl
from jax.experimental.pallas import tpu as pltpu

# ----------------------------- model dimensions -----------------------------
NUM_ACTOR_OBS = 48
NUM_ENCODER_INFO = 69                                # = privileged obs dim
NUM_CRITIC_OBS = NUM_ACTOR_OBS + NUM_ENCODER_INFO    # critic consumes cat(obs, priv)
NUM_ACTIONS = 12
NUM_LATENT = 16
ENC_HID = [256, 256, 256]
ACT_HID = [256, 256, 256]
CRI_HID = [256, 256, 256]
INIT_NOISE_STD = 1.0

HID = 256
IN_LANES = 128       # packed input: lanes 0:48 obs, 48:117 priv, 117:128 zero pad
HEAD_LANES = 128     # lane-dense output slab: lanes 0:12 = mean, lane 12 = value
BATCH = 512          # example batch: TB=256, grid=2 -> MXU-filling and 2-TC friendly


# ------------------------------- kernel body --------------------------------
def _elu_f32(x):
    # nn.ELU(alpha=1.0).  exp(x)-1 instead of expm1: Mosaic-safe; error is far below
    # the bf16 weight/activation noise floor.
    return jnp.where(x > 0, x, jnp.exp(x) - 1.0)


def ac_teacher_kernel(x_ref, w_first_ref, w_hid_ref, w_head_ref, b_ref, out_ref):
    bf16 = jnp.bfloat16
    f32 = jnp.float32

    def dot(a, w):
        return jnp.dot(a, w, preferred_element_type=f32)

    # packed input tile (f32 in HBM/VMEM, cast to bf16 in-kernel)
    x = x_ref[...].astype(bf16)                       # [TB, 128]

    # ---- fused first layer: one K=128, N=768 matmul ----
    first = dot(x, w_first_ref[...])                  # [TB, 768] f32
    #   lanes   0:256 -> encoder (priv rows, with the we0@we1 fold)
    #   lanes 256:512 -> actor   (obs rows, pre-activation partial sum)
    #   lanes 512:768 -> critic  (obs + priv rows)

    h = _elu_f32(first[:, 0:HID] + b_ref[0:1, :])            # encoder l0+l1 (folded)
    a_obs = first[:, HID:2 * HID]                            # actor l0 obs partial
    c = _elu_f32(first[:, 2 * HID:3 * HID] + b_ref[1:2, :])  # critic l0

    # ---- remaining encoder hidden layer ----
    h = _elu_f32(dot(h.astype(bf16), w_hid_ref[0]) + b_ref[3:4, :])      # we2

    # ---- actor MLP; encoder 256->16 head folded into w_hid[1] = we3 @ wa0_lat ----
    a = _elu_f32(a_obs + dot(h.astype(bf16), w_hid_ref[1]) + b_ref[2:3, :])
    a = _elu_f32(dot(a.astype(bf16), w_hid_ref[2]) + b_ref[4:5, :])      # wa1
    a = _elu_f32(dot(a.astype(bf16), w_hid_ref[3]) + b_ref[5:6, :])      # wa2

    # ---- critic MLP ----
    c = _elu_f32(dot(c.astype(bf16), w_hid_ref[4]) + b_ref[6:7, :])      # wc1
    c = _elu_f32(dot(c.astype(bf16), w_hid_ref[5]) + b_ref[7:8, :])      # wc2

    # ---- fused head, no concatenate: two K=256 matmuls into the same lanes ----
    out_ref[...] = (dot(a.astype(bf16), w_head_ref[0]) +
                    dot(c.astype(bf16), w_head_ref[1]) +
                    b_ref[8:9, :HEAD_LANES])


# ------------------------------ wrapper / call -------------------------------
def _tile_cfg(b):
    """Pick (TB, padded_batch): TB in {128,256}, grid length >= 2 when batch allows."""
    b128 = max(128, ((b + 127) // 128) * 128)
    if b128 == 128:
        return 128, 128
    tb = min(256, max(128, ((b128 // 2) // 128) * 128))   # keep >= 2 grid steps
    b_pad = ((b128 + tb - 1) // tb) * tb
    return tb, b_pad


@jax.jit
def act_and_evaluate(obs, priv, packed):
    """Returns (action_mean [B, NUM_ACTIONS], value [B, 1])."""
    w_first, w_hid, w_head, b_all = packed
    b = obs.shape[0]
    tb, b_pad = _tile_cfg(b)

    # Single wrapper-side op: pack obs|priv and pad to a lane-/sublane-aligned slab.
    x = jnp.concatenate([obs, priv], axis=-1)                         # [b, 117] f32
    x = jnp.pad(x, ((0, b_pad - b), (0, IN_LANES - NUM_CRITIC_OBS)))  # [b_pad, 128] f32

    out = pl.pallas_call(
        ac_teacher_kernel,
        out_shape=jax.ShapeDtypeStruct((b_pad, HEAD_LANES), jnp.float32),
        grid_spec=pltpu.PrefetchScalarGridSpec(
            num_scalar_prefetch=0,
            grid=(b_pad // tb,),
            in_specs=[
                pl.BlockSpec((tb, IN_LANES), lambda i: (i, 0)),            # packed input
                # weight slabs: constant index_map -> stay VMEM-resident across steps
                pl.BlockSpec((IN_LANES, 3 * HID), lambda i: (0, 0)),       # w_first
                pl.BlockSpec((6, HID, HID), lambda i: (0, 0, 0)),          # w_hid
                pl.BlockSpec((2, HID, HEAD_LANES), lambda i: (0, 0, 0)),   # w_head
                pl.BlockSpec((9, HID), lambda i: (0, 0)),                  # biases
            ],
            out_specs=pl.BlockSpec((tb, HEAD_LANES), lambda i: (i, 0)),
        ),
        compiler_params=pltpu.CompilerParams(
            dimension_semantics=("parallel",)),     # both TCs on v7x
    )(x, w_first, w_hid, w_head, b_all)

    mean = out[:b, :NUM_ACTIONS]
    value = out[:b, NUM_ACTIONS:NUM_ACTIONS + 1]
    return mean, value


# --------------------------- deterministic params ----------------------------
def _init_linear(key, fan_in, fan_out):
    # PyTorch nn.Linear default: U(-1/sqrt(fan_in), 1/sqrt(fan_in)) for W and b.
    kw, kb = jax.random.split(key)
    bound = 1.0 / jnp.sqrt(jnp.float32(fan_in))
    w = jax.random.uniform(kw, (fan_in, fan_out), jnp.float32, -bound, bound)
    b = jax.random.uniform(kb, (1, fan_out), jnp.float32, -bound, bound)
    return w, b


def build_params(seed=0):
    key = jax.random.PRNGKey(seed)
    keys = jax.random.split(key, 16)
    ki = iter(keys)

    # encoder: Linear(69,256), Linear(256,256), ELU, Linear(256,256), ELU, Linear(256,16)
    we0, be0 = _init_linear(next(ki), NUM_ENCODER_INFO, ENC_HID[0])
    we1, be1 = _init_linear(next(ki), ENC_HID[0], ENC_HID[1])
    we2, be2 = _init_linear(next(ki), ENC_HID[1], ENC_HID[2])
    we3, be3 = _init_linear(next(ki), ENC_HID[2], NUM_LATENT)

    # actor (first layer takes cat(obs, latent); init as one matrix then split)
    wa0, ba0 = _init_linear(next(ki), NUM_ACTOR_OBS + NUM_LATENT, ACT_HID[0])
    wa0_obs, wa0_lat = wa0[:NUM_ACTOR_OBS], wa0[NUM_ACTOR_OBS:]
    wa1, ba1 = _init_linear(next(ki), ACT_HID[0], ACT_HID[1])
    wa2, ba2 = _init_linear(next(ki), ACT_HID[1], ACT_HID[2])
    wa3, ba3 = _init_linear(next(ki), ACT_HID[2], NUM_ACTIONS)

    # critic (first layer takes cat(obs, priv); init as one matrix then split)
    wc0, bc0 = _init_linear(next(ki), NUM_CRITIC_OBS, CRI_HID[0])
    wc0_obs, wc0_priv = wc0[:NUM_ACTOR_OBS], wc0[NUM_ACTOR_OBS:]
    wc1, bc1 = _init_linear(next(ki), CRI_HID[0], CRI_HID[1])
    wc2, bc2 = _init_linear(next(ki), CRI_HID[1], CRI_HID[2])
    wc3, bc3 = _init_linear(next(ki), CRI_HID[2], 1)

    # self.std parameter (used by Normal distribution, not the mean path)
    std = INIT_NOISE_STD * jnp.ones((NUM_ACTIONS,), jnp.float32)

    flat = (
        we0, be0, we1, be1, we2, be2, we3, be3,
        wa0_obs, wa0_lat, ba0, wa1, ba1, wa2, ba2, wa3, ba3,
        wc0_obs, wc0_priv, bc0, wc1, bc1, wc2, bc2, wc3, bc3,
    )
    return flat, std


def pack_params(p):
    """Pack 26 f32 arrays into 4 kernel slabs (fused / folded / bf16)."""
    (we0, be0, we1, be1, we2, be2, we3, be3,
     wa0_obs, wa0_lat, ba0, wa1, ba1, wa2, ba2, wa3, ba3,
     wc0_obs, wc0_priv, bc0, wc1, bc1, wc2, bc2, wc3, bc3) = p
    f32, bf16 = jnp.float32, jnp.bfloat16

    # Exact fold: no activation between encoder Linear(69,256) and Linear(256,256).
    we01 = we0 @ we1                      # [69, 256]
    b01 = be0 @ we1 + be1                 # [1, 256]

    # Exact fold: encoder 256->16 head (no activation) into the actor latent branch.
    w_lat = we3 @ wa0_lat                 # [256, 256]
    ba0_eff = ba0 + be3 @ wa0_lat         # [1, 256]

    # Single fused first-layer weight [128, 768] over the packed [obs|priv|pad] input.
    w_first = jnp.zeros((IN_LANES, 3 * HID), f32)
    w_first = w_first.at[NUM_ACTOR_OBS:NUM_CRITIC_OBS, 0:HID].set(we01)            # encoder <- priv
    w_first = w_first.at[:NUM_ACTOR_OBS, HID:2 * HID].set(wa0_obs)                 # actor   <- obs
    w_first = w_first.at[:NUM_ACTOR_OBS, 2 * HID:3 * HID].set(wc0_obs)             # critic  <- obs
    w_first = w_first.at[NUM_ACTOR_OBS:NUM_CRITIC_OBS, 2 * HID:3 * HID].set(wc0_priv)  # critic <- priv

    w_hid = jnp.stack([we2, w_lat, wa1, wa2, wc1, wc2], axis=0)    # [6,256,256]

    # Head stack: [0] actor 256->12 (padded to 128 lanes), [1] critic 256->1 at lane 12.
    w_head = jnp.zeros((2, HID, HEAD_LANES), f32)
    w_head = w_head.at[0, :, :NUM_ACTIONS].set(wa3)
    w_head = w_head.at[1, :, NUM_ACTIONS:NUM_ACTIONS + 1].set(wc3)

    b_head = jnp.zeros((1, HID), f32)
    b_head = b_head.at[0, :NUM_ACTIONS].set(ba3[0])
    b_head = b_head.at[0, NUM_ACTIONS].set(bc3[0, 0])

    b_all = jnp.concatenate(
        [b01, bc0, ba0_eff, be2, ba1, ba2, bc1, bc2, b_head], axis=0)   # [9,256]

    return (w_first.astype(bf16), w_hid.astype(bf16), w_head.astype(bf16),
            b_all.astype(f32))


# ------------------------------ references ----------------------------------
def reference(obs, priv, p):
    """Faithful f32 reference of the original PyTorch module."""
    (we0, be0, we1, be1, we2, be2, we3, be3,
     wa0_obs, wa0_lat, ba0, wa1, ba1, wa2, ba2, wa3, ba3,
     wc0_obs, wc0_priv, bc0, wc1, bc1, wc2, bc2, wc3, bc3) = p

    def elu(x):
        return jnp.where(x > 0, x, jnp.exp(x) - 1.0)

    h = priv @ we0 + be0                       # no activation after encoder layer 0
    h = elu(h @ we1 + be1)
    h = elu(h @ we2 + be2)
    latent = h @ we3 + be3                     # no activation on the latent

    ain = jnp.concatenate([obs, latent], axis=-1)
    wa0 = jnp.concatenate([wa0_obs, wa0_lat], axis=0)
    a = elu(ain @ wa0 + ba0)
    a = elu(a @ wa1 + ba1)
    a = elu(a @ wa2 + ba2)
    mean = a @ wa3 + ba3

    cin = jnp.concatenate([obs, priv], axis=-1)
    wc0 = jnp.concatenate([wc0_obs, wc0_priv], axis=0)
    c = elu(cin @ wc0 + bc0)
    c = elu(c @ wc1 + bc1)
    c = elu(c @ wc2 + bc2)
    value = c @ wc3 + bc3
    return mean, value


def reference_packed(obs, priv, packed):
    """Same folded bf16 weights / same math as the kernel, plain JAX (tight check)."""
    w_first, w_hid, w_head, b_all = packed
    bf16, f32 = jnp.bfloat16, jnp.float32

    def dot(a, w):
        return jnp.dot(a, w, preferred_element_type=f32)

    def elu(v):
        return jnp.where(v > 0, v, jnp.exp(v) - 1.0)

    pad = jnp.zeros((obs.shape[0], IN_LANES - NUM_CRITIC_OBS), obs.dtype)
    x = jnp.concatenate([obs, priv, pad], axis=-1).astype(bf16)
    first = dot(x, w_first)
    h = elu(first[:, :HID] + b_all[0:1])
    a_obs = first[:, HID:2 * HID]
    c = elu(first[:, 2 * HID:] + b_all[1:2])
    h = elu(dot(h.astype(bf16), w_hid[0]) + b_all[3:4])
    a = elu(a_obs + dot(h.astype(bf16), w_hid[1]) + b_all[2:3])
    a = elu(dot(a.astype(bf16), w_hid[2]) + b_all[4:5])
    a = elu(dot(a.astype(bf16), w_hid[3]) + b_all[5:6])
    c = elu(dot(c.astype(bf16), w_hid[4]) + b_all[6:7])
    c = elu(dot(c.astype(bf16), w_hid[5]) + b_all[7:8])
    out = (dot(a.astype(bf16), w_head[0]) + dot(c.astype(bf16), w_head[1])
           + b_all[8:9, :HEAD_LANES])
    return out[:, :NUM_ACTIONS], out[:, NUM_ACTIONS:NUM_ACTIONS + 1]


# ----------------------------------- main ------------------------------------
if __name__ == "__main__":
    params, std = build_params(seed=0)
    packed = pack_params(params)

    key = jax.random.PRNGKey(0)
    k_obs, k_priv = jax.random.split(key)
    obs = jax.random.normal(k_obs, (BATCH, NUM_ACTOR_OBS), jnp.float32)
    priv = jax.random.normal(k_priv, (BATCH, NUM_ENCODER_INFO), jnp.float32)

    mean, value = act_and_evaluate(obs, priv, packed)
    mean = jax.block_until_ready(mean)
    value = jax.block_until_ready(value)

    # action_std (what ActorCriticTeacher.action_std reports): mean*0 + std
    action_std = jax.block_until_ready(mean * 0.0 + std[None, :])

    # TODO(synk): Normal.sample / log_prob / entropy (stochastic act()) are host-side
    # distribution ops, intentionally left outside the kernel.

    assert mean.shape == (BATCH, NUM_ACTIONS)
    assert value.shape == (BATCH, 1)

    # Tight check: plain-JAX path with the SAME folded bf16 weights (catches
    # layout / bias-row / slicing bugs independently of quantization error).
    pm, pv = reference_packed(obs, priv, packed)
    assert jnp.allclose(mean, pm, atol=2e-3, rtol=2e-3), \
        float(jnp.max(jnp.abs(mean - pm)))
    assert jnp.allclose(value, pv, atol=2e-3, rtol=2e-3), \
        float(jnp.max(jnp.abs(value - pv)))

    # Loose end-to-end check vs the faithful f32 reference (bf16 weight noise).
    ref_mean, ref_value = reference(obs, priv, params)
    assert jnp.allclose(mean, ref_mean, atol=5e-2, rtol=5e-2), \
        float(jnp.max(jnp.abs(mean - ref_mean)))
    assert jnp.allclose(value, ref_value, atol=5e-2, rtol=5e-2), \
        float(jnp.max(jnp.abs(value - ref_value)))

    print("KERNEL_OK")
</pallas_src>

<mosaic_0001>
module attributes {stable_mosaic.version = 11 : i64} {
  func.func @ac_teacher_kernel(%arg0: i32, %arg1: memref<256x128xf32, #tpu.memory_space<vmem>>, %arg2: memref<128x768xbf16, #tpu.memory_space<vmem>>, %arg3: memref<6x256x256xbf16, #tpu.memory_space<vmem>>, %arg4: memref<2x256x128xbf16, #tpu.memory_space<vmem>>, %arg5: memref<9x256xf32, #tpu.memory_space<vmem>>, %arg6: memref<256x128xf32, #tpu.memory_space<vmem>>) attributes {dimension_semantics = [#tpu.dimension_semantics<parallel>], iteration_bounds = array<i64: 2>, scalar_prefetch = 0 : i64, scratch_operands = 0 : i64, tpu.core_type = #tpu.core_type<tc>, window_params = [{transform_indices = @transform_0, window_bounds = array<i64: 256, 128>}, {pipeline_mode = #tpu.pipeline_mode<synchronous>, transform_indices = @transform_1, window_bounds = array<i64: 128, 768>}, {pipeline_mode = #tpu.pipeline_mode<synchronous>, transform_indices = @transform_2, window_bounds = array<i64: 6, 256, 256>}, {pipeline_mode = #tpu.pipeline_mode<synchronous>, transform_indices = @transform_3, window_bounds = array<i64: 2, 256, 128>}, {pipeline_mode = #tpu.pipeline_mode<synchronous>, transform_indices = @transform_4, window_bounds = array<i64: 9, 256>}, {transform_indices = @transform_5, window_bounds = array<i64: 256, 128>}]} {
    %c0 = arith.constant 0 : index
    %c0_0 = arith.constant 0 : index
    %0 = vector.load %arg1[%c0, %c0_0] : memref<256x128xf32, #tpu.memory_space<vmem>>, vector<256x128xf32>
    %1 = arith.truncf %0 : vector<256x128xf32> to vector<256x128xbf16>
    %c0_1 = arith.constant 0 : index
    %c0_2 = arith.constant 0 : index
    %2 = vector.load %arg2[%c0_1, %c0_2] : memref<128x768xbf16, #tpu.memory_space<vmem>>, vector<128x768xbf16>
    %cst = arith.constant dense<0.000000e+00> : vector<256x768xf32>
    %3 = tpu.matmul %1, %2, %cst {dimension_numbers = #tpu.dot_dimension_numbers<[1], [0], [0], [1], [0, 0, 1, 1], [], []>} : vector<256x128xbf16>, vector<128x768xbf16>, vector<256x768xf32> -> vector<256x768xf32>
    %4 = vector.extract_strided_slice %3 {offsets = [0, 0], sizes = [256, 256], strides = [1, 1]} : vector<256x768xf32> to vector<256x256xf32>
    %c0_3 = arith.constant 0 : index
    %c0_4 = arith.constant 0 : index
    %5 = vector.load %arg5[%c0_3, %c0_4] : memref<9x256xf32, #tpu.memory_space<vmem>>, vector<1x256xf32>
    %6 = vector.broadcast %5 : vector<1x256xf32> to vector<256x256xf32>
    %7 = arith.addf %4, %6 : vector<256x256xf32>
    %cst_5 = arith.constant 0.000000e+00 : f32
    %8 = vector.broadcast %cst_5 : f32 to vector<256x256xf32>
    %9 = arith.cmpf ogt, %7, %8 : vector<256x256xf32>
    %10 = math.exp %7 : vector<256x256xf32>
    %cst_6 = arith.constant 1.000000e+00 : f32
    %11 = vector.broadcast %cst_6 : f32 to vector<256x256xf32>
    %12 = arith.subf %10, %11 : vector<256x256xf32>
    %13 = arith.select %9, %7, %12 : vector<256x256xi1>, vector<256x256xf32>
    %14 = vector.extract_strided_slice %3 {offsets = [0, 256], sizes = [256, 256], strides = [1, 1]} : vector<256x768xf32> to vector<256x256xf32>
    %15 = vector.extract_strided_slice %3 {offsets = [0, 512], sizes = [256, 256], strides = [1, 1]} : vector<256x768xf32> to vector<256x256xf32>
    %c1 = arith.constant 1 : index
    %c0_7 = arith.constant 0 : index
    %16 = vector.load %arg5[%c1, %c0_7] : memref<9x256xf32, #tpu.memory_space<vmem>>, vector<1x256xf32>
    %17 = vector.broadcast %16 : vector<1x256xf32> to vector<256x256xf32>
    %18 = arith.addf %15, %17 : vector<256x256xf32>
    %cst_8 = arith.constant 0.000000e+00 : f32
    %19 = vector.broadcast %cst_8 : f32 to vector<256x256xf32>
    %20 = arith.cmpf ogt, %18, %19 : vector<256x256xf32>
    %21 = math.exp %18 : vector<256x256xf32>
    %cst_9 = arith.constant 1.000000e+00 : f32
    %22 = vector.broadcast %cst_9 : f32 to vector<256x256xf32>
    %23 = arith.subf %21, %22 : vector<256x256xf32>
    %24 = arith.select %20, %18, %23 : vector<256x256xi1>, vector<256x256xf32>
    %25 = arith.truncf %13 : vector<256x256xf32> to vector<256x256xbf16>
    %c0_10 = arith.constant 0 : index
    %c0_11 = arith.constant 0 : index
    %c0_12 = arith.constant 0 : index
    %26 = vector.load %arg3[%c0_10, %c0_11, %c0_12] : memref<6x256x256xbf16, #tpu.memory_space<vmem>>, vector<1x256x256xbf16>
    %27 = vector.shape_cast %26 : vector<1x256x256xbf16> to vector<256x256xbf16>
    %cst_13 = arith.constant dense<0.000000e+00> : vector<256x256xf32>
    %28 = tpu.matmul %25, %27, %cst_13 {dimension_numbers = #tpu.dot_dimension_numbers<[1], [0], [0], [1], [0, 0, 1, 1], [], []>} : vector<256x256xbf16>, vector<256x256xbf16>, vector<256x256xf32> -> vector<256x256xf32>
    %c3 = arith.constant 3 : index
    %c0_14 = arith.constant 0 : index
    %29 = vector.load %arg5[%c3, %c0_14] : memref<9x256xf32, #tpu.memory_space<vmem>>, vector<1x256xf32>
    %30 = vector.broadcast %29 : vector<1x256xf32> to vector<256x256xf32>
    %31 = arith.addf %28, %30 : vector<256x256xf32>
    %cst_15 = arith.constant 0.000000e+00 : f32
    %32 = vector.broadcast %cst_15 : f32 to vector<256x256xf32>
    %33 = arith.cmpf ogt, %31, %32 : vector<256x256xf32>
    %34 = math.exp %31 : vector<256x256xf32>
    %cst_16 = arith.constant 1.000000e+00 : f32
    %35 = vector.broadcast %cst_16 : f32 to vector<256x256xf32>
    %36 = arith.subf %34, %35 : vector<256x256xf32>
    %37 = arith.select %33, %31, %36 : vector<256x256xi1>, vector<256x256xf32>
    %38 = arith.truncf %37 : vector<256x256xf32> to vector<256x256xbf16>
    %c1_17 = arith.constant 1 : index
    %c0_18 = arith.constant 0 : index
    %c0_19 = arith.constant 0 : index
    %39 = vector.load %arg3[%c1_17, %c0_18, %c0_19] : memref<6x256x256xbf16, #tpu.memory_space<vmem>>, vector<1x256x256xbf16>
    %40 = vector.shape_cast %39 : vector<1x256x256xbf16> to vector<256x256xbf16>
    %cst_20 = arith.constant dense<0.000000e+00> : vector<256x256xf32>
    %41 = tpu.matmul %38, %40, %cst_20 {dimension_numbers = #tpu.dot_dimension_numbers<[1], [0], [0], [1], [0, 0, 1, 1], [], []>} : vector<256x256xbf16>, vector<256x256xbf16>, vector<256x256xf32> -> vector<256x256xf32>
    %42 = arith.addf %14, %41 : vector<256x256xf32>
    %c2 = arith.constant 2 : index
    %c0_21 = arith.constant 0 : index
    %43 = vector.load %arg5[%c2, %c0_21] : memref<9x256xf32, #tpu.memory_space<vmem>>, vector<1x256xf32>
    %44 = vector.broadcast %43 : vector<1x256xf32> to vector<256x256xf32>
    %45 = arith.addf %42, %44 : vector<256x256xf32>
    %cst_22 = arith.constant 0.000000e+00 : f32
    %46 = vector.broadcast %cst_22 : f32 to vector<256x256xf32>
    %47 = arith.cmpf ogt, %45, %46 : vector<256x256xf32>
    %48 = math.exp %45 : vector<256x256xf32>
    %cst_23 = arith.constant 1.000000e+00 : f32
    %49 = vector.broadcast %cst_23 : f32 to vector<256x256xf32>
    %50 = arith.subf %48, %49 : vector<256x256xf32>
    %51 = arith.select %47, %45, %50 : vector<256x256xi1>, vector<256x256xf32>
    %52 = arith.truncf %51 : vector<256x256xf32> to vector<256x256xbf16>
    %c2_24 = arith.constant 2 : index
    %c0_25 = arith.constant 0 : index
    %c0_26 = arith.constant 0 : index
    %53 = vector.load %arg3[%c2_24, %c0_25, %c0_26] : memref<6x256x256xbf16, #tpu.memory_space<vmem>>, vector<1x256x256xbf16>
    %54 = vector.shape_cast %53 : vector<1x256x256xbf16> to vector<256x256xbf16>
    %cst_27 = arith.constant dense<0.000000e+00> : vector<256x256xf32>
    %55 = tpu.matmul %52, %54, %cst_27 {dimension_numbers = #tpu.dot_dimension_numbers<[1], [0], [0], [1], [0, 0, 1, 1], [], []>} : vector<256x256xbf16>, vector<256x256xbf16>, vector<256x256xf32> -> vector<256x256xf32>
    %c4 = arith.constant 4 : index
    %c0_28 = arith.constant 0 : index
    %56 = vector.load %arg5[%c4, %c0_28] : memref<9x256xf32, #tpu.memory_space<vmem>>, vector<1x256xf32>
    %57 = vector.broadcast %56 : vector<1x256xf32> to vector<256x256xf32>
    %58 = arith.addf %55, %57 : vector<256x256xf32>
    %cst_29 = arith.constant 0.000000e+00 : f32
    %59 = vector.broadcast %cst_29 : f32 to vector<256x256xf32>
    %60 = arith.cmpf ogt, %58, %59 : vector<256x256xf32>
    %61 = math.exp %58 : vector<256x256xf32>
    %cst_30 = arith.constant 1.000000e+00 : f32
    %62 = vector.broadcast %cst_30 : f32 to vector<256x256xf32>
    %63 = arith.subf %61, %62 : vector<256x256xf32>
    %64 = arith.select %60, %58, %63 : vector<256x256xi1>, vector<256x256xf32>
    %65 = arith.truncf %64 : vector<256x256xf32> to vector<256x256xbf16>
    %c3_31 = arith.constant 3 : index
    %c0_32 = arith.constant 0 : index
    %c0_33 = arith.constant 0 : index
    %66 = vector.load %arg3[%c3_31, %c0_32, %c0_33] : memref<6x256x256xbf16, #tpu.memory_space<vmem>>, vector<1x256x256xbf16>
    %67 = vector.shape_cast %66 : vector<1x256x256xbf16> to vector<256x256xbf16>
    %cst_34 = arith.constant dense<0.000000e+00> : vector<256x256xf32>
    %68 = tpu.matmul %65, %67, %cst_34 {dimension_numbers = #tpu.dot_dimension_numbers<[1], [0], [0], [1], [0, 0, 1, 1], [], []>} : vector<256x256xbf16>, vector<256x256xbf16>, vector<256x256xf32> -> vector<256x256xf32>
    %c5 = arith.constant 5 : index
    %c0_35 = arith.constant 0 : index
    %69 = vector.load %arg5[%c5, %c0_35] : memref<9x256xf32, #tpu.memory_space<vmem>>, vector<1x256xf32>
    %70 = vector.broadcast %69 : vector<1x256xf32> to vector<256x256xf32>
    %71 = arith.addf %68, %70 : vector<256x256xf32>
    %cst_36 = arith.constant 0.000000e+00 : f32
    %72 = vector.broadcast %cst_36 : f32 to vector<256x256xf32>
    %73 = arith.cmpf ogt, %71, %72 : vector<256x256xf32>
    %74 = math.exp %71 : vector<256x256xf32>
    %cst_37 = arith.constant 1.000000e+00 : f32
    %75 = vector.broadcast %cst_37 : f32 to vector<256x256xf32>
    %76 = arith.subf %74, %75 : vector<256x256xf32>
    %77 = arith.select %73, %71, %76 : vector<256x256xi1>, vector<256x256xf32>
    %78 = arith.truncf %24 : vector<256x256xf32> to vector<256x256xbf16>
    %c4_38 = arith.constant 4 : index
    %c0_39 = arith.constant 0 : index
    %c0_40 = arith.constant 0 : index
    %79 = vector.load %arg3[%c4_38, %c0_39, %c0_40] : memref<6x256x256xbf16, #tpu.memory_space<vmem>>, vector<1x256x256xbf16>
    %80 = vector.shape_cast %79 : vector<1x256x256xbf16> to vector<256x256xbf16>
    %cst_41 = arith.constant dense<0.000000e+00> : vector<256x256xf32>
    %81 = tpu.matmul %78, %80, %cst_41 {dimension_numbers = #tpu.dot_dimension_numbers<[1], [0], [0], [1], [0, 0, 1, 1], [], []>} : vector<256x256xbf16>, vector<256x256xbf16>, vector<256x256xf32> -> vector<256x256xf32>
    %c6 = arith.constant 6 : index
    %c0_42 = arith.constant 0 : index
    %82 = vector.load %arg5[%c6, %c0_42] : memref<9x256xf32, #tpu.memory_space<vmem>>, vector<1x256xf32>
    %83 = vector.broadcast %82 : vector<1x256xf32> to vector<256x256xf32>
    %84 = arith.addf %81, %83 : vector<256x256xf32>
    %cst_43 = arith.constant 0.000000e+00 : f32
    %85 = vector.broadcast %cst_43 : f32 to vector<256x256xf32>
    %86 = arith.cmpf ogt, %84, %85 : vector<256x256xf32>
    %87 = math.exp %84 : vector<256x256xf32>
    %cst_44 = arith.constant 1.000000e+00 : f32
    %88 = vector.broadcast %cst_44 : f32 to vector<256x256xf32>
    %89 = arith.subf %87, %88 : vector<256x256xf32>
    %90 = arith.select %86, %84, %89 : vector<256x256xi1>, vector<256x256xf32>
    %91 = arith.truncf %90 : vector<256x256xf32> to vector<256x256xbf16>
    %c5_45 = arith.constant 5 : index
    %c0_46 = arith.constant 0 : index
    %c0_47 = arith.constant 0 : index
    %92 = vector.load %arg3[%c5_45, %c0_46, %c0_47] : memref<6x256x256xbf16, #tpu.memory_space<vmem>>, vector<1x256x256xbf16>
    %93 = vector.shape_cast %92 : vector<1x256x256xbf16> to vector<256x256xbf16>
    %cst_48 = arith.constant dense<0.000000e+00> : vector<256x256xf32>
    %94 = tpu.matmul %91, %93, %cst_48 {dimension_numbers = #tpu.dot_dimension_numbers<[1], [0], [0], [1], [0, 0, 1, 1], [], []>} : vector<256x256xbf16>, vector<256x256xbf16>, vector<256x256xf32> -> vector<256x256xf32>
    %c7 = arith.constant 7 : index
    %c0_49 = arith.constant 0 : index
    %95 = vector.load %arg5[%c7, %c0_49] : memref<9x256xf32, #tpu.memory_space<vmem>>, vector<1x256xf32>
    %96 = vector.broadcast %95 : vector<1x256xf32> to vector<256x256xf32>
    %97 = arith.addf %94, %96 : vector<256x256xf32>
    %cst_50 = arith.constant 0.000000e+00 : f32
    %98 = vector.broadcast %cst_50 : f32 to vector<256x256xf32>
    %99 = arith.cmpf ogt, %97, %98 : vector<256x256xf32>
    %100 = math.exp %97 : vector<256x256xf32>
    %cst_51 = arith.constant 1.000000e+00 : f32
    %101 = vector.broadcast %cst_51 : f32 to vector<256x256xf32>
    %102 = arith.subf %100, %101 : vector<256x256xf32>
    %103 = arith.select %99, %97, %102 : vector<256x256xi1>, vector<256x256xf32>
    %104 = arith.truncf %77 : vector<256x256xf32> to vector<256x256xbf16>
    %c0_52 = arith.constant 0 : index
    %c0_53 = arith.constant 0 : index
    %c0_54 = arith.constant 0 : index
    %105 = vector.load %arg4[%c0_52, %c0_53, %c0_54] : memref<2x256x128xbf16, #tpu.memory_space<vmem>>, vector<1x256x128xbf16>
    %106 = vector.shape_cast %105 : vector<1x256x128xbf16> to vector<256x128xbf16>
    %cst_55 = arith.constant dense<0.000000e+00> : vector<256x128xf32>
    %107 = tpu.matmul %104, %106, %cst_55 {dimension_numbers = #tpu.dot_dimension_numbers<[1], [0], [0], [1], [0, 0, 1, 1], [], []>} : vector<256x256xbf16>, vector<256x128xbf16>, vector<256x128xf32> -> vector<256x128xf32>
    %108 = arith.truncf %103 : vector<256x256xf32> to vector<256x256xbf16>
    %c1_56 = arith.constant 1 : index
    %c0_57 = arith.constant 0 : index
    %c0_58 = arith.constant 0 : index
    %109 = vector.load %arg4[%c1_56, %c0_57, %c0_58] : memref<2x256x128xbf16, #tpu.memory_space<vmem>>, vector<1x256x128xbf16>
    %110 = vector.shape_cast %109 : vector<1x256x128xbf16> to vector<256x128xbf16>
    %cst_59 = arith.constant dense<0.000000e+00> : vector<256x128xf32>
    %111 = tpu.matmul %108, %110, %cst_59 {dimension_numbers = #tpu.dot_dimension_numbers<[1], [0], [0], [1], [0, 0, 1, 1], [], []>} : vector<256x256xbf16>, vector<256x128xbf16>, vector<256x128xf32> -> vector<256x128xf32>
    %112 = arith.addf %107, %111 : vector<256x128xf32>
    %c8 = arith.constant 8 : index
    %c0_60 = arith.constant 0 : index
    %113 = vector.load %arg5[%c8, %c0_60] : memref<9x256xf32, #tpu.memory_space<vmem>>, vector<1x128xf32>
    %114 = vector.broadcast %113 : vector<1x128xf32> to vector<256x128xf32>
    %115 = arith.addf %112, %114 : vector<256x128xf32>
    %c0_61 = arith.constant 0 : index
    %c0_62 = arith.constant 0 : index
    %116 = vector.load %arg6[%c0_61, %c0_62] : memref<256x128xf32, #tpu.memory_space<vmem>>, vector<256x128xf32>
    tpu.vector_store %arg6[%c0_61, %c0_62], %115 {strides = array<i32>} : memref<256x128xf32, #tpu.memory_space<vmem>>, vector<256x128xf32>,
    return
  }
  func.func @transform_0(%arg0: i32) -> (i32, i32) {
    %c0_i32 = arith.constant 0 : i32
    %c0_i32_0 = arith.constant 0 : i32
    return %arg0, %c0_i32 : i32, i32
  }
  func.func @transform_1(%arg0: i32) -> (i32, i32) {
    %c0_i32 = arith.constant 0 : i32
    %c0_i32_0 = arith.constant 0 : i32
    %c0_i32_1 = arith.constant 0 : i32
    return %c0_i32, %c0_i32_0 : i32, i32
  }
  func.func @transform_2(%arg0: i32) -> (i32, i32, i32) {
    %c0_i32 = arith.constant 0 : i32
    %c0_i32_0 = arith.constant 0 : i32
    %c0_i32_1 = arith.constant 0 : i32
    %c0_i32_2 = arith.constant 0 : i32
    return %c0_i32, %c0_i32_0, %c0_i32_1 : i32, i32, i32
  }
  func.func @transform_3(%arg0: i32) -> (i32, i32, i32) {
    %c0_i32 = arith.constant 0 : i32
    %c0_i32_0 = arith.constant 0 : i32
    %c0_i32_1 = arith.constant 0 : i32
    %c0_i32_2 = arith.constant 0 : i32
    return %c0_i32, %c0_i32_0, %c0_i32_1 : i32, i32, i32
  }
  func.func @transform_4(%arg0: i32) -> (i32, i32) {
    %c0_i32 = arith.constant 0 : i32
    %c0_i32_0 = arith.constant 0 : i32
    %c0_i32_1 = arith.constant 0 : i32
    return %c0_i32, %c0_i32_0 : i32, i32
  }
  func.func @transform_5(%arg0: i32) -> (i32, i32) {
    %c0_i32 = arith.constant 0 : i32
    %c0_i32_0 = arith.constant 0 : i32
    return %arg0, %c0_i32 : i32, i32
  }
}

</mosaic_0001>

<llo_original>
// kernel: act_and_evaluate.1
$region0: #{act_and_evaluate.1}
  #allocation0 [shape = 'u32[]', space=smem, size = 0x4, offset = 0x4, fixed_abs, tag = 'smem constant byte address 0x4 - core index']
  #allocation1 [shape = 'u32[144,128]{1,0:T(1,128)}', space=vmem, size = 0x12000, scoped, tag = 'internal scratch']
  %s0 = inlined_call_operand.vmem [shape: f32[512,128], index: 0, kind: input, shape index: {}]
  %s1 = inlined_call_operand.vmem [shape: bf16[128,768], index: 1, kind: input, shape index: {}]
  %s2 = inlined_call_operand.vmem [shape: bf16[6,256,256], index: 2, kind: input, shape index: {}]
  %s3 = inlined_call_operand.vmem [shape: bf16[2,256,128], index: 3, kind: input, shape index: {}]
  %s4 = inlined_call_operand.vmem [shape: f32[9,256], index: 4, kind: input, shape index: {}]
  %s5 = inlined_call_operand.vmem [shape: f32[512,128], index: 5, kind: output, shape index: {}]
  %s6 = sld [smem:[#allocation0]]
  $region53: #{act_and_evaluate.1} parent=0
    _
  %s8 = ssub.s32 1, %s6
  %s9 = scalar_select 0, %s8, %s6
  loop: start=0, step=1, limit=4
  $region2: #{act_and_evaluate.1} parent=0 // loop_pre_header
    _
  $region3: #{act_and_evaluate.1} parent=0 // loop_header
    %s11 = sphi 0, %s15
    %p12 = scmp.ge.s32.totalorder %s11, 4
    %s21 = sphi 0, %s23
    %s24 = sphi 0, %s21
    %s25 = sphi 0, %s24
    %s41 = sphi 0, %s25
    %s45 = sphi 0, %s45
    %s47 = sphi 0, %s45
    %s48 = sphi 0, %s47
    %s62 = sphi 0, %s48
    %s66 = sphi 0, %s66
    %s68 = sphi 0, %s66
    %s69 = sphi 0, %s68
    %s83 = sphi 0, %s69
    %s87 = sphi 0, %s87
    %s89 = sphi 0, %s87
    %s90 = sphi 0, %s89
    %s104 = sphi 0, %s90
    %s108 = sphi 0, %s108
    %s110 = sphi 0, %s108
    %s111 = sphi 0, %s110
    %s125 = sphi 0, %s111
    %s131 = sphi 0, %s133
    %s134 = sphi 0, %s131
    %s135 = sphi 0, %s134
    %s151 = sphi 0, %s135
  $region4: #{act_and_evaluate.1} parent=0 // loop_header_branch
    %14 = sbr.rel (%p12) target = $region8
  $region5: #{act_and_evaluate.1} parent=0 // loop_body
    %s16 = ssub.s32 %s11, 1
    %s17 = ssub.s32 %s11, 2
    %s18 = sadd.s32 %s11, 1
    %s19 = ssub.s32 %s11, %s18
    %p20 = scmp.eq.s32.totalorder %s19, 0
    %s22 = sadd.s32 %s21, 1
    %s23 = scalar_select %p20, %s21, %s22
    %p26 = pneg %p20
    %p27 = scmp.eq.s32.totalorder %s11, 1
    %p28 = por %p26, %p27
    %p29 = scmp.ne.s32.totalorder %s21, %s24
    %p30 = scmp.eq.s32.totalorder %s11, 0
    %p31 = por %p29, %p30
    %p32 = scmp.ne.s32.totalorder %s21, %s24
    %p33 = scmp.eq.s32.totalorder %s16, 1
    %p34 = por %p32, %p33
    %p35 = scmp.ne.s32.totalorder %s24, %s25
    %p36 = scmp.eq.s32.totalorder %s16, 0
    %p37 = por %p35, %p36
    %p38 = scmp.ne.s32.totalorder %s24, %s25
    %p39 = scmp.eq.s32.totalorder %s17, 1
    %p40 = por %p38, %p39
    %p42 = scmp.ne.s32.totalorder %s25, %s41
    %p43 = scmp.eq.s32.totalorder %s17, 0
    %p44 = por %p42, %p43
    %s46 = sadd.s32 %s45, 1
    %p49 = scmp.eq.s32.totalorder %s11, 1
    %p50 = scmp.ne.s32.totalorder %s45, %s47
    %p51 = scmp.eq.s32.totalorder %s11, 0
    %p52 = por %p50, %p51
    %p53 = scmp.ne.s32.totalorder %s45, %s47
    %p54 = scmp.eq.s32.totalorder %s16, 1
    %p55 = por %p53, %p54
    %p56 = scmp.ne.s32.totalorder %s47, %s48
    %p57 = scmp.eq.s32.totalorder %s16, 0
    %p58 = por %p56, %p57
    %p59 = scmp.ne.s32.totalorder %s47, %s48
    %p60 = scmp.eq.s32.totalorder %s17, 1
    %p61 = por %p59, %p60
    %p63 = scmp.ne.s32.totalorder %s48, %s62
    %p64 = scmp.eq.s32.totalorder %s17, 0
    %p65 = por %p63, %p64
    %s67 = sadd.s32 %s66, 1
    %p70 = scmp.eq.s32.totalorder %s11, 1
    %p71 = scmp.ne.s32.totalorder %s66, %s68
    %p72 = scmp.eq.s32.totalorder %s11, 0
    %p73 = por %p71, %p72
    %p74 = scmp.ne.s32.totalorder %s66, %s68
    %p75 = scmp.eq.s32.totalorder %s16, 1
    %p76 = por %p74, %p75
    %p77 = scmp.ne.s32.totalorder %s68, %s69
    %p78 = scmp.eq.s32.totalorder %s16, 0
    %p79 = por %p77, %p78
    %p80 = scmp.ne.s32.totalorder %s68, %s69
    %p81 = scmp.eq.s32.totalorder %s17, 1
    %p82 = por %p80, %p81
    %p84 = scmp.ne.s32.totalorder %s69, %s83
    %p85 = scmp.eq.s32.totalorder %s17, 0
    %p86 = por %p84, %p85
    %s88 = sadd.s32 %s87, 1
    %p91 = scmp.eq.s32.totalorder %s11, 1
    %p92 = scmp.ne.s32.totalorder %s87, %s89
    %p93 = scmp.eq.s32.totalorder %s11, 0
    %p94 = por %p92, %p93
    %p95 = scmp.ne.s32.totalorder %s87, %s89
    %p96 = scmp.eq.s32.totalorder %s16, 1
    %p97 = por %p95, %p96
    %p98 = scmp.ne.s32.totalorder %s89, %s90
    %p99 = scmp.eq.s32.totalorder %s16, 0
    %p100 = por %p98, %p99
    %p101 = scmp.ne.s32.totalorder %s89, %s90
    %p102 = scmp.eq.s32.totalorder %s17, 1
    %p103 = por %p101, %p102
    %p105 = scmp.ne.s32.totalorder %s90, %s104
    %p106 = scmp.eq.s32.totalorder %s17, 0
    %p107 = por %p105, %p106
    %s109 = sadd.s32 %s108, 1
    %p112 = scmp.eq.s32.totalorder %s11, 1
    %p113 = scmp.ne.s32.totalorder %s108, %s110
    %p114 = scmp.eq.s32.totalorder %s11, 0
    %p115 = por %p113, %p114
    %p116 = scmp.ne.s32.totalorder %s108, %s110
    %p117 = scmp.eq.s32.totalorder %s16, 1
    %p118 = por %p116, %p117
    %p119 = scmp.ne.s32.totalorder %s110, %s111
    %p120 = scmp.eq.s32.totalorder %s16, 0
    %p121 = por %p119, %p120
    %p122 = scmp.ne.s32.totalorder %s110, %s111
    %p123 = scmp.eq.s32.totalorder %s17, 1
    %p124 = por %p122, %p123
    %p126 = scmp.ne.s32.totalorder %s111, %s125
    %p127 = scmp.eq.s32.totalorder %s17, 0
    %p128 = por %p126, %p127
    %s129 = ssub.s32 %s11, %s18
    %p130 = scmp.eq.s32.totalorder %s129, 0
    %s132 = sadd.s32 %s131, 1
    %s133 = scalar_select %p130, %s131, %s132
    %p136 = pneg %p130
    %p137 = scmp.eq.s32.totalorder %s11, 1
    %p138 = por %p136, %p137
    %p139 = scmp.ne.s32.totalorder %s131, %s134
    %p140 = scmp.eq.s32.totalorder %s11, 0
    %p141 = por %p139, %p140
    %p142 = scmp.ne.s32.totalorder %s131, %s134
    %p143 = scmp.eq.s32.totalorder %s16, 1
    %p144 = por %p142, %p143
    %p145 = scmp.ne.s32.totalorder %s134, %s135
    %p146 = scmp.eq.s32.totalorder %s16, 0
    %p147 = por %p145, %p146
    %p148 = scmp.ne.s32.totalorder %s134, %s135
    %p149 = scmp.eq.s32.totalorder %s17, 1
    %p150 = por %p148, %p149
    %p152 = scmp.ne.s32.totalorder %s135, %s151
    %p153 = scmp.eq.s32.totalorder %s17, 0
    %p154 = por %p152, %p153
    %p155 = scmp.le.s32.totalorder 1, %s11
    %p156 = scmp.lt.s32.totalorder %s11, 3
    %p157 = pnand %p155, %p156
    %p158 = pneg %p157
    // Predicated region
    $region9: #{act_and_evaluate.1} parent=5 // pred_check
      _
    $region10: #{act_and_evaluate.1} parent=5 // pred_check_branch
      %160 = sbr.rel (%p157) target = $region12
    $region11: #{act_and_evaluate.1} parent=5 // pred_region
      %s161 = ssub.s32 %s11, 1
      // Predicated region
      $region13: #{act_and_evaluate.1} parent=11 // pred_check
        %p162 = pneg %p58
      $region14: #{act_and_evaluate.1} parent=11 // pred_check_branch
        %164 = sbr.rel (%p162) target = $region16
      $region15: #{act_and_evaluate.1} parent=11 // pred_region
        _
      $region16: #{act_and_evaluate.1} parent=11 // pred_fallthru
        _
      // Predicated region
      $region17: #{act_and_evaluate.1} parent=11 // pred_check
        %p165 = pneg %p79
      $region18: #{act_and_evaluate.1} parent=11 // pred_check_branch
        %167 = sbr.rel (%p165) target = $region20
      $region19: #{act_and_evaluate.1} parent=11 // pred_region
        _
      $region20: #{act_and_evaluate.1} parent=11 // pred_fallthru
        _
      // Predicated region
      $region21: #{act_and_evaluate.1} parent=11 // pred_check
        %p168 = pneg %p100
      $region22: #{act_and_evaluate.1} parent=11 // pred_check_branch
        %170 = sbr.rel (%p168) target = $region24
      $region23: #{act_and_evaluate.1} parent=11 // pred_region
        _
      $region24: #{act_and_evaluate.1} parent=11 // pred_fallthru
        _
      // Predicated region
      $region25: #{act_and_evaluate.1} parent=11 // pred_check
        %p171 = pneg %p121
      $region26: #{act_and_evaluate.1} parent=11 // pred_check_branch
        %173 = sbr.rel (%p171) target = $region28
      $region27: #{act_and_evaluate.1} parent=11 // pred_region
        _
      $region28: #{act_and_evaluate.1} parent=11 // pred_fallthru
        _
    $region12: #{act_and_evaluate.1} parent=5 // pred_fallthru
      _
    %p174 = scmp.lt.s32.totalorder %s11, 2
    // Predicated region
    $region29: #{act_and_evaluate.1} parent=5 // pred_check
      %p175 = pneg %p174
    $region30: #{act_and_evaluate.1} parent=5 // pred_check_branch
      %177 = sbr.rel (%p175) target = $region32
    $region31: #{act_and_evaluate.1} parent=5 // pred_region
      // Predicated region
      $region33: #{act_and_evaluate.1} parent=31 // pred_check
        %p178 = pneg %p31
      $region34: #{act_and_evaluate.1} parent=31 // pred_check_branch
        %180 = sbr.rel (%p178) target = $region36
      $region35: #{act_and_evaluate.1} parent=31 // pred_region
        %s181 = smul.u32 32, %s11
        %p182 = scmp.lt.s32.totalorder %s181, 63
        %s183 = scalar_select %p182, %s181, 63
        %s184 = smul.addr %s183, 8
        %s185 = scalar_lea.vmem %s0, %s184
        %s186 = smul.u32 32, %s11
      $region36: #{act_and_evaluate.1} parent=31 // pred_fallthru
        _
    $region32: #{act_and_evaluate.1} parent=5 // pred_fallthru
      _
    %p187 = scmp.le.s32.totalorder 1, %s11
    %p188 = scmp.lt.s32.totalorder %s11, 3
    %p189 = pnand %p187, %p188
    %p190 = pneg %p189
    // Predicated region
    $region37: #{act_and_evaluate.1} parent=5 // pred_check
      _
    $region38: #{act_and_evaluate.1} parent=5 // pred_check_branch
      %192 = sbr.rel (%p189) target = $region40
    $region39: #{act_and_evaluate.1} parent=5 // pred_region
      %s193 = ssub.s32 %s11, 1
      %s194 = smul.u32 32, %s16
      %p195 = scmp.lt.s32.totalorder %s194, 63
      %s196 = scalar_select %p195, %s194, 63
      %s197 = smul.addr %s196, 8
      %s198 = scalar_lea.vmem %s0, %s197
      %p199 = pneg %p37
      %p200 = pneg %p34
      %p201 = pneg %p58
      %p202 = pneg %p55
      %p203 = pneg %p79
      %p204 = pneg %p76
      %p205 = pneg %p100
      %p206 = pneg %p97
      %p207 = pneg %p121
      %p208 = pneg %p118
      %p209 = pneg %p147
      %p210 = pneg %p144
      %s211 = smul.u32 32, %s16
      %p212 = scmp.lt.s32.totalorder %s211, 63
      %s213 = scalar_select %p212, %s211, 63
      %s214 = smul.addr %s213, 8
      %s215 = scalar_lea.vmem %s5, %s214
      %s216 = smul.u32 32, %s16
      %p217 = scmp.lt.s32.totalorder %s216, 63
      %s218 = scalar_select %p217, %s216, 63
      %s219 = smul.addr %s218, 8
      %s220 = scalar_lea.vmem %s0, %s219
      %s221 = smul.u32 32, %s16
      %s222 = smul.u32 32, %s16
      %p223 = scmp.lt.s32.totalorder %s222, 63
      %s224 = scalar_select %p223, %s222, 63
      %s225 = smul.addr %s224, 8
      %s226 = scalar_lea.vmem %s5, %s225
      %s227 = smul.u32 32, %s16
      %v229 = vld [vmem:[%s220] sm:$0xff]
      %v230 = vld [vmem:[%s220 + $0x8] sm:$0xff]
      %v231 = vld [vmem:[%s220 + $0x10] sm:$0xff]
      %v232 = vld [vmem:[%s220 + $0x18] sm:$0xff]
      %v233 = vld [vmem:[%s220 + $0x20] sm:$0xff]
      %v234 = vld [vmem:[%s220 + $0x28] sm:$0xff]
      %v235 = vld [vmem:[%s220 + $0x30] sm:$0xff]
      %v236 = vld [vmem:[%s220 + $0x38] sm:$0xff]
      %v237 = vld [vmem:[%s220 + $0x40] sm:$0xff]
      %v238 = vld [vmem:[%s220 + $0x48] sm:$0xff]
      %v239 = vld [vmem:[%s220 + $0x50] sm:$0xff]
      %v240 = vld [vmem:[%s220 + $0x58] sm:$0xff]
      %v241 = vld [vmem:[%s220 + $0x60] sm:$0xff]
      %v242 = vld [vmem:[%s220 + $0x68] sm:$0xff]
      %v243 = vld [vmem:[%s220 + $0x70] sm:$0xff]
      %v244 = vld [vmem:[%s220 + $0x78] sm:$0xff]
      %v245 = vld [vmem:[%s220 + $0x80] sm:$0xff]
      %v246 = vld [vmem:[%s220 + $0x88] sm:$0xff]
      %v247 = vld [vmem:[%s220 + $0x90] sm:$0xff]
      %v248 = vld [vmem:[%s220 + $0x98] sm:$0xff]
      %v249 = vld [vmem:[%s220 + $0xa0] sm:$0xff]
      %v250 = vld [vmem:[%s220 + $0xa8] sm:$0xff]
      %v251 = vld [vmem:[%s220 + $0xb0] sm:$0xff]
      %v252 = vld [vmem:[%s220 + $0xb8] sm:$0xff]
      %v253 = vld [vmem:[%s220 + $0xc0] sm:$0xff]
      %v254 = vld [vmem:[%s220 + $0xc8] sm:$0xff]
      %v255 = vld [vmem:[%s220 + $0xd0] sm:$0xff]
      %v256 = vld [vmem:[%s220 + $0xd8] sm:$0xff]
      %v257 = vld [vmem:[%s220 + $0xe0] sm:$0xff]
      %v258 = vld [vmem:[%s220 + $0xe8] sm:$0xff]
      %v259 = vld [vmem:[%s220 + $0xf0] sm:$0xff]
      %v260 = vld [vmem:[%s220 + $0xf8] sm:$0xff]
      %v261 = vpack.c.bf16 %v230, %v229
      %v262 = vpack.c.bf16 %v232, %v231
      %v263 = vpack.c.bf16 %v234, %v233
      %v264 = vpack.c.bf16 %v236, %v235
      %v265 = vpack.c.bf16 %v238, %v237
      %v266 = vpack.c.bf16 %v240, %v239
      %v267 = vpack.c.bf16 %v242, %v241
      %v268 = vpack.c.bf16 %v244, %v243
      %v269 = vpack.c.bf16 %v246, %v245
      %v270 = vpack.c.bf16 %v248, %v247
      %v271 = vpack.c.bf16 %v250, %v249
      %v272 = vpack.c.bf16 %v252, %v251
      %v273 = vpack.c.bf16 %v254, %v253
      %v274 = vpack.c.bf16 %v256, %v255
      %v275 = vpack.c.bf16 %v258, %v257
      %v276 = vpack.c.bf16 %v260, %v259
      %v277 = vld [vmem:[%s1] sm:$0xff]
      %v278 = vld [vmem:[%s1 + $0x8] sm:$0xff]
      %v279 = vld [vmem:[%s1 + $0x10] sm:$0xff]
      %v280 = vld [vmem:[%s1 + $0x18] sm:$0xff]
      %v281 = vld [vmem:[%s1 + $0x20] sm:$0xff]
      %v282 = vld [vmem:[%s1 + $0x28] sm:$0xff]
      %v283 = vld [vmem:[%s1 + $0x30] sm:$0xff]
      %v284 = vld [vmem:[%s1 + $0x38] sm:$0xff]
      %v285 = vld [vmem:[%s1 + $0x40] sm:$0xff]
      %v286 = vld [vmem:[%s1 + $0x48] sm:$0xff]
      %v287 = vld [vmem:[%s1 + $0x50] sm:$0xff]
      %v288 = vld [vmem:[%s1 + $0x58] sm:$0xff]
      %v289 = vld [vmem:[%s1 + $0x60] sm:$0xff]
      %v290 = vld [vmem:[%s1 + $0x68] sm:$0xff]
      %v291 = vld [vmem:[%s1 + $0x70] sm:$0xff]
      %v292 = vld [vmem:[%s1 + $0x78] sm:$0xff]
      %v293 = vld [vmem:[%s1 + $0x80] sm:$0xff]
      %v294 = vld [vmem:[%s1 + $0x88] sm:$0xff]
      %v295 = vld [vmem:[%s1 + $0x90] sm:$0xff]
      %v296 = vld [vmem:[%s1 + $0x98] sm:$0xff]
      %v297 = vld [vmem:[%s1 + $0xa0] sm:$0xff]
      %v298 = vld [vmem:[%s1 + $0xa8] sm:$0xff]
      %v299 = vld [vmem:[%s1 + $0xb0] sm:$0xff]
      %v300 = vld [vmem:[%s1 + $0xb8] sm:$0xff]
      %v301 = vld [vmem:[%s1 + $0xc0] sm:$0xff]
      %v302 = vld [vmem:[%s1 + $0xc8] sm:$0xff]
      %v303 = vld [vmem:[%s1 + $0xd0] sm:$0xff]
      %v304 = vld [vmem:[%s1 + $0xd8] sm:$0xff]
      %v305 = vld [vmem:[%s1 + $0xe0] sm:$0xff]
      %v306 = vld [vmem:[%s1 + $0xe8] sm:$0xff]
      %v307 = vld [vmem:[%s1 + $0xf0] sm:$0xff]
      %v308 = vld [vmem:[%s1 + $0xf8] sm:$0xff]
      %v309 = vld [vmem:[%s1 + $0x100] sm:$0xff]
      %v310 = vld [vmem:[%s1 + $0x108] sm:$0xff]
      %v311 = vld [vmem:[%s1 + $0x110] sm:$0xff]
      %v312 = vld [vmem:[%s1 + $0x118] sm:$0xff]
      %v313 = vld [vmem:[%s1 + $0x120] sm:$0xff]
      %v314 = vld [vmem:[%s1 + $0x128] sm:$0xff]
      %v315 = vld [vmem:[%s1 + $0x130] sm:$0xff]
      %v316 = vld [vmem:[%s1 + $0x138] sm:$0xff]
      %v317 = vld [vmem:[%s1 + $0x140] sm:$0xff]
      %v318 = vld [vmem:[%s1 + $0x148] sm:$0xff]
      %v319 = vld [vmem:[%s1 + $0x150] sm:$0xff]
      %v320 = vld [vmem:[%s1 + $0x158] sm:$0xff]
      %v321 = vld [vmem:[%s1 + $0x160] sm:$0xff]
      %v322 = vld [vmem:[%s1 + $0x168] sm:$0xff]
      %v323 = vld [vmem:[%s1 + $0x170] sm:$0xff]
      %v324 = vld [vmem:[%s1 + $0x178] sm:$0xff]
      %v373 = vunpack.c.l.b16 %v277
      %v374 = vunpack.c.h.b16 %v277
      %v375 = vunpack.c.l.b16 %v278
      %v376 = vunpack.c.h.b16 %v278
      %v377 = vunpack.c.l.b16 %v279
      %v378 = vunpack.c.h.b16 %v279
      %v379 = vunpack.c.l.b16 %v280
      %v380 = vunpack.c.h.b16 %v280
      %v381 = vunpack.c.l.b16 %v281
      %v382 = vunpack.c.h.b16 %v281
      %v383 = vunpack.c.l.b16 %v282
      %v384 = vunpack.c.h.b16 %v282
      %v385 = vunpack.c.l.b16 %v283
      %v386 = vunpack.c.h.b16 %v283
      %v387 = vunpack.c.l.b16 %v284
      %v388 = vunpack.c.h.b16 %v284
      %v389 = vunpack.c.l.b16 %v285
      %v390 = vunpack.c.h.b16 %v285
      %v391 = vunpack.c.l.b16 %v286
      %v392 = vunpack.c.h.b16 %v286
      %v393 = vunpack.c.l.b16 %v287
      %v394 = vunpack.c.h.b16 %v287
      %v395 = vunpack.c.l.b16 %v288
      %v396 = vunpack.c.h.b16 %v288
      %v397 = vunpack.c.l.b16 %v289
      %v398 = vunpack.c.h.b16 %v289
      %v399 = vunpack.c.l.b16 %v290
      %v400 = vunpack.c.h.b16 %v290
      %v401 = vunpack.c.l.b16 %v291
      %v402 = vunpack.c.h.b16 %v291
      %v403 = vunpack.c.l.b16 %v292
      %v404 = vunpack.c.h.b16 %v292
      %v405 = vunpack.c.l.b16 %v293
      %v406 = vunpack.c.h.b16 %v293
      %v407 = vunpack.c.l.b16 %v294
      %v408 = vunpack.c.h.b16 %v294
      %v409 = vunpack.c.l.b16 %v295
      %v410 = vunpack.c.h.b16 %v295
      %v411 = vunpack.c.l.b16 %v296
      %v412 = vunpack.c.h.b16 %v296
      %v413 = vunpack.c.l.b16 %v297
      %v414 = vunpack.c.h.b16 %v297
      %v415 = vunpack.c.l.b16 %v298
      %v416 = vunpack.c.h.b16 %v298
      %v417 = vunpack.c.l.b16 %v299
      %v418 = vunpack.c.h.b16 %v299
      %v419 = vunpack.c.l.b16 %v300
      %v420 = vunpack.c.h.b16 %v300
      %v421 = vunpack.c.l.b16 %v301
      %v422 = vunpack.c.h.b16 %v301
      %v423 = vunpack.c.l.b16 %v302
      %v424 = vunpack.c.h.b16 %v302
      %v425 = vunpack.c.l.b16 %v303
      %v426 = vunpack.c.h.b16 %v303
      %v427 = vunpack.c.l.b16 %v304
      %v428 = vunpack.c.h.b16 %v304
      %v429 = vunpack.c.l.b16 %v305
      %v430 = vunpack.c.h.b16 %v305
      %v431 = vunpack.c.l.b16 %v306
      %v432 = vunpack.c.h.b16 %v306
      %v433 = vunpack.c.l.b16 %v307
      %v434 = vunpack.c.h.b16 %v307
      %v435 = vunpack.c.l.b16 %v308
      %v436 = vunpack.c.h.b16 %v308
      %v437 = vunpack.c.l.b16 %v309
      %v438 = vunpack.c.h.b16 %v309
      %v439 = vunpack.c.l.b16 %v310
      %v440 = vunpack.c.h.b16 %v310
      %v441 = vunpack.c.l.b16 %v311
      %v442 = vunpack.c.h.b16 %v311
      %v443 = vunpack.c.l.b16 %v312
      %v444 = vunpack.c.h.b16 %v312
      %v445 = vunpack.c.l.b16 %v313
      %v446 = vunpack.c.h.b16 %v313
      %v447 = vunpack.c.l.b16 %v314
      %v448 = vunpack.c.h.b16 %v314
      %v449 = vunpack.c.l.b16 %v315
      %v450 = vunpack.c.h.b16 %v315
      %v451 = vunpack.c.l.b16 %v316
      %v452 = vunpack.c.h.b16 %v316
      %v453 = vunpack.c.l.b16 %v317
      %v454 = vunpack.c.h.b16 %v317
      %v455 = vunpack.c.l.b16 %v318
      %v456 = vunpack.c.h.b16 %v318
      %v457 = vunpack.c.l.b16 %v319
      %v458 = vunpack.c.h.b16 %v319
      %v459 = vunpack.c.l.b16 %v320
      %v460 = vunpack.c.h.b16 %v320
      %v461 = vunpack.c.l.b16 %v321
      %v462 = vunpack.c.h.b16 %v321
      %v463 = vunpack.c.l.b16 %v322
      %v464 = vunpack.c.h.b16 %v322
      %v465 = vunpack.c.l.b16 %v323
      %v466 = vunpack.c.h.b16 %v323
      %v467 = vunpack.c.l.b16 %v324
      %v468 = vunpack.c.h.b16 %v324
      %v469 = vpack.c.b16 %v379, %v373
      %v470 = vpack.c.b16 %v380, %v374
      %v471 = vpack.c.b16 %v381, %v375
      %v472 = vpack.c.b16 %v382, %v376
      %v473 = vpack.c.b16 %v383, %v377
      %v474 = vpack.c.b16 %v384, %v378
      %v475 = vpack.c.b16 %v391, %v385
      %v476 = vpack.c.b16 %v392, %v386
      %v477 = vpack.c.b16 %v393, %v387
      %v478 = vpack.c.b16 %v394, %v388
      %v479 = vpack.c.b16 %v395, %v389
      %v480 = vpack.c.b16 %v396, %v390
      %v481 = vpack.c.b16 %v403, %v397
      %v482 = vpack.c.b16 %v404, %v398
      %v483 = vpack.c.b16 %v405, %v399
      %v484 = vpack.c.b16 %v406, %v400
      %v485 = vpack.c.b16 %v407, %v401
      %v486 = vpack.c.b16 %v408, %v402
      %v487 = vpack.c.b16 %v415, %v409
      %v488 = vpack.c.b16 %v416, %v410
      %v489 = vpack.c.b16 %v417, %v411
      %v490 = vpack.c.b16 %v418, %v412
      %v491 = vpack.c.b16 %v419, %v413
      %v492 = vpack.c.b16 %v420, %v414
      %v493 = vpack.c.b16 %v427, %v421
      %v494 = vpack.c.b16 %v428, %v422
      %v495 = vpack.c.b16 %v429, %v423
      %v496 = vpack.c.b16 %v430, %v424
      %v497 = vpack.c.b16 %v431, %v425
      %v498 = vpack.c.b16 %v432, %v426
      %v499 = vpack.c.b16 %v439, %v433
      %v500 = vpack.c.b16 %v440, %v434
      %v501 = vpack.c.b16 %v441, %v435
      %v502 = vpack.c.b16 %v442, %v436
      %v503 = vpack.c.b16 %v443, %v437
      %v504 = vpack.c.b16 %v444, %v438
      %v505 = vpack.c.b16 %v451, %v445
      %v506 = vpack.c.b16 %v452, %v446
      %v507 = vpack.c.b16 %v453, %v447
      %v508 = vpack.c.b16 %v454, %v448
      %v509 = vpack.c.b16 %v455, %v449
      %v510 = vpack.c.b16 %v456, %v450
      %v511 = vpack.c.b16 %v463, %v457
      %v512 = vpack.c.b16 %v464, %v458
      %v513 = vpack.c.b16 %v465, %v459
      %v514 = vpack.c.b16 %v466, %v460
      %v515 = vpack.c.b16 %v467, %v461
      %v516 = vpack.c.b16 %v468, %v462
      %565 = vmatprep.subr.bf16.mxu0 %v470
      %566 = vmatpush1.bf16.msra.mxu0 %v469
      %567 = vmatprep.subr.bf16.mxu0 %v476
      %568 = vmatpush1.bf16.msra.mxu0 %v475
      %569 = vmatprep.subr.bf16.mxu0 %v482
      %570 = vmatpush1.bf16.msra.mxu0 %v481
      %571 = vmatprep.subr.bf16.mxu0 %v488
      %572 = vmatpush1.bf16.msra.mxu0 %v487
      %573 = vmatprep.subr.bf16.mxu0 %v494
      %574 = vmatpush1.bf16.msra.mxu0 %v493
      %575 = vmatprep.subr.bf16.mxu0 %v500
      %576 = vmatpush1.bf16.msra.mxu0 %v499
      %577 = vmatprep.subr.bf16.mxu0 %v506
      %578 = vmatpush1.bf16.msra.mxu0 %v505
      %579 = vmatprep.subr.bf16.mxu0 %v512
      %580 = vmatpush1.bf16.msra.mxu0 %v511
      %581 = vmatprep.subr.bf16.mxu0 0
      %582 = vmatpush1.bf16.msra.mxu0 0
      %583 = vmatprep.subr.bf16.mxu0 0
      %584 = vmatpush1.bf16.msra.mxu0 0
      %585 = vmatprep.subr.bf16.mxu0 0
      %586 = vmatpush1.bf16.msra.mxu0 0
      %587 = vmatprep.subr.bf16.mxu0 0
      %588 = vmatpush1.bf16.msra.mxu0 0
      %589 = vmatprep.subr.bf16.mxu0 0
      %590 = vmatpush1.bf16.msra.mxu0 0
      %591 = vmatprep.subr.bf16.mxu0 0
      %592 = vmatpush1.bf16.msra.mxu0 0
      %593 = vmatprep.subr.bf16.mxu0 0
      %594 = vmatpush1.bf16.msra.mxu0 0
      %595 = vmatprep.subr.bf16.mxu0 0
      %596 = vmatpush1.bf16.msra.mxu0 0
      %597 = vmatprep.mubr.bf16.mxu0 0
      %598 = vmatmul.mubr.bf16.gmra.mrb[0].mxu0 %v261
      %v599 = vpop.f32.mrb[0].mxu0
      %v600 = vadd.f32 0.0, %v599
      %v601 = vpop.f32.mrb[0].mxu0
      %v602 = vadd.f32 0.0, %v601
      %v603 = vpop.f32.mrb[0].mxu0
      %v604 = vadd.f32 0.0, %v603
      %v605 = vpop.f32.mrb[0].mxu0
      %v606 = vadd.f32 0.0, %v605
      %607 = vmatprep.mubr.bf16.mxu0 0
      %608 = vmatmul.mubr.bf16.gmra.mrb[0].mxu0 %v262
      %v609 = vpop.f32.mrb[0].mxu0
      %v610 = vadd.f32 0.0, %v609
      %v611 = vpop.f32.mrb[0].mxu0
      %v612 = vadd.f32 0.0, %v611
      %v613 = vpop.f32.mrb[0].mxu0
      %v614 = vadd.f32 0.0, %v613
      %v615 = vpop.f32.mrb[0].mxu0
      %v616 = vadd.f32 0.0, %v615
      %617 = vmatprep.mubr.bf16.mxu0 0
      %618 = vmatmul.mubr.bf16.gmra.mrb[0].mxu0 %v263
      %v619 = vpop.f32.mrb[0].mxu0
      %v620 = vadd.f32 0.0, %v619
      %v621 = vpop.f32.mrb[0].mxu0
      %v622 = vadd.f32 0.0, %v621
      %v623 = vpop.f32.mrb[0].mxu0
      %v624 = vadd.f32 0.0, %v623
      %v625 = vpop.f32.mrb[0].mxu0
      %v626 = vadd.f32 0.0, %v625
      %627 = vmatprep.mubr.bf16.mxu0 0
      %628 = vmatmul.mubr.bf16.gmra.mrb[0].mxu0 %v264
      %v629 = vpop.f32.mrb[0].mxu0
      %v630 = vadd.f32 0.0, %v629
      %v631 = vpop.f32.mrb[0].mxu0
      %v632 = vadd.f32 0.0, %v631
      %v633 = vpop.f32.mrb[0].mxu0
      %v634 = vadd.f32 0.0, %v633
      %v635 = vpop.f32.mrb[0].mxu0
      %v636 = vadd.f32 0.0, %v635
      %637 = vmatprep.mubr.bf16.mxu0 0
      %638 = vmatmul.mubr.bf16.gmra.mrb[0].mxu0 %v265
      %v639 = vpop.f32.mrb[0].mxu0
      %v640 = vadd.f32 0.0, %v639
      %v641 = vpop.f32.mrb[0].mxu0
      %v642 = vadd.f32 0.0, %v641
      %v643 = vpop.f32.mrb[0].mxu0
      %v644 = vadd.f32 0.0, %v643
      %v645 = vpop.f32.mrb[0].mxu0
      %v646 = vadd.f32 0.0, %v645
      %647 = vmatprep.mubr.bf16.mxu0 0
      %648 = vmatmul.mubr.bf16.gmra.mrb[0].mxu0 %v266
      %v649 = vpop.f32.mrb[0].mxu0
      %v650 = vadd.f32 0.0, %v649
      %v651 = vpop.f32.mrb[0].mxu0
      %v652 = vadd.f32 0.0, %v651
      %v653 = vpop.f32.mrb[0].mxu0
      %v654 = vadd.f32 0.0, %v653
      %v655 = vpop.f32.mrb[0].mxu0
      %v656 = vadd.f32 0.0, %v655
      %657 = vmatprep.mubr.bf16.mxu0 0
      %658 = vmatmul.mubr.bf16.gmra.mrb[0].mxu0 %v267
      %v659 = vpop.f32.mrb[0].mxu0
      %v660 = vadd.f32 0.0, %v659
      %v661 = vpop.f32.mrb[0].mxu0
      %v662 = vadd.f32 0.0, %v661
      %v663 = vpop.f32.mrb[0].mxu0
      %v664 = vadd.f32 0.0, %v663
      %v665 = vpop.f32.mrb[0].mxu0
      %v666 = vadd.f32 0.0, %v665
      %667 = vmatprep.mubr.bf16.mxu0 0
      %668 = vmatmul.mubr.bf16.gmra.mrb[0].mxu0 %v268
      %v669 = vpop.f32.mrb[0].mxu0
      %v670 = vadd.f32 0.0, %v669
      %v671 = vpop.f32.mrb[0].mxu0
      %v672 = vadd.f32 0.0, %v671
      %v673 = vpop.f32.mrb[0].mxu0
      %v674 = vadd.f32 0.0, %v673
      %v675 = vpop.f32.mrb[0].mxu0
      %v676 = vadd.f32 0.0, %v675
      %677 = vmatprep.mubr.bf16.mxu0 0
      %678 = vmatmul.mubr.bf16.gmra.mrb[0].mxu0 %v269
      %v679 = vpop.f32.mrb[0].mxu0
      %v680 = vadd.f32 0.0, %v679
      %v681 = vpop.f32.mrb[0].mxu0
      %v682 = vadd.f32 0.0, %v681
      %v683 = vpop.f32.mrb[0].mxu0
      %v684 = vadd.f32 0.0, %v683
      %v685 = vpop.f32.mrb[0].mxu0
      %v686 = vadd.f32 0.0, %v685
      %687 = vmatprep.mubr.bf16.mxu0 0
      %688 = vmatmul.mubr.bf16.gmra.mrb[0].mxu0 %v270
      %v689 = vpop.f32.mrb[0].mxu0
      %v690 = vadd.f32 0.0, %v689
      %v691 = vpop.f32.mrb[0].mxu0
      %v692 = vadd.f32 0.0, %v691
      %v693 = vpop.f32.mrb[0].mxu0
      %v694 = vadd.f32 0.0, %v693
      %v695 = vpop.f32.mrb[0].mxu0
      %v696 = vadd.f32 0.0, %v695
      %697 = vmatprep.mubr.bf16.mxu0 0
      %698 = vmatmul.mubr.bf16.gmra.mrb[0].mxu0 %v271
      %v699 = vpop.f32.mrb[0].mxu0
      %v700 = vadd.f32 0.0, %v699
      %v701 = vpop.f32.mrb[0].mxu0
      %v702 = vadd.f32 0.0, %v701
      %v703 = vpop.f32.mrb[0].mxu0
      %v704 = vadd.f32 0.0, %v703
      %v705 = vpop.f32.mrb[0].mxu0
      %v706 = vadd.f32 0.0, %v705
      %707 = vmatprep.mubr.bf16.mxu0 0
      %708 = vmatmul.mubr.bf16.gmra.mrb[0].mxu0 %v272
      %v709 = vpop.f32.mrb[0].mxu0
      %v710 = vadd.f32 0.0, %v709
      %v711 = vpop.f32.mrb[0].mxu0
      %v712 = vadd.f32 0.0, %v711
      %v713 = vpop.f32.mrb[0].mxu0
      %v714 = vadd.f32 0.0, %v713
      %v715 = vpop.f32.mrb[0].mxu0
      %v716 = vadd.f32 0.0, %v715
      %717 = vmatprep.mubr.bf16.mxu0 0
      %718 = vmatmul.mubr.bf16.gmra.mrb[0].mxu0 %v273
      %v719 = vpop.f32.mrb[0].mxu0
      %v720 = vadd.f32 0.0, %v719
      %v721 = vpop.f32.mrb[0].mxu0
      %v722 = vadd.f32 0.0, %v721
      %v723 = vpop.f32.mrb[0].mxu0
      %v724 = vadd.f32 0.0, %v723
      %v725 = vpop.f32.mrb[0].mxu0
      %v726 = vadd.f32 0.0, %v725
      %727 = vmatprep.mubr.bf16.mxu0 0
      %728 = vmatmul.mubr.bf16.gmra.mrb[0].mxu0 %v274
      %v729 = vpop.f32.mrb[0].mxu0
      %v730 = vadd.f32 0.0, %v729
      %v731 = vpop.f32.mrb[0].mxu0
      %v732 = vadd.f32 0.0, %v731
      %v733 = vpop.f32.mrb[0].mxu0
      %v734 = vadd.f32 0.0, %v733
      %v735 = vpop.f32.mrb[0].mxu0
      %v736 = vadd.f32 0.0, %v735
      %737 = vmatprep.mubr.bf16.mxu0 0
      %738 = vmatmul.mubr.bf16.gmra.mrb[0].mxu0 %v275
      %v739 = vpop.f32.mrb[0].mxu0
      %v740 = vadd.f32 0.0, %v739
      %v741 = vpop.f32.mrb[0].mxu0
      %v742 = vadd.f32 0.0, %v741
      %v743 = vpop.f32.mrb[0].mxu0
      %v744 = vadd.f32 0.0, %v743
      %v745 = vpop.f32.mrb[0].mxu0
      %v746 = vadd.f32 0.0, %v745
      %747 = vmatprep.mubr.bf16.mxu0 0
      %748 = vmatmul.mubr.bf16.gmra.mrb[0].mxu0 %v276
      %v749 = vpop.f32.mrb[0].mxu0
      %v750 = vadd.f32 0.0, %v749
      %v751 = vpop.f32.mrb[0].mxu0
      %v752 = vadd.f32 0.0, %v751
      %v753 = vpop.f32.mrb[0].mxu0
      %v754 = vadd.f32 0.0, %v753
      %v755 = vpop.f32.mrb[0].mxu0
      %v756 = vadd.f32 0.0, %v755
      %757 = vdwg.mxu0
      %758 = vmatprep.subr.bf16.mxu0 %v472
      %759 = vmatpush1.bf16.msra.mxu0 %v471
      %760 = vmatprep.subr.bf16.mxu0 %v478
      %761 = vmatpush1.bf16.msra.mxu0 %v477
      %762 = vmatprep.subr.bf16.mxu0 %v484
      %763 = vmatpush1.bf16.msra.mxu0 %v483
      %764 = vmatprep.subr.bf16.mxu0 %v490
      %765 = vmatpush1.bf16.msra.mxu0 %v489
      %766 = vmatprep.subr.bf16.mxu0 %v496
      %767 = vmatpush1.bf16.msra.mxu0 %v495
      %768 = vmatprep.subr.bf16.mxu0 %v502
      %769 = vmatpush1.bf16.msra.mxu0 %v501
      %770 = vmatprep.subr.bf16.mxu0 %v508
      %771 = vmatpush1.bf16.msra.mxu0 %v507
      %772 = vmatprep.subr.bf16.mxu0 %v514
      %773 = vmatpush1.bf16.msra.mxu0 %v513
      %774 = vmatprep.subr.bf16.mxu0 0
      %775 = vmatpush1.bf16.msra.mxu0 0
      %776 = vmatprep.subr.bf16.mxu0 0
      %777 = vmatpush1.bf16.msra.mxu0 0
      %778 = vmatprep.subr.bf16.mxu0 0
      %779 = vmatpush1.bf16.msra.mxu0 0
      %780 = vmatprep.subr.bf16.mxu0 0
      %781 = vmatpush1.bf16.msra.mxu0 0
      %782 = vmatprep.subr.bf16.mxu0 0
      %783 = vmatpush1.bf16.msra.mxu0 0
      %784 = vmatprep.subr.bf16.mxu0 0
      %785 = vmatpush1.bf16.msra.mxu0 0
      %786 = vmatprep.subr.bf16.mxu0 0
      %787 = vmatpush1.bf16.msra.mxu0 0
      %788 = vmatprep.subr.bf16.mxu0 0
      %789 = vmatpush1.bf16.msra.mxu0 0
      %790 = vmatprep.mubr.bf16.mxu0 0
      %791 = vmatmul.mubr.bf16.gmra.mrb[0].mxu0 %v261
      %v792 = vpop.f32.mrb[0].mxu0
      %v793 = vadd.f32 0.0, %v792
      %v794 = vpop.f32.mrb[0].mxu0
      %v795 = vadd.f32 0.0, %v794
      %v796 = vpop.f32.mrb[0].mxu0
      %v797 = vadd.f32 0.0, %v796
      %v798 = vpop.f32.mrb[0].mxu0
      %v799 = vadd.f32 0.0, %v798
      %800 = vmatprep.mubr.bf16.mxu0 0
      %801 = vmatmul.mubr.bf16.gmra.mrb[0].mxu0 %v262
      %v802 = vpop.f32.mrb[0].mxu0
      %v803 = vadd.f32 0.0, %v802
      %v804 = vpop.f32.mrb[0].mxu0
      %v805 = vadd.f32 0.0, %v804
      %v806 = vpop.f32.mrb[0].mxu0
      %v807 = vadd.f32 0.0, %v806
      %v808 = vpop.f32.mrb[0].mxu0
      %v809 = vadd.f32 0.0, %v808
      %810 = vmatprep.mubr.bf16.mxu0 0
      %811 = vmatmul.mubr.bf16.gmra.mrb[0].mxu0 %v263
      %v812 = vpop.f32.mrb[0].mxu0
      %v813 = vadd.f32 0.0, %v812
      %v814 = vpop.f32.mrb[0].mxu0
      %v815 = vadd.f32 0.0, %v814
      %v816 = vpop.f32.mrb[0].mxu0
      %v817 = vadd.f32 0.0, %v816
      %v818 = vpop.f32.mrb[0].mxu0
      %v819 = vadd.f32 0.0, %v818
      %820 = vmatprep.mubr.bf16.mxu0 0
      %821 = vmatmul.mubr.bf16.gmra.mrb[0].mxu0 %v264
      %v822 = vpop.f32.mrb[0].mxu0
      %v823 = vadd.f32 0.0, %v822
      %v824 = vpop.f32.mrb[0].mxu0
      %v825 = vadd.f32 0.0, %v824
      %v826 = vpop.f32.mrb[0].mxu0
      %v827 = vadd.f32 0.0, %v826
      %v828 = vpop.f32.mrb[0].mxu0
      %v829 = vadd.f32 0.0, %v828
      %830 = vmatprep.mubr.bf16.mxu0 0
      %831 = vmatmul.mubr.bf16.gmra.mrb[0].mxu0 %v265
      %v832 = vpop.f32.mrb[0].mxu0
      %v833 = vadd.f32 0.0, %v832
      %v834 = vpop.f32.mrb[0].mxu0
      %v835 = vadd.f32 0.0, %v834
      %v836 = vpop.f32.mrb[0].mxu0
      %v837 = vadd.f32 0.0, %v836
      %v838 = vpop.f32.mrb[0].mxu0
      %v839 = vadd.f32 0.0, %v838
      %840 = vmatprep.mubr.bf16.mxu0 0
      %841 = vmatmul.mubr.bf16.gmra.mrb[0].mxu0 %v266
      %v842 = vpop.f32.mrb[0].mxu0
      %v843 = vadd.f32 0.0, %v842
      %v844 = vpop.f32.mrb[0].mxu0
      %v845 = vadd.f32 0.0, %v844
      %v846 = vpop.f32.mrb[0].mxu0
      %v847 = vadd.f32 0.0, %v846
      %v848 = vpop.f32.mrb[0].mxu0
      %v849 = vadd.f32 0.0, %v848
      %850 = vmatprep.mubr.bf16.mxu0 0
      %851 = vmatmul.mubr.bf16.gmra.mrb[0].mxu0 %v267
      %v852 = vpop.f32.mrb[0].mxu0
      %v853 = vadd.f32 0.0, %v852
      %v854 = vpop.f32.mrb[0].mxu0
      %v855 = vadd.f32 0.0, %v854
      %v856 = vpop.f32.mrb[0].mxu0
      %v857 = vadd.f32 0.0, %v856
      %v858 = vpop.f32.mrb[0].mxu0
      %v859 = vadd.f32 0.0, %v858
      %860 = vmatprep.mubr.bf16.mxu0 0
      %861 = vmatmul.mubr.bf16.gmra.mrb[0].mxu0 %v268
      %v862 = vpop.f32.mrb[0].mxu0
      %v863 = vadd.f32 0.0, %v862
      %v864 = vpop.f32.mrb[0].mxu0
      %v865 = vadd.f32 0.0, %v864
      %v866 = vpop.f32.mrb[0].mxu0
      %v867 = vadd.f32 0.0, %v866
      %v868 = vpop.f32.mrb[0].mxu0
      %v869 = vadd.f32 0.0, %v868
      %870 = vmatprep.mubr.bf16.mxu0 0
      %871 = vmatmul.mubr.bf16.gmra.mrb[0].mxu0 %v269
      %v872 = vpop.f32.mrb[0].mxu0
      %v873 = vadd.f32 0.0, %v872
      %v874 = vpop.f32.mrb[0].mxu0
      %v875 = vadd.f32 0.0, %v874
      %v876 = vpop.f32.mrb[0].mxu0
      %v877 = vadd.f32 0.0, %v876
      %v878 = vpop.f32.mrb[0].mxu0
      %v879 = vadd.f32 0.0, %v878
      %880 = vmatprep.mubr.bf16.mxu0 0
      %881 = vmatmul.mubr.bf16.gmra.mrb[0].mxu0 %v270
      %v882 = vpop.f32.mrb[0].mxu0
      %v883 = vadd.f32 0.0, %v882
      %v884 = vpop.f32.mrb[0].mxu0
      %v885 = vadd.f32 0.0, %v884
      %v886 = vpop.f32.mrb[0].mxu0
      %v887 = vadd.f32 0.0, %v886
      %v888 = vpop.f32.mrb[0].mxu0
      %v889 = vadd.f32 0.0, %v888
      %890 = vmatprep.mubr.bf16.mxu0 0
      %891 = vmatmul.mubr.bf16.gmra.mrb[0].mxu0 %v271
      %v892 = vpop.f32.mrb[0].mxu0
      %v893 = vadd.f32 0.0, %v892
      %v894 = vpop.f32.mrb[0].mxu0
      %v895 = vadd.f32 0.0, %v894
      %v896 = vpop.f32.mrb[0].mxu0
      %v897 = vadd.f32 0.0, %v896
      %v898 = vpop.f32.mrb[0].mxu0
      %v899 = vadd.f32 0.0, %v898
      %900 = vmatprep.mubr.bf16.mxu0 0
      %901 = vmatmul.mubr.bf16.gmra.mrb[0].mxu0 %v272
      %v902 = vpop.f32.mrb[0].mxu0
      %v903 = vadd.f32 0.0, %v902
      %v904 = vpop.f32.mrb[0].mxu0
      %v905 = vadd.f32 0.0, %v904
      %v906 = vpop.f32.mrb[0].mxu0
      %v907 = vadd.f32 0.0, %v906
      %v908 = vpop.f32.mrb[0].mxu0
      %v909 = vadd.f32 0.0, %v908
      %910 = vmatprep.mubr.bf16.mxu0 0
      %911 = vmatmul.mubr.bf16.gmra.mrb[0].mxu0 %v273
      %v912 = vpop.f32.mrb[0].mxu0
      %v913 = vadd.f32 0.0, %v912
      %v914 = vpop.f32.mrb[0].mxu0
      %v915 = vadd.f32 0.0, %v914
      %v916 = vpop.f32.mrb[0].mxu0
      %v917 = vadd.f32 0.0, %v916
      %v918 = vpop.f32.mrb[0].mxu0
      %v919 = vadd.f32 0.0, %v918
      %920 = vmatprep.mubr.bf16.mxu0 0
      %921 = vmatmul.mubr.bf16.gmra.mrb[0].mxu0 %v274
      %v922 = vpop.f32.mrb[0].mxu0
      %v923 = vadd.f32 0.0, %v922
      %v924 = vpop.f32.mrb[0].mxu0
      %v925 = vadd.f32 0.0, %v924
      %v926 = vpop.f32.mrb[0].mxu0
      %v927 = vadd.f32 0.0, %v926
      %v928 = vpop.f32.mrb[0].mxu0
      %v929 = vadd.f32 0.0, %v928
      %930 = vmatprep.mubr.bf16.mxu0 0
      %931 = vmatmul.mubr.bf16.gmra.mrb[0].mxu0 %v275
      %v932 = vpop.f32.mrb[0].mxu0
      %v933 = vadd.f32 0.0, %v932
      %v934 = vpop.f32.mrb[0].mxu0
      %v935 = vadd.f32 0.0, %v934
      %v936 = vpop.f32.mrb[0].mxu0
      %v937 = vadd.f32 0.0, %v936
      %v938 = vpop.f32.mrb[0].mxu0
      %v939 = vadd.f32 0.0, %v938
      %940 = vmatprep.mubr.bf16.mxu0 0
      %941 = vmatmul.mubr.bf16.gmra.mrb[0].mxu0 %v276
      %v942 = vpop.f32.mrb[0].mxu0
      %v943 = vadd.f32 0.0, %v942
      %v944 = vpop.f32.mrb[0].mxu0
      %v945 = vadd.f32 0.0, %v944
      %v946 = vpop.f32.mrb[0].mxu0
      %v947 = vadd.f32 0.0, %v946
      %v948 = vpop.f32.mrb[0].mxu0
      %v949 = vadd.f32 0.0, %v948
      %950 = vdwg.mxu0
      %951 = vmatprep.subr.bf16.mxu0 %v474
      %952 = vmatpush1.bf16.msra.mxu0 %v473
      %953 = vmatprep.subr.bf16.mxu0 %v480
      %954 = vmatpush1.bf16.msra.mxu0 %v479
      %955 = vmatprep.subr.bf16.mxu0 %v486
      %956 = vmatpush1.bf16.msra.mxu0 %v485
      %957 = vmatprep.subr.bf16.mxu0 %v492
      %958 = vmatpush1.bf16.msra.mxu0 %v491
      %959 = vmatprep.subr.bf16.mxu0 %v498
      %960 = vmatpush1.bf16.msra.mxu0 %v497
      %961 = vmatprep.subr.bf16.mxu0 %v504
      %962 = vmatpush1.bf16.msra.mxu0 %v503
      %963 = vmatprep.subr.bf16.mxu0 %v510
      %964 = vmatpush1.bf16.msra.mxu0 %v509
      %965 = vmatprep.subr.bf16.mxu0 %v516
      %966 = vmatpush1.bf16.msra.mxu0 %v515
      %967 = vmatprep.subr.bf16.mxu0 0
      %968 = vmatpush1.bf16.msra.mxu0 0
      %969 = vmatprep.subr.bf16.mxu0 0
      %970 = vmatpush1.bf16.msra.mxu0 0
      %971 = vmatprep.subr.bf16.mxu0 0
      %972 = vmatpush1.bf16.msra.mxu0 0
      %973 = vmatprep.subr.bf16.mxu0 0
      %974 = vmatpush1.bf16.msra.mxu0 0
      %975 = vmatprep.subr.bf16.mxu0 0
      %976 = vmatpush1.bf16.msra.mxu0 0
      %977 = vmatprep.subr.bf16.mxu0 0
      %978 = vmatpush1.bf16.msra.mxu0 0
      %979 = vmatprep.subr.bf16.mxu0 0
      %980 = vmatpush1.bf16.msra.mxu0 0
      %981 = vmatprep.subr.bf16.mxu0 0
      %982 = vmatpush1.bf16.msra.mxu0 0
      %983 = vmatprep.mubr.bf16.mxu0 0
      %984 = vmatmul.mubr.bf16.gmra.mrb[0].mxu0 %v261
      %v985 = vpop.f32.mrb[0].mxu0
      %v986 = vadd.f32 0.0, %v985
      %v987 = vpop.f32.mrb[0].mxu0
      %v988 = vadd.f32 0.0, %v987
      %v989 = vpop.f32.mrb[0].mxu0
      %v990 = vadd.f32 0.0, %v989
      %v991 = vpop.f32.mrb[0].mxu0
      %v992 = vadd.f32 0.0, %v991
      %993 = vmatprep.mubr.bf16.mxu0 0
      %994 = vmatmul.mubr.bf16.gmra.mrb[0].mxu0 %v262
      %v995 = vpop.f32.mrb[0].mxu0
      %v996 = vadd.f32 0.0, %v995
      %v997 = vpop.f32.mrb[0].mxu0
      %v998 = vadd.f32 0.0, %v997
      %v999 = vpop.f32.mrb[0].mxu0
      %v1000 = vadd.f32 0.0, %v999
      %v1001 = vpop.f32.mrb[0].mxu0
      %v1002 = vadd.f32 0.0, %v1001
      %1003 = vmatprep.mubr.bf16.mxu0 0
      %1004 = vmatmul.mubr.bf16.gmra.mrb[0].mxu0 %v263
      %v1005 = vpop.f32.mrb[0].mxu0
      %v1006 = vadd.f32 0.0, %v1005
      %v1007 = vpop.f32.mrb[0].mxu0
      %v1008 = vadd.f32 0.0, %v1007
      %v1009 = vpop.f32.mrb[0].mxu0
      %v1010 = vadd.f32 0.0, %v1009
      %v1011 = vpop.f32.mrb[0].mxu0
      %v1012 = vadd.f32 0.0, %v1011
      %1013 = vmatprep.mubr.bf16.mxu0 0
      %1014 = vmatmul.mubr.bf16.gmra.mrb[0].mxu0 %v264
      %v1015 = vpop.f32.mrb[0].mxu0
      %v1016 = vadd.f32 0.0, %v1015
      %v1017 = vpop.f32.mrb[0].mxu0
      %v1018 = vadd.f32 0.0, %v1017
      %v1019 = vpop.f32.mrb[0].mxu0
      %v1020 = vadd.f32 0.0, %v1019
      %v1021 = vpop.f32.mrb[0].mxu0
      %v1022 = vadd.f32 0.0, %v1021
      %1023 = vmatprep.mubr.bf16.mxu0 0
      %1024 = vmatmul.mubr.bf16.gmra.mrb[0].mxu0 %v265
      %v1025 = vpop.f32.mrb[0].mxu0
      %v1026 = vadd.f32 0.0, %v1025
      %v1027 = vpop.f32.mrb[0].mxu0
      %v1028 = vadd.f32 0.0, %v1027
      %v1029 = vpop.f32.mrb[0].mxu0
      %v1030 = vadd.f32 0.0, %v1029
      %v1031 = vpop.f32.mrb[0].mxu0
      %v1032 = vadd.f32 0.0, %v1031
      %1033 = vmatprep.mubr.bf16.mxu0 0
      %1034 = vmatmul.mubr.bf16.gmra.mrb[0].mxu0 %v266
      %v1035 = vpop.f32.mrb[0].mxu0
      %v1036 = vadd.f32 0.0, %v1035
      %v1037 = vpop.f32.mrb[0].mxu0
      %v1038 = vadd.f32 0.0, %v1037
      %v1039 = vpop.f32.mrb[0].mxu0
      %v1040 = vadd.f32 0.0, %v1039
      %v1041 = vpop.f32.mrb[0].mxu0
      %v1042 = vadd.f32 0.0, %v1041
      %1043 = vmatprep.mubr.bf16.mxu0 0
      %1044 = vmatmul.mubr.bf16.gmra.mrb[0].mxu0 %v267
      %v1045 = vpop.f32.mrb[0].mxu0
      %v1046 = vadd.f32 0.0, %v1045
      %v1047 = vpop.f32.mrb[0].mxu0
      %v1048 = vadd.f32 0.0, %v1047
      %v1049 = vpop.f32.mrb[0].mxu0
      %v1050 = vadd.f32 0.0, %v1049
      %v1051 = vpop.f32.mrb[0].mxu0
      %v1052 = vadd.f32 0.0, %v1051
      %1053 = vmatprep.mubr.bf16.mxu0 0
      %1054 = vmatmul.mubr.bf16.gmra.mrb[0].mxu0 %v268
      %v1055 = vpop.f32.mrb[0].mxu0
      %v1056 = vadd.f32 0.0, %v1055
      %v1057 = vpop.f32.mrb[0].mxu0
      %v1058 = vadd.f32 0.0, %v1057
      %v1059 = vpop.f32.mrb[0].mxu0
      %v1060 = vadd.f32 0.0, %v1059
      %v1061 = vpop.f32.mrb[0].mxu0
      %v1062 = vadd.f32 0.0, %v1061
      %1063 = vmatprep.mubr.bf16.mxu0 0
      %1064 = vmatmul.mubr.bf16.gmra.mrb[0].mxu0 %v269
      %v1065 = vpop.f32.mrb[0].mxu0
      %v1066 = vadd.f32 0.0, %v1065
      %v1067 = vpop.f32.mrb[0].mxu0
      %v1068 = vadd.f32 0.0, %v1067
      %v1069 = vpop.f32.mrb[0].mxu0
      %v1070 = vadd.f32 0.0, %v1069
      %v1071 = vpop.f32.mrb[0].mxu0
      %v1072 = vadd.f32 0.0, %v1071
      %1073 = vmatprep.mubr.bf16.mxu0 0
      %1074 = vmatmul.mubr.bf16.gmra.mrb[0].mxu0 %v270
      %v1075 = vpop.f32.mrb[0].mxu0
      %v1076 = vadd.f32 0.0, %v1075
      %v1077 = vpop.f32.mrb[0].mxu0
      %v1078 = vadd.f32 0.0, %v1077
      %v1079 = vpop.f32.mrb[0].mxu0
      %v1080 = vadd.f32 0.0, %v1079
      %v1081 = vpop.f32.mrb[0].mxu0
      %v1082 = vadd.f32 0.0, %v1081
      %1083 = vmatprep.mubr.bf16.mxu0 0
      %1084 = vmatmul.mubr.bf16.gmra.mrb[0].mxu0 %v271
      %v1085 = vpop.f32.mrb[0].mxu0
      %v1086 = vadd.f32 0.0, %v1085
      %v1087 = vpop.f32.mrb[0].mxu0
      %v1088 = vadd.f32 0.0, %v1087
      %v1089 = vpop.f32.mrb[0].mxu0
      %v1090 = vadd.f32 0.0, %v1089
      %v1091 = vpop.f32.mrb[0].mxu0
      %v1092 = vadd.f32 0.0, %v1091
      %1093 = vmatprep.mubr.bf16.mxu0 0
      %1094 = vmatmul.mubr.bf16.gmra.mrb[0].mxu0 %v272
      %v1095 = vpop.f32.mrb[0].mxu0
      %v1096 = vadd.f32 0.0, %v1095
      %v1097 = vpop.f32.mrb[0].mxu0
      %v1098 = vadd.f32 0.0, %v1097
      %v1099 = vpop.f32.mrb[0].mxu0
      %v1100 = vadd.f32 0.0, %v1099
      %v1101 = vpop.f32.mrb[0].mxu0
      %v1102 = vadd.f32 0.0, %v1101
      %1103 = vmatprep.mubr.bf16.mxu0 0
      %1104 = vmatmul.mubr.bf16.gmra.mrb[0].mxu0 %v273
      %v1105 = vpop.f32.mrb[0].mxu0
      %v1106 = vadd.f32 0.0, %v1105
      %v1107 = vpop.f32.mrb[0].mxu0
      %v1108 = vadd.f32 0.0, %v1107
      %v1109 = vpop.f32.mrb[0].mxu0
      %v1110 = vadd.f32 0.0, %v1109
      %v1111 = vpop.f32.mrb[0].mxu0
      %v1112 = vadd.f32 0.0, %v1111
      %1113 = vmatprep.mubr.bf16.mxu0 0
      %1114 = vmatmul.mubr.bf16.gmra.mrb[0].mxu0 %v274
      %v1115 = vpop.f32.mrb[0].mxu0
      %v1116 = vadd.f32 0.0, %v1115
      %v1117 = vpop.f32.mrb[0].mxu0
      %v1118 = vadd.f32 0.0, %v1117
      %v1119 = vpop.f32.mrb[0].mxu0
      %v1120 = vadd.f32 0.0, %v1119
      %v1121 = vpop.f32.mrb[0].mxu0
      %v1122 = vadd.f32 0.0, %v1121
      %1123 = vmatprep.mubr.bf16.mxu0 0
      %1124 = vmatmul.mubr.bf16.gmra.mrb[0].mxu0 %v275
      %v1125 = vpop.f32.mrb[0].mxu0
      %v1126 = vadd.f32 0.0, %v1125
      %v1127 = vpop.f32.mrb[0].mxu0
      %v1128 = vadd.f32 0.0, %v1127
      %v1129 = vpop.f32.mrb[0].mxu0
      %v1130 = vadd.f32 0.0, %v1129
      %v1131 = vpop.f32.mrb[0].mxu0
      %v1132 = vadd.f32 0.0, %v1131
      %1133 = vmatprep.mubr.bf16.mxu0 0
      %1134 = vmatmul.mubr.bf16.gmra.mrb[0].mxu0 %v276
      %v1135 = vpop.f32.mrb[0].mxu0
      %v1136 = vadd.f32 0.0, %v1135
      %v1137 = vpop.f32.mrb[0].mxu0
      %v1138 = vadd.f32 0.0, %v1137
      %v1139 = vpop.f32.mrb[0].mxu0
      %v1140 = vadd.f32 0.0, %v1139
      %v1141 = vpop.f32.mrb[0].mxu0
      %v1142 = vadd.f32 0.0, %v1141
      %1143 = vdwg.mxu0
      %v1144 = vld [vmem:[%s4] ss:$8 sm:$0x3]
      %v1146 = vlaneseq
      %v1147 = vshrl.u32 %v1146, 7
      %v1148 = vsub.s32 0, %v1147
      %v1149 = vrot.slane %v1144, %v1148
      %v1150 = vlaneseq
      %v1151 = vshrl.u32 %v1150, 7
      %v1152 = vsub.s32 1, %v1151
      %v1153 = vrot.slane %v1144, %v1152
      %v1156 = vadd.f32 %v600, %v1149
      %v1157 = vadd.f32 %v602, %v1153
      %v1158 = vadd.f32 %v604, %v1149
      %v1159 = vadd.f32 %v606, %v1153
      %v1160 = vadd.f32 %v610, %v1149
      %v1161 = vadd.f32 %v612, %v1153
      %v1162 = vadd.f32 %v614, %v1149
      %v1163 = vadd.f32 %v616, %v1153
      %v1164 = vadd.f32 %v620, %v1149
      %v1165 = vadd.f32 %v622, %v1153
      %v1166 = vadd.f32 %v624, %v1149
      %v1167 = vadd.f32 %v626, %v1153
      %v1168 = vadd.f32 %v630, %v1149
      %v1169 = vadd.f32 %v632, %v1153
      %v1170 = vadd.f32 %v634, %v1149
      %v1171 = vadd.f32 %v636, %v1153
      %v1172 = vadd.f32 %v640, %v1149
      %v1173 = vadd.f32 %v642, %v1153
      %v1174 = vadd.f32 %v644, %v1149
      %v1175 = vadd.f32 %v646, %v1153
      %v1176 = vadd.f32 %v650, %v1149
      %v1177 = vadd.f32 %v652, %v1153
      %v1178 = vadd.f32 %v654, %v1149
      %v1179 = vadd.f32 %v656, %v1153
      %v1180 = vadd.f32 %v660, %v1149
      %v1181 = vadd.f32 %v662, %v1153
      %v1182 = vadd.f32 %v664, %v1149
      %v1183 = vadd.f32 %v666, %v1153
      %v1184 = vadd.f32 %v670, %v1149
      %v1185 = vadd.f32 %v672, %v1153
      %v1186 = vadd.f32 %v674, %v1149
      %v1187 = vadd.f32 %v676, %v1153
      %v1188 = vadd.f32 %v680, %v1149
      %v1189 = vadd.f32 %v682, %v1153
      %v1190 = vadd.f32 %v684, %v1149
      %v1191 = vadd.f32 %v686, %v1153
      %v1192 = vadd.f32 %v690, %v1149
      %v1193 = vadd.f32 %v692, %v1153
      %v1194 = vadd.f32 %v694, %v1149
      %v1195 = vadd.f32 %v696, %v1153
      %v1196 = vadd.f32 %v700, %v1149
      %v1197 = vadd.f32 %v702, %v1153
      %v1198 = vadd.f32 %v704, %v1149
      %v1199 = vadd.f32 %v706, %v1153
      %v1200 = vadd.f32 %v710, %v1149
      %v1201 = vadd.f32 %v712, %v1153
      %v1202 = vadd.f32 %v714, %v1149
      %v1203 = vadd.f32 %v716, %v1153
      %v1204 = vadd.f32 %v720, %v1149
      %v1205 = vadd.f32 %v722, %v1153
      %v1206 = vadd.f32 %v724, %v1149
      %v1207 = vadd.f32 %v726, %v1153
      %v1208 = vadd.f32 %v730, %v1149
      %v1209 = vadd.f32 %v732, %v1153
      %v1210 = vadd.f32 %v734, %v1149
      %v1211 = vadd.f32 %v736, %v1153
      %v1212 = vadd.f32 %v740, %v1149
      %v1213 = vadd.f32 %v742, %v1153
      %v1214 = vadd.f32 %v744, %v1149
      %v1215 = vadd.f32 %v746, %v1153
      %v1216 = vadd.f32 %v750, %v1149
      %v1217 = vadd.f32 %v752, %v1153
      %v1218 = vadd.f32 %v754, %v1149
      %v1219 = vadd.f32 %v756, %v1153
      %vm1220 = vcmp.gt.f32.partialorder %v1156, 0.0
      %vm1221 = vcmp.gt.f32.partialorder %v1157, 0.0
      %vm1222 = vcmp.gt.f32.partialorder %v1158, 0.0
      %vm1223 = vcmp.gt.f32.partialorder %v1159, 0.0
      %vm1224 = vcmp.gt.f32.partialorder %v1160, 0.0
      %vm1225 = vcmp.gt.f32.partialorder %v1161, 0.0
      %vm1226 = vcmp.gt.f32.partialorder %v1162, 0.0
      %vm1227 = vcmp.gt.f32.partialorder %v1163, 0.0
      %vm1228 = vcmp.gt.f32.partialorder %v1164, 0.0
      %vm1229 = vcmp.gt.f32.partialorder %v1165, 0.0
      %vm1230 = vcmp.gt.f32.partialorder %v1166, 0.0
      %vm1231 = vcmp.gt.f32.partialorder %v1167, 0.0
      %vm1232 = vcmp.gt.f32.partialorder %v1168, 0.0
      %vm1233 = vcmp.gt.f32.partialorder %v1169, 0.0
      %vm1234 = vcmp.gt.f32.partialorder %v1170, 0.0
      %vm1235 = vcmp.gt.f32.partialorder %v1171, 0.0
      %vm1236 = vcmp.gt.f32.partialorder %v1172, 0.0
      %vm1237 = vcmp.gt.f32.partialorder %v1173, 0.0
      %vm1238 = vcmp.gt.f32.partialorder %v1174, 0.0
      %vm1239 = vcmp.gt.f32.partialorder %v1175, 0.0
      %vm1240 = vcmp.gt.f32.partialorder %v1176, 0.0
      %vm1241 = vcmp.gt.f32.partialorder %v1177, 0.0
      %vm1242 = vcmp.gt.f32.partialorder %v1178, 0.0
      %vm1243 = vcmp.gt.f32.partialorder %v1179, 0.0
      %vm1244 = vcmp.gt.f32.partialorder %v1180, 0.0
      %vm1245 = vcmp.gt.f32.partialorder %v1181, 0.0
      %vm1246 = vcmp.gt.f32.partialorder %v1182, 0.0
      %vm1247 = vcmp.gt.f32.partialorder %v1183, 0.0
      %vm1248 = vcmp.gt.f32.partialorder %v1184, 0.0
      %vm1249 = vcmp.gt.f32.partialorder %v1185, 0.0
      %vm1250 = vcmp.gt.f32.partialorder %v1186, 0.0
      %vm1251 = vcmp.gt.f32.partialorder %v1187, 0.0
      %vm1252 = vcmp.gt.f32.partialorder %v1188, 0.0
      %vm1253 = vcmp.gt.f32.partialorder %v1189, 0.0
      %vm1254 = vcmp.gt.f32.partialorder %v1190, 0.0
      %vm1255 = vcmp.gt.f32.partialorder %v1191, 0.0
      %vm1256 = vcmp.gt.f32.partialorder %v1192, 0.0
      %vm1257 = vcmp.gt.f32.partialorder %v1193, 0.0
      %vm1258 = vcmp.gt.f32.partialorder %v1194, 0.0
      %vm1259 = vcmp.gt.f32.partialorder %v1195, 0.0
      %vm1260 = vcmp.gt.f32.partialorder %v1196, 0.0
      %vm1261 = vcmp.gt.f32.partialorder %v1197, 0.0
      %vm1262 = vcmp.gt.f32.partialorder %v1198, 0.0
      %vm1263 = vcmp.gt.f32.partialorder %v1199, 0.0
      %vm1264 = vcmp.gt.f32.partialorder %v1200, 0.0
      %vm1265 = vcmp.gt.f32.partialorder %v1201, 0.0
      %vm1266 = vcmp.gt.f32.partialorder %v1202, 0.0
      %vm1267 = vcmp.gt.f32.partialorder %v1203, 0.0
      %vm1268 = vcmp.gt.f32.partialorder %v1204, 0.0
      %vm1269 = vcmp.gt.f32.partialorder %v1205, 0.0
      %vm1270 = vcmp.gt.f32.partialorder %v1206, 0.0
      %vm1271 = vcmp.gt.f32.partialorder %v1207, 0.0
      %vm1272 = vcmp.gt.f32.partialorder %v1208, 0.0
      %vm1273 = vcmp.gt.f32.partialorder %v1209, 0.0
      %vm1274 = vcmp.gt.f32.partialorder %v1210, 0.0
      %vm1275 = vcmp.gt.f32.partialorder %v1211, 0.0
      %vm1276 = vcmp.gt.f32.partialorder %v1212, 0.0
      %vm1277 = vcmp.gt.f32.partialorder %v1213, 0.0
      %vm1278 = vcmp.gt.f32.partialorder %v1214, 0.0
      %vm1279 = vcmp.gt.f32.partialorder %v1215, 0.0
      %vm1280 = vcmp.gt.f32.partialorder %v1216, 0.0
      %vm1281 = vcmp.gt.f32.partialorder %v1217, 0.0
      %vm1282 = vcmp.gt.f32.partialorder %v1218, 0.0
      %vm1283 = vcmp.gt.f32.partialorder %v1219, 0.0
      %v1284 = vmul.f32 %v1156, 1.442695
      %v1285 = vpow.pop %v1284
      %v1286 = vmul.f32 %v1157, 1.442695
      %v1287 = vpow.pop %v1286
      %v1288 = vmul.f32 %v1158, 1.442695
      %v1289 = vpow.pop %v1288
      %v1290 = vmul.f32 %v1159, 1.442695
      %v1291 = vpow.pop %v1290
      %v1292 = vmul.f32 %v1160, 1.442695
      %v1293 = vpow.pop %v1292
      %v1294 = vmul.f32 %v1161, 1.442695
      %v1295 = vpow.pop %v1294
      %v1296 = vmul.f32 %v1162, 1.442695
      %v1297 = vpow.pop %v1296
      %v1298 = vmul.f32 %v1163, 1.442695
      %v1299 = vpow.pop %v1298
      %v1300 = vmul.f32 %v1164, 1.442695
      %v1301 = vpow.pop %v1300
      %v1302 = vmul.f32 %v1165, 1.442695
      %v1303 = vpow.pop %v1302
      %v1304 = vmul.f32 %v1166, 1.442695
      %v1305 = vpow.pop %v1304
      %v1306 = vmul.f32 %v1167, 1.442695
      %v1307 = vpow.pop %v1306
      %v1308 = vmul.f32 %v1168, 1.442695
      %v1309 = vpow.pop %v1308
      %v1310 = vmul.f32 %v1169, 1.442695
      %v1311 = vpow.pop %v1310
      %v1312 = vmul.f32 %v1170, 1.442695
      %v1313 = vpow.pop %v1312
      %v1314 = vmul.f32 %v1171, 1.442695
      %v1315 = vpow.pop %v1314
      %v1316 = vmul.f32 %v1172, 1.442695
      %v1317 = vpow.pop %v1316
      %v1318 = vmul.f32 %v1173, 1.442695
      %v1319 = vpow.pop %v1318
      %v1320 = vmul.f32 %v1174, 1.442695
      %v1321 = vpow.pop %v1320
      %v1322 = vmul.f32 %v1175, 1.442695
      %v1323 = vpow.pop %v1322
      %v1324 = vmul.f32 %v1176, 1.442695
      %v1325 = vpow.pop %v1324
      %v1326 = vmul.f32 %v1177, 1.442695
      %v1327 = vpow.pop %v1326
      %v1328 = vmul.f32 %v1178, 1.442695
      %v1329 = vpow.pop %v1328
      %v1330 = vmul.f32 %v1179, 1.442695
      %v1331 = vpow.pop %v1330
      %v1332 = vmul.f32 %v1180, 1.442695
      %v1333 = vpow.pop %v1332
      %v1334 = vmul.f32 %v1181, 1.442695
      %v1335 = vpow.pop %v1334
      %v1336 = vmul.f32 %v1182, 1.442695
      %v1337 = vpow.pop %v1336
      %v1338 = vmul.f32 %v1183, 1.442695
      %v1339 = vpow.pop %v1338
      %v1340 = vmul.f32 %v1184, 1.442695
      %v1341 = vpow.pop %v1340
      %v1342 = vmul.f32 %v1185, 1.442695
      %v1343 = vpow.pop %v1342
      %v1344 = vmul.f32 %v1186, 1.442695
      %v1345 = vpow.pop %v1344
      %v1346 = vmul.f32 %v1187, 1.442695
      %v1347 = vpow.pop %v1346
      %v1348 = vmul.f32 %v1188, 1.442695
      %v1349 = vpow.pop %v1348
      %v1350 = vmul.f32 %v1189, 1.442695
      %v1351 = vpow.pop %v1350
      %v1352 = vmul.f32 %v1190, 1.442695
      %v1353 = vpow.pop %v1352
      %v1354 = vmul.f32 %v1191, 1.442695
      %v1355 = vpow.pop %v1354
      %v1356 = vmul.f32 %v1192, 1.442695
      %v1357 = vpow.pop %v1356
      %v1358 = vmul.f32 %v1193, 1.442695
      %v1359 = vpow.pop %v1358
      %v1360 = vmul.f32 %v1194, 1.442695
      %v1361 = vpow.pop %v1360
      %v1362 = vmul.f32 %v1195, 1.442695
      %v1363 = vpow.pop %v1362
      %v1364 = vmul.f32 %v1196, 1.442695
      %v1365 = vpow.pop %v1364
      %v1366 = vmul.f32 %v1197, 1.442695
      %v1367 = vpow.pop %v1366
      %v1368 = vmul.f32 %v1198, 1.442695
      %v1369 = vpow.pop %v1368
      %v1370 = vmul.f32 %v1199, 1.442695
      %v1371 = vpow.pop %v1370
      %v1372 = vmul.f32 %v1200, 1.442695
      %v1373 = vpow.pop %v1372
      %v1374 = vmul.f32 %v1201, 1.442695
      %v1375 = vpow.pop %v1374
      %v1376 = vmul.f32 %v1202, 1.442695
      %v1377 = vpow.pop %v1376
      %v1378 = vmul.f32 %v1203, 1.442695
      %v1379 = vpow.pop %v1378
      %v1380 = vmul.f32 %v1204, 1.442695
      %v1381 = vpow.pop %v1380
      %v1382 = vmul.f32 %v1205, 1.442695
      %v1383 = vpow.pop %v1382
      %v1384 = vmul.f32 %v1206, 1.442695
      %v1385 = vpow.pop %v1384
      %v1386 = vmul.f32 %v1207, 1.442695
      %v1387 = vpow.pop %v1386
      %v1388 = vmul.f32 %v1208, 1.442695
      %v1389 = vpow.pop %v1388
      %v1390 = vmul.f32 %v1209, 1.442695
      %v1391 = vpow.pop %v1390
      %v1392 = vmul.f32 %v1210, 1.442695
      %v1393 = vpow.pop %v1392
      %v1394 = vmul.f32 %v1211, 1.442695
      %v1395 = vpow.pop %v1394
      %v1396 = vmul.f32 %v1212, 1.442695
      %v1397 = vpow.pop %v1396
      %v1398 = vmul.f32 %v1213, 1.442695
      %v1399 = vpow.pop %v1398
      %v1400 = vmul.f32 %v1214, 1.442695
      %v1401 = vpow.pop %v1400
      %v1402 = vmul.f32 %v1215, 1.442695
      %v1403 = vpow.pop %v1402
      %v1404 = vmul.f32 %v1216, 1.442695
      %v1405 = vpow.pop %v1404
      %v1406 = vmul.f32 %v1217, 1.442695
      %v1407 = vpow.pop %v1406
      %v1408 = vmul.f32 %v1218, 1.442695
      %v1409 = vpow.pop %v1408
      %v1410 = vmul.f32 %v1219, 1.442695
      %v1411 = vpow.pop %v1410
      %v1412 = vsub.f32 %v1285, 1.0
      %v1413 = vsub.f32 %v1287, 1.0
      %v1414 = vsub.f32 %v1289, 1.0
      %v1415 = vsub.f32 %v1291, 1.0
      %v1416 = vsub.f32 %v1293, 1.0
      %v1417 = vsub.f32 %v1295, 1.0
      %v1418 = vsub.f32 %v1297, 1.0
      %v1419 = vsub.f32 %v1299, 1.0
      %v1420 = vsub.f32 %v1301, 1.0
      %v1421 = vsub.f32 %v1303, 1.0
      %v1422 = vsub.f32 %v1305, 1.0
      %v1423 = vsub.f32 %v1307, 1.0
      %v1424 = vsub.f32 %v1309, 1.0
      %v1425 = vsub.f32 %v1311, 1.0
      %v1426 = vsub.f32 %v1313, 1.0
      %v1427 = vsub.f32 %v1315, 1.0
      %v1428 = vsub.f32 %v1317, 1.0
      %v1429 = vsub.f32 %v1319, 1.0
      %v1430 = vsub.f32 %v1321, 1.0
      %v1431 = vsub.f32 %v1323, 1.0
      %v1432 = vsub.f32 %v1325, 1.0
      %v1433 = vsub.f32 %v1327, 1.0
      %v1434 = vsub.f32 %v1329, 1.0
      %v1435 = vsub.f32 %v1331, 1.0
      %v1436 = vsub.f32 %v1333, 1.0
      %v1437 = vsub.f32 %v1335, 1.0
      %v1438 = vsub.f32 %v1337, 1.0
      %v1439 = vsub.f32 %v1339, 1.0
      %v1440 = vsub.f32 %v1341, 1.0
      %v1441 = vsub.f32 %v1343, 1.0
      %v1442 = vsub.f32 %v1345, 1.0
      %v1443 = vsub.f32 %v1347, 1.0
      %v1444 = vsub.f32 %v1349, 1.0
      %v1445 = vsub.f32 %v1351, 1.0
      %v1446 = vsub.f32 %v1353, 1.0
      %v1447 = vsub.f32 %v1355, 1.0
      %v1448 = vsub.f32 %v1357, 1.0
      %v1449 = vsub.f32 %v1359, 1.0
      %v1450 = vsub.f32 %v1361, 1.0
      %v1451 = vsub.f32 %v1363, 1.0
      %v1452 = vsub.f32 %v1365, 1.0
      %v1453 = vsub.f32 %v1367, 1.0
      %v1454 = vsub.f32 %v1369, 1.0
      %v1455 = vsub.f32 %v1371, 1.0
      %v1456 = vsub.f32 %v1373, 1.0
      %v1457 = vsub.f32 %v1375, 1.0
      %v1458 = vsub.f32 %v1377, 1.0
      %v1459 = vsub.f32 %v1379, 1.0
      %v1460 = vsub.f32 %v1381, 1.0
      %v1461 = vsub.f32 %v1383, 1.0
      %v1462 = vsub.f32 %v1385, 1.0
      %v1463 = vsub.f32 %v1387, 1.0
      %v1464 = vsub.f32 %v1389, 1.0
      %v1465 = vsub.f32 %v1391, 1.0
      %v1466 = vsub.f32 %v1393, 1.0
      %v1467 = vsub.f32 %v1395, 1.0
      %v1468 = vsub.f32 %v1397, 1.0
      %v1469 = vsub.f32 %v1399, 1.0
      %v1470 = vsub.f32 %v1401, 1.0
      %v1471 = vsub.f32 %v1403, 1.0
      %v1472 = vsub.f32 %v1405, 1.0
      %v1473 = vsub.f32 %v1407, 1.0
      %v1474 = vsub.f32 %v1409, 1.0
      %v1475 = vsub.f32 %v1411, 1.0
      %v1476 = vsel %vm1220, %v1156, %v1412
      %v1477 = vsel %vm1221, %v1157, %v1413
      %v1478 = vsel %vm1222, %v1158, %v1414
      %v1479 = vsel %vm1223, %v1159, %v1415
      %v1480 = vsel %vm1224, %v1160, %v1416
      %v1481 = vsel %vm1225, %v1161, %v1417
      %v1482 = vsel %vm1226, %v1162, %v1418
      %v1483 = vsel %vm1227, %v1163, %v1419
      %v1484 = vsel %vm1228, %v1164, %v1420
      %v1485 = vsel %vm1229, %v1165, %v1421
      %v1486 = vsel %vm1230, %v1166, %v1422
      %v1487 = vsel %vm1231, %v1167, %v1423
      %v1488 = vsel %vm1232, %v1168, %v1424
      %v1489 = vsel %vm1233, %v1169, %v1425
      %v1490 = vsel %vm1234, %v1170, %v1426
      %v1491 = vsel %vm1235, %v1171, %v1427
      %v1492 = vsel %vm1236, %v1172, %v1428
      %v1493 = vsel %vm1237, %v1173, %v1429
      %v1494 = vsel %vm1238, %v1174, %v1430
      %v1495 = vsel %vm1239, %v1175, %v1431
      %v1496 = vsel %vm1240, %v1176, %v1432
      %v1497 = vsel %vm1241, %v1177, %v1433
      %v1498 = vsel %vm1242, %v1178, %v1434
      %v1499 = vsel %vm1243, %v1179, %v1435
      %v1500 = vsel %vm1244, %v1180, %v1436
      %v1501 = vsel %vm1245, %v1181, %v1437
      %v1502 = vsel %vm1246, %v1182, %v1438
      %v1503 = vsel %vm1247, %v1183, %v1439
      %v1504 = vsel %vm1248, %v1184, %v1440
      %v1505 = vsel %vm1249, %v1185, %v1441
      %v1506 = vsel %vm1250, %v1186, %v1442
      %v1507 = vsel %vm1251, %v1187, %v1443
      %v1508 = vsel %vm1252, %v1188, %v1444
      %v1509 = vsel %vm1253, %v1189, %v1445
      %v1510 = vsel %vm1254, %v1190, %v1446
      %v1511 = vsel %vm1255, %v1191, %v1447
      %v1512 = vsel %vm1256, %v1192, %v1448
      %v1513 = vsel %vm1257, %v1193, %v1449
      %v1514 = vsel %vm1258, %v1194, %v1450
      %v1515 = vsel %vm1259, %v1195, %v1451
      %v1516 = vsel %vm1260, %v1196, %v1452
      %v1517 = vsel %vm1261, %v1197, %v1453
      %v1518 = vsel %vm1262, %v1198, %v1454
      %v1519 = vsel %vm1263, %v1199, %v1455
      %v1520 = vsel %vm1264, %v1200, %v1456
      %v1521 = vsel %vm1265, %v1201, %v1457
      %v1522 = vsel %vm1266, %v1202, %v1458
      %v1523 = vsel %vm1267, %v1203, %v1459
      %v1524 = vsel %vm1268, %v1204, %v1460
      %v1525 = vsel %vm1269, %v1205, %v1461
      %v1526 = vsel %vm1270, %v1206, %v1462
      %v1527 = vsel %vm1271, %v1207, %v1463
      %v1528 = vsel %vm1272, %v1208, %v1464
      %v1529 = vsel %vm1273, %v1209, %v1465
      %v1530 = vsel %vm1274, %v1210, %v1466
      %v1531 = vsel %vm1275, %v1211, %v1467
      %v1532 = vsel %vm1276, %v1212, %v1468
      %v1533 = vsel %vm1277, %v1213, %v1469
      %v1534 = vsel %vm1278, %v1214, %v1470
      %v1535 = vsel %vm1279, %v1215, %v1471
      %v1536 = vsel %vm1280, %v1216, %v1472
      %v1537 = vsel %vm1281, %v1217, %v1473
      %v1538 = vsel %vm1282, %v1218, %v1474
      %v1539 = vsel %vm1283, %v1219, %v1475
      %s1540 = scalar_lea.vmem %s4, 1
      %v1541 = vld [vmem:[%s1540] ss:$8 sm:$0x3]
      %v1543 = vlaneseq
      %v1544 = vshrl.u32 %v1543, 7
      %v1545 = vsub.s32 0, %v1544
      %v1546 = vrot.slane %v1541, %v1545
      %v1547 = vlaneseq
      %v1548 = vshrl.u32 %v1547, 7
      %v1549 = vsub.s32 1, %v1548
      %v1550 = vrot.slane %v1541, %v1549
      %v1553 = vadd.f32 %v986, %v1546
      %v1554 = vadd.f32 %v988, %v1550
      %v1555 = vadd.f32 %v990, %v1546
      %v1556 = vadd.f32 %v992, %v1550
      %v1557 = vadd.f32 %v996, %v1546
      %v1558 = vadd.f32 %v998, %v1550
      %v1559 = vadd.f32 %v1000, %v1546
      %v1560 = vadd.f32 %v1002, %v1550
      %v1561 = vadd.f32 %v1006, %v1546
      %v1562 = vadd.f32 %v1008, %v1550
      %v1563 = vadd.f32 %v1010, %v1546
      %v1564 = vadd.f32 %v1012, %v1550
      %v1565 = vadd.f32 %v1016, %v1546
      %v1566 = vadd.f32 %v1018, %v1550
      %v1567 = vadd.f32 %v1020, %v1546
      %v1568 = vadd.f32 %v1022, %v1550
      %v1569 = vadd.f32 %v1026, %v1546
      %v1570 = vadd.f32 %v1028, %v1550
      %v1571 = vadd.f32 %v1030, %v1546
      %v1572 = vadd.f32 %v1032, %v1550
      %v1573 = vadd.f32 %v1036, %v1546
      %v1574 = vadd.f32 %v1038, %v1550
      %v1575 = vadd.f32 %v1040, %v1546
      %v1576 = vadd.f32 %v1042, %v1550
      %v1577 = vadd.f32 %v1046, %v1546
      %v1578 = vadd.f32 %v1048, %v1550
      %v1579 = vadd.f32 %v1050, %v1546
      %v1580 = vadd.f32 %v1052, %v1550
      %v1581 = vadd.f32 %v1056, %v1546
      %v1582 = vadd.f32 %v1058, %v1550
      %v1583 = vadd.f32 %v1060, %v1546
      %v1584 = vadd.f32 %v1062, %v1550
      %v1585 = vadd.f32 %v1066, %v1546
      %v1586 = vadd.f32 %v1068, %v1550
      %v1587 = vadd.f32 %v1070, %v1546
      %v1588 = vadd.f32 %v1072, %v1550
      %v1589 = vadd.f32 %v1076, %v1546
      %v1590 = vadd.f32 %v1078, %v1550
      %v1591 = vadd.f32 %v1080, %v1546
      %v1592 = vadd.f32 %v1082, %v1550
      %v1593 = vadd.f32 %v1086, %v1546
      %v1594 = vadd.f32 %v1088, %v1550
      %v1595 = vadd.f32 %v1090, %v1546
      %v1596 = vadd.f32 %v1092, %v1550
      %v1597 = vadd.f32 %v1096, %v1546
      %v1598 = vadd.f32 %v1098, %v1550
      %v1599 = vadd.f32 %v1100, %v1546
      %v1600 = vadd.f32 %v1102, %v1550
      %v1601 = vadd.f32 %v1106, %v1546
      %v1602 = vadd.f32 %v1108, %v1550
      %v1603 = vadd.f32 %v1110, %v1546
      %v1604 = vadd.f32 %v1112, %v1550
      %v1605 = vadd.f32 %v1116, %v1546
      %v1606 = vadd.f32 %v1118, %v1550
      %v1607 = vadd.f32 %v1120, %v1546
      %v1608 = vadd.f32 %v1122, %v1550
      %v1609 = vadd.f32 %v1126, %v1546
      %v1610 = vadd.f32 %v1128, %v1550
      %v1611 = vadd.f32 %v1130, %v1546
      %v1612 = vadd.f32 %v1132, %v1550
      %v1613 = vadd.f32 %v1136, %v1546
      %v1614 = vadd.f32 %v1138, %v1550
      %v1615 = vadd.f32 %v1140, %v1546
      %v1616 = vadd.f32 %v1142, %v1550
      %vm1617 = vcmp.gt.f32.partialorder %v1553, 0.0
      %vm1618 = vcmp.gt.f32.partialorder %v1554, 0.0
      %vm1619 = vcmp.gt.f32.partialorder %v1555, 0.0
      %vm1620 = vcmp.gt.f32.partialorder %v1556, 0.0
      %vm1621 = vcmp.gt.f32.partialorder %v1557, 0.0
      %vm1622 = vcmp.gt.f32.partialorder %v1558, 0.0
      %vm1623 = vcmp.gt.f32.partialorder %v1559, 0.0
      %vm1624 = vcmp.gt.f32.partialorder %v1560, 0.0
      %vm1625 = vcmp.gt.f32.partialorder %v1561, 0.0
      %vm1626 = vcmp.gt.f32.partialorder %v1562, 0.0
      %vm1627 = vcmp.gt.f32.partialorder %v1563, 0.0
      %vm1628 = vcmp.gt.f32.partialorder %v1564, 0.0
      %vm1629 = vcmp.gt.f32.partialorder %v1565, 0.0
      %vm1630 = vcmp.gt.f32.partialorder %v1566, 0.0
      %vm1631 = vcmp.gt.f32.partialorder %v1567, 0.0
      %vm1632 = vcmp.gt.f32.partialorder %v1568, 0.0
      %vm1633 = vcmp.gt.f32.partialorder %v1569, 0.0
      %vm1634 = vcmp.gt.f32.partialorder %v1570, 0.0
      %vm1635 = vcmp.gt.f32.partialorder %v1571, 0.0
      %vm1636 = vcmp.gt.f32.partialorder %v1572, 0.0
      %vm1637 = vcmp.gt.f32.partialorder %v1573, 0.0
      %vm1638 = vcmp.gt.f32.partialorder %v1574, 0.0
      %vm1639 = vcmp.gt.f32.partialorder %v1575, 0.0
      %vm1640 = vcmp.gt.f32.partialorder %v1576, 0.0
      %vm1641 = vcmp.gt.f32.partialorder %v1577, 0.0
      %vm1642 = vcmp.gt.f32.partialorder %v1578, 0.0
      %vm1643 = vcmp.gt.f32.partialorder %v1579, 0.0
      %vm1644 = vcmp.gt.f32.partialorder %v1580, 0.0
      %vm1645 = vcmp.gt.f32.partialorder %v1581, 0.0
      %vm1646 = vcmp.gt.f32.partialorder %v1582, 0.0
      %vm1647 = vcmp.gt.f32.partialorder %v1583, 0.0
      %vm1648 = vcmp.gt.f32.partialorder %v1584, 0.0
      %vm1649 = vcmp.gt.f32.partialorder %v1585, 0.0
      %vm1650 = vcmp.gt.f32.partialorder %v1586, 0.0
      %vm1651 = vcmp.gt.f32.partialorder %v1587, 0.0
      %vm1652 = vcmp.gt.f32.partialorder %v1588, 0.0
      %vm1653 = vcmp.gt.f32.partialorder %v1589, 0.0
      %vm1654 = vcmp.gt.f32.partialorder %v1590, 0.0
      %vm1655 = vcmp.gt.f32.partialorder %v1591, 0.0
      %vm1656 = vcmp.gt.f32.partialorder %v1592, 0.0
      %vm1657 = vcmp.gt.f32.partialorder %v1593, 0.0
      %vm1658 = vcmp.gt.f32.partialorder %v1594, 0.0
      %vm1659 = vcmp.gt.f32.partialorder %v1595, 0.0
      %vm1660 = vcmp.gt.f32.partialorder %v1596, 0.0
      %vm1661 = vcmp.gt.f32.partialorder %v1597, 0.0
      %vm1662 = vcmp.gt.f32.partialorder %v1598, 0.0
      %vm1663 = vcmp.gt.f32.partialorder %v1599, 0.0
      %vm1664 = vcmp.gt.f32.partialorder %v1600, 0.0
      %vm1665 = vcmp.gt.f32.partialorder %v1601, 0.0
      %vm1666 = vcmp.gt.f32.partialorder %v1602, 0.0
      %vm1667 = vcmp.gt.f32.partialorder %v1603, 0.0
      %vm1668 = vcmp.gt.f32.partialorder %v1604, 0.0
      %vm1669 = vcmp.gt.f32.partialorder %v1605, 0.0
      %vm1670 = vcmp.gt.f32.partialorder %v1606, 0.0
      %vm1671 = vcmp.gt.f32.partialorder %v1607, 0.0
      %vm1672 = vcmp.gt.f32.partialorder %v1608, 0.0
      %vm1673 = vcmp.gt.f32.partialorder %v1609, 0.0
      %vm1674 = vcmp.gt.f32.partialorder %v1610, 0.0
      %vm1675 = vcmp.gt.f32.partialorder %v1611, 0.0
      %vm1676 = vcmp.gt.f32.partialorder %v1612, 0.0
      %vm1677 = vcmp.gt.f32.partialorder %v1613, 0.0
      %vm1678 = vcmp.gt.f32.partialorder %v1614, 0.0
      %vm1679 = vcmp.gt.f32.partialorder %v1615, 0.0
      %vm1680 = vcmp.gt.f32.partialorder %v1616, 0.0
      %v1681 = vmul.f32 %v1553, 1.442695
      %v1682 = vpow.pop %v1681
      %v1683 = vmul.f32 %v1554, 1.442695
      %v1684 = vpow.pop %v1683
      %v1685 = vmul.f32 %v1555, 1.442695
      %v1686 = vpow.pop %v1685
      %v1687 = vmul.f32 %v1556, 1.442695
      %v1688 = vpow.pop %v1687
      %v1689 = vmul.f32 %v1557, 1.442695
      %v1690 = vpow.pop %v1689
      %v1691 = vmul.f32 %v1558, 1.442695
      %v1692 = vpow.pop %v1691
      %v1693 = vmul.f32 %v1559, 1.442695
      %v1694 = vpow.pop %v1693
      %v1695 = vmul.f32 %v1560, 1.442695
      %v1696 = vpow.pop %v1695
      %v1697 = vmul.f32 %v1561, 1.442695
      %v1698 = vpow.pop %v1697
      %v1699 = vmul.f32 %v1562, 1.442695
      %v1700 = vpow.pop %v1699
      %v1701 = vmul.f32 %v1563, 1.442695
      %v1702 = vpow.pop %v1701
      %v1703 = vmul.f32 %v1564, 1.442695
      %v1704 = vpow.pop %v1703
      %v1705 = vmul.f32 %v1565, 1.442695
      %v1706 = vpow.pop %v1705
      %v1707 = vmul.f32 %v1566, 1.442695
      %v1708 = vpow.pop %v1707
      %v1709 = vmul.f32 %v1567, 1.442695
      %v1710 = vpow.pop %v1709
      %v1711 = vmul.f32 %v1568, 1.442695
      %v1712 = vpow.pop %v1711
      %v1713 = vmul.f32 %v1569, 1.442695
      %v1714 = vpow.pop %v1713
      %v1715 = vmul.f32 %v1570, 1.442695
      %v1716 = vpow.pop %v1715
      %v1717 = vmul.f32 %v1571, 1.442695
      %v1718 = vpow.pop %v1717
      %v1719 = vmul.f32 %v1572, 1.442695
      %v1720 = vpow.pop %v1719
      %v1721 = vmul.f32 %v1573, 1.442695
      %v1722 = vpow.pop %v1721
      %v1723 = vmul.f32 %v1574, 1.442695
      %v1724 = vpow.pop %v1723
      %v1725 = vmul.f32 %v1575, 1.442695
      %v1726 = vpow.pop %v1725
      %v1727 = vmul.f32 %v1576, 1.442695
      %v1728 = vpow.pop %v1727
      %v1729 = vmul.f32 %v1577, 1.442695
      %v1730 = vpow.pop %v1729
      %v1731 = vmul.f32 %v1578, 1.442695
      %v1732 = vpow.pop %v1731
      %v1733 = vmul.f32 %v1579, 1.442695
      %v1734 = vpow.pop %v1733
      %v1735 = vmul.f32 %v1580, 1.442695
      %v1736 = vpow.pop %v1735
      %v1737 = vmul.f32 %v1581, 1.442695
      %v1738 = vpow.pop %v1737
      %v1739 = vmul.f32 %v1582, 1.442695
      %v1740 = vpow.pop %v1739
      %v1741 = vmul.f32 %v1583, 1.442695
      %v1742 = vpow.pop %v1741
      %v1743 = vmul.f32 %v1584, 1.442695
      %v1744 = vpow.pop %v1743
      %v1745 = vmul.f32 %v1585, 1.442695
      %v1746 = vpow.pop %v1745
      %v1747 = vmul.f32 %v1586, 1.442695
      %v1748 = vpow.pop %v1747
      %v1749 = vmul.f32 %v1587, 1.442695
      %v1750 = vpow.pop %v1749
      %v1751 = vmul.f32 %v1588, 1.442695
      %v1752 = vpow.pop %v1751
      %v1753 = vmul.f32 %v1589, 1.442695
      %v1754 = vpow.pop %v1753
      %v1755 = vmul.f32 %v1590, 1.442695
      %v1756 = vpow.pop %v1755
      %v1757 = vmul.f32 %v1591, 1.442695
      %v1758 = vpow.pop %v1757
      %v1759 = vmul.f32 %v1592, 1.442695
      %v1760 = vpow.pop %v1759
      %v1761 = vmul.f32 %v1593, 1.442695
      %v1762 = vpow.pop %v1761
      %v1763 = vmul.f32 %v1594, 1.442695
      %v1764 = vpow.pop %v1763
      %v1765 = vmul.f32 %v1595, 1.442695
      %v1766 = vpow.pop %v1765
      %v1767 = vmul.f32 %v1596, 1.442695
      %v1768 = vpow.pop %v1767
      %v1769 = vmul.f32 %v1597, 1.442695
      %v1770 = vpow.pop %v1769
      %v1771 = vmul.f32 %v1598, 1.442695
      %v1772 = vpow.pop %v1771
      %v1773 = vmul.f32 %v1599, 1.442695
      %v1774 = vpow.pop %v1773
      %v1775 = vmul.f32 %v1600, 1.442695
      %v1776 = vpow.pop %v1775
      %v1777 = vmul.f32 %v1601, 1.442695
      %v1778 = vpow.pop %v1777
      %v1779 = vmul.f32 %v1602, 1.442695
      %v1780 = vpow.pop %v1779
      %v1781 = vmul.f32 %v1603, 1.442695
      %v1782 = vpow.pop %v1781
      %v1783 = vmul.f32 %v1604, 1.442695
      %v1784 = vpow.pop %v1783
      %v1785 = vmul.f32 %v1605, 1.442695
      %v1786 = vpow.pop %v1785
      %v1787 = vmul.f32 %v1606, 1.442695
      %v1788 = vpow.pop %v1787
      %v1789 = vmul.f32 %v1607, 1.442695
      %v1790 = vpow.pop %v1789
      %v1791 = vmul.f32 %v1608, 1.442695
      %v1792 = vpow.pop %v1791
      %v1793 = vmul.f32 %v1609, 1.442695
      %v1794 = vpow.pop %v1793
      %v1795 = vmul.f32 %v1610, 1.442695
      %v1796 = vpow.pop %v1795
      %v1797 = vmul.f32 %v1611, 1.442695
      %v1798 = vpow.pop %v1797
      %v1799 = vmul.f32 %v1612, 1.442695
      %v1800 = vpow.pop %v1799
      %v1801 = vmul.f32 %v1613, 1.442695
      %v1802 = vpow.pop %v1801
      %v1803 = vmul.f32 %v1614, 1.442695
      %v1804 = vpow.pop %v1803
      %v1805 = vmul.f32 %v1615, 1.442695
      %v1806 = vpow.pop %v1805
      %v1807 = vmul.f32 %v1616, 1.442695
      %v1808 = vpow.pop %v1807
      %v1809 = vsub.f32 %v1682, 1.0
      %v1810 = vsub.f32 %v1684, 1.0
      %v1811 = vsub.f32 %v1686, 1.0
      %v1812 = vsub.f32 %v1688, 1.0
      %v1813 = vsub.f32 %v1690, 1.0
      %v1814 = vsub.f32 %v1692, 1.0
      %v1815 = vsub.f32 %v1694, 1.0
      %v1816 = vsub.f32 %v1696, 1.0
      %v1817 = vsub.f32 %v1698, 1.0
      %v1818 = vsub.f32 %v1700, 1.0
      %v1819 = vsub.f32 %v1702, 1.0
      %v1820 = vsub.f32 %v1704, 1.0
      %v1821 = vsub.f32 %v1706, 1.0
      %v1822 = vsub.f32 %v1708, 1.0
      %v1823 = vsub.f32 %v1710, 1.0
      %v1824 = vsub.f32 %v1712, 1.0
      %v1825 = vsub.f32 %v1714, 1.0
      %v1826 = vsub.f32 %v1716, 1.0
      %v1827 = vsub.f32 %v1718, 1.0
      %v1828 = vsub.f32 %v1720, 1.0
      %v1829 = vsub.f32 %v1722, 1.0
      %v1830 = vsub.f32 %v1724, 1.0
      %v1831 = vsub.f32 %v1726, 1.0
      %v1832 = vsub.f32 %v1728, 1.0
      %v1833 = vsub.f32 %v1730, 1.0
      %v1834 = vsub.f32 %v1732, 1.0
      %v1835 = vsub.f32 %v1734, 1.0
      %v1836 = vsub.f32 %v1736, 1.0
      %v1837 = vsub.f32 %v1738, 1.0
      %v1838 = vsub.f32 %v1740, 1.0
      %v1839 = vsub.f32 %v1742, 1.0
      %v1840 = vsub.f32 %v1744, 1.0
      %v1841 = vsub.f32 %v1746, 1.0
      %v1842 = vsub.f32 %v1748, 1.0
      %v1843 = vsub.f32 %v1750, 1.0
      %v1844 = vsub.f32 %v1752, 1.0
      %v1845 = vsub.f32 %v1754, 1.0
      %v1846 = vsub.f32 %v1756, 1.0
      %v1847 = vsub.f32 %v1758, 1.0
      %v1848 = vsub.f32 %v1760, 1.0
      %v1849 = vsub.f32 %v1762, 1.0
      %v1850 = vsub.f32 %v1764, 1.0
      %v1851 = vsub.f32 %v1766, 1.0
      %v1852 = vsub.f32 %v1768, 1.0
      %v1853 = vsub.f32 %v1770, 1.0
      %v1854 = vsub.f32 %v1772, 1.0
      %v1855 = vsub.f32 %v1774, 1.0
      %v1856 = vsub.f32 %v1776, 1.0
      %v1857 = vsub.f32 %v1778, 1.0
      %v1858 = vsub.f32 %v1780, 1.0
      %v1859 = vsub.f32 %v1782, 1.0
      %v1860 = vsub.f32 %v1784, 1.0
      %v1861 = vsub.f32 %v1786, 1.0
      %v1862 = vsub.f32 %v1788, 1.0
      %v1863 = vsub.f32 %v1790, 1.0
      %v1864 = vsub.f32 %v1792, 1.0
      %v1865 = vsub.f32 %v1794, 1.0
      %v1866 = vsub.f32 %v1796, 1.0
      %v1867 = vsub.f32 %v1798, 1.0
      %v1868 = vsub.f32 %v1800, 1.0
      %v1869 = vsub.f32 %v1802, 1.0
      %v1870 = vsub.f32 %v1804, 1.0
      %v1871 = vsub.f32 %v1806, 1.0
      %v1872 = vsub.f32 %v1808, 1.0
      %v1873 = vsel %vm1617, %v1553, %v1809
      %v1874 = vsel %vm1618, %v1554, %v1810
      %v1875 = vsel %vm1619, %v1555, %v1811
      %v1876 = vsel %vm1620, %v1556, %v1812
      %v1877 = vsel %vm1621, %v1557, %v1813
      %v1878 = vsel %vm1622, %v1558, %v1814
      %v1879 = vsel %vm1623, %v1559, %v1815
      %v1880 = vsel %vm1624, %v1560, %v1816
      %v1881 = vsel %vm1625, %v1561, %v1817
      %v1882 = vsel %vm1626, %v1562, %v1818
      %v1883 = vsel %vm1627, %v1563, %v1819
      %v1884 = vsel %vm1628, %v1564, %v1820
      %v1885 = vsel %vm1629, %v1565, %v1821
      %v1886 = vsel %vm1630, %v1566, %v1822
      %v1887 = vsel %vm1631, %v1567, %v1823
      %v1888 = vsel %vm1632, %v1568, %v1824
      %v1889 = vsel %vm1633, %v1569, %v1825
      %v1890 = vsel %vm1634, %v1570, %v1826
      %v1891 = vsel %vm1635, %v1571, %v1827
      %v1892 = vsel %vm1636, %v1572, %v1828
      %v1893 = vsel %vm1637, %v1573, %v1829
      %v1894 = vsel %vm1638, %v1574, %v1830
      %v1895 = vsel %vm1639, %v1575, %v1831
      %v1896 = vsel %vm1640, %v1576, %v1832
      %v1897 = vsel %vm1641, %v1577, %v1833
      %v1898 = vsel %vm1642, %v1578, %v1834
      %v1899 = vsel %vm1643, %v1579, %v1835
      %v1900 = vsel %vm1644, %v1580, %v1836
      %v1901 = vsel %vm1645, %v1581, %v1837
      %v1902 = vsel %vm1646, %v1582, %v1838
      %v1903 = vsel %vm1647, %v1583, %v1839
      %v1904 = vsel %vm1648, %v1584, %v1840
      %v1905 = vsel %vm1649, %v1585, %v1841
      %v1906 = vsel %vm1650, %v1586, %v1842
      %v1907 = vsel %vm1651, %v1587, %v1843
      %v1908 = vsel %vm1652, %v1588, %v1844
      %v1909 = vsel %vm1653, %v1589, %v1845
      %v1910 = vsel %vm1654, %v1590, %v1846
      %v1911 = vsel %vm1655, %v1591, %v1847
      %v1912 = vsel %vm1656, %v1592, %v1848
      %v1913 = vsel %vm1657, %v1593, %v1849
      %v1914 = vsel %vm1658, %v1594, %v1850
      %v1915 = vsel %vm1659, %v1595, %v1851
      %v1916 = vsel %vm1660, %v1596, %v1852
      %v1917 = vsel %vm1661, %v1597, %v1853
      %v1918 = vsel %vm1662, %v1598, %v1854
      %v1919 = vsel %vm1663, %v1599, %v1855
      %v1920 = vsel %vm1664, %v1600, %v1856
      %v1921 = vsel %vm1665, %v1601, %v1857
      %v1922 = vsel %vm1666, %v1602, %v1858
      %v1923 = vsel %vm1667, %v1603, %v1859
      %v1924 = vsel %vm1668, %v1604, %v1860
      %v1925 = vsel %vm1669, %v1605, %v1861
      %v1926 = vsel %vm1670, %v1606, %v1862
      %v1927 = vsel %vm1671, %v1607, %v1863
      %v1928 = vsel %vm1672, %v1608, %v1864
      %v1929 = vsel %vm1673, %v1609, %v1865
      %v1930 = vsel %vm1674, %v1610, %v1866
      %v1931 = vsel %vm1675, %v1611, %v1867
      %v1932 = vsel %vm1676, %v1612, %v1868
      %v1933 = vsel %vm1677, %v1613, %v1869
      %v1934 = vsel %vm1678, %v1614, %v1870
      %v1935 = vsel %vm1679, %v1615, %v1871
      %v1936 = vsel %vm1680, %v1616, %v1872
      %v1937 = vpack.c.bf16 %v1478, %v1476
      %v1938 = vpack.c.bf16 %v1479, %v1477
      %v1939 = vpack.c.bf16 %v1482, %v1480
      %v1940 = vpack.c.bf16 %v1483, %v1481
      %v1941 = vpack.c.bf16 %v1486, %v1484
      %v1942 = vpack.c.bf16 %v1487, %v1485
      %v1943 = vpack.c.bf16 %v1490, %v1488
      %v1944 = vpack.c.bf16 %v1491, %v1489
      %v1945 = vpack.c.bf16 %v1494, %v1492
      %v1946 = vpack.c.bf16 %v1495, %v1493
      %v1947 = vpack.c.bf16 %v1498, %v1496
      %v1948 = vpack.c.bf16 %v1499, %v1497
      %v1949 = vpack.c.bf16 %v1502, %v1500
      %v1950 = vpack.c.bf16 %v1503, %v1501
      %v1951 = vpack.c.bf16 %v1506, %v1504
      %v1952 = vpack.c.bf16 %v1507, %v1505
      %v1953 = vpack.c.bf16 %v1510, %v1508
      %v1954 = vpack.c.bf16 %v1511, %v1509
      %v1955 = vpack.c.bf16 %v1514, %v1512
      %v1956 = vpack.c.bf16 %v1515, %v1513
      %v1957 = vpack.c.bf16 %v1518, %v1516
      %v1958 = vpack.c.bf16 %v1519, %v1517
      %v1959 = vpack.c.bf16 %v1522, %v1520
      %v1960 = vpack.c.bf16 %v1523, %v1521
      %v1961 = vpack.c.bf16 %v1526, %v1524
      %v1962 = vpack.c.bf16 %v1527, %v1525
      %v1963 = vpack.c.bf16 %v1530, %v1528
      %v1964 = vpack.c.bf16 %v1531, %v1529
      %v1965 = vpack.c.bf16 %v1534, %v1532
      %v1966 = vpack.c.bf16 %v1535, %v1533
      %v1967 = vpack.c.bf16 %v1538, %v1536
      %v1968 = vpack.c.bf16 %v1539, %v1537
      %v1969 = vld [vmem:[%s2] sm:$0xff]
      %v1970 = vld [vmem:[%s2 + $0x8] sm:$0xff]
      %v1971 = vld [vmem:[%s2 + $0x10] sm:$0xff]
      %v1972 = vld [vmem:[%s2 + $0x18] sm:$0xff]
      %v1973 = vld [vmem:[%s2 + $0x20] sm:$0xff]
      %v1974 = vld [vmem:[%s2 + $0x28] sm:$0xff]
      %v1975 = vld [vmem:[%s2 + $0x30] sm:$0xff]
      %v1976 = vld [vmem:[%s2 + $0x38] sm:$0xff]
      %v1977 = vld [vmem:[%s2 + $0x40] sm:$0xff]
      %v1978 = vld [vmem:[%s2 + $0x48] sm:$0xff]
      %v1979 = vld [vmem:[%s2 + $0x50] sm:$0xff]
      %v1980 = vld [vmem:[%s2 + $0x58] sm:$0xff]
      %v1981 = vld [vmem:[%s2 + $0x60] sm:$0xff]
      %v1982 = vld [vmem:[%s2 + $0x68] sm:$0xff]
      %v1983 = vld [vmem:[%s2 + $0x70] sm:$0xff]
      %v1984 = vld [vmem:[%s2 + $0x78] sm:$0xff]
      %v1985 = vld [vmem:[%s2 + $0x80] sm:$0xff]
      %v1986 = vld [vmem:[%s2 + $0x88] sm:$0xff]
      %v1987 = vld [vmem:[%s2 + $0x90] sm:$0xff]
      %v1988 = vld [vmem:[%s2 + $0x98] sm:$0xff]
      %v1989 = vld [vmem:[%s2 + $0xa0] sm:$0xff]
      %v1990 = vld [vmem:[%s2 + $0xa8] sm:$0xff]
      %v1991 = vld [vmem:[%s2 + $0xb0] sm:$0xff]
      %v1992 = vld [vmem:[%s2 + $0xb8] sm:$0xff]
      %v1993 = vld [vmem:[%s2 + $0xc0] sm:$0xff]
      %v1994 = vld [vmem:[%s2 + $0xc8] sm:$0xff]
      %v1995 = vld [vmem:[%s2 + $0xd0] sm:$0xff]
      %v1996 = vld [vmem:[%s2 + $0xd8] sm:$0xff]
      %v1997 = vld [vmem:[%s2 + $0xe0] sm:$0xff]
      %v1998 = vld [vmem:[%s2 + $0xe8] sm:$0xff]
      %v1999 = vld [vmem:[%s2 + $0xf0] sm:$0xff]
      %v2000 = vld [vmem:[%s2 + $0xf8] sm:$0xff]
      %s2001 = scalar_lea.vmem %s4, 3
      %v2002 = vld [vmem:[%s2001] ss:$8 sm:$0x3]
      %v2004 = vlaneseq
      %v2005 = vshrl.u32 %v2004, 7
      %v2006 = vsub.s32 0, %v2005
      %v2007 = vrot.slane %v2002, %v2006
      %v2008 = vlaneseq
      %v2009 = vshrl.u32 %v2008, 7
      %v2010 = vsub.s32 1, %v2009
      %v2011 = vrot.slane %v2002, %v2010
      %v2046 = vunpack.c.l.b16 %v1969
      %v2047 = vunpack.c.h.b16 %v1969
      %v2048 = vunpack.c.l.b16 %v1970
      %v2049 = vunpack.c.h.b16 %v1970
      %v2050 = vunpack.c.l.b16 %v1971
      %v2051 = vunpack.c.h.b16 %v1971
      %v2052 = vunpack.c.l.b16 %v1972
      %v2053 = vunpack.c.h.b16 %v1972
      %v2054 = vunpack.c.l.b16 %v1973
      %v2055 = vunpack.c.h.b16 %v1973
      %v2056 = vunpack.c.l.b16 %v1974
      %v2057 = vunpack.c.h.b16 %v1974
      %v2058 = vunpack.c.l.b16 %v1975
      %v2059 = vunpack.c.h.b16 %v1975
      %v2060 = vunpack.c.l.b16 %v1976
      %v2061 = vunpack.c.h.b16 %v1976
      %v2062 = vunpack.c.l.b16 %v1977
      %v2063 = vunpack.c.h.b16 %v1977
      %v2064 = vunpack.c.l.b16 %v1978
      %v2065 = vunpack.c.h.b16 %v1978
      %v2066 = vunpack.c.l.b16 %v1979
      %v2067 = vunpack.c.h.b16 %v1979
      %v2068 = vunpack.c.l.b16 %v1980
      %v2069 = vunpack.c.h.b16 %v1980
      %v2070 = vunpack.c.l.b16 %v1981
      %v2071 = vunpack.c.h.b16 %v1981
      %v2072 = vunpack.c.l.b16 %v1982
      %v2073 = vunpack.c.h.b16 %v1982
      %v2074 = vunpack.c.l.b16 %v1983
      %v2075 = vunpack.c.h.b16 %v1983
      %v2076 = vunpack.c.l.b16 %v1984
      %v2077 = vunpack.c.h.b16 %v1984
      %v2078 = vunpack.c.l.b16 %v1985
      %v2079 = vunpack.c.h.b16 %v1985
      %v2080 = vunpack.c.l.b16 %v1986
      %v2081 = vunpack.c.h.b16 %v1986
      %v2082 = vunpack.c.l.b16 %v1987
      %v2083 = vunpack.c.h.b16 %v1987
      %v2084 = vunpack.c.l.b16 %v1988
      %v2085 = vunpack.c.h.b16 %v1988
      %v2086 = vunpack.c.l.b16 %v1989
      %v2087 = vunpack.c.h.b16 %v1989
      %v2088 = vunpack.c.l.b16 %v1990
      %v2089 = vunpack.c.h.b16 %v1990
      %v2090 = vunpack.c.l.b16 %v1991
      %v2091 = vunpack.c.h.b16 %v1991
      %v2092 = vunpack.c.l.b16 %v1992
      %v2093 = vunpack.c.h.b16 %v1992
      %v2094 = vunpack.c.l.b16 %v1993
      %v2095 = vunpack.c.h.b16 %v1993
      %v2096 = vunpack.c.l.b16 %v1994
      %v2097 = vunpack.c.h.b16 %v1994
      %v2098 = vunpack.c.l.b16 %v1995
      %v2099 = vunpack.c.h.b16 %v1995
      %v2100 = vunpack.c.l.b16 %v1996
      %v2101 = vunpack.c.h.b16 %v1996
      %v2102 = vunpack.c.l.b16 %v1997
      %v2103 = vunpack.c.h.b16 %v1997
      %v2104 = vunpack.c.l.b16 %v1998
      %v2105 = vunpack.c.h.b16 %v1998
      %v2106 = vunpack.c.l.b16 %v1999
      %v2107 = vunpack.c.h.b16 %v1999
      %v2108 = vunpack.c.l.b16 %v2000
      %v2109 = vunpack.c.h.b16 %v2000
      %v2110 = vpack.c.b16 %v2048, %v2046
      %v2111 = vpack.c.b16 %v2049, %v2047
      %v2112 = vpack.c.b16 %v2052, %v2050
      %v2113 = vpack.c.b16 %v2053, %v2051
      %v2114 = vpack.c.b16 %v2056, %v2054
      %v2115 = vpack.c.b16 %v2057, %v2055
      %v2116 = vpack.c.b16 %v2060, %v2058
      %v2117 = vpack.c.b16 %v2061, %v2059
      %v2118 = vpack.c.b16 %v2064, %v2062
      %v2119 = vpack.c.b16 %v2065, %v2063
      %v2120 = vpack.c.b16 %v2068, %v2066
      %v2121 = vpack.c.b16 %v2069, %v2067
      %v2122 = vpack.c.b16 %v2072, %v2070
      %v2123 = vpack.c.b16 %v2073, %v2071
      %v2124 = vpack.c.b16 %v2076, %v2074
      %v2125 = vpack.c.b16 %v2077, %v2075
      %v2126 = vpack.c.b16 %v2080, %v2078
      %v2127 = vpack.c.b16 %v2081, %v2079
      %v2128 = vpack.c.b16 %v2084, %v2082
      %v2129 = vpack.c.b16 %v2085, %v2083
      %v2130 = vpack.c.b16 %v2088, %v2086
      %v2131 = vpack.c.b16 %v2089, %v2087
      %v2132 = vpack.c.b16 %v2092, %v2090
      %v2133 = vpack.c.b16 %v2093, %v2091
      %v2134 = vpack.c.b16 %v2096, %v2094
      %v2135 = vpack.c.b16 %v2097, %v2095
      %v2136 = vpack.c.b16 %v2100, %v2098
      %v2137 = vpack.c.b16 %v2101, %v2099
      %v2138 = vpack.c.b16 %v2104, %v2102
      %v2139 = vpack.c.b16 %v2105, %v2103
      %v2140 = vpack.c.b16 %v2108, %v2106
      %v2141 = vpack.c.b16 %v2109, %v2107
      %2174 = vmatprep.subr.bf16.mxu0 %v2111
      %2175 = vmatpush1.bf16.msra.mxu0 %v2110
      %2176 = vmatprep.subr.bf16.mxu0 %v2113
      %2177 = vmatpush1.bf16.msra.mxu0 %v2112
      %2178 = vmatprep.subr.bf16.mxu0 %v2115
      %2179 = vmatpush1.bf16.msra.mxu0 %v2114
      %2180 = vmatprep.subr.bf16.mxu0 %v2117
      %2181 = vmatpush1.bf16.msra.mxu0 %v2116
      %2182 = vmatprep.subr.bf16.mxu0 %v2119
      %2183 = vmatpush1.bf16.msra.mxu0 %v2118
      %2184 = vmatprep.subr.bf16.mxu0 %v2121
      %2185 = vmatpush1.bf16.msra.mxu0 %v2120
      %2186 = vmatprep.subr.bf16.mxu0 %v2123
      %2187 = vmatpush1.bf16.msra.mxu0 %v2122
      %2188 = vmatprep.subr.bf16.mxu0 %v2125
      %2189 = vmatpush1.bf16.msra.mxu0 %v2124
      %2190 = vmatprep.subr.bf16.mxu0 %v2127
      %2191 = vmatpush1.bf16.msra.mxu0 %v2126
      %2192 = vmatprep.subr.bf16.mxu0 %v2129
      %2193 = vmatpush1.bf16.msra.mxu0 %v2128
      %2194 = vmatprep.subr.bf16.mxu0 %v2131
      %2195 = vmatpush1.bf16.msra.mxu0 %v2130
      %2196 = vmatprep.subr.bf16.mxu0 %v2133
      %2197 = vmatpush1.bf16.msra.mxu0 %v2132
      %2198 = vmatprep.subr.bf16.mxu0 %v2135
      %2199 = vmatpush1.bf16.msra.mxu0 %v2134
      %2200 = vmatprep.subr.bf16.mxu0 %v2137
      %2201 = vmatpush1.bf16.msra.mxu0 %v2136
      %2202 = vmatprep.subr.bf16.mxu0 %v2139
      %2203 = vmatpush1.bf16.msra.mxu0 %v2138
      %2204 = vmatprep.subr.bf16.mxu0 %v2141
      %2205 = vmatpush1.bf16.msra.mxu0 %v2140
      %2206 = vmatprep.mubr.bf16.mxu0 %v1938
      %2207 = vmatmul.mubr.bf16.gmra.mrb[0].mxu0 %v1937
      %v2208 = vpop.f32.mrb[0].mxu0
      %v2209 = vadd.f32 %v2007, %v2208
      %v2210 = vpop.f32.mrb[0].mxu0
      %v2211 = vadd.f32 %v2011, %v2210
      %v2212 = vpop.f32.mrb[0].mxu0
      %v2213 = vadd.f32 %v2007, %v2212
      %v2214 = vpop.f32.mrb[0].mxu0
      %v2215 = vadd.f32 %v2011, %v2214
      %2216 = vmatprep.mubr.bf16.mxu0 %v1940
      %2217 = vmatmul.mubr.bf16.gmra.mrb[0].mxu0 %v1939
      %v2218 = vpop.f32.mrb[0].mxu0
      %v2219 = vadd.f32 %v2007, %v2218
      %v2220 = vpop.f32.mrb[0].mxu0
      %v2221 = vadd.f32 %v2011, %v2220
      %v2222 = vpop.f32.mrb[0].mxu0
      %v2223 = vadd.f32 %v2007, %v2222
      %v2224 = vpop.f32.mrb[0].mxu0
      %v2225 = vadd.f32 %v2011, %v2224
      %2226 = vmatprep.mubr.bf16.mxu0 %v1942
      %2227 = vmatmul.mubr.bf16.gmra.mrb[0].mxu0 %v1941
      %v2228 = vpop.f32.mrb[0].mxu0
      %v2229 = vadd.f32 %v2007, %v2228
      %v2230 = vpop.f32.mrb[0].mxu0
      %v2231 = vadd.f32 %v2011, %v2230
      %v2232 = vpop.f32.mrb[0].mxu0
      %v2233 = vadd.f32 %v2007, %v2232
      %v2234 = vpop.f32.mrb[0].mxu0
      %v2235 = vadd.f32 %v2011, %v2234
      %2236 = vmatprep.mubr.bf16.mxu0 %v1944
      %2237 = vmatmul.mubr.bf16.gmra.mrb[0].mxu0 %v1943
      %v2238 = vpop.f32.mrb[0].mxu0
      %v2239 = vadd.f32 %v2007, %v2238
      %v2240 = vpop.f32.mrb[0].mxu0
      %v2241 = vadd.f32 %v2011, %v2240
      %v2242 = vpop.f32.mrb[0].mxu0
      %v2243 = vadd.f32 %v2007, %v2242
      %v2244 = vpop.f32.mrb[0].mxu0
      %v2245 = vadd.f32 %v2011, %v2244
      %2246 = vmatprep.mubr.bf16.mxu0 %v1946
      %2247 = vmatmul.mubr.bf16.gmra.mrb[0].mxu0 %v1945
      %v2248 = vpop.f32.mrb[0].mxu0
      %v2249 = vadd.f32 %v2007, %v2248
      %v2250 = vpop.f32.mrb[0].mxu0
      %v2251 = vadd.f32 %v2011, %v2250
      %v2252 = vpop.f32.mrb[0].mxu0
      %v2253 = vadd.f32 %v2007, %v2252
      %v2254 = vpop.f32.mrb[0].mxu0
      %v2255 = vadd.f32 %v2011, %v2254
      %2256 = vmatprep.mubr.bf16.mxu0 %v1948
      %2257 = vmatmul.mubr.bf16.gmra.mrb[0].mxu0 %v1947
      %v2258 = vpop.f32.mrb[0].mxu0
      %v2259 = vadd.f32 %v2007, %v2258
      %v2260 = vpop.f32.mrb[0].mxu0
      %v2261 = vadd.f32 %v2011, %v2260
      %v2262 = vpop.f32.mrb[0].mxu0
      %v2263 = vadd.f32 %v2007, %v2262
      %v2264 = vpop.f32.mrb[0].mxu0
      %v2265 = vadd.f32 %v2011, %v2264
      %2266 = vmatprep.mubr.bf16.mxu0 %v1950
      %2267 = vmatmul.mubr.bf16.gmra.mrb[0].mxu0 %v1949
      %v2268 = vpop.f32.mrb[0].mxu0
      %v2269 = vadd.f32 %v2007, %v2268
      %v2270 = vpop.f32.mrb[0].mxu0
      %v2271 = vadd.f32 %v2011, %v2270
      %v2272 = vpop.f32.mrb[0].mxu0
      %v2273 = vadd.f32 %v2007, %v2272
      %v2274 = vpop.f32.mrb[0].mxu0
      %v2275 = vadd.f32 %v2011, %v2274
      %2276 = vmatprep.mubr.bf16.mxu0 %v1952
      %2277 = vmatmul.mubr.bf16.gmra.mrb[0].mxu0 %v1951
      %v2278 = vpop.f32.mrb[0].mxu0
      %v2279 = vadd.f32 %v2007, %v2278
      %v2280 = vpop.f32.mrb[0].mxu0
      %v2281 = vadd.f32 %v2011, %v2280
      %v2282 = vpop.f32.mrb[0].mxu0
      %v2283 = vadd.f32 %v2007, %v2282
      %v2284 = vpop.f32.mrb[0].mxu0
      %v2285 = vadd.f32 %v2011, %v2284
      %2286 = vmatprep.mubr.bf16.mxu0 %v1954
      %2287 = vmatmul.mubr.bf16.gmra.mrb[0].mxu0 %v1953
      %v2288 = vpop.f32.mrb[0].mxu0
      %v2289 = vadd.f32 %v2007, %v2288
      %v2290 = vpop.f32.mrb[0].mxu0
      %v2291 = vadd.f32 %v2011, %v2290
      %v2292 = vpop.f32.mrb[0].mxu0
      %v2293 = vadd.f32 %v2007, %v2292
      %v2294 = vpop.f32.mrb[0].mxu0
      %v2295 = vadd.f32 %v2011, %v2294
      %2296 = vmatprep.mubr.bf16.mxu0 %v1956
      %2297 = vmatmul.mubr.bf16.gmra.mrb[0].mxu0 %v1955
      %v2298 = vpop.f32.mrb[0].mxu0
      %v2299 = vadd.f32 %v2007, %v2298
      %v2300 = vpop.f32.mrb[0].mxu0
      %v2301 = vadd.f32 %v2011, %v2300
      %v2302 = vpop.f32.mrb[0].mxu0
      %v2303 = vadd.f32 %v2007, %v2302
      %v2304 = vpop.f32.mrb[0].mxu0
      %v2305 = vadd.f32 %v2011, %v2304
      %2306 = vmatprep.mubr.bf16.mxu0 %v1958
      %2307 = vmatmul.mubr.bf16.gmra.mrb[0].mxu0 %v1957
      %v2308 = vpop.f32.mrb[0].mxu0
      %v2309 = vadd.f32 %v2007, %v2308
      %v2310 = vpop.f32.mrb[0].mxu0
      %v2311 = vadd.f32 %v2011, %v2310
      %v2312 = vpop.f32.mrb[0].mxu0
      %v2313 = vadd.f32 %v2007, %v2312
      %v2314 = vpop.f32.mrb[0].mxu0
      %v2315 = vadd.f32 %v2011, %v2314
      %2316 = vmatprep.mubr.bf16.mxu0 %v1960
      %2317 = vmatmul.mubr.bf16.gmra.mrb[0].mxu0 %v1959
      %v2318 = vpop.f32.mrb[0].mxu0
      %v2319 = vadd.f32 %v2007, %v2318
      %v2320 = vpop.f32.mrb[0].mxu0
      %v2321 = vadd.f32 %v2011, %v2320
      %v2322 = vpop.f32.mrb[0].mxu0
      %v2323 = vadd.f32 %v2007, %v2322
      %v2324 = vpop.f32.mrb[0].mxu0
      %v2325 = vadd.f32 %v2011, %v2324
      %2326 = vmatprep.mubr.bf16.mxu0 %v1962
      %2327 = vmatmul.mubr.bf16.gmra.mrb[0].mxu0 %v1961
      %v2328 = vpop.f32.mrb[0].mxu0
      %v2329 = vadd.f32 %v2007, %v2328
      %v2330 = vpop.f32.mrb[0].mxu0
      %v2331 = vadd.f32 %v2011, %v2330
      %v2332 = vpop.f32.mrb[0].mxu0
      %v2333 = vadd.f32 %v2007, %v2332
      %v2334 = vpop.f32.mrb[0].mxu0
      %v2335 = vadd.f32 %v2011, %v2334
      %2336 = vmatprep.mubr.bf16.mxu0 %v1964
      %2337 = vmatmul.mubr.bf16.gmra.mrb[0].mxu0 %v1963
      %v2338 = vpop.f32.mrb[0].mxu0
      %v2339 = vadd.f32 %v2007, %v2338
      %v2340 = vpop.f32.mrb[0].mxu0
      %v2341 = vadd.f32 %v2011, %v2340
      %v2342 = vpop.f32.mrb[0].mxu0
      %v2343 = vadd.f32 %v2007, %v2342
      %v2344 = vpop.f32.mrb[0].mxu0
      %v2345 = vadd.f32 %v2011, %v2344
      %2346 = vmatprep.mubr.bf16.mxu0 %v1966
      %2347 = vmatmul.mubr.bf16.gmra.mrb[0].mxu0 %v1965
      %v2348 = vpop.f32.mrb[0].mxu0
      %v2349 = vadd.f32 %v2007, %v2348
      %v2350 = vpop.f32.mrb[0].mxu0
      %v2351 = vadd.f32 %v2011, %v2350
      %v2352 = vpop.f32.mrb[0].mxu0
      %v2353 = vadd.f32 %v2007, %v2352
      %v2354 = vpop.f32.mrb[0].mxu0
      %v2355 = vadd.f32 %v2011, %v2354
      %2356 = vmatprep.mubr.bf16.mxu0 %v1968
      %2357 = vmatmul.mubr.bf16.gmra.mrb[0].mxu0 %v1967
      %v2358 = vpop.f32.mrb[0].mxu0
      %v2359 = vadd.f32 %v2007, %v2358
      %v2360 = vpop.f32.mrb[0].mxu0
      %v2361 = vadd.f32 %v2011, %v2360
      %v2362 = vpop.f32.mrb[0].mxu0
      %v2363 = vadd.f32 %v2007, %v2362
      %v2364 = vpop.f32.mrb[0].mxu0
      %v2365 = vadd.f32 %v2011, %v2364
      %2366 = vdwg.mxu0
      %vm2367 = vcmp.gt.f32.partialorder %v2209, 0.0
      %vm2368 = vcmp.gt.f32.partialorder %v2211, 0.0
      %vm2369 = vcmp.gt.f32.partialorder %v2213, 0.0
      %vm2370 = vcmp.gt.f32.partialorder %v2215, 0.0
      %vm2371 = vcmp.gt.f32.partialorder %v2219, 0.0
      %vm2372 = vcmp.gt.f32.partialorder %v2221, 0.0
      %vm2373 = vcmp.gt.f32.partialorder %v2223, 0.0
      %vm2374 = vcmp.gt.f32.partialorder %v2225, 0.0
      %vm2375 = vcmp.gt.f32.partialorder %v2229, 0.0
      %vm2376 = vcmp.gt.f32.partialorder %v2231, 0.0
      %vm2377 = vcmp.gt.f32.partialorder %v2233, 0.0
      %vm2378 = vcmp.gt.f32.partialorder %v2235, 0.0
      %vm2379 = vcmp.gt.f32.partialorder %v2239, 0.0
      %vm2380 = vcmp.gt.f32.partialorder %v2241, 0.0
      %vm2381 = vcmp.gt.f32.partialorder %v2243, 0.0
      %vm2382 = vcmp.gt.f32.partialorder %v2245, 0.0
      %vm2383 = vcmp.gt.f32.partialorder %v2249, 0.0
      %vm2384 = vcmp.gt.f32.partialorder %v2251, 0.0
      %vm2385 = vcmp.gt.f32.partialorder %v2253, 0.0
      %vm2386 = vcmp.gt.f32.partialorder %v2255, 0.0
      %vm2387 = vcmp.gt.f32.partialorder %v2259, 0.0
      %vm2388 = vcmp.gt.f32.partialorder %v2261, 0.0
      %vm2389 = vcmp.gt.f32.partialorder %v2263, 0.0
      %vm2390 = vcmp.gt.f32.partialorder %v2265, 0.0
      %vm2391 = vcmp.gt.f32.partialorder %v2269, 0.0
      %vm2392 = vcmp.gt.f32.partialorder %v2271, 0.0
      %vm2393 = vcmp.gt.f32.partialorder %v2273, 0.0
      %vm2394 = vcmp.gt.f32.partialorder %v2275, 0.0
      %vm2395 = vcmp.gt.f32.partialorder %v2279, 0.0
      %vm2396 = vcmp.gt.f32.partialorder %v2281, 0.0
      %vm2397 = vcmp.gt.f32.partialorder %v2283, 0.0
      %vm2398 = vcmp.gt.f32.partialorder %v2285, 0.0
      %vm2399 = vcmp.gt.f32.partialorder %v2289, 0.0
      %vm2400 = vcmp.gt.f32.partialorder %v2291, 0.0
      %vm2401 = vcmp.gt.f32.partialorder %v2293, 0.0
      %vm2402 = vcmp.gt.f32.partialorder %v2295, 0.0
      %vm2403 = vcmp.gt.f32.partialorder %v2299, 0.0
      %vm2404 = vcmp.gt.f32.partialorder %v2301, 0.0
      %vm2405 = vcmp.gt.f32.partialorder %v2303, 0.0
      %vm2406 = vcmp.gt.f32.partialorder %v2305, 0.0
      %vm2407 = vcmp.gt.f32.partialorder %v2309, 0.0
      %vm2408 = vcmp.gt.f32.partialorder %v2311, 0.0
      %vm2409 = vcmp.gt.f32.partialorder %v2313, 0.0
      %vm2410 = vcmp.gt.f32.partialorder %v2315, 0.0
      %vm2411 = vcmp.gt.f32.partialorder %v2319, 0.0
      %vm2412 = vcmp.gt.f32.partialorder %v2321, 0.0
      %vm2413 = vcmp.gt.f32.partialorder %v2323, 0.0
      %vm2414 = vcmp.gt.f32.partialorder %v2325, 0.0
      %vm2415 = vcmp.gt.f32.partialorder %v2329, 0.0
      %vm2416 = vcmp.gt.f32.partialorder %v2331, 0.0
      %vm2417 = vcmp.gt.f32.partialorder %v2333, 0.0
      %vm2418 = vcmp.gt.f32.partialorder %v2335, 0.0
      %vm2419 = vcmp.gt.f32.partialorder %v2339, 0.0
      %vm2420 = vcmp.gt.f32.partialorder %v2341, 0.0
      %vm2421 = vcmp.gt.f32.partialorder %v2343, 0.0
      %vm2422 = vcmp.gt.f32.partialorder %v2345, 0.0
      %vm2423 = vcmp.gt.f32.partialorder %v2349, 0.0
      %vm2424 = vcmp.gt.f32.partialorder %v2351, 0.0
      %vm2425 = vcmp.gt.f32.partialorder %v2353, 0.0
      %vm2426 = vcmp.gt.f32.partialorder %v2355, 0.0
      %vm2427 = vcmp.gt.f32.partialorder %v2359, 0.0
      %vm2428 = vcmp.gt.f32.partialorder %v2361, 0.0
      %vm2429 = vcmp.gt.f32.partialorder %v2363, 0.0
      %vm2430 = vcmp.gt.f32.partialorder %v2365, 0.0
      %v2431 = vmul.f32 %v2209, 1.442695
      %v2432 = vpow.pop %v2431
      %v2433 = vmul.f32 %v2211, 1.442695
      %v2434 = vpow.pop %v2433
      %v2435 = vmul.f32 %v2213, 1.442695
      %v2436 = vpow.pop %v2435
      %v2437 = vmul.f32 %v2215, 1.442695
      %v2438 = vpow.pop %v2437
      %v2439 = vmul.f32 %v2219, 1.442695
      %v2440 = vpow.pop %v2439
      %v2441 = vmul.f32 %v2221, 1.442695
      %v2442 = vpow.pop %v2441
      %v2443 = vmul.f32 %v2223, 1.442695
      %v2444 = vpow.pop %v2443
      %v2445 = vmul.f32 %v2225, 1.442695
      %v2446 = vpow.pop %v2445
      %v2447 = vmul.f32 %v2229, 1.442695
      %v2448 = vpow.pop %v2447
      %v2449 = vmul.f32 %v2231, 1.442695
      %v2450 = vpow.pop %v2449
      %v2451 = vmul.f32 %v2233, 1.442695
      %v2452 = vpow.pop %v2451
      %v2453 = vmul.f32 %v2235, 1.442695
      %v2454 = vpow.pop %v2453
      %v2455 = vmul.f32 %v2239, 1.442695
      %v2456 = vpow.pop %v2455
      %v2457 = vmul.f32 %v2241, 1.442695
      %v2458 = vpow.pop %v2457
      %v2459 = vmul.f32 %v2243, 1.442695
      %v2460 = vpow.pop %v2459
      %v2461 = vmul.f32 %v2245, 1.442695
      %v2462 = vpow.pop %v2461
      %v2463 = vmul.f32 %v2249, 1.442695
      %v2464 = vpow.pop %v2463
      %v2465 = vmul.f32 %v2251, 1.442695
      %v2466 = vpow.pop %v2465
      %v2467 = vmul.f32 %v2253, 1.442695
      %v2468 = vpow.pop %v2467
      %v2469 = vmul.f32 %v2255, 1.442695
      %v2470 = vpow.pop %v2469
      %v2471 = vmul.f32 %v2259, 1.442695
      %v2472 = vpow.pop %v2471
      %v2473 = vmul.f32 %v2261, 1.442695
      %v2474 = vpow.pop %v2473
      %v2475 = vmul.f32 %v2263, 1.442695
      %v2476 = vpow.pop %v2475
      %v2477 = vmul.f32 %v2265, 1.442695
      %v2478 = vpow.pop %v2477
      %v2479 = vmul.f32 %v2269, 1.442695
      %v2480 = vpow.pop %v2479
      %v2481 = vmul.f32 %v2271, 1.442695
      %v2482 = vpow.pop %v2481
      %v2483 = vmul.f32 %v2273, 1.442695
      %v2484 = vpow.pop %v2483
      %v2485 = vmul.f32 %v2275, 1.442695
      %v2486 = vpow.pop %v2485
      %v2487 = vmul.f32 %v2279, 1.442695
      %v2488 = vpow.pop %v2487
      %v2489 = vmul.f32 %v2281, 1.442695
      %v2490 = vpow.pop %v2489
      %v2491 = vmul.f32 %v2283, 1.442695
      %v2492 = vpow.pop %v2491
      %v2493 = vmul.f32 %v2285, 1.442695
      %v2494 = vpow.pop %v2493
      %v2495 = vmul.f32 %v2289, 1.442695
      %v2496 = vpow.pop %v2495
      %v2497 = vmul.f32 %v2291, 1.442695
      %v2498 = vpow.pop %v2497
      %v2499 = vmul.f32 %v2293, 1.442695
      %v2500 = vpow.pop %v2499
      %v2501 = vmul.f32 %v2295, 1.442695
      %v2502 = vpow.pop %v2501
      %v2503 = vmul.f32 %v2299, 1.442695
      %v2504 = vpow.pop %v2503
      %v2505 = vmul.f32 %v2301, 1.442695
      %v2506 = vpow.pop %v2505
      %v2507 = vmul.f32 %v2303, 1.442695
      %v2508 = vpow.pop %v2507
      %v2509 = vmul.f32 %v2305, 1.442695
      %v2510 = vpow.pop %v2509
      %v2511 = vmul.f32 %v2309, 1.442695
      %v2512 = vpow.pop %v2511
      %v2513 = vmul.f32 %v2311, 1.442695
      %v2514 = vpow.pop %v2513
      %v2515 = vmul.f32 %v2313, 1.442695
      %v2516 = vpow.pop %v2515
      %v2517 = vmul.f32 %v2315, 1.442695
      %v2518 = vpow.pop %v2517
      %v2519 = vmul.f32 %v2319, 1.442695
      %v2520 = vpow.pop %v2519
      %v2521 = vmul.f32 %v2321, 1.442695
      %v2522 = vpow.pop %v2521
      %v2523 = vmul.f32 %v2323, 1.442695
      %v2524 = vpow.pop %v2523
      %v2525 = vmul.f32 %v2325, 1.442695
      %v2526 = vpow.pop %v2525
      %v2527 = vmul.f32 %v2329, 1.442695
      %v2528 = vpow.pop %v2527
      %v2529 = vmul.f32 %v2331, 1.442695
      %v2530 = vpow.pop %v2529
      %v2531 = vmul.f32 %v2333, 1.442695
      %v2532 = vpow.pop %v2531
      %v2533 = vmul.f32 %v2335, 1.442695
      %v2534 = vpow.pop %v2533
      %v2535 = vmul.f32 %v2339, 1.442695
      %v2536 = vpow.pop %v2535
      %v2537 = vmul.f32 %v2341, 1.442695
      %v2538 = vpow.pop %v2537
      %v2539 = vmul.f32 %v2343, 1.442695
      %v2540 = vpow.pop %v2539
      %v2541 = vmul.f32 %v2345, 1.442695
      %v2542 = vpow.pop %v2541
      %v2543 = vmul.f32 %v2349, 1.442695
      %v2544 = vpow.pop %v2543
      %v2545 = vmul.f32 %v2351, 1.442695
      %v2546 = vpow.pop %v2545
      %v2547 = vmul.f32 %v2353, 1.442695
      %v2548 = vpow.pop %v2547
      %v2549 = vmul.f32 %v2355, 1.442695
      %v2550 = vpow.pop %v2549
      %v2551 = vmul.f32 %v2359, 1.442695
      %v2552 = vpow.pop %v2551
      %v2553 = vmul.f32 %v2361, 1.442695
      %v2554 = vpow.pop %v2553
      %v2555 = vmul.f32 %v2363, 1.442695
      %v2556 = vpow.pop %v2555
      %v2557 = vmul.f32 %v2365, 1.442695
      %v2558 = vpow.pop %v2557
      %v2559 = vsub.f32 %v2432, 1.0
      %v2560 = vsub.f32 %v2434, 1.0
      %v2561 = vsub.f32 %v2436, 1.0
      %v2562 = vsub.f32 %v2438, 1.0
      %v2563 = vsub.f32 %v2440, 1.0
      %v2564 = vsub.f32 %v2442, 1.0
      %v2565 = vsub.f32 %v2444, 1.0
      %v2566 = vsub.f32 %v2446, 1.0
      %v2567 = vsub.f32 %v2448, 1.0
      %v2568 = vsub.f32 %v2450, 1.0
      %v2569 = vsub.f32 %v2452, 1.0
      %v2570 = vsub.f32 %v2454, 1.0
      %v2571 = vsub.f32 %v2456, 1.0
      %v2572 = vsub.f32 %v2458, 1.0
      %v2573 = vsub.f32 %v2460, 1.0
      %v2574 = vsub.f32 %v2462, 1.0
      %v2575 = vsub.f32 %v2464, 1.0
      %v2576 = vsub.f32 %v2466, 1.0
      %v2577 = vsub.f32 %v2468, 1.0
      %v2578 = vsub.f32 %v2470, 1.0
      %v2579 = vsub.f32 %v2472, 1.0
      %v2580 = vsub.f32 %v2474, 1.0
      %v2581 = vsub.f32 %v2476, 1.0
      %v2582 = vsub.f32 %v2478, 1.0
      %v2583 = vsub.f32 %v2480, 1.0
      %v2584 = vsub.f32 %v2482, 1.0
      %v2585 = vsub.f32 %v2484, 1.0
      %v2586 = vsub.f32 %v2486, 1.0
      %v2587 = vsub.f32 %v2488, 1.0
      %v2588 = vsub.f32 %v2490, 1.0
      %v2589 = vsub.f32 %v2492, 1.0
      %v2590 = vsub.f32 %v2494, 1.0
      %v2591 = vsub.f32 %v2496, 1.0
      %v2592 = vsub.f32 %v2498, 1.0
      %v2593 = vsub.f32 %v2500, 1.0
      %v2594 = vsub.f32 %v2502, 1.0
      %v2595 = vsub.f32 %v2504, 1.0
      %v2596 = vsub.f32 %v2506, 1.0
      %v2597 = vsub.f32 %v2508, 1.0
      %v2598 = vsub.f32 %v2510, 1.0
      %v2599 = vsub.f32 %v2512, 1.0
      %v2600 = vsub.f32 %v2514, 1.0
      %v2601 = vsub.f32 %v2516, 1.0
      %v2602 = vsub.f32 %v2518, 1.0
      %v2603 = vsub.f32 %v2520, 1.0
      %v2604 = vsub.f32 %v2522, 1.0
      %v2605 = vsub.f32 %v2524, 1.0
      %v2606 = vsub.f32 %v2526, 1.0
      %v2607 = vsub.f32 %v2528, 1.0
      %v2608 = vsub.f32 %v2530, 1.0
      %v2609 = vsub.f32 %v2532, 1.0
      %v2610 = vsub.f32 %v2534, 1.0
      %v2611 = vsub.f32 %v2536, 1.0
      %v2612 = vsub.f32 %v2538, 1.0
      %v2613 = vsub.f32 %v2540, 1.0
      %v2614 = vsub.f32 %v2542, 1.0
      %v2615 = vsub.f32 %v2544, 1.0
      %v2616 = vsub.f32 %v2546, 1.0
      %v2617 = vsub.f32 %v2548, 1.0
      %v2618 = vsub.f32 %v2550, 1.0
      %v2619 = vsub.f32 %v2552, 1.0
      %v2620 = vsub.f32 %v2554, 1.0
      %v2621 = vsub.f32 %v2556, 1.0
      %v2622 = vsub.f32 %v2558, 1.0
      %v2623 = vsel %vm2367, %v2209, %v2559
      %v2624 = vsel %vm2368, %v2211, %v2560
      %v2625 = vsel %vm2369, %v2213, %v2561
      %v2626 = vsel %vm2370, %v2215, %v2562
      %v2627 = vsel %vm2371, %v2219, %v2563
      %v2628 = vsel %vm2372, %v2221, %v2564
      %v2629 = vsel %vm2373, %v2223, %v2565
      %v2630 = vsel %vm2374, %v2225, %v2566
      %v2631 = vsel %vm2375, %v2229, %v2567
      %v2632 = vsel %vm2376, %v2231, %v2568
      %v2633 = vsel %vm2377, %v2233, %v2569
      %v2634 = vsel %vm2378, %v2235, %v2570
      %v2635 = vsel %vm2379, %v2239, %v2571
      %v2636 = vsel %vm2380, %v2241, %v2572
      %v2637 = vsel %vm2381, %v2243, %v2573
      %v2638 = vsel %vm2382, %v2245, %v2574
      %v2639 = vsel %vm2383, %v2249, %v2575
      %v2640 = vsel %vm2384, %v2251, %v2576
      %v2641 = vsel %vm2385, %v2253, %v2577
      %v2642 = vsel %vm2386, %v2255, %v2578
      %v2643 = vsel %vm2387, %v2259, %v2579
      %v2644 = vsel %vm2388, %v2261, %v2580
      %v2645 = vsel %vm2389, %v2263, %v2581
      %v2646 = vsel %vm2390, %v2265, %v2582
      %v2647 = vsel %vm2391, %v2269, %v2583
      %v2648 = vsel %vm2392, %v2271, %v2584
      %v2649 = vsel %vm2393, %v2273, %v2585
      %v2650 = vsel %vm2394, %v2275, %v2586
      %v2651 = vsel %vm2395, %v2279, %v2587
      %v2652 = vsel %vm2396, %v2281, %v2588
      %v2653 = vsel %vm2397, %v2283, %v2589
      %v2654 = vsel %vm2398, %v2285, %v2590
      %v2655 = vsel %vm2399, %v2289, %v2591
      %v2656 = vsel %vm2400, %v2291, %v2592
      %v2657 = vsel %vm2401, %v2293, %v2593
      %v2658 = vsel %vm2402, %v2295, %v2594
      %v2659 = vsel %vm2403, %v2299, %v2595
      %v2660 = vsel %vm2404, %v2301, %v2596
      %v2661 = vsel %vm2405, %v2303, %v2597
      %v2662 = vsel %vm2406, %v2305, %v2598
      %v2663 = vsel %vm2407, %v2309, %v2599
      %v2664 = vsel %vm2408, %v2311, %v2600
      %v2665 = vsel %vm2409, %v2313, %v2601
      %v2666 = vsel %vm2410, %v2315, %v2602
      %v2667 = vsel %vm2411, %v2319, %v2603
      %v2668 = vsel %vm2412, %v2321, %v2604
      %v2669 = vsel %vm2413, %v2323, %v2605
      %v2670 = vsel %vm2414, %v2325, %v2606
      %v2671 = vsel %vm2415, %v2329, %v2607
      %v2672 = vsel %vm2416, %v2331, %v2608
      %v2673 = vsel %vm2417, %v2333, %v2609
      %v2674 = vsel %vm2418, %v2335, %v2610
      %v2675 = vsel %vm2419, %v2339, %v2611
      %v2676 = vsel %vm2420, %v2341, %v2612
      %v2677 = vsel %vm2421, %v2343, %v2613
      %v2678 = vsel %vm2422, %v2345, %v2614
      %v2679 = vsel %vm2423, %v2349, %v2615
      %v2680 = vsel %vm2424, %v2351, %v2616
      %v2681 = vsel %vm2425, %v2353, %v2617
      %v2682 = vsel %vm2426, %v2355, %v2618
      %v2683 = vsel %vm2427, %v2359, %v2619
      %v2684 = vsel %vm2428, %v2361, %v2620
      %v2685 = vsel %vm2429, %v2363, %v2621
      %v2686 = vsel %vm2430, %v2365, %v2622
      %v2687 = vpack.c.bf16 %v2625, %v2623
      %v2688 = vpack.c.bf16 %v2626, %v2624
      %v2689 = vpack.c.bf16 %v2629, %v2627
      %v2690 = vpack.c.bf16 %v2630, %v2628
      %v2691 = vpack.c.bf16 %v2633, %v2631
      %v2692 = vpack.c.bf16 %v2634, %v2632
      %v2693 = vpack.c.bf16 %v2637, %v2635
      %v2694 = vpack.c.bf16 %v2638, %v2636
      %v2695 = vpack.c.bf16 %v2641, %v2639
      %v2696 = vpack.c.bf16 %v2642, %v2640
      %v2697 = vpack.c.bf16 %v2645, %v2643
      %v2698 = vpack.c.bf16 %v2646, %v2644
      %v2699 = vpack.c.bf16 %v2649, %v2647
      %v2700 = vpack.c.bf16 %v2650, %v2648
      %v2701 = vpack.c.bf16 %v2653, %v2651
      %v2702 = vpack.c.bf16 %v2654, %v2652
      %v2703 = vpack.c.bf16 %v2657, %v2655
      %v2704 = vpack.c.bf16 %v2658, %v2656
      %v2705 = vpack.c.bf16 %v2661, %v2659
      %v2706 = vpack.c.bf16 %v2662, %v2660
      %v2707 = vpack.c.bf16 %v2665, %v2663
      %v2708 = vpack.c.bf16 %v2666, %v2664
      %v2709 = vpack.c.bf16 %v2669, %v2667
      %v2710 = vpack.c.bf16 %v2670, %v2668
      %v2711 = vpack.c.bf16 %v2673, %v2671
      %v2712 = vpack.c.bf16 %v2674, %v2672
      %v2713 = vpack.c.bf16 %v2677, %v2675
      %v2714 = vpack.c.bf16 %v2678, %v2676
      %v2715 = vpack.c.bf16 %v2681, %v2679
      %v2716 = vpack.c.bf16 %v2682, %v2680
      %v2717 = vpack.c.bf16 %v2685, %v2683
      %v2718 = vpack.c.bf16 %v2686, %v2684
      %s2719 = scalar_lea.vmem %s2, 256
      %v2720 = vld [vmem:[%s2719] sm:$0xff]
      %v2721 = vld [vmem:[%s2719 + $0x8] sm:$0xff]
      %v2722 = vld [vmem:[%s2719 + $0x10] sm:$0xff]
      %v2723 = vld [vmem:[%s2719 + $0x18] sm:$0xff]
      %v2724 = vld [vmem:[%s2719 + $0x20] sm:$0xff]
      %v2725 = vld [vmem:[%s2719 + $0x28] sm:$0xff]
      %v2726 = vld [vmem:[%s2719 + $0x30] sm:$0xff]
      %v2727 = vld [vmem:[%s2719 + $0x38] sm:$0xff]
      %v2728 = vld [vmem:[%s2719 + $0x40] sm:$0xff]
      %v2729 = vld [vmem:[%s2719 + $0x48] sm:$0xff]
      %v2730 = vld [vmem:[%s2719 + $0x50] sm:$0xff]
      %v2731 = vld [vmem:[%s2719 + $0x58] sm:$0xff]
      %v2732 = vld [vmem:[%s2719 + $0x60] sm:$0xff]
      %v2733 = vld [vmem:[%s2719 + $0x68] sm:$0xff]
      %v2734 = vld [vmem:[%s2719 + $0x70] sm:$0xff]
      %v2735 = vld [vmem:[%s2719 + $0x78] sm:$0xff]
      %v2736 = vld [vmem:[%s2719 + $0x80] sm:$0xff]
      %v2737 = vld [vmem:[%s2719 + $0x88] sm:$0xff]
      %v2738 = vld [vmem:[%s2719 + $0x90] sm:$0xff]
      %v2739 = vld [vmem:[%s2719 + $0x98] sm:$0xff]
      %v2740 = vld [vmem:[%s2719 + $0xa0] sm:$0xff]
      %v2741 = vld [vmem:[%s2719 + $0xa8] sm:$0xff]
      %v2742 = vld [vmem:[%s2719 + $0xb0] sm:$0xff]
      %v2743 = vld [vmem:[%s2719 + $0xb8] sm:$0xff]
      %v2744 = vld [vmem:[%s2719 + $0xc0] sm:$0xff]
      %v2745 = vld [vmem:[%s2719 + $0xc8] sm:$0xff]
      %v2746 = vld [vmem:[%s2719 + $0xd0] sm:$0xff]
      %v2747 = vld [vmem:[%s2719 + $0xd8] sm:$0xff]
      %v2748 = vld [vmem:[%s2719 + $0xe0] sm:$0xff]
      %v2749 = vld [vmem:[%s2719 + $0xe8] sm:$0xff]
      %v2750 = vld [vmem:[%s2719 + $0xf0] sm:$0xff]
      %v2751 = vld [vmem:[%s2719 + $0xf8] sm:$0xff]
      %v2784 = vunpack.c.l.b16 %v2720
      %v2785 = vunpack.c.h.b16 %v2720
      %v2786 = vunpack.c.l.b16 %v2721
      %v2787 = vunpack.c.h.b16 %v2721
      %v2788 = vunpack.c.l.b16 %v2722
      %v2789 = vunpack.c.h.b16 %v2722
      %v2790 = vunpack.c.l.b16 %v2723
      %v2791 = vunpack.c.h.b16 %v2723
      %v2792 = vunpack.c.l.b16 %v2724
      %v2793 = vunpack.c.h.b16 %v2724
      %v2794 = vunpack.c.l.b16 %v2725
      %v2795 = vunpack.c.h.b16 %v2725
      %v2796 = vunpack.c.l.b16 %v2726
      %v2797 = vunpack.c.h.b16 %v2726
      %v2798 = vunpack.c.l.b16 %v2727
      %v2799 = vunpack.c.h.b16 %v2727
      %v2800 = vunpack.c.l.b16 %v2728
      %v2801 = vunpack.c.h.b16 %v2728
      %v2802 = vunpack.c.l.b16 %v2729
      %v2803 = vunpack.c.h.b16 %v2729
      %v2804 = vunpack.c.l.b16 %v2730
      %v2805 = vunpack.c.h.b16 %v2730
      %v2806 = vunpack.c.l.b16 %v2731
      %v2807 = vunpack.c.h.b16 %v2731
      %v2808 = vunpack.c.l.b16 %v2732
      %v2809 = vunpack.c.h.b16 %v2732
      %v2810 = vunpack.c.l.b16 %v2733
      %v2811 = vunpack.c.h.b16 %v2733
      %v2812 = vunpack.c.l.b16 %v2734
      %v2813 = vunpack.c.h.b16 %v2734
      %v2814 = vunpack.c.l.b16 %v2735
      %v2815 = vunpack.c.h.b16 %v2735
      %v2816 = vunpack.c.l.b16 %v2736
      %v2817 = vunpack.c.h.b16 %v2736
      %v2818 = vunpack.c.l.b16 %v2737
      %v2819 = vunpack.c.h.b16 %v2737
      %v2820 = vunpack.c.l.b16 %v2738
      %v2821 = vunpack.c.h.b16 %v2738
      %v2822 = vunpack.c.l.b16 %v2739
      %v2823 = vunpack.c.h.b16 %v2739
      %v2824 = vunpack.c.l.b16 %v2740
      %v2825 = vunpack.c.h.b16 %v2740
      %v2826 = vunpack.c.l.b16 %v2741
      %v2827 = vunpack.c.h.b16 %v2741
      %v2828 = vunpack.c.l.b16 %v2742
      %v2829 = vunpack.c.h.b16 %v2742
      %v2830 = vunpack.c.l.b16 %v2743
      %v2831 = vunpack.c.h.b16 %v2743
      %v2832 = vunpack.c.l.b16 %v2744
      %v2833 = vunpack.c.h.b16 %v2744
      %v2834 = vunpack.c.l.b16 %v2745
      %v2835 = vunpack.c.h.b16 %v2745
      %v2836 = vunpack.c.l.b16 %v2746
      %v2837 = vunpack.c.h.b16 %v2746
      %v2838 = vunpack.c.l.b16 %v2747
      %v2839 = vunpack.c.h.b16 %v2747
      %v2840 = vunpack.c.l.b16 %v2748
      %v2841 = vunpack.c.h.b16 %v2748
      %v2842 = vunpack.c.l.b16 %v2749
      %v2843 = vunpack.c.h.b16 %v2749
      %v2844 = vunpack.c.l.b16 %v2750
      %v2845 = vunpack.c.h.b16 %v2750
      %v2846 = vunpack.c.l.b16 %v2751
      %v2847 = vunpack.c.h.b16 %v2751
      %v2848 = vpack.c.b16 %v2786, %v2784
      %v2849 = vpack.c.b16 %v2787, %v2785
      %v2850 = vpack.c.b16 %v2790, %v2788
      %v2851 = vpack.c.b16 %v2791, %v2789
      %v2852 = vpack.c.b16 %v2794, %v2792
      %v2853 = vpack.c.b16 %v2795, %v2793
      %v2854 = vpack.c.b16 %v2798, %v2796
      %v2855 = vpack.c.b16 %v2799, %v2797
      %v2856 = vpack.c.b16 %v2802, %v2800
      %v2857 = vpack.c.b16 %v2803, %v2801
      %v2858 = vpack.c.b16 %v2806, %v2804
      %v2859 = vpack.c.b16 %v2807, %v2805
      %v2860 = vpack.c.b16 %v2810, %v2808
      %v2861 = vpack.c.b16 %v2811, %v2809
      %v2862 = vpack.c.b16 %v2814, %v2812
      %v2863 = vpack.c.b16 %v2815, %v2813
      %v2864 = vpack.c.b16 %v2818, %v2816
      %v2865 = vpack.c.b16 %v2819, %v2817
      %v2866 = vpack.c.b16 %v2822, %v2820
      %v2867 = vpack.c.b16 %v2823, %v2821
      %v2868 = vpack.c.b16 %v2826, %v2824
      %v2869 = vpack.c.b16 %v2827, %v2825
      %v2870 = vpack.c.b16 %v2830, %v2828
      %v2871 = vpack.c.b16 %v2831, %v2829
      %v2872 = vpack.c.b16 %v2834, %v2832
      %v2873 = vpack.c.b16 %v2835, %v2833
      %v2874 = vpack.c.b16 %v2838, %v2836
      %v2875 = vpack.c.b16 %v2839, %v2837
      %v2876 = vpack.c.b16 %v2842, %v2840
      %v2877 = vpack.c.b16 %v2843, %v2841
      %v2878 = vpack.c.b16 %v2846, %v2844
      %v2879 = vpack.c.b16 %v2847, %v2845
      %2912 = vmatprep.subr.bf16.mxu0 %v2849
      %2913 = vmatpush1.bf16.msra.mxu0 %v2848
      %2914 = vmatprep.subr.bf16.mxu0 %v2851
      %2915 = vmatpush1.bf16.msra.mxu0 %v2850
      %2916 = vmatprep.subr.bf16.mxu0 %v2853
      %2917 = vmatpush1.bf16.msra.mxu0 %v2852
      %2918 = vmatprep.subr.bf16.mxu0 %v2855
      %2919 = vmatpush1.bf16.msra.mxu0 %v2854
      %2920 = vmatprep.subr.bf16.mxu0 %v2857
      %2921 = vmatpush1.bf16.msra.mxu0 %v2856
      %2922 = vmatprep.subr.bf16.mxu0 %v2859
      %2923 = vmatpush1.bf16.msra.mxu0 %v2858
      %2924 = vmatprep.subr.bf16.mxu0 %v2861
      %2925 = vmatpush1.bf16.msra.mxu0 %v2860
      %2926 = vmatprep.subr.bf16.mxu0 %v2863
      %2927 = vmatpush1.bf16.msra.mxu0 %v2862
      %2928 = vmatprep.subr.bf16.mxu0 %v2865
      %2929 = vmatpush1.bf16.msra.mxu0 %v2864
      %2930 = vmatprep.subr.bf16.mxu0 %v2867
      %2931 = vmatpush1.bf16.msra.mxu0 %v2866
      %2932 = vmatprep.subr.bf16.mxu0 %v2869
      %2933 = vmatpush1.bf16.msra.mxu0 %v2868
      %2934 = vmatprep.subr.bf16.mxu0 %v2871
      %2935 = vmatpush1.bf16.msra.mxu0 %v2870
      %2936 = vmatprep.subr.bf16.mxu0 %v2873
      %2937 = vmatpush1.bf16.msra.mxu0 %v2872
      %2938 = vmatprep.subr.bf16.mxu0 %v2875
      %2939 = vmatpush1.bf16.msra.mxu0 %v2874
      %2940 = vmatprep.subr.bf16.mxu0 %v2877
      %2941 = vmatpush1.bf16.msra.mxu0 %v2876
      %2942 = vmatprep.subr.bf16.mxu0 %v2879
      %2943 = vmatpush1.bf16.msra.mxu0 %v2878
      %2944 = vmatprep.mubr.bf16.mxu0 %v2688
      %2945 = vmatmul.mubr.bf16.gmra.mrb[0].mxu0 %v2687
      %v2946 = vpop.f32.mrb[0].mxu0
      %v2947 = vadd.f32 0.0, %v2946
      %v2948 = vpop.f32.mrb[0].mxu0
      %v2949 = vadd.f32 0.0, %v2948
      %v2950 = vpop.f32.mrb[0].mxu0
      %v2951 = vadd.f32 0.0, %v2950
      %v2952 = vpop.f32.mrb[0].mxu0
      %v2953 = vadd.f32 0.0, %v2952
      %2954 = vmatprep.mubr.bf16.mxu0 %v2690
      %2955 = vmatmul.mubr.bf16.gmra.mrb[0].mxu0 %v2689
      %v2956 = vpop.f32.mrb[0].mxu0
      %v2957 = vadd.f32 0.0, %v2956
      %v2958 = vpop.f32.mrb[0].mxu0
      %v2959 = vadd.f32 0.0, %v2958
      %v2960 = vpop.f32.mrb[0].mxu0
      %v2961 = vadd.f32 0.0, %v2960
      %v2962 = vpop.f32.mrb[0].mxu0
      %v2963 = vadd.f32 0.0, %v2962
      %2964 = vmatprep.mubr.bf16.mxu0 %v2692
      %2965 = vmatmul.mubr.bf16.gmra.mrb[0].mxu0 %v2691
      %v2966 = vpop.f32.mrb[0].mxu0
      %v2967 = vadd.f32 0.0, %v2966
      %v2968 = vpop.f32.mrb[0].mxu0
      %v2969 = vadd.f32 0.0, %v2968
      %v2970 = vpop.f32.mrb[0].mxu0
      %v2971 = vadd.f32 0.0, %v2970
      %v2972 = vpop.f32.mrb[0].mxu0
      %v2973 = vadd.f32 0.0, %v2972
      %2974 = vmatprep.mubr.bf16.mxu0 %v2694
      %2975 = vmatmul.mubr.bf16.gmra.mrb[0].mxu0 %v2693
      %v2976 = vpop.f32.mrb[0].mxu0
      %v2977 = vadd.f32 0.0, %v2976
      %v2978 = vpop.f32.mrb[0].mxu0
      %v2979 = vadd.f32 0.0, %v2978
      %v2980 = vpop.f32.mrb[0].mxu0
      %v2981 = vadd.f32 0.0, %v2980
      %v2982 = vpop.f32.mrb[0].mxu0
      %v2983 = vadd.f32 0.0, %v2982
      %2984 = vmatprep.mubr.bf16.mxu0 %v2696
      %2985 = vmatmul.mubr.bf16.gmra.mrb[0].mxu0 %v2695
      %v2986 = vpop.f32.mrb[0].mxu0
      %v2987 = vadd.f32 0.0, %v2986
      %v2988 = vpop.f32.mrb[0].mxu0
      %v2989 = vadd.f32 0.0, %v2988
      %v2990 = vpop.f32.mrb[0].mxu0
      %v2991 = vadd.f32 0.0, %v2990
      %v2992 = vpop.f32.mrb[0].mxu0
      %v2993 = vadd.f32 0.0, %v2992
      %2994 = vmatprep.mubr.bf16.mxu0 %v2698
      %2995 = vmatmul.mubr.bf16.gmra.mrb[0].mxu0 %v2697
      %v2996 = vpop.f32.mrb[0].mxu0
      %v2997 = vadd.f32 0.0, %v2996
      %v2998 = vpop.f32.mrb[0].mxu0
      %v2999 = vadd.f32 0.0, %v2998
      %v3000 = vpop.f32.mrb[0].mxu0
      %v3001 = vadd.f32 0.0, %v3000
      %v3002 = vpop.f32.mrb[0].mxu0
      %v3003 = vadd.f32 0.0, %v3002
      %3004 = vmatprep.mubr.bf16.mxu0 %v2700
      %3005 = vmatmul.mubr.bf16.gmra.mrb[0].mxu0 %v2699
      %v3006 = vpop.f32.mrb[0].mxu0
      %v3007 = vadd.f32 0.0, %v3006
      %v3008 = vpop.f32.mrb[0].mxu0
      %v3009 = vadd.f32 0.0, %v3008
      %v3010 = vpop.f32.mrb[0].mxu0
      %v3011 = vadd.f32 0.0, %v3010
      %v3012 = vpop.f32.mrb[0].mxu0
      %v3013 = vadd.f32 0.0, %v3012
      %3014 = vmatprep.mubr.bf16.mxu0 %v2702
      %3015 = vmatmul.mubr.bf16.gmra.mrb[0].mxu0 %v2701
      %v3016 = vpop.f32.mrb[0].mxu0
      %v3017 = vadd.f32 0.0, %v3016
      %v3018 = vpop.f32.mrb[0].mxu0
      %v3019 = vadd.f32 0.0, %v3018
      %v3020 = vpop.f32.mrb[0].mxu0
      %v3021 = vadd.f32 0.0, %v3020
      %v3022 = vpop.f32.mrb[0].mxu0
      %v3023 = vadd.f32 0.0, %v3022
      %3024 = vmatprep.mubr.bf16.mxu0 %v2704
      %3025 = vmatmul.mubr.bf16.gmra.mrb[0].mxu0 %v2703
      %v3026 = vpop.f32.mrb[0].mxu0
      %v3027 = vadd.f32 0.0, %v3026
      %v3028 = vpop.f32.mrb[0].mxu0
      %v3029 = vadd.f32 0.0, %v3028
      %v3030 = vpop.f32.mrb[0].mxu0
      %v3031 = vadd.f32 0.0, %v3030
      %v3032 = vpop.f32.mrb[0].mxu0
      %v3033 = vadd.f32 0.0, %v3032
      %3034 = vmatprep.mubr.bf16.mxu0 %v2706
      %3035 = vmatmul.mubr.bf16.gmra.mrb[0].mxu0 %v2705
      %v3036 = vpop.f32.mrb[0].mxu0
      %v3037 = vadd.f32 0.0, %v3036
      %v3038 = vpop.f32.mrb[0].mxu0
      %v3039 = vadd.f32 0.0, %v3038
      %v3040 = vpop.f32.mrb[0].mxu0
      %v3041 = vadd.f32 0.0, %v3040
      %v3042 = vpop.f32.mrb[0].mxu0
      %v3043 = vadd.f32 0.0, %v3042
      %3044 = vmatprep.mubr.bf16.mxu0 %v2708
      %3045 = vmatmul.mubr.bf16.gmra.mrb[0].mxu0 %v2707
      %v3046 = vpop.f32.mrb[0].mxu0
      %v3047 = vadd.f32 0.0, %v3046
      %v3048 = vpop.f32.mrb[0].mxu0
      %v3049 = vadd.f32 0.0, %v3048
      %v3050 = vpop.f32.mrb[0].mxu0
      %v3051 = vadd.f32 0.0, %v3050
      %v3052 = vpop.f32.mrb[0].mxu0
      %v3053 = vadd.f32 0.0, %v3052
      %3054 = vmatprep.mubr.bf16.mxu0 %v2710
      %3055 = vmatmul.mubr.bf16.gmra.mrb[0].mxu0 %v2709
      %v3056 = vpop.f32.mrb[0].mxu0
      %v3057 = vadd.f32 0.0, %v3056
      %v3058 = vpop.f32.mrb[0].mxu0
      %v3059 = vadd.f32 0.0, %v3058
      %v3060 = vpop.f32.mrb[0].mxu0
      %v3061 = vadd.f32 0.0, %v3060
      %v3062 = vpop.f32.mrb[0].mxu0
      %v3063 = vadd.f32 0.0, %v3062
      %3064 = vmatprep.mubr.bf16.mxu0 %v2712
      %3065 = vmatmul.mubr.bf16.gmra.mrb[0].mxu0 %v2711
      %v3066 = vpop.f32.mrb[0].mxu0
      %v3067 = vadd.f32 0.0, %v3066
      %v3068 = vpop.f32.mrb[0].mxu0
      %v3069 = vadd.f32 0.0, %v3068
      %v3070 = vpop.f32.mrb[0].mxu0
      %v3071 = vadd.f32 0.0, %v3070
      %v3072 = vpop.f32.mrb[0].mxu0
      %v3073 = vadd.f32 0.0, %v3072
      %3074 = vmatprep.mubr.bf16.mxu0 %v2714
      %3075 = vmatmul.mubr.bf16.gmra.mrb[0].mxu0 %v2713
      %v3076 = vpop.f32.mrb[0].mxu0
      %v3077 = vadd.f32 0.0, %v3076
      %v3078 = vpop.f32.mrb[0].mxu0
      %v3079 = vadd.f32 0.0, %v3078
      %v3080 = vpop.f32.mrb[0].mxu0
      %v3081 = vadd.f32 0.0, %v3080
      %v3082 = vpop.f32.mrb[0].mxu0
      %v3083 = vadd.f32 0.0, %v3082
      %3084 = vmatprep.mubr.bf16.mxu0 %v2716
      %3085 = vmatmul.mubr.bf16.gmra.mrb[0].mxu0 %v2715
      %v3086 = vpop.f32.mrb[0].mxu0
      %v3087 = vadd.f32 0.0, %v3086
      %v3088 = vpop.f32.mrb[0].mxu0
      %v3089 = vadd.f32 0.0, %v3088
      %v3090 = vpop.f32.mrb[0].mxu0
      %v3091 = vadd.f32 0.0, %v3090
      %v3092 = vpop.f32.mrb[0].mxu0
      %v3093 = vadd.f32 0.0, %v3092
      %3094 = vmatprep.mubr.bf16.mxu0 %v2718
      %3095 = vmatmul.mubr.bf16.gmra.mrb[0].mxu0 %v2717
      %v3096 = vpop.f32.mrb[0].mxu0
      %v3097 = vadd.f32 0.0, %v3096
      %v3098 = vpop.f32.mrb[0].mxu0
      %v3099 = vadd.f32 0.0, %v3098
      %v3100 = vpop.f32.mrb[0].mxu0
      %v3101 = vadd.f32 0.0, %v3100
      %v3102 = vpop.f32.mrb[0].mxu0
      %v3103 = vadd.f32 0.0, %v3102
      %3104 = vdwg.mxu0
      %v3105 = vadd.f32 %v793, %v2947
      %v3106 = vadd.f32 %v795, %v2949
      %v3107 = vadd.f32 %v797, %v2951
      %v3108 = vadd.f32 %v799, %v2953
      %v3109 = vadd.f32 %v803, %v2957
      %v3110 = vadd.f32 %v805, %v2959
      %v3111 = vadd.f32 %v807, %v2961
      %v3112 = vadd.f32 %v809, %v2963
      %v3113 = vadd.f32 %v813, %v2967
      %v3114 = vadd.f32 %v815, %v2969
      %v3115 = vadd.f32 %v817, %v2971
      %v3116 = vadd.f32 %v819, %v2973
      %v3117 = vadd.f32 %v823, %v2977
      %v3118 = vadd.f32 %v825, %v2979
      %v3119 = vadd.f32 %v827, %v2981
      %v3120 = vadd.f32 %v829, %v2983
      %v3121 = vadd.f32 %v833, %v2987
      %v3122 = vadd.f32 %v835, %v2989
      %v3123 = vadd.f32 %v837, %v2991
      %v3124 = vadd.f32 %v839, %v2993
      %v3125 = vadd.f32 %v843, %v2997
      %v3126 = vadd.f32 %v845, %v2999
      %v3127 = vadd.f32 %v847, %v3001
      %v3128 = vadd.f32 %v849, %v3003
      %v3129 = vadd.f32 %v853, %v3007
      %v3130 = vadd.f32 %v855, %v3009
      %v3131 = vadd.f32 %v857, %v3011
      %v3132 = vadd.f32 %v859, %v3013
      %v3133 = vadd.f32 %v863, %v3017
      %v3134 = vadd.f32 %v865, %v3019
      %v3135 = vadd.f32 %v867, %v3021
      %v3136 = vadd.f32 %v869, %v3023
      %v3137 = vadd.f32 %v873, %v3027
      %v3138 = vadd.f32 %v875, %v3029
      %v3139 = vadd.f32 %v877, %v3031
      %v3140 = vadd.f32 %v879, %v3033
      %v3141 = vadd.f32 %v883, %v3037
      %v3142 = vadd.f32 %v885, %v3039
      %v3143 = vadd.f32 %v887, %v3041
      %v3144 = vadd.f32 %v889, %v3043
      %v3145 = vadd.f32 %v893, %v3047
      %v3146 = vadd.f32 %v895, %v3049
      %v3147 = vadd.f32 %v897, %v3051
      %v3148 = vadd.f32 %v899, %v3053
      %v3149 = vadd.f32 %v903, %v3057
      %v3150 = vadd.f32 %v905, %v3059
      %v3151 = vadd.f32 %v907, %v3061
      %v3152 = vadd.f32 %v909, %v3063
      %v3153 = vadd.f32 %v913, %v3067
      %v3154 = vadd.f32 %v915, %v3069
      %v3155 = vadd.f32 %v917, %v3071
      %v3156 = vadd.f32 %v919, %v3073
      %v3157 = vadd.f32 %v923, %v3077
      %v3158 = vadd.f32 %v925, %v3079
      %v3159 = vadd.f32 %v927, %v3081
      %v3160 = vadd.f32 %v929, %v3083
      %v3161 = vadd.f32 %v933, %v3087
      %v3162 = vadd.f32 %v935, %v3089
      %v3163 = vadd.f32 %v937, %v3091
      %v3164 = vadd.f32 %v939, %v3093
      %v3165 = vadd.f32 %v943, %v3097
      %v3166 = vadd.f32 %v945, %v3099
      %v3167 = vadd.f32 %v947, %v3101
      %v3168 = vadd.f32 %v949, %v3103
      %s3169 = scalar_lea.vmem %s4, 2
      %v3170 = vld [vmem:[%s3169] ss:$8 sm:$0x3]
      %v3172 = vlaneseq
      %v3173 = vshrl.u32 %v3172, 7
      %v3174 = vsub.s32 0, %v3173
      %v3175 = vrot.slane %v3170, %v3174
      %v3176 = vlaneseq
      %v3177 = vshrl.u32 %v3176, 7
      %v3178 = vsub.s32 1, %v3177
      %v3179 = vrot.slane %v3170, %v3178
      %v3182 = vadd.f32 %v3105, %v3175
      %v3183 = vadd.f32 %v3106, %v3179
      %v3184 = vadd.f32 %v3107, %v3175
      %v3185 = vadd.f32 %v3108, %v3179
      %v3186 = vadd.f32 %v3109, %v3175
      %v3187 = vadd.f32 %v3110, %v3179
      %v3188 = vadd.f32 %v3111, %v3175
      %v3189 = vadd.f32 %v3112, %v3179
      %v3190 = vadd.f32 %v3113, %v3175
      %v3191 = vadd.f32 %v3114, %v3179
      %v3192 = vadd.f32 %v3115, %v3175
      %v3193 = vadd.f32 %v3116, %v3179
      %v3194 = vadd.f32 %v3117, %v3175
      %v3195 = vadd.f32 %v3118, %v3179
      %v3196 = vadd.f32 %v3119, %v3175
      %v3197 = vadd.f32 %v3120, %v3179
      %v3198 = vadd.f32 %v3121, %v3175
      %v3199 = vadd.f32 %v3122, %v3179
      %v3200 = vadd.f32 %v3123, %v3175
      %v3201 = vadd.f32 %v3124, %v3179
      %v3202 = vadd.f32 %v3125, %v3175
      %v3203 = vadd.f32 %v3126, %v3179
      %v3204 = vadd.f32 %v3127, %v3175
      %v3205 = vadd.f32 %v3128, %v3179
      %v3206 = vadd.f32 %v3129, %v3175
      %v3207 = vadd.f32 %v3130, %v3179
      %v3208 = vadd.f32 %v3131, %v3175
      %v3209 = vadd.f32 %v3132, %v3179
      %v3210 = vadd.f32 %v3133, %v3175
      %v3211 = vadd.f32 %v3134, %v3179
      %v3212 = vadd.f32 %v3135, %v3175
      %v3213 = vadd.f32 %v3136, %v3179
      %v3214 = vadd.f32 %v3137, %v3175
      %v3215 = vadd.f32 %v3138, %v3179
      %v3216 = vadd.f32 %v3139, %v3175
      %v3217 = vadd.f32 %v3140, %v3179
      %v3218 = vadd.f32 %v3141, %v3175
      %v3219 = vadd.f32 %v3142, %v3179
      %v3220 = vadd.f32 %v3143, %v3175
      %v3221 = vadd.f32 %v3144, %v3179
      %v3222 = vadd.f32 %v3145, %v3175
      %v3223 = vadd.f32 %v3146, %v3179
      %v3224 = vadd.f32 %v3147, %v3175
      %v3225 = vadd.f32 %v3148, %v3179
      %v3226 = vadd.f32 %v3149, %v3175
      %v3227 = vadd.f32 %v3150, %v3179
      %v3228 = vadd.f32 %v3151, %v3175
      %v3229 = vadd.f32 %v3152, %v3179
      %v3230 = vadd.f32 %v3153, %v3175
      %v3231 = vadd.f32 %v3154, %v3179
      %v3232 = vadd.f32 %v3155, %v3175
      %v3233 = vadd.f32 %v3156, %v3179
      %v3234 = vadd.f32 %v3157, %v3175
      %v3235 = vadd.f32 %v3158, %v3179
      %v3236 = vadd.f32 %v3159, %v3175
      %v3237 = vadd.f32 %v3160, %v3179
      %v3238 = vadd.f32 %v3161, %v3175
      %v3239 = vadd.f32 %v3162, %v3179
      %v3240 = vadd.f32 %v3163, %v3175
      %v3241 = vadd.f32 %v3164, %v3179
      %v3242 = vadd.f32 %v3165, %v3175
      %v3243 = vadd.f32 %v3166, %v3179
      %v3244 = vadd.f32 %v3167, %v3175
      %v3245 = vadd.f32 %v3168, %v3179
      %vm3246 = vcmp.gt.f32.partialorder %v3182, 0.0
      %vm3247 = vcmp.gt.f32.partialorder %v3183, 0.0
      %vm3248 = vcmp.gt.f32.partialorder %v3184, 0.0
      %vm3249 = vcmp.gt.f32.partialorder %v3185, 0.0
      %vm3250 = vcmp.gt.f32.partialorder %v3186, 0.0
      %vm3251 = vcmp.gt.f32.partialorder %v3187, 0.0
      %vm3252 = vcmp.gt.f32.partialorder %v3188, 0.0
      %vm3253 = vcmp.gt.f32.partialorder %v3189, 0.0
      %vm3254 = vcmp.gt.f32.partialorder %v3190, 0.0
      %vm3255 = vcmp.gt.f32.partialorder %v3191, 0.0
      %vm3256 = vcmp.gt.f32.partialorder %v3192, 0.0
      %vm3257 = vcmp.gt.f32.partialorder %v3193, 0.0
      %vm3258 = vcmp.gt.f32.partialorder %v3194, 0.0
      %vm3259 = vcmp.gt.f32.partialorder %v3195, 0.0
      %vm3260 = vcmp.gt.f32.partialorder %v3196, 0.0
      %vm3261 = vcmp.gt.f32.partialorder %v3197, 0.0
      %vm3262 = vcmp.gt.f32.partialorder %v3198, 0.0
      %vm3263 = vcmp.gt.f32.partialorder %v3199, 0.0
      %vm3264 = vcmp.gt.f32.partialorder %v3200, 0.0
      %vm3265 = vcmp.gt.f32.partialorder %v3201, 0.0
      %vm3266 = vcmp.gt.f32.partialorder %v3202, 0.0
      %vm3267 = vcmp.gt.f32.partialorder %v3203, 0.0
      %vm3268 = vcmp.gt.f32.partialorder %v3204, 0.0
      %vm3269 = vcmp.gt.f32.partialorder %v3205, 0.0
      %vm3270 = vcmp.gt.f32.partialorder %v3206, 0.0
      %vm3271 = vcmp.gt.f32.partialorder %v3207, 0.0
      %vm3272 = vcmp.gt.f32.partialorder %v3208, 0.0
      %vm3273 = vcmp.gt.f32.partialorder %v3209, 0.0
      %vm3274 = vcmp.gt.f32.partialorder %v3210, 0.0
      %vm3275 = vcmp.gt.f32.partialorder %v3211, 0.0
      %vm3276 = vcmp.gt.f32.partialorder %v3212, 0.0
      %vm3277 = vcmp.gt.f32.partialorder %v3213, 0.0
      %vm3278 = vcmp.gt.f32.partialorder %v3214, 0.0
      %vm3279 = vcmp.gt.f32.partialorder %v3215, 0.0
      %vm3280 = vcmp.gt.f32.partialorder %v3216, 0.0
      %vm3281 = vcmp.gt.f32.partialorder %v3217, 0.0
      %vm3282 = vcmp.gt.f32.partialorder %v3218, 0.0
      %vm3283 = vcmp.gt.f32.partialorder %v3219, 0.0
      %vm3284 = vcmp.gt.f32.partialorder %v3220, 0.0
      %vm3285 = vcmp.gt.f32.partialorder %v3221, 0.0
      %vm3286 = vcmp.gt.f32.partialorder %v3222, 0.0
      %vm3287 = vcmp.gt.f32.partialorder %v3223, 0.0
      %vm3288 = vcmp.gt.f32.partialorder %v3224, 0.0
      %vm3289 = vcmp.gt.f32.partialorder %v3225, 0.0
      %vm3290 = vcmp.gt.f32.partialorder %v3226, 0.0
      %vm3291 = vcmp.gt.f32.partialorder %v3227, 0.0
      %vm3292 = vcmp.gt.f32.partialorder %v3228, 0.0
      %vm3293 = vcmp.gt.f32.partialorder %v3229, 0.0
      %vm3294 = vcmp.gt.f32.partialorder %v3230, 0.0
      %vm3295 = vcmp.gt.f32.partialorder %v3231, 0.0
      %vm3296 = vcmp.gt.f32.partialorder %v3232, 0.0
      %vm3297 = vcmp.gt.f32.partialorder %v3233, 0.0
      %vm3298 = vcmp.gt.f32.partialorder %v3234, 0.0
      %vm3299 = vcmp.gt.f32.partialorder %v3235, 0.0
      %vm3300 = vcmp.gt.f32.partialorder %v3236, 0.0
      %vm3301 = vcmp.gt.f32.partialorder %v3237, 0.0
      %vm3302 = vcmp.gt.f32.partialorder %v3238, 0.0
      %vm3303 = vcmp.gt.f32.partialorder %v3239, 0.0
      %vm3304 = vcmp.gt.f32.partialorder %v3240, 0.0
      %vm3305 = vcmp.gt.f32.partialorder %v3241, 0.0
      %vm3306 = vcmp.gt.f32.partialorder %v3242, 0.0
      %vm3307 = vcmp.gt.f32.partialorder %v3243, 0.0
      %vm3308 = vcmp.gt.f32.partialorder %v3244, 0.0
      %vm3309 = vcmp.gt.f32.partialorder %v3245, 0.0
      %v3310 = vmul.f32 %v3182, 1.442695
      %v3311 = vpow.pop %v3310
      %v3312 = vmul.f32 %v3183, 1.442695
      %v3313 = vpow.pop %v3312
      %v3314 = vmul.f32 %v3184, 1.442695
      %v3315 = vpow.pop %v3314
      %v3316 = vmul.f32 %v3185, 1.442695
      %v3317 = vpow.pop %v3316
      %v3318 = vmul.f32 %v3186, 1.442695
      %v3319 = vpow.pop %v3318
      %v3320 = vmul.f32 %v3187, 1.442695
      %v3321 = vpow.pop %v3320
      %v3322 = vmul.f32 %v3188, 1.442695
      %v3323 = vpow.pop %v3322
      %v3324 = vmul.f32 %v3189, 1.442695
      %v3325 = vpow.pop %v3324
      %v3326 = vmul.f32 %v3190, 1.442695
      %v3327 = vpow.pop %v3326
      %v3328 = vmul.f32 %v3191, 1.442695
      %v3329 = vpow.pop %v3328
      %v3330 = vmul.f32 %v3192, 1.442695
      %v3331 = vpow.pop %v3330
      %v3332 = vmul.f32 %v3193, 1.442695
      %v3333 = vpow.pop %v3332
      %v3334 = vmul.f32 %v3194, 1.442695
      %v3335 = vpow.pop %v3334
      %v3336 = vmul.f32 %v3195, 1.442695
      %v3337 = vpow.pop %v3336
      %v3338 = vmul.f32 %v3196, 1.442695
      %v3339 = vpow.pop %v3338
      %v3340 = vmul.f32 %v3197, 1.442695
      %v3341 = vpow.pop %v3340
      %v3342 = vmul.f32 %v3198, 1.442695
      %v3343 = vpow.pop %v3342
      %v3344 = vmul.f32 %v3199, 1.442695
      %v3345 = vpow.pop %v3344
      %v3346 = vmul.f32 %v3200, 1.442695
      %v3347 = vpow.pop %v3346
      %v3348 = vmul.f32 %v3201, 1.442695
      %v3349 = vpow.pop %v3348
      %v3350 = vmul.f32 %v3202, 1.442695
      %v3351 = vpow.pop %v3350
      %v3352 = vmul.f32 %v3203, 1.442695
      %v3353 = vpow.pop %v3352
      %v3354 = vmul.f32 %v3204, 1.442695
      %v3355 = vpow.pop %v3354
      %v3356 = vmul.f32 %v3205, 1.442695
      %v3357 = vpow.pop %v3356
      %v3358 = vmul.f32 %v3206, 1.442695
      %v3359 = vpow.pop %v3358
      %v3360 = vmul.f32 %v3207, 1.442695
      %v3361 = vpow.pop %v3360
      %v3362 = vmul.f32 %v3208, 1.442695
      %v3363 = vpow.pop %v3362
      %v3364 = vmul.f32 %v3209, 1.442695
      %v3365 = vpow.pop %v3364
      %v3366 = vmul.f32 %v3210, 1.442695
      %v3367 = vpow.pop %v3366
      %v3368 = vmul.f32 %v3211, 1.442695
      %v3369 = vpow.pop %v3368
      %v3370 = vmul.f32 %v3212, 1.442695
      %v3371 = vpow.pop %v3370
      %v3372 = vmul.f32 %v3213, 1.442695
      %v3373 = vpow.pop %v3372
      %v3374 = vmul.f32 %v3214, 1.442695
      %v3375 = vpow.pop %v3374
      %v3376 = vmul.f32 %v3215, 1.442695
      %v3377 = vpow.pop %v3376
      %v3378 = vmul.f32 %v3216, 1.442695
      %v3379 = vpow.pop %v3378
      %v3380 = vmul.f32 %v3217, 1.442695
      %v3381 = vpow.pop %v3380
      %v3382 = vmul.f32 %v3218, 1.442695
      %v3383 = vpow.pop %v3382
      %v3384 = vmul.f32 %v3219, 1.442695
      %v3385 = vpow.pop %v3384
      %v3386 = vmul.f32 %v3220, 1.442695
      %v3387 = vpow.pop %v3386
      %v3388 = vmul.f32 %v3221, 1.442695
      %v3389 = vpow.pop %v3388
      %v3390 = vmul.f32 %v3222, 1.442695
      %v3391 = vpow.pop %v3390
      %v3392 = vmul.f32 %v3223, 1.442695
      %v3393 = vpow.pop %v3392
      %v3394 = vmul.f32 %v3224, 1.442695
      %v3395 = vpow.pop %v3394
      %v3396 = vmul.f32 %v3225, 1.442695
      %v3397 = vpow.pop %v3396
      %v3398 = vmul.f32 %v3226, 1.442695
      %v3399 = vpow.pop %v3398
      %v3400 = vmul.f32 %v3227, 1.442695
      %v3401 = vpow.pop %v3400
      %v3402 = vmul.f32 %v3228, 1.442695
      %v3403 = vpow.pop %v3402
      %v3404 = vmul.f32 %v3229, 1.442695
      %v3405 = vpow.pop %v3404
      %v3406 = vmul.f32 %v3230, 1.442695
      %v3407 = vpow.pop %v3406
      %v3408 = vmul.f32 %v3231, 1.442695
      %v3409 = vpow.pop %v3408
      %v3410 = vmul.f32 %v3232, 1.442695
      %v3411 = vpow.pop %v3410
      %v3412 = vmul.f32 %v3233, 1.442695
      %v3413 = vpow.pop %v3412
      %v3414 = vmul.f32 %v3234, 1.442695
      %v3415 = vpow.pop %v3414
      %v3416 = vmul.f32 %v3235, 1.442695
      %v3417 = vpow.pop %v3416
      %v3418 = vmul.f32 %v3236, 1.442695
      %v3419 = vpow.pop %v3418
      %v3420 = vmul.f32 %v3237, 1.442695
      %v3421 = vpow.pop %v3420
      %v3422 = vmul.f32 %v3238, 1.442695
      %v3423 = vpow.pop %v3422
      %v3424 = vmul.f32 %v3239, 1.442695
      %v3425 = vpow.pop %v3424
      %v3426 = vmul.f32 %v3240, 1.442695
      %v3427 = vpow.pop %v3426
      %v3428 = vmul.f32 %v3241, 1.442695
      %v3429 = vpow.pop %v3428
      %v3430 = vmul.f32 %v3242, 1.442695
      %v3431 = vpow.pop %v3430
      %v3432 = vmul.f32 %v3243, 1.442695
      %v3433 = vpow.pop %v3432
      %v3434 = vmul.f32 %v3244, 1.442695
      %v3435 = vpow.pop %v3434
      %v3436 = vmul.f32 %v3245, 1.442695
      %v3437 = vpow.pop %v3436
      %v3438 = vsub.f32 %v3311, 1.0
      %v3439 = vsub.f32 %v3313, 1.0
      %v3440 = vsub.f32 %v3315, 1.0
      %v3441 = vsub.f32 %v3317, 1.0
      %v3442 = vsub.f32 %v3319, 1.0
      %v3443 = vsub.f32 %v3321, 1.0
      %v3444 = vsub.f32 %v3323, 1.0
      %v3445 = vsub.f32 %v3325, 1.0
      %v3446 = vsub.f32 %v3327, 1.0
      %v3447 = vsub.f32 %v3329, 1.0
      %v3448 = vsub.f32 %v3331, 1.0
      %v3449 = vsub.f32 %v3333, 1.0
      %v3450 = vsub.f32 %v3335, 1.0
      %v3451 = vsub.f32 %v3337, 1.0
      %v3452 = vsub.f32 %v3339, 1.0
      %v3453 = vsub.f32 %v3341, 1.0
      %v3454 = vsub.f32 %v3343, 1.0
      %v3455 = vsub.f32 %v3345, 1.0
      %v3456 = vsub.f32 %v3347, 1.0
      %v3457 = vsub.f32 %v3349, 1.0
      %v3458 = vsub.f32 %v3351, 1.0
      %v3459 = vsub.f32 %v3353, 1.0
      %v3460 = vsub.f32 %v3355, 1.0
      %v3461 = vsub.f32 %v3357, 1.0
      %v3462 = vsub.f32 %v3359, 1.0
      %v3463 = vsub.f32 %v3361, 1.0
      %v3464 = vsub.f32 %v3363, 1.0
      %v3465 = vsub.f32 %v3365, 1.0
      %v3466 = vsub.f32 %v3367, 1.0
      %v3467 = vsub.f32 %v3369, 1.0
      %v3468 = vsub.f32 %v3371, 1.0
      %v3469 = vsub.f32 %v3373, 1.0
      %v3470 = vsub.f32 %v3375, 1.0
      %v3471 = vsub.f32 %v3377, 1.0
      %v3472 = vsub.f32 %v3379, 1.0
      %v3473 = vsub.f32 %v3381, 1.0
      %v3474 = vsub.f32 %v3383, 1.0
      %v3475 = vsub.f32 %v3385, 1.0
      %v3476 = vsub.f32 %v3387, 1.0
      %v3477 = vsub.f32 %v3389, 1.0
      %v3478 = vsub.f32 %v3391, 1.0
      %v3479 = vsub.f32 %v3393, 1.0
      %v3480 = vsub.f32 %v3395, 1.0
      %v3481 = vsub.f32 %v3397, 1.0
      %v3482 = vsub.f32 %v3399, 1.0
      %v3483 = vsub.f32 %v3401, 1.0
      %v3484 = vsub.f32 %v3403, 1.0
      %v3485 = vsub.f32 %v3405, 1.0
      %v3486 = vsub.f32 %v3407, 1.0
      %v3487 = vsub.f32 %v3409, 1.0
      %v3488 = vsub.f32 %v3411, 1.0
      %v3489 = vsub.f32 %v3413, 1.0
      %v3490 = vsub.f32 %v3415, 1.0
      %v3491 = vsub.f32 %v3417, 1.0
      %v3492 = vsub.f32 %v3419, 1.0
      %v3493 = vsub.f32 %v3421, 1.0
      %v3494 = vsub.f32 %v3423, 1.0
      %v3495 = vsub.f32 %v3425, 1.0
      %v3496 = vsub.f32 %v3427, 1.0
      %v3497 = vsub.f32 %v3429, 1.0
      %v3498 = vsub.f32 %v3431, 1.0
      %v3499 = vsub.f32 %v3433, 1.0
      %v3500 = vsub.f32 %v3435, 1.0
      %v3501 = vsub.f32 %v3437, 1.0
      %v3502 = vsel %vm3246, %v3182, %v3438
      %v3503 = vsel %vm3247, %v3183, %v3439
      %v3504 = vsel %vm3248, %v3184, %v3440
      %v3505 = vsel %vm3249, %v3185, %v3441
      %v3506 = vsel %vm3250, %v3186, %v3442
      %v3507 = vsel %vm3251, %v3187, %v3443
      %v3508 = vsel %vm3252, %v3188, %v3444
      %v3509 = vsel %vm3253, %v3189, %v3445
      %v3510 = vsel %vm3254, %v3190, %v3446
      %v3511 = vsel %vm3255, %v3191, %v3447
      %v3512 = vsel %vm3256, %v3192, %v3448
      %v3513 = vsel %vm3257, %v3193, %v3449
      %v3514 = vsel %vm3258, %v3194, %v3450
      %v3515 = vsel %vm3259, %v3195, %v3451
      %v3516 = vsel %vm3260, %v3196, %v3452
      %v3517 = vsel %vm3261, %v3197, %v3453
      %v3518 = vsel %vm3262, %v3198, %v3454
      %v3519 = vsel %vm3263, %v3199, %v3455
      %v3520 = vsel %vm3264, %v3200, %v3456
      %v3521 = vsel %vm3265, %v3201, %v3457
      %v3522 = vsel %vm3266, %v3202, %v3458
      %v3523 = vsel %vm3267, %v3203, %v3459
      %v3524 = vsel %vm3268, %v3204, %v3460
      %v3525 = vsel %vm3269, %v3205, %v3461
      %v3526 = vsel %vm3270, %v3206, %v3462
      %v3527 = vsel %vm3271, %v3207, %v3463
      %v3528 = vsel %vm3272, %v3208, %v3464
      %v3529 = vsel %vm3273, %v3209, %v3465
      %v3530 = vsel %vm3274, %v3210, %v3466
      %v3531 = vsel %vm3275, %v3211, %v3467
      %v3532 = vsel %vm3276, %v3212, %v3468
      %v3533 = vsel %vm3277, %v3213, %v3469
      %v3534 = vsel %vm3278, %v3214, %v3470
      %v3535 = vsel %vm3279, %v3215, %v3471
      %v3536 = vsel %vm3280, %v3216, %v3472
      %v3537 = vsel %vm3281, %v3217, %v3473
      %v3538 = vsel %vm3282, %v3218, %v3474
      %v3539 = vsel %vm3283, %v3219, %v3475
      %v3540 = vsel %vm3284, %v3220, %v3476
      %v3541 = vsel %vm3285, %v3221, %v3477
      %v3542 = vsel %vm3286, %v3222, %v3478
      %v3543 = vsel %vm3287, %v3223, %v3479
      %v3544 = vsel %vm3288, %v3224, %v3480
      %v3545 = vsel %vm3289, %v3225, %v3481
      %v3546 = vsel %vm3290, %v3226, %v3482
      %v3547 = vsel %vm3291, %v3227, %v3483
      %v3548 = vsel %vm3292, %v3228, %v3484
      %v3549 = vsel %vm3293, %v3229, %v3485
      %v3550 = vsel %vm3294, %v3230, %v3486
      %v3551 = vsel %vm3295, %v3231, %v3487
      %v3552 = vsel %vm3296, %v3232, %v3488
      %v3553 = vsel %vm3297, %v3233, %v3489
      %v3554 = vsel %vm3298, %v3234, %v3490
      %v3555 = vsel %vm3299, %v3235, %v3491
      %v3556 = vsel %vm3300, %v3236, %v3492
      %v3557 = vsel %vm3301, %v3237, %v3493
      %v3558 = vsel %vm3302, %v3238, %v3494
      %v3559 = vsel %vm3303, %v3239, %v3495
      %v3560 = vsel %vm3304, %v3240, %v3496
      %v3561 = vsel %vm3305, %v3241, %v3497
      %v3562 = vsel %vm3306, %v3242, %v3498
      %v3563 = vsel %vm3307, %v3243, %v3499
      %v3564 = vsel %vm3308, %v3244, %v3500
      %v3565 = vsel %vm3309, %v3245, %v3501
      %v3566 = vpack.c.bf16 %v3504, %v3502
      %v3567 = vpack.c.bf16 %v3505, %v3503
      %v3568 = vpack.c.bf16 %v3508, %v3506
      %v3569 = vpack.c.bf16 %v3509, %v3507
      %v3570 = vpack.c.bf16 %v3512, %v3510
      %v3571 = vpack.c.bf16 %v3513, %v3511
      %v3572 = vpack.c.bf16 %v3516, %v3514
      %v3573 = vpack.c.bf16 %v3517, %v3515
      %v3574 = vpack.c.bf16 %v3520, %v3518
      %v3575 = vpack.c.bf16 %v3521, %v3519
      %v3576 = vpack.c.bf16 %v3524, %v3522
      %v3577 = vpack.c.bf16 %v3525, %v3523
      %v3578 = vpack.c.bf16 %v3528, %v3526
      %v3579 = vpack.c.bf16 %v3529, %v3527
      %v3580 = vpack.c.bf16 %v3532, %v3530
      %v3581 = vpack.c.bf16 %v3533, %v3531
      %v3582 = vpack.c.bf16 %v3536, %v3534
      %v3583 = vpack.c.bf16 %v3537, %v3535
      %v3584 = vpack.c.bf16 %v3540, %v3538
      %v3585 = vpack.c.bf16 %v3541, %v3539
      %v3586 = vpack.c.bf16 %v3544, %v3542
      %v3587 = vpack.c.bf16 %v3545, %v3543
      %v3588 = vpack.c.bf16 %v3548, %v3546
      %v3589 = vpack.c.bf16 %v3549, %v3547
      %v3590 = vpack.c.bf16 %v3552, %v3550
      %v3591 = vpack.c.bf16 %v3553, %v3551
      %v3592 = vpack.c.bf16 %v3556, %v3554
      %v3593 = vpack.c.bf16 %v3557, %v3555
      %v3594 = vpack.c.bf16 %v3560, %v3558
      %v3595 = vpack.c.bf16 %v3561, %v3559
      %v3596 = vpack.c.bf16 %v3564, %v3562
      %v3597 = vpack.c.bf16 %v3565, %v3563
      %s3598 = scalar_lea.vmem %s2, 512
      %v3599 = vld [vmem:[%s3598] sm:$0xff]
      %v3600 = vld [vmem:[%s3598 + $0x8] sm:$0xff]
      %v3601 = vld [vmem:[%s3598 + $0x10] sm:$0xff]
      %v3602 = vld [vmem:[%s3598 + $0x18] sm:$0xff]
      %v3603 = vld [vmem:[%s3598 + $0x20] sm:$0xff]
      %v3604 = vld [vmem:[%s3598 + $0x28] sm:$0xff]
      %v3605 = vld [vmem:[%s3598 + $0x30] sm:$0xff]
      %v3606 = vld [vmem:[%s3598 + $0x38] sm:$0xff]
      %v3607 = vld [vmem:[%s3598 + $0x40] sm:$0xff]
      %v3608 = vld [vmem:[%s3598 + $0x48] sm:$0xff]
      %v3609 = vld [vmem:[%s3598 + $0x50] sm:$0xff]
      %v3610 = vld [vmem:[%s3598 + $0x58] sm:$0xff]
      %v3611 = vld [vmem:[%s3598 + $0x60] sm:$0xff]
      %v3612 = vld [vmem:[%s3598 + $0x68] sm:$0xff]
      %v3613 = vld [vmem:[%s3598 + $0x70] sm:$0xff]
      %v3614 = vld [vmem:[%s3598 + $0x78] sm:$0xff]
      %v3615 = vld [vmem:[%s3598 + $0x80] sm:$0xff]
      %v3616 = vld [vmem:[%s3598 + $0x88] sm:$0xff]
      %v3617 = vld [vmem:[%s3598 + $0x90] sm:$0xff]
      %v3618 = vld [vmem:[%s3598 + $0x98] sm:$0xff]
      %v3619 = vld [vmem:[%s3598 + $0xa0] sm:$0xff]
      %v3620 = vld [vmem:[%s3598 + $0xa8] sm:$0xff]
      %v3621 = vld [vmem:[%s3598 + $0xb0] sm:$0xff]
      %v3622 = vld [vmem:[%s3598 + $0xb8] sm:$0xff]
      %v3623 = vld [vmem:[%s3598 + $0xc0] sm:$0xff]
      %v3624 = vld [vmem:[%s3598 + $0xc8] sm:$0xff]
      %v3625 = vld [vmem:[%s3598 + $0xd0] sm:$0xff]
      %v3626 = vld [vmem:[%s3598 + $0xd8] sm:$0xff]
      %v3627 = vld [vmem:[%s3598 + $0xe0] sm:$0xff]
      %v3628 = vld [vmem:[%s3598 + $0xe8] sm:$0xff]
      %v3629 = vld [vmem:[%s3598 + $0xf0] sm:$0xff]
      %v3630 = vld [vmem:[%s3598 + $0xf8] sm:$0xff]
      %s3631 = scalar_lea.vmem %s4, 4
      %v3632 = vld [vmem:[%s3631] ss:$8 sm:$0x3]
      %v3634 = vlaneseq
      %v3635 = vshrl.u32 %v3634, 7
      %v3636 = vsub.s32 0, %v3635
      %v3637 = vrot.slane %v3632, %v3636
      %v3638 = vlaneseq
      %v3639 = vshrl.u32 %v3638, 7
      %v3640 = vsub.s32 1, %v3639
      %v3641 = vrot.slane %v3632, %v3640
      %v3676 = vunpack.c.l.b16 %v3599
      %v3677 = vunpack.c.h.b16 %v3599
      %v3678 = vunpack.c.l.b16 %v3600
      %v3679 = vunpack.c.h.b16 %v3600
      %v3680 = vunpack.c.l.b16 %v3601
      %v3681 = vunpack.c.h.b16 %v3601
      %v3682 = vunpack.c.l.b16 %v3602
      %v3683 = vunpack.c.h.b16 %v3602
      %v3684 = vunpack.c.l.b16 %v3603
      %v3685 = vunpack.c.h.b16 %v3603
      %v3686 = vunpack.c.l.b16 %v3604
      %v3687 = vunpack.c.h.b16 %v3604
      %v3688 = vunpack.c.l.b16 %v3605
      %v3689 = vunpack.c.h.b16 %v3605
      %v3690 = vunpack.c.l.b16 %v3606
      %v3691 = vunpack.c.h.b16 %v3606
      %v3692 = vunpack.c.l.b16 %v3607
      %v3693 = vunpack.c.h.b16 %v3607
      %v3694 = vunpack.c.l.b16 %v3608
      %v3695 = vunpack.c.h.b16 %v3608
      %v3696 = vunpack.c.l.b16 %v3609
      %v3697 = vunpack.c.h.b16 %v3609
      %v3698 = vunpack.c.l.b16 %v3610
      %v3699 = vunpack.c.h.b16 %v3610
      %v3700 = vunpack.c.l.b16 %v3611
      %v3701 = vunpack.c.h.b16 %v3611
      %v3702 = vunpack.c.l.b16 %v3612
      %v3703 = vunpack.c.h.b16 %v3612
      %v3704 = vunpack.c.l.b16 %v3613
      %v3705 = vunpack.c.h.b16 %v3613
      %v3706 = vunpack.c.l.b16 %v3614
      %v3707 = vunpack.c.h.b16 %v3614
      %v3708 = vunpack.c.l.b16 %v3615
      %v3709 = vunpack.c.h.b16 %v3615
      %v3710 = vunpack.c.l.b16 %v3616
      %v3711 = vunpack.c.h.b16 %v3616
      %v3712 = vunpack.c.l.b16 %v3617
      %v3713 = vunpack.c.h.b16 %v3617
      %v3714 = vunpack.c.l.b16 %v3618
      %v3715 = vunpack.c.h.b16 %v3618
      %v3716 = vunpack.c.l.b16 %v3619
      %v3717 = vunpack.c.h.b16 %v3619
      %v3718 = vunpack.c.l.b16 %v3620
      %v3719 = vunpack.c.h.b16 %v3620
      %v3720 = vunpack.c.l.b16 %v3621
      %v3721 = vunpack.c.h.b16 %v3621
      %v3722 = vunpack.c.l.b16 %v3622
      %v3723 = vunpack.c.h.b16 %v3622
      %v3724 = vunpack.c.l.b16 %v3623
      %v3725 = vunpack.c.h.b16 %v3623
      %v3726 = vunpack.c.l.b16 %v3624
      %v3727 = vunpack.c.h.b16 %v3624
      %v3728 = vunpack.c.l.b16 %v3625
      %v3729 = vunpack.c.h.b16 %v3625
      %v3730 = vunpack.c.l.b16 %v3626
      %v3731 = vunpack.c.h.b16 %v3626
      %v3732 = vunpack.c.l.b16 %v3627
      %v3733 = vunpack.c.h.b16 %v3627
      %v3734 = vunpack.c.l.b16 %v3628
      %v3735 = vunpack.c.h.b16 %v3628
      %v3736 = vunpack.c.l.b16 %v3629
      %v3737 = vunpack.c.h.b16 %v3629
      %v3738 = vunpack.c.l.b16 %v3630
      %v3739 = vunpack.c.h.b16 %v3630
      %v3740 = vpack.c.b16 %v3678, %v3676
      %v3741 = vpack.c.b16 %v3679, %v3677
      %v3742 = vpack.c.b16 %v3682, %v3680
      %v3743 = vpack.c.b16 %v3683, %v3681
      %v3744 = vpack.c.b16 %v3686, %v3684
      %v3745 = vpack.c.b16 %v3687, %v3685
      %v3746 = vpack.c.b16 %v3690, %v3688
      %v3747 = vpack.c.b16 %v3691, %v3689
      %v3748 = vpack.c.b16 %v3694, %v3692
      %v3749 = vpack.c.b16 %v3695, %v3693
      %v3750 = vpack.c.b16 %v3698, %v3696
      %v3751 = vpack.c.b16 %v3699, %v3697
      %v3752 = vpack.c.b16 %v3702, %v3700
      %v3753 = vpack.c.b16 %v3703, %v3701
      %v3754 = vpack.c.b16 %v3706, %v3704
      %v3755 = vpack.c.b16 %v3707, %v3705
      %v3756 = vpack.c.b16 %v3710, %v3708
      %v3757 = vpack.c.b16 %v3711, %v3709
      %v3758 = vpack.c.b16 %v3714, %v3712
      %v3759 = vpack.c.b16 %v3715, %v3713
      %v3760 = vpack.c.b16 %v3718, %v3716
      %v3761 = vpack.c.b16 %v3719, %v3717
      %v3762 = vpack.c.b16 %v3722, %v3720
      %v3763 = vpack.c.b16 %v3723, %v3721
      %v3764 = vpack.c.b16 %v3726, %v3724
      %v3765 = vpack.c.b16 %v3727, %v3725
      %v3766 = vpack.c.b16 %v3730, %v3728
      %v3767 = vpack.c.b16 %v3731, %v3729
      %v3768 = vpack.c.b16 %v3734, %v3732
      %v3769 = vpack.c.b16 %v3735, %v3733
      %v3770 = vpack.c.b16 %v3738, %v3736
      %v3771 = vpack.c.b16 %v3739, %v3737
      %3804 = vmatprep.subr.bf16.mxu0 %v3741
      %3805 = vmatpush1.bf16.msra.mxu0 %v3740
      %3806 = vmatprep.subr.bf16.mxu0 %v3743
      %3807 = vmatpush1.bf16.msra.mxu0 %v3742
      %3808 = vmatprep.subr.bf16.mxu0 %v3745
      %3809 = vmatpush1.bf16.msra.mxu0 %v3744
      %3810 = vmatprep.subr.bf16.mxu0 %v3747
      %3811 = vmatpush1.bf16.msra.mxu0 %v3746
      %3812 = vmatprep.subr.bf16.mxu0 %v3749
      %3813 = vmatpush1.bf16.msra.mxu0 %v3748
      %3814 = vmatprep.subr.bf16.mxu0 %v3751
      %3815 = vmatpush1.bf16.msra.mxu0 %v3750
      %3816 = vmatprep.subr.bf16.mxu0 %v3753
      %3817 = vmatpush1.bf16.msra.mxu0 %v3752
      %3818 = vmatprep.subr.bf16.mxu0 %v3755
      %3819 = vmatpush1.bf16.msra.mxu0 %v3754
      %3820 = vmatprep.subr.bf16.mxu0 %v3757
      %3821 = vmatpush1.bf16.msra.mxu0 %v3756
      %3822 = vmatprep.subr.bf16.mxu0 %v3759
      %3823 = vmatpush1.bf16.msra.mxu0 %v3758
      %3824 = vmatprep.subr.bf16.mxu0 %v3761
      %3825 = vmatpush1.bf16.msra.mxu0 %v3760
      %3826 = vmatprep.subr.bf16.mxu0 %v3763
      %3827 = vmatpush1.bf16.msra.mxu0 %v3762
      %3828 = vmatprep.subr.bf16.mxu0 %v3765
      %3829 = vmatpush1.bf16.msra.mxu0 %v3764
      %3830 = vmatprep.subr.bf16.mxu0 %v3767
      %3831 = vmatpush1.bf16.msra.mxu0 %v3766
      %3832 = vmatprep.subr.bf16.mxu0 %v3769
      %3833 = vmatpush1.bf16.msra.mxu0 %v3768
      %3834 = vmatprep.subr.bf16.mxu0 %v3771
      %3835 = vmatpush1.bf16.msra.mxu0 %v3770
      %3836 = vmatprep.mubr.bf16.mxu0 %v3567
      %3837 = vmatmul.mubr.bf16.gmra.mrb[0].mxu0 %v3566
      %v3838 = vpop.f32.mrb[0].mxu0
      %v3839 = vadd.f32 %v3637, %v3838
      %v3840 = vpop.f32.mrb[0].mxu0
      %v3841 = vadd.f32 %v3641, %v3840
      %v3842 = vpop.f32.mrb[0].mxu0
      %v3843 = vadd.f32 %v3637, %v3842
      %v3844 = vpop.f32.mrb[0].mxu0
      %v3845 = vadd.f32 %v3641, %v3844
      %3846 = vmatprep.mubr.bf16.mxu0 %v3569
      %3847 = vmatmul.mubr.bf16.gmra.mrb[0].mxu0 %v3568
      %v3848 = vpop.f32.mrb[0].mxu0
      %v3849 = vadd.f32 %v3637, %v3848
      %v3850 = vpop.f32.mrb[0].mxu0
      %v3851 = vadd.f32 %v3641, %v3850
      %v3852 = vpop.f32.mrb[0].mxu0
      %v3853 = vadd.f32 %v3637, %v3852
      %v3854 = vpop.f32.mrb[0].mxu0
      %v3855 = vadd.f32 %v3641, %v3854
      %3856 = vmatprep.mubr.bf16.mxu0 %v3571
      %3857 = vmatmul.mubr.bf16.gmra.mrb[0].mxu0 %v3570
      %v3858 = vpop.f32.mrb[0].mxu0
      %v3859 = vadd.f32 %v3637, %v3858
      %v3860 = vpop.f32.mrb[0].mxu0
      %v3861 = vadd.f32 %v3641, %v3860
      %v3862 = vpop.f32.mrb[0].mxu0
      %v3863 = vadd.f32 %v3637, %v3862
      %v3864 = vpop.f32.mrb[0].mxu0
      %v3865 = vadd.f32 %v3641, %v3864
      %3866 = vmatprep.mubr.bf16.mxu0 %v3573
      %3867 = vmatmul.mubr.bf16.gmra.mrb[0].mxu0 %v3572
      %v3868 = vpop.f32.mrb[0].mxu0
      %v3869 = vadd.f32 %v3637, %v3868
      %v3870 = vpop.f32.mrb[0].mxu0
      %v3871 = vadd.f32 %v3641, %v3870
      %v3872 = vpop.f32.mrb[0].mxu0
      %v3873 = vadd.f32 %v3637, %v3872
      %v3874 = vpop.f32.mrb[0].mxu0
      %v3875 = vadd.f32 %v3641, %v3874
      %3876 = vmatprep.mubr.bf16.mxu0 %v3575
      %3877 = vmatmul.mubr.bf16.gmra.mrb[0].mxu0 %v3574
      %v3878 = vpop.f32.mrb[0].mxu0
      %v3879 = vadd.f32 %v3637, %v3878
      %v3880 = vpop.f32.mrb[0].mxu0
      %v3881 = vadd.f32 %v3641, %v3880
      %v3882 = vpop.f32.mrb[0].mxu0
      %v3883 = vadd.f32 %v3637, %v3882
      %v3884 = vpop.f32.mrb[0].mxu0
      %v3885 = vadd.f32 %v3641, %v3884
      %3886 = vmatprep.mubr.bf16.mxu0 %v3577
      %3887 = vmatmul.mubr.bf16.gmra.mrb[0].mxu0 %v3576
      %v3888 = vpop.f32.mrb[0].mxu0
      %v3889 = vadd.f32 %v3637, %v3888
      %v3890 = vpop.f32.mrb[0].mxu0
      %v3891 = vadd.f32 %v3641, %v3890
      %v3892 = vpop.f32.mrb[0].mxu0
      %v3893 = vadd.f32 %v3637, %v3892
      %v3894 = vpop.f32.mrb[0].mxu0
      %v3895 = vadd.f32 %v3641, %v3894
      %3896 = vmatprep.mubr.bf16.mxu0 %v3579
      %3897 = vmatmul.mubr.bf16.gmra.mrb[0].mxu0 %v3578
      %v3898 = vpop.f32.mrb[0].mxu0
      %v3899 = vadd.f32 %v3637, %v3898
      %v3900 = vpop.f32.mrb[0].mxu0
      %v3901 = vadd.f32 %v3641, %v3900
      %v3902 = vpop.f32.mrb[0].mxu0
      %v3903 = vadd.f32 %v3637, %v3902
      %v3904 = vpop.f32.mrb[0].mxu0
      %v3905 = vadd.f32 %v3641, %v3904
      %3906 = vmatprep.mubr.bf16.mxu0 %v3581
      %3907 = vmatmul.mubr.bf16.gmra.mrb[0].mxu0 %v3580
      %v3908 = vpop.f32.mrb[0].mxu0
      %v3909 = vadd.f32 %v3637, %v3908
      %v3910 = vpop.f32.mrb[0].mxu0
      %v3911 = vadd.f32 %v3641, %v3910
      %v3912 = vpop.f32.mrb[0].mxu0
      %v3913 = vadd.f32 %v3637, %v3912
      %v3914 = vpop.f32.mrb[0].mxu0
      %v3915 = vadd.f32 %v3641, %v3914
      %3916 = vmatprep.mubr.bf16.mxu0 %v3583
      %3917 = vmatmul.mubr.bf16.gmra.mrb[0].mxu0 %v3582
      %v3918 = vpop.f32.mrb[0].mxu0
      %v3919 = vadd.f32 %v3637, %v3918
      %v3920 = vpop.f32.mrb[0].mxu0
      %v3921 = vadd.f32 %v3641, %v3920
      %v3922 = vpop.f32.mrb[0].mxu0
      %v3923 = vadd.f32 %v3637, %v3922
      %v3924 = vpop.f32.mrb[0].mxu0
      %v3925 = vadd.f32 %v3641, %v3924
      %3926 = vmatprep.mubr.bf16.mxu0 %v3585
      %3927 = vmatmul.mubr.bf16.gmra.mrb[0].mxu0 %v3584
      %v3928 = vpop.f32.mrb[0].mxu0
      %v3929 = vadd.f32 %v3637, %v3928
      %v3930 = vpop.f32.mrb[0].mxu0
      %v3931 = vadd.f32 %v3641, %v3930
      %v3932 = vpop.f32.mrb[0].mxu0
      %v3933 = vadd.f32 %v3637, %v3932
      %v3934 = vpop.f32.mrb[0].mxu0
      %v3935 = vadd.f32 %v3641, %v3934
      %3936 = vmatprep.mubr.bf16.mxu0 %v3587
      %3937 = vmatmul.mubr.bf16.gmra.mrb[0].mxu0 %v3586
      %v3938 = vpop.f32.mrb[0].mxu0
      %v3939 = vadd.f32 %v3637, %v3938
      %v3940 = vpop.f32.mrb[0].mxu0
      %v3941 = vadd.f32 %v3641, %v3940
      %v3942 = vpop.f32.mrb[0].mxu0
      %v3943 = vadd.f32 %v3637, %v3942
      %v3944 = vpop.f32.mrb[0].mxu0
      %v3945 = vadd.f32 %v3641, %v3944
      %3946 = vmatprep.mubr.bf16.mxu0 %v3589
      %3947 = vmatmul.mubr.bf16.gmra.mrb[0].mxu0 %v3588
      %v3948 = vpop.f32.mrb[0].mxu0
      %v3949 = vadd.f32 %v3637, %v3948
      %v3950 = vpop.f32.mrb[0].mxu0
      %v3951 = vadd.f32 %v3641, %v3950
      %v3952 = vpop.f32.mrb[0].mxu0
      %v3953 = vadd.f32 %v3637, %v3952
      %v3954 = vpop.f32.mrb[0].mxu0
      %v3955 = vadd.f32 %v3641, %v3954
      %3956 = vmatprep.mubr.bf16.mxu0 %v3591
      %3957 = vmatmul.mubr.bf16.gmra.mrb[0].mxu0 %v3590
      %v3958 = vpop.f32.mrb[0].mxu0
      %v3959 = vadd.f32 %v3637, %v3958
      %v3960 = vpop.f32.mrb[0].mxu0
      %v3961 = vadd.f32 %v3641, %v3960
      %v3962 = vpop.f32.mrb[0].mxu0
      %v3963 = vadd.f32 %v3637, %v3962
      %v3964 = vpop.f32.mrb[0].mxu0
      %v3965 = vadd.f32 %v3641, %v3964
      %3966 = vmatprep.mubr.bf16.mxu0 %v3593
      %3967 = vmatmul.mubr.bf16.gmra.mrb[0].mxu0 %v3592
      %v3968 = vpop.f32.mrb[0].mxu0
      %v3969 = vadd.f32 %v3637, %v3968
      %v3970 = vpop.f32.mrb[0].mxu0
      %v3971 = vadd.f32 %v3641, %v3970
      %v3972 = vpop.f32.mrb[0].mxu0
      %v3973 = vadd.f32 %v3637, %v3972
      %v3974 = vpop.f32.mrb[0].mxu0
      %v3975 = vadd.f32 %v3641, %v3974
      %3976 = vmatprep.mubr.bf16.mxu0 %v3595
      %3977 = vmatmul.mubr.bf16.gmra.mrb[0].mxu0 %v3594
      %v3978 = vpop.f32.mrb[0].mxu0
      %v3979 = vadd.f32 %v3637, %v3978
      %v3980 = vpop.f32.mrb[0].mxu0
      %v3981 = vadd.f32 %v3641, %v3980
      %v3982 = vpop.f32.mrb[0].mxu0
      %v3983 = vadd.f32 %v3637, %v3982
      %v3984 = vpop.f32.mrb[0].mxu0
      %v3985 = vadd.f32 %v3641, %v3984
      %3986 = vmatprep.mubr.bf16.mxu0 %v3597
      %3987 = vmatmul.mubr.bf16.gmra.mrb[0].mxu0 %v3596
      %v3988 = vpop.f32.mrb[0].mxu0
      %v3989 = vadd.f32 %v3637, %v3988
      %v3990 = vpop.f32.mrb[0].mxu0
      %v3991 = vadd.f32 %v3641, %v3990
      %v3992 = vpop.f32.mrb[0].mxu0
      %v3993 = vadd.f32 %v3637, %v3992
      %v3994 = vpop.f32.mrb[0].mxu0
      %v3995 = vadd.f32 %v3641, %v3994
      %3996 = vdwg.mxu0
      %vm3997 = vcmp.gt.f32.partialorder %v3839, 0.0
      %vm3998 = vcmp.gt.f32.partialorder %v3841, 0.0
      %vm3999 = vcmp.gt.f32.partialorder %v3843, 0.0
      %vm4000 = vcmp.gt.f32.partialorder %v3845, 0.0
      %vm4001 = vcmp.gt.f32.partialorder %v3849, 0.0
      %vm4002 = vcmp.gt.f32.partialorder %v3851, 0.0
      %vm4003 = vcmp.gt.f32.partialorder %v3853, 0.0
      %vm4004 = vcmp.gt.f32.partialorder %v3855, 0.0
      %vm4005 = vcmp.gt.f32.partialorder %v3859, 0.0
      %vm4006 = vcmp.gt.f32.partialorder %v3861, 0.0
      %vm4007 = vcmp.gt.f32.partialorder %v3863, 0.0
      %vm4008 = vcmp.gt.f32.partialorder %v3865, 0.0
      %vm4009 = vcmp.gt.f32.partialorder %v3869, 0.0
      %vm4010 = vcmp.gt.f32.partialorder %v3871, 0.0
      %vm4011 = vcmp.gt.f32.partialorder %v3873, 0.0
      %vm4012 = vcmp.gt.f32.partialorder %v3875, 0.0
      %vm4013 = vcmp.gt.f32.partialorder %v3879, 0.0
      %vm4014 = vcmp.gt.f32.partialorder %v3881, 0.0
      %vm4015 = vcmp.gt.f32.partialorder %v3883, 0.0
      %vm4016 = vcmp.gt.f32.partialorder %v3885, 0.0
      %vm4017 = vcmp.gt.f32.partialorder %v3889, 0.0
      %vm4018 = vcmp.gt.f32.partialorder %v3891, 0.0
      %vm4019 = vcmp.gt.f32.partialorder %v3893, 0.0
      %vm4020 = vcmp.gt.f32.partialorder %v3895, 0.0
      %vm4021 = vcmp.gt.f32.partialorder %v3899, 0.0
      %vm4022 = vcmp.gt.f32.partialorder %v3901, 0.0
      %vm4023 = vcmp.gt.f32.partialorder %v3903, 0.0
      %vm4024 = vcmp.gt.f32.partialorder %v3905, 0.0
      %vm4025 = vcmp.gt.f32.partialorder %v3909, 0.0
      %vm4026 = vcmp.gt.f32.partialorder %v3911, 0.0
      %vm4027 = vcmp.gt.f32.partialorder %v3913, 0.0
      %vm4028 = vcmp.gt.f32.partialorder %v3915, 0.0
      %vm4029 = vcmp.gt.f32.partialorder %v3919, 0.0
      %vm4030 = vcmp.gt.f32.partialorder %v3921, 0.0
      %vm4031 = vcmp.gt.f32.partialorder %v3923, 0.0
      %vm4032 = vcmp.gt.f32.partialorder %v3925, 0.0
      %vm4033 = vcmp.gt.f32.partialorder %v3929, 0.0
      %vm4034 = vcmp.gt.f32.partialorder %v3931, 0.0
      %vm4035 = vcmp.gt.f32.partialorder %v3933, 0.0
      %vm4036 = vcmp.gt.f32.partialorder %v3935, 0.0
      %vm4037 = vcmp.gt.f32.partialorder %v3939, 0.0
      %vm4038 = vcmp.gt.f32.partialorder %v3941, 0.0
      %vm4039 = vcmp.gt.f32.partialorder %v3943, 0.0
      %vm4040 = vcmp.gt.f32.partialorder %v3945, 0.0
      %vm4041 = vcmp.gt.f32.partialorder %v3949, 0.0
      %vm4042 = vcmp.gt.f32.partialorder %v3951, 0.0
      %vm4043 = vcmp.gt.f32.partialorder %v3953, 0.0
      %vm4044 = vcmp.gt.f32.partialorder %v3955, 0.0
      %vm4045 = vcmp.gt.f32.partialorder %v3959, 0.0
      %vm4046 = vcmp.gt.f32.partialorder %v3961, 0.0
      %vm4047 = vcmp.gt.f32.partialorder %v3963, 0.0
      %vm4048 = vcmp.gt.f32.partialorder %v3965, 0.0
      %vm4049 = vcmp.gt.f32.partialorder %v3969, 0.0
      %vm4050 = vcmp.gt.f32.partialorder %v3971, 0.0
      %vm4051 = vcmp.gt.f32.partialorder %v3973, 0.0
      %vm4052 = vcmp.gt.f32.partialorder %v3975, 0.0
      %vm4053 = vcmp.gt.f32.partialorder %v3979, 0.0
      %vm4054 = vcmp.gt.f32.partialorder %v3981, 0.0
      %vm4055 = vcmp.gt.f32.partialorder %v3983, 0.0
      %vm4056 = vcmp.gt.f32.partialorder %v3985, 0.0
      %vm4057 = vcmp.gt.f32.partialorder %v3989, 0.0
      %vm4058 = vcmp.gt.f32.partialorder %v3991, 0.0
      %vm4059 = vcmp.gt.f32.partialorder %v3993, 0.0
      %vm4060 = vcmp.gt.f32.partialorder %v3995, 0.0
      %v4061 = vmul.f32 %v3839, 1.442695
      %v4062 = vpow.pop %v4061
      %v4063 = vmul.f32 %v3841, 1.442695
      %v4064 = vpow.pop %v4063
      %v4065 = vmul.f32 %v3843, 1.442695
      %v4066 = vpow.pop %v4065
      %v4067 = vmul.f32 %v3845, 1.442695
      %v4068 = vpow.pop %v4067
      %v4069 = vmul.f32 %v3849, 1.442695
      %v4070 = vpow.pop %v4069
      %v4071 = vmul.f32 %v3851, 1.442695
      %v4072 = vpow.pop %v4071
      %v4073 = vmul.f32 %v3853, 1.442695
      %v4074 = vpow.pop %v4073
      %v4075 = vmul.f32 %v3855, 1.442695
      %v4076 = vpow.pop %v4075
      %v4077 = vmul.f32 %v3859, 1.442695
      %v4078 = vpow.pop %v4077
      %v4079 = vmul.f32 %v3861, 1.442695
      %v4080 = vpow.pop %v4079
      %v4081 = vmul.f32 %v3863, 1.442695
      %v4082 = vpow.pop %v4081
      %v4083 = vmul.f32 %v3865, 1.442695
      %v4084 = vpow.pop %v4083
      %v4085 = vmul.f32 %v3869, 1.442695
      %v4086 = vpow.pop %v4085
      %v4087 = vmul.f32 %v3871, 1.442695
      %v4088 = vpow.pop %v4087
      %v4089 = vmul.f32 %v3873, 1.442695
      %v4090 = vpow.pop %v4089
      %v4091 = vmul.f32 %v3875, 1.442695
      %v4092 = vpow.pop %v4091
      %v4093 = vmul.f32 %v3879, 1.442695
      %v4094 = vpow.pop %v4093
      %v4095 = vmul.f32 %v3881, 1.442695
      %v4096 = vpow.pop %v4095
      %v4097 = vmul.f32 %v3883, 1.442695
      %v4098 = vpow.pop %v4097
      %v4099 = vmul.f32 %v3885, 1.442695
      %v4100 = vpow.pop %v4099
      %v4101 = vmul.f32 %v3889, 1.442695
      %v4102 = vpow.pop %v4101
      %v4103 = vmul.f32 %v3891, 1.442695
      %v4104 = vpow.pop %v4103
      %v4105 = vmul.f32 %v3893, 1.442695
      %v4106 = vpow.pop %v4105
      %v4107 = vmul.f32 %v3895, 1.442695
      %v4108 = vpow.pop %v4107
      %v4109 = vmul.f32 %v3899, 1.442695
      %v4110 = vpow.pop %v4109
      %v4111 = vmul.f32 %v3901, 1.442695
      %v4112 = vpow.pop %v4111
      %v4113 = vmul.f32 %v3903, 1.442695
      %v4114 = vpow.pop %v4113
      %v4115 = vmul.f32 %v3905, 1.442695
      %v4116 = vpow.pop %v4115
      %v4117 = vmul.f32 %v3909, 1.442695
      %v4118 = vpow.pop %v4117
      %v4119 = vmul.f32 %v3911, 1.442695
      %v4120 = vpow.pop %v4119
      %v4121 = vmul.f32 %v3913, 1.442695
      %v4122 = vpow.pop %v4121
      %v4123 = vmul.f32 %v3915, 1.442695
      %v4124 = vpow.pop %v4123
      %v4125 = vmul.f32 %v3919, 1.442695
      %v4126 = vpow.pop %v4125
      %v4127 = vmul.f32 %v3921, 1.442695
      %v4128 = vpow.pop %v4127
      %v4129 = vmul.f32 %v3923, 1.442695
      %v4130 = vpow.pop %v4129
      %v4131 = vmul.f32 %v3925, 1.442695
      %v4132 = vpow.pop %v4131
      %v4133 = vmul.f32 %v3929, 1.442695
      %v4134 = vpow.pop %v4133
      %v4135 = vmul.f32 %v3931, 1.442695
      %v4136 = vpow.pop %v4135
      %v4137 = vmul.f32 %v3933, 1.442695
      %v4138 = vpow.pop %v4137
      %v4139 = vmul.f32 %v3935, 1.442695
      %v4140 = vpow.pop %v4139
      %v4141 = vmul.f32 %v3939, 1.442695
      %v4142 = vpow.pop %v4141
      %v4143 = vmul.f32 %v3941, 1.442695
      %v4144 = vpow.pop %v4143
      %v4145 = vmul.f32 %v3943, 1.442695
      %v4146 = vpow.pop %v4145
      %v4147 = vmul.f32 %v3945, 1.442695
      %v4148 = vpow.pop %v4147
      %v4149 = vmul.f32 %v3949, 1.442695
      %v4150 = vpow.pop %v4149
      %v4151 = vmul.f32 %v3951, 1.442695
      %v4152 = vpow.pop %v4151
      %v4153 = vmul.f32 %v3953, 1.442695
      %v4154 = vpow.pop %v4153
      %v4155 = vmul.f32 %v3955, 1.442695
      %v4156 = vpow.pop %v4155
      %v4157 = vmul.f32 %v3959, 1.442695
      %v4158 = vpow.pop %v4157
      %v4159 = vmul.f32 %v3961, 1.442695
      %v4160 = vpow.pop %v4159
      %v4161 = vmul.f32 %v3963, 1.442695
      %v4162 = vpow.pop %v4161
      %v4163 = vmul.f32 %v3965, 1.442695
      %v4164 = vpow.pop %v4163
      %v4165 = vmul.f32 %v3969, 1.442695
      %v4166 = vpow.pop %v4165
      %v4167 = vmul.f32 %v3971, 1.442695
      %v4168 = vpow.pop %v4167
      %v4169 = vmul.f32 %v3973, 1.442695
      %v4170 = vpow.pop %v4169
      %v4171 = vmul.f32 %v3975, 1.442695
      %v4172 = vpow.pop %v4171
      %v4173 = vmul.f32 %v3979, 1.442695
      %v4174 = vpow.pop %v4173
      %v4175 = vmul.f32 %v3981, 1.442695
      %v4176 = vpow.pop %v4175
      %v4177 = vmul.f32 %v3983, 1.442695
      %v4178 = vpow.pop %v4177
      %v4179 = vmul.f32 %v3985, 1.442695
      %v4180 = vpow.pop %v4179
      %v4181 = vmul.f32 %v3989, 1.442695
      %v4182 = vpow.pop %v4181
      %v4183 = vmul.f32 %v3991, 1.442695
      %v4184 = vpow.pop %v4183
      %v4185 = vmul.f32 %v3993, 1.442695
      %v4186 = vpow.pop %v4185
      %v4187 = vmul.f32 %v3995, 1.442695
      %v4188 = vpow.pop %v4187
      %v4189 = vsub.f32 %v4062, 1.0
      %v4190 = vsub.f32 %v4064, 1.0
      %v4191 = vsub.f32 %v4066, 1.0
      %v4192 = vsub.f32 %v4068, 1.0
      %v4193 = vsub.f32 %v4070, 1.0
      %v4194 = vsub.f32 %v4072, 1.0
      %v4195 = vsub.f32 %v4074, 1.0
      %v4196 = vsub.f32 %v4076, 1.0
      %v4197 = vsub.f32 %v4078, 1.0
      %v4198 = vsub.f32 %v4080, 1.0
      %v4199 = vsub.f32 %v4082, 1.0
      %v4200 = vsub.f32 %v4084, 1.0
      %v4201 = vsub.f32 %v4086, 1.0
      %v4202 = vsub.f32 %v4088, 1.0
      %v4203 = vsub.f32 %v4090, 1.0
      %v4204 = vsub.f32 %v4092, 1.0
      %v4205 = vsub.f32 %v4094, 1.0
      %v4206 = vsub.f32 %v4096, 1.0
      %v4207 = vsub.f32 %v4098, 1.0
      %v4208 = vsub.f32 %v4100, 1.0
      %v4209 = vsub.f32 %v4102, 1.0
      %v4210 = vsub.f32 %v4104, 1.0
      %v4211 = vsub.f32 %v4106, 1.0
      %v4212 = vsub.f32 %v4108, 1.0
      %v4213 = vsub.f32 %v4110, 1.0
      %v4214 = vsub.f32 %v4112, 1.0
      %v4215 = vsub.f32 %v4114, 1.0
      %v4216 = vsub.f32 %v4116, 1.0
      %v4217 = vsub.f32 %v4118, 1.0
      %v4218 = vsub.f32 %v4120, 1.0
      %v4219 = vsub.f32 %v4122, 1.0
      %v4220 = vsub.f32 %v4124, 1.0
      %v4221 = vsub.f32 %v4126, 1.0
      %v4222 = vsub.f32 %v4128, 1.0
      %v4223 = vsub.f32 %v4130, 1.0
      %v4224 = vsub.f32 %v4132, 1.0
      %v4225 = vsub.f32 %v4134, 1.0
      %v4226 = vsub.f32 %v4136, 1.0
      %v4227 = vsub.f32 %v4138, 1.0
      %v4228 = vsub.f32 %v4140, 1.0
      %v4229 = vsub.f32 %v4142, 1.0
      %v4230 = vsub.f32 %v4144, 1.0
      %v4231 = vsub.f32 %v4146, 1.0
      %v4232 = vsub.f32 %v4148, 1.0
      %v4233 = vsub.f32 %v4150, 1.0
      %v4234 = vsub.f32 %v4152, 1.0
      %v4235 = vsub.f32 %v4154, 1.0
      %v4236 = vsub.f32 %v4156, 1.0
      %v4237 = vsub.f32 %v4158, 1.0
      %v4238 = vsub.f32 %v4160, 1.0
      %v4239 = vsub.f32 %v4162, 1.0
      %v4240 = vsub.f32 %v4164, 1.0
      %v4241 = vsub.f32 %v4166, 1.0
      %v4242 = vsub.f32 %v4168, 1.0
      %v4243 = vsub.f32 %v4170, 1.0
      %v4244 = vsub.f32 %v4172, 1.0
      %v4245 = vsub.f32 %v4174, 1.0
      %v4246 = vsub.f32 %v4176, 1.0
      %v4247 = vsub.f32 %v4178, 1.0
      %v4248 = vsub.f32 %v4180, 1.0
      %v4249 = vsub.f32 %v4182, 1.0
      %v4250 = vsub.f32 %v4184, 1.0
      %v4251 = vsub.f32 %v4186, 1.0
      %v4252 = vsub.f32 %v4188, 1.0
      %v4253 = vsel %vm3997, %v3839, %v4189
      %v4254 = vsel %vm3998, %v3841, %v4190
      %v4255 = vsel %vm3999, %v3843, %v4191
      %v4256 = vsel %vm4000, %v3845, %v4192
      %v4257 = vsel %vm4001, %v3849, %v4193
      %v4258 = vsel %vm4002, %v3851, %v4194
      %v4259 = vsel %vm4003, %v3853, %v4195
      %v4260 = vsel %vm4004, %v3855, %v4196
      %v4261 = vsel %vm4005, %v3859, %v4197
      %v4262 = vsel %vm4006, %v3861, %v4198
      %v4263 = vsel %vm4007, %v3863, %v4199
      %v4264 = vsel %vm4008, %v3865, %v4200
      %v4265 = vsel %vm4009, %v3869, %v4201
      %v4266 = vsel %vm4010, %v3871, %v4202
      %v4267 = vsel %vm4011, %v3873, %v4203
      %v4268 = vsel %vm4012, %v3875, %v4204
      %v4269 = vsel %vm4013, %v3879, %v4205
      %v4270 = vsel %vm4014, %v3881, %v4206
      %v4271 = vsel %vm4015, %v3883, %v4207
      %v4272 = vsel %vm4016, %v3885, %v4208
      %v4273 = vsel %vm4017, %v3889, %v4209
      %v4274 = vsel %vm4018, %v3891, %v4210
      %v4275 = vsel %vm4019, %v3893, %v4211
      %v4276 = vsel %vm4020, %v3895, %v4212
      %v4277 = vsel %vm4021, %v3899, %v4213
      %v4278 = vsel %vm4022, %v3901, %v4214
      %v4279 = vsel %vm4023, %v3903, %v4215
      %v4280 = vsel %vm4024, %v3905, %v4216
      %v4281 = vsel %vm4025, %v3909, %v4217
      %v4282 = vsel %vm4026, %v3911, %v4218
      %v4283 = vsel %vm4027, %v3913, %v4219
      %v4284 = vsel %vm4028, %v3915, %v4220
      %v4285 = vsel %vm4029, %v3919, %v4221
      %v4286 = vsel %vm4030, %v3921, %v4222
      %v4287 = vsel %vm4031, %v3923, %v4223
      %v4288 = vsel %vm4032, %v3925, %v4224
      %v4289 = vsel %vm4033, %v3929, %v4225
      %v4290 = vsel %vm4034, %v3931, %v4226
      %v4291 = vsel %vm4035, %v3933, %v4227
      %v4292 = vsel %vm4036, %v3935, %v4228
      %v4293 = vsel %vm4037, %v3939, %v4229
      %v4294 = vsel %vm4038, %v3941, %v4230
      %v4295 = vsel %vm4039, %v3943, %v4231
      %v4296 = vsel %vm4040, %v3945, %v4232
      %v4297 = vsel %vm4041, %v3949, %v4233
      %v4298 = vsel %vm4042, %v3951, %v4234
      %v4299 = vsel %vm4043, %v3953, %v4235
      %v4300 = vsel %vm4044, %v3955, %v4236
      %v4301 = vsel %vm4045, %v3959, %v4237
      %v4302 = vsel %vm4046, %v3961, %v4238
      %v4303 = vsel %vm4047, %v3963, %v4239
      %v4304 = vsel %vm4048, %v3965, %v4240
      %v4305 = vsel %vm4049, %v3969, %v4241
      %v4306 = vsel %vm4050, %v3971, %v4242
      %v4307 = vsel %vm4051, %v3973, %v4243
      %v4308 = vsel %vm4052, %v3975, %v4244
      %v4309 = vsel %vm4053, %v3979, %v4245
      %v4310 = vsel %vm4054, %v3981, %v4246
      %v4311 = vsel %vm4055, %v3983, %v4247
      %v4312 = vsel %vm4056, %v3985, %v4248
      %v4313 = vsel %vm4057, %v3989, %v4249
      %v4314 = vsel %vm4058, %v3991, %v4250
      %v4315 = vsel %vm4059, %v3993, %v4251
      %v4316 = vsel %vm4060, %v3995, %v4252
      %v4317 = vpack.c.bf16 %v4255, %v4253
      %v4318 = vpack.c.bf16 %v4256, %v4254
      %v4319 = vpack.c.bf16 %v4259, %v4257
      %v4320 = vpack.c.bf16 %v4260, %v4258
      %v4321 = vpack.c.bf16 %v4263, %v4261
      %v4322 = vpack.c.bf16 %v4264, %v4262
      %v4323 = vpack.c.bf16 %v4267, %v4265
      %v4324 = vpack.c.bf16 %v4268, %v4266
      %v4325 = vpack.c.bf16 %v4271, %v4269
      %v4326 = vpack.c.bf16 %v4272, %v4270
      %v4327 = vpack.c.bf16 %v4275, %v4273
      %v4328 = vpack.c.bf16 %v4276, %v4274
      %v4329 = vpack.c.bf16 %v4279, %v4277
      %v4330 = vpack.c.bf16 %v4280, %v4278
      %v4331 = vpack.c.bf16 %v4283, %v4281
      %v4332 = vpack.c.bf16 %v4284, %v4282
      %v4333 = vpack.c.bf16 %v4287, %v4285
      %v4334 = vpack.c.bf16 %v4288, %v4286
      %v4335 = vpack.c.bf16 %v4291, %v4289
      %v4336 = vpack.c.bf16 %v4292, %v4290
      %v4337 = vpack.c.bf16 %v4295, %v4293
      %v4338 = vpack.c.bf16 %v4296, %v4294
      %v4339 = vpack.c.bf16 %v4299, %v4297
      %v4340 = vpack.c.bf16 %v4300, %v4298
      %v4341 = vpack.c.bf16 %v4303, %v4301
      %v4342 = vpack.c.bf16 %v4304, %v4302
      %v4343 = vpack.c.bf16 %v4307, %v4305
      %v4344 = vpack.c.bf16 %v4308, %v4306
      %v4345 = vpack.c.bf16 %v4311, %v4309
      %v4346 = vpack.c.bf16 %v4312, %v4310
      %v4347 = vpack.c.bf16 %v4315, %v4313
      %v4348 = vpack.c.bf16 %v4316, %v4314
      %s4349 = scalar_lea.vmem %s2, 768
      %v4350 = vld [vmem:[%s4349] sm:$0xff]
      %v4351 = vld [vmem:[%s4349 + $0x8] sm:$0xff]
      %v4352 = vld [vmem:[%s4349 + $0x10] sm:$0xff]
      %v4353 = vld [vmem:[%s4349 + $0x18] sm:$0xff]
      %v4354 = vld [vmem:[%s4349 + $0x20] sm:$0xff]
      %v4355 = vld [vmem:[%s4349 + $0x28] sm:$0xff]
      %v4356 = vld [vmem:[%s4349 + $0x30] sm:$0xff]
      %v4357 = vld [vmem:[%s4349 + $0x38] sm:$0xff]
      %v4358 = vld [vmem:[%s4349 + $0x40] sm:$0xff]
      %v4359 = vld [vmem:[%s4349 + $0x48] sm:$0xff]
      %v4360 = vld [vmem:[%s4349 + $0x50] sm:$0xff]
      %v4361 = vld [vmem:[%s4349 + $0x58] sm:$0xff]
      %v4362 = vld [vmem:[%s4349 + $0x60] sm:$0xff]
      %v4363 = vld [vmem:[%s4349 + $0x68] sm:$0xff]
      %v4364 = vld [vmem:[%s4349 + $0x70] sm:$0xff]
      %v4365 = vld [vmem:[%s4349 + $0x78] sm:$0xff]
      %v4366 = vld [vmem:[%s4349 + $0x80] sm:$0xff]
      %v4367 = vld [vmem:[%s4349 + $0x88] sm:$0xff]
      %v4368 = vld [vmem:[%s4349 + $0x90] sm:$0xff]
      %v4369 = vld [vmem:[%s4349 + $0x98] sm:$0xff]
      %v4370 = vld [vmem:[%s4349 + $0xa0] sm:$0xff]
      %v4371 = vld [vmem:[%s4349 + $0xa8] sm:$0xff]
      %v4372 = vld [vmem:[%s4349 + $0xb0] sm:$0xff]
      %v4373 = vld [vmem:[%s4349 + $0xb8] sm:$0xff]
      %v4374 = vld [vmem:[%s4349 + $0xc0] sm:$0xff]
      %v4375 = vld [vmem:[%s4349 + $0xc8] sm:$0xff]
      %v4376 = vld [vmem:[%s4349 + $0xd0] sm:$0xff]
      %v4377 = vld [vmem:[%s4349 + $0xd8] sm:$0xff]
      %v4378 = vld [vmem:[%s4349 + $0xe0] sm:$0xff]
      %v4379 = vld [vmem:[%s4349 + $0xe8] sm:$0xff]
      %v4380 = vld [vmem:[%s4349 + $0xf0] sm:$0xff]
      %v4381 = vld [vmem:[%s4349 + $0xf8] sm:$0xff]
      %s4382 = scalar_lea.vmem %s4, 5
      %v4383 = vld [vmem:[%s4382] ss:$8 sm:$0x3]
      %v4385 = vlaneseq
      %v4386 = vshrl.u32 %v4385, 7
      %v4387 = vsub.s32 0, %v4386
      %v4388 = vrot.slane %v4383, %v4387
      %v4389 = vlaneseq
      %v4390 = vshrl.u32 %v4389, 7
      %v4391 = vsub.s32 1, %v4390
      %v4392 = vrot.slane %v4383, %v4391
      %v4427 = vunpack.c.l.b16 %v4350
      %v4428 = vunpack.c.h.b16 %v4350
      %v4429 = vunpack.c.l.b16 %v4351
      %v4430 = vunpack.c.h.b16 %v4351
      %v4431 = vunpack.c.l.b16 %v4352
      %v4432 = vunpack.c.h.b16 %v4352
      %v4433 = vunpack.c.l.b16 %v4353
      %v4434 = vunpack.c.h.b16 %v4353
      %v4435 = vunpack.c.l.b16 %v4354
      %v4436 = vunpack.c.h.b16 %v4354
      %v4437 = vunpack.c.l.b16 %v4355
      %v4438 = vunpack.c.h.b16 %v4355
      %v4439 = vunpack.c.l.b16 %v4356
      %v4440 = vunpack.c.h.b16 %v4356
      %v4441 = vunpack.c.l.b16 %v4357
      %v4442 = vunpack.c.h.b16 %v4357
      %v4443 = vunpack.c.l.b16 %v4358
      %v4444 = vunpack.c.h.b16 %v4358
      %v4445 = vunpack.c.l.b16 %v4359
      %v4446 = vunpack.c.h.b16 %v4359
      %v4447 = vunpack.c.l.b16 %v4360
      %v4448 = vunpack.c.h.b16 %v4360
      %v4449 = vunpack.c.l.b16 %v4361
      %v4450 = vunpack.c.h.b16 %v4361
      %v4451 = vunpack.c.l.b16 %v4362
      %v4452 = vunpack.c.h.b16 %v4362
      %v4453 = vunpack.c.l.b16 %v4363
      %v4454 = vunpack.c.h.b16 %v4363
      %v4455 = vunpack.c.l.b16 %v4364
      %v4456 = vunpack.c.h.b16 %v4364
      %v4457 = vunpack.c.l.b16 %v4365
      %v4458 = vunpack.c.h.b16 %v4365
      %v4459 = vunpack.c.l.b16 %v4366
      %v4460 = vunpack.c.h.b16 %v4366
      %v4461 = vunpack.c.l.b16 %v4367
      %v4462 = vunpack.c.h.b16 %v4367
      %v4463 = vunpack.c.l.b16 %v4368
      %v4464 = vunpack.c.h.b16 %v4368
      %v4465 = vunpack.c.l.b16 %v4369
      %v4466 = vunpack.c.h.b16 %v4369
      %v4467 = vunpack.c.l.b16 %v4370
      %v4468 = vunpack.c.h.b16 %v4370
      %v4469 = vunpack.c.l.b16 %v4371
      %v4470 = vunpack.c.h.b16 %v4371
      %v4471 = vunpack.c.l.b16 %v4372
      %v4472 = vunpack.c.h.b16 %v4372
      %v4473 = vunpack.c.l.b16 %v4373
      %v4474 = vunpack.c.h.b16 %v4373
      %v4475 = vunpack.c.l.b16 %v4374
      %v4476 = vunpack.c.h.b16 %v4374
      %v4477 = vunpack.c.l.b16 %v4375
      %v4478 = vunpack.c.h.b16 %v4375
      %v4479 = vunpack.c.l.b16 %v4376
      %v4480 = vunpack.c.h.b16 %v4376
      %v4481 = vunpack.c.l.b16 %v4377
      %v4482 = vunpack.c.h.b16 %v4377
      %v4483 = vunpack.c.l.b16 %v4378
      %v4484 = vunpack.c.h.b16 %v4378
      %v4485 = vunpack.c.l.b16 %v4379
      %v4486 = vunpack.c.h.b16 %v4379
      %v4487 = vunpack.c.l.b16 %v4380
      %v4488 = vunpack.c.h.b16 %v4380
      %v4489 = vunpack.c.l.b16 %v4381
      %v4490 = vunpack.c.h.b16 %v4381
      %v4491 = vpack.c.b16 %v4429, %v4427
      %v4492 = vpack.c.b16 %v4430, %v4428
      %v4493 = vpack.c.b16 %v4433, %v4431
      %v4494 = vpack.c.b16 %v4434, %v4432
      %v4495 = vpack.c.b16 %v4437, %v4435
      %v4496 = vpack.c.b16 %v4438, %v4436
      %v4497 = vpack.c.b16 %v4441, %v4439
      %v4498 = vpack.c.b16 %v4442, %v4440
      %v4499 = vpack.c.b16 %v4445, %v4443
      %v4500 = vpack.c.b16 %v4446, %v4444
      %v4501 = vpack.c.b16 %v4449, %v4447
      %v4502 = vpack.c.b16 %v4450, %v4448
      %v4503 = vpack.c.b16 %v4453, %v4451
      %v4504 = vpack.c.b16 %v4454, %v4452
      %v4505 = vpack.c.b16 %v4457, %v4455
      %v4506 = vpack.c.b16 %v4458, %v4456
      %v4507 = vpack.c.b16 %v4461, %v4459
      %v4508 = vpack.c.b16 %v4462, %v4460
      %v4509 = vpack.c.b16 %v4465, %v4463
      %v4510 = vpack.c.b16 %v4466, %v4464
      %v4511 = vpack.c.b16 %v4469, %v4467
      %v4512 = vpack.c.b16 %v4470, %v4468
      %v4513 = vpack.c.b16 %v4473, %v4471
      %v4514 = vpack.c.b16 %v4474, %v4472
      %v4515 = vpack.c.b16 %v4477, %v4475
      %v4516 = vpack.c.b16 %v4478, %v4476
      %v4517 = vpack.c.b16 %v4481, %v4479
      %v4518 = vpack.c.b16 %v4482, %v4480
      %v4519 = vpack.c.b16 %v4485, %v4483
      %v4520 = vpack.c.b16 %v4486, %v4484
      %v4521 = vpack.c.b16 %v4489, %v4487
      %v4522 = vpack.c.b16 %v4490, %v4488
      %4555 = vmatprep.subr.bf16.mxu0 %v4492
      %4556 = vmatpush1.bf16.msra.mxu0 %v4491
      %4557 = vmatprep.subr.bf16.mxu0 %v4494
      %4558 = vmatpush1.bf16.msra.mxu0 %v4493
      %4559 = vmatprep.subr.bf16.mxu0 %v4496
      %4560 = vmatpush1.bf16.msra.mxu0 %v4495
      %4561 = vmatprep.subr.bf16.mxu0 %v4498
      %4562 = vmatpush1.bf16.msra.mxu0 %v4497
      %4563 = vmatprep.subr.bf16.mxu0 %v4500
      %4564 = vmatpush1.bf16.msra.mxu0 %v4499
      %4565 = vmatprep.subr.bf16.mxu0 %v4502
      %4566 = vmatpush1.bf16.msra.mxu0 %v4501
      %4567 = vmatprep.subr.bf16.mxu0 %v4504
      %4568 = vmatpush1.bf16.msra.mxu0 %v4503
      %4569 = vmatprep.subr.bf16.mxu0 %v4506
      %4570 = vmatpush1.bf16.msra.mxu0 %v4505
      %4571 = vmatprep.subr.bf16.mxu0 %v4508
      %4572 = vmatpush1.bf16.msra.mxu0 %v4507
      %4573 = vmatprep.subr.bf16.mxu0 %v4510
      %4574 = vmatpush1.bf16.msra.mxu0 %v4509
      %4575 = vmatprep.subr.bf16.mxu0 %v4512
      %4576 = vmatpush1.bf16.msra.mxu0 %v4511
      %4577 = vmatprep.subr.bf16.mxu0 %v4514
      %4578 = vmatpush1.bf16.msra.mxu0 %v4513
      %4579 = vmatprep.subr.bf16.mxu0 %v4516
      %4580 = vmatpush1.bf16.msra.mxu0 %v4515
      %4581 = vmatprep.subr.bf16.mxu0 %v4518
      %4582 = vmatpush1.bf16.msra.mxu0 %v4517
      %4583 = vmatprep.subr.bf16.mxu0 %v4520
      %4584 = vmatpush1.bf16.msra.mxu0 %v4519
      %4585 = vmatprep.subr.bf16.mxu0 %v4522
      %4586 = vmatpush1.bf16.msra.mxu0 %v4521
      %4587 = vmatprep.mubr.bf16.mxu0 %v4318
      %4588 = vmatmul.mubr.bf16.gmra.mrb[0].mxu0 %v4317
      %v4589 = vpop.f32.mrb[0].mxu0
      %v4590 = vadd.f32 %v4388, %v4589
      %v4591 = vpop.f32.mrb[0].mxu0
      %v4592 = vadd.f32 %v4392, %v4591
      %v4593 = vpop.f32.mrb[0].mxu0
      %v4594 = vadd.f32 %v4388, %v4593
      %v4595 = vpop.f32.mrb[0].mxu0
      %v4596 = vadd.f32 %v4392, %v4595
      %4597 = vmatprep.mubr.bf16.mxu0 %v4320
      %4598 = vmatmul.mubr.bf16.gmra.mrb[0].mxu0 %v4319
      %v4599 = vpop.f32.mrb[0].mxu0
      %v4600 = vadd.f32 %v4388, %v4599
      %v4601 = vpop.f32.mrb[0].mxu0
      %v4602 = vadd.f32 %v4392, %v4601
      %v4603 = vpop.f32.mrb[0].mxu0
      %v4604 = vadd.f32 %v4388, %v4603
      %v4605 = vpop.f32.mrb[0].mxu0
      %v4606 = vadd.f32 %v4392, %v4605
      %4607 = vmatprep.mubr.bf16.mxu0 %v4322
      %4608 = vmatmul.mubr.bf16.gmra.mrb[0].mxu0 %v4321
      %v4609 = vpop.f32.mrb[0].mxu0
      %v4610 = vadd.f32 %v4388, %v4609
      %v4611 = vpop.f32.mrb[0].mxu0
      %v4612 = vadd.f32 %v4392, %v4611
      %v4613 = vpop.f32.mrb[0].mxu0
      %v4614 = vadd.f32 %v4388, %v4613
      %v4615 = vpop.f32.mrb[0].mxu0
      %v4616 = vadd.f32 %v4392, %v4615
      %4617 = vmatprep.mubr.bf16.mxu0 %v4324
      %4618 = vmatmul.mubr.bf16.gmra.mrb[0].mxu0 %v4323
      %v4619 = vpop.f32.mrb[0].mxu0
      %v4620 = vadd.f32 %v4388, %v4619
      %v4621 = vpop.f32.mrb[0].mxu0
      %v4622 = vadd.f32 %v4392, %v4621
      %v4623 = vpop.f32.mrb[0].mxu0
      %v4624 = vadd.f32 %v4388, %v4623
      %v4625 = vpop.f32.mrb[0].mxu0
      %v4626 = vadd.f32 %v4392, %v4625
      %4627 = vmatprep.mubr.bf16.mxu0 %v4326
      %4628 = vmatmul.mubr.bf16.gmra.mrb[0].mxu0 %v4325
      %v4629 = vpop.f32.mrb[0].mxu0
      %v4630 = vadd.f32 %v4388, %v4629
      %v4631 = vpop.f32.mrb[0].mxu0
      %v4632 = vadd.f32 %v4392, %v4631
      %v4633 = vpop.f32.mrb[0].mxu0
      %v4634 = vadd.f32 %v4388, %v4633
      %v4635 = vpop.f32.mrb[0].mxu0
      %v4636 = vadd.f32 %v4392, %v4635
      %4637 = vmatprep.mubr.bf16.mxu0 %v4328
      %4638 = vmatmul.mubr.bf16.gmra.mrb[0].mxu0 %v4327
      %v4639 = vpop.f32.mrb[0].mxu0
      %v4640 = vadd.f32 %v4388, %v4639
      %v4641 = vpop.f32.mrb[0].mxu0
      %v4642 = vadd.f32 %v4392, %v4641
      %v4643 = vpop.f32.mrb[0].mxu0
      %v4644 = vadd.f32 %v4388, %v4643
      %v4645 = vpop.f32.mrb[0].mxu0
      %v4646 = vadd.f32 %v4392, %v4645
      %4647 = vmatprep.mubr.bf16.mxu0 %v4330
      %4648 = vmatmul.mubr.bf16.gmra.mrb[0].mxu0 %v4329
      %v4649 = vpop.f32.mrb[0].mxu0
      %v4650 = vadd.f32 %v4388, %v4649
      %v4651 = vpop.f32.mrb[0].mxu0
      %v4652 = vadd.f32 %v4392, %v4651
      %v4653 = vpop.f32.mrb[0].mxu0
      %v4654 = vadd.f32 %v4388, %v4653
      %v4655 = vpop.f32.mrb[0].mxu0
      %v4656 = vadd.f32 %v4392, %v4655
      %4657 = vmatprep.mubr.bf16.mxu0 %v4332
      %4658 = vmatmul.mubr.bf16.gmra.mrb[0].mxu0 %v4331
      %v4659 = vpop.f32.mrb[0].mxu0
      %v4660 = vadd.f32 %v4388, %v4659
      %v4661 = vpop.f32.mrb[0].mxu0
      %v4662 = vadd.f32 %v4392, %v4661
      %v4663 = vpop.f32.mrb[0].mxu0
      %v4664 = vadd.f32 %v4388, %v4663
      %v4665 = vpop.f32.mrb[0].mxu0
      %v4666 = vadd.f32 %v4392, %v4665
      %4667 = vmatprep.mubr.bf16.mxu0 %v4334
      %4668 = vmatmul.mubr.bf16.gmra.mrb[0].mxu0 %v4333
      %v4669 = vpop.f32.mrb[0].mxu0
      %v4670 = vadd.f32 %v4388, %v4669
      %v4671 = vpop.f32.mrb[0].mxu0
      %v4672 = vadd.f32 %v4392, %v4671
      %v4673 = vpop.f32.mrb[0].mxu0
      %v4674 = vadd.f32 %v4388, %v4673
      %v4675 = vpop.f32.mrb[0].mxu0
      %v4676 = vadd.f32 %v4392, %v4675
      %4677 = vmatprep.mubr.bf16.mxu0 %v4336
      %4678 = vmatmul.mubr.bf16.gmra.mrb[0].mxu0 %v4335
      %v4679 = vpop.f32.mrb[0].mxu0
      %v4680 = vadd.f32 %v4388, %v4679
      %v4681 = vpop.f32.mrb[0].mxu0
      %v4682 = vadd.f32 %v4392, %v4681
      %v4683 = vpop.f32.mrb[0].mxu0
      %v4684 = vadd.f32 %v4388, %v4683
      %v4685 = vpop.f32.mrb[0].mxu0
      %v4686 = vadd.f32 %v4392, %v4685
      %4687 = vmatprep.mubr.bf16.mxu0 %v4338
      %4688 = vmatmul.mubr.bf16.gmra.mrb[0].mxu0 %v4337
      %v4689 = vpop.f32.mrb[0].mxu0
      %v4690 = vadd.f32 %v4388, %v4689
      %v4691 = vpop.f32.mrb[0].mxu0
      %v4692 = vadd.f32 %v4392, %v4691
      %v4693 = vpop.f32.mrb[0].mxu0
      %v4694 = vadd.f32 %v4388, %v4693
      %v4695 = vpop.f32.mrb[0].mxu0
      %v4696 = vadd.f32 %v4392, %v4695
      %4697 = vmatprep.mubr.bf16.mxu0 %v4340
      %4698 = vmatmul.mubr.bf16.gmra.mrb[0].mxu0 %v4339
      %v4699 = vpop.f32.mrb[0].mxu0
      %v4700 = vadd.f32 %v4388, %v4699
      %v4701 = vpop.f32.mrb[0].mxu0
      %v4702 = vadd.f32 %v4392, %v4701
      %v4703 = vpop.f32.mrb[0].mxu0
      %v4704 = vadd.f32 %v4388, %v4703
      %v4705 = vpop.f32.mrb[0].mxu0
      %v4706 = vadd.f32 %v4392, %v4705
      %4707 = vmatprep.mubr.bf16.mxu0 %v4342
      %4708 = vmatmul.mubr.bf16.gmra.mrb[0].mxu0 %v4341
      %v4709 = vpop.f32.mrb[0].mxu0
      %v4710 = vadd.f32 %v4388, %v4709
      %v4711 = vpop.f32.mrb[0].mxu0
      %v4712 = vadd.f32 %v4392, %v4711
      %v4713 = vpop.f32.mrb[0].mxu0
      %v4714 = vadd.f32 %v4388, %v4713
      %v4715 = vpop.f32.mrb[0].mxu0
      %v4716 = vadd.f32 %v4392, %v4715
      %4717 = vmatprep.mubr.bf16.mxu0 %v4344
      %4718 = vmatmul.mubr.bf16.gmra.mrb[0].mxu0 %v4343
      %v4719 = vpop.f32.mrb[0].mxu0
      %v4720 = vadd.f32 %v4388, %v4719
      %v4721 = vpop.f32.mrb[0].mxu0
      %v4722 = vadd.f32 %v4392, %v4721
      %v4723 = vpop.f32.mrb[0].mxu0
      %v4724 = vadd.f32 %v4388, %v4723
      %v4725 = vpop.f32.mrb[0].mxu0
      %v4726 = vadd.f32 %v4392, %v4725
      %4727 = vmatprep.mubr.bf16.mxu0 %v4346
      %4728 = vmatmul.mubr.bf16.gmra.mrb[0].mxu0 %v4345
      %v4729 = vpop.f32.mrb[0].mxu0
      %v4730 = vadd.f32 %v4388, %v4729
      %v4731 = vpop.f32.mrb[0].mxu0
      %v4732 = vadd.f32 %v4392, %v4731
      %v4733 = vpop.f32.mrb[0].mxu0
      %v4734 = vadd.f32 %v4388, %v4733
      %v4735 = vpop.f32.mrb[0].mxu0
      %v4736 = vadd.f32 %v4392, %v4735
      %4737 = vmatprep.mubr.bf16.mxu0 %v4348
      %4738 = vmatmul.mubr.bf16.gmra.mrb[0].mxu0 %v4347
      %v4739 = vpop.f32.mrb[0].mxu0
      %v4740 = vadd.f32 %v4388, %v4739
      %v4741 = vpop.f32.mrb[0].mxu0
      %v4742 = vadd.f32 %v4392, %v4741
      %v4743 = vpop.f32.mrb[0].mxu0
      %v4744 = vadd.f32 %v4388, %v4743
      %v4745 = vpop.f32.mrb[0].mxu0
      %v4746 = vadd.f32 %v4392, %v4745
      %4747 = vdwg.mxu0
      %vm4748 = vcmp.gt.f32.partialorder %v4590, 0.0
      %vm4749 = vcmp.gt.f32.partialorder %v4592, 0.0
      %vm4750 = vcmp.gt.f32.partialorder %v4594, 0.0
      %vm4751 = vcmp.gt.f32.partialorder %v4596, 0.0
      %vm4752 = vcmp.gt.f32.partialorder %v4600, 0.0
      %vm4753 = vcmp.gt.f32.partialorder %v4602, 0.0
      %vm4754 = vcmp.gt.f32.partialorder %v4604, 0.0
      %vm4755 = vcmp.gt.f32.partialorder %v4606, 0.0
      %vm4756 = vcmp.gt.f32.partialorder %v4610, 0.0
      %vm4757 = vcmp.gt.f32.partialorder %v4612, 0.0
      %vm4758 = vcmp.gt.f32.partialorder %v4614, 0.0
      %vm4759 = vcmp.gt.f32.partialorder %v4616, 0.0
      %vm4760 = vcmp.gt.f32.partialorder %v4620, 0.0
      %vm4761 = vcmp.gt.f32.partialorder %v4622, 0.0
      %vm4762 = vcmp.gt.f32.partialorder %v4624, 0.0
      %vm4763 = vcmp.gt.f32.partialorder %v4626, 0.0
      %vm4764 = vcmp.gt.f32.partialorder %v4630, 0.0
      %vm4765 = vcmp.gt.f32.partialorder %v4632, 0.0
      %vm4766 = vcmp.gt.f32.partialorder %v4634, 0.0
      %vm4767 = vcmp.gt.f32.partialorder %v4636, 0.0
      %vm4768 = vcmp.gt.f32.partialorder %v4640, 0.0
      %vm4769 = vcmp.gt.f32.partialorder %v4642, 0.0
      %vm4770 = vcmp.gt.f32.partialorder %v4644, 0.0
      %vm4771 = vcmp.gt.f32.partialorder %v4646, 0.0
      %vm4772 = vcmp.gt.f32.partialorder %v4650, 0.0
      %vm4773 = vcmp.gt.f32.partialorder %v4652, 0.0
      %vm4774 = vcmp.gt.f32.partialorder %v4654, 0.0
      %vm4775 = vcmp.gt.f32.partialorder %v4656, 0.0
      %vm4776 = vcmp.gt.f32.partialorder %v4660, 0.0
      %vm4777 = vcmp.gt.f32.partialorder %v4662, 0.0
      %vm4778 = vcmp.gt.f32.partialorder %v4664, 0.0
      %vm4779 = vcmp.gt.f32.partialorder %v4666, 0.0
      %vm4780 = vcmp.gt.f32.partialorder %v4670, 0.0
      %vm4781 = vcmp.gt.f32.partialorder %v4672, 0.0
      %vm4782 = vcmp.gt.f32.partialorder %v4674, 0.0
      %vm4783 = vcmp.gt.f32.partialorder %v4676, 0.0
      %vm4784 = vcmp.gt.f32.partialorder %v4680, 0.0
      %vm4785 = vcmp.gt.f32.partialorder %v4682, 0.0
      %vm4786 = vcmp.gt.f32.partialorder %v4684, 0.0
      %vm4787 = vcmp.gt.f32.partialorder %v4686, 0.0
      %vm4788 = vcmp.gt.f32.partialorder %v4690, 0.0
      %vm4789 = vcmp.gt.f32.partialorder %v4692, 0.0
      %vm4790 = vcmp.gt.f32.partialorder %v4694, 0.0
      %vm4791 = vcmp.gt.f32.partialorder %v4696, 0.0
      %vm4792 = vcmp.gt.f32.partialorder %v4700, 0.0
      %vm4793 = vcmp.gt.f32.partialorder %v4702, 0.0
      %vm4794 = vcmp.gt.f32.partialorder %v4704, 0.0
      %vm4795 = vcmp.gt.f32.partialorder %v4706, 0.0
      %vm4796 = vcmp.gt.f32.partialorder %v4710, 0.0
      %vm4797 = vcmp.gt.f32.partialorder %v4712, 0.0
      %vm4798 = vcmp.gt.f32.partialorder %v4714, 0.0
      %vm4799 = vcmp.gt.f32.partialorder %v4716, 0.0
      %vm4800 = vcmp.gt.f32.partialorder %v4720, 0.0
      %vm4801 = vcmp.gt.f32.partialorder %v4722, 0.0
      %vm4802 = vcmp.gt.f32.partialorder %v4724, 0.0
      %vm4803 = vcmp.gt.f32.partialorder %v4726, 0.0
      %vm4804 = vcmp.gt.f32.partialorder %v4730, 0.0
      %vm4805 = vcmp.gt.f32.partialorder %v4732, 0.0
      %vm4806 = vcmp.gt.f32.partialorder %v4734, 0.0
      %vm4807 = vcmp.gt.f32.partialorder %v4736, 0.0
      %vm4808 = vcmp.gt.f32.partialorder %v4740, 0.0
      %vm4809 = vcmp.gt.f32.partialorder %v4742, 0.0
      %vm4810 = vcmp.gt.f32.partialorder %v4744, 0.0
      %vm4811 = vcmp.gt.f32.partialorder %v4746, 0.0
      %v4812 = vmul.f32 %v4590, 1.442695
      %v4813 = vpow.pop %v4812
      %v4814 = vmul.f32 %v4592, 1.442695
      %v4815 = vpow.pop %v4814
      %v4816 = vmul.f32 %v4594, 1.442695
      %v4817 = vpow.pop %v4816
      %v4818 = vmul.f32 %v4596, 1.442695
      %v4819 = vpow.pop %v4818
      %v4820 = vmul.f32 %v4600, 1.442695
      %v4821 = vpow.pop %v4820
      %v4822 = vmul.f32 %v4602, 1.442695
      %v4823 = vpow.pop %v4822
      %v4824 = vmul.f32 %v4604, 1.442695
      %v4825 = vpow.pop %v4824
      %v4826 = vmul.f32 %v4606, 1.442695
      %v4827 = vpow.pop %v4826
      %v4828 = vmul.f32 %v4610, 1.442695
      %v4829 = vpow.pop %v4828
      %v4830 = vmul.f32 %v4612, 1.442695
      %v4831 = vpow.pop %v4830
      %v4832 = vmul.f32 %v4614, 1.442695
      %v4833 = vpow.pop %v4832
      %v4834 = vmul.f32 %v4616, 1.442695
      %v4835 = vpow.pop %v4834
      %v4836 = vmul.f32 %v4620, 1.442695
      %v4837 = vpow.pop %v4836
      %v4838 = vmul.f32 %v4622, 1.442695
      %v4839 = vpow.pop %v4838
      %v4840 = vmul.f32 %v4624, 1.442695
      %v4841 = vpow.pop %v4840
      %v4842 = vmul.f32 %v4626, 1.442695
      %v4843 = vpow.pop %v4842
      %v4844 = vmul.f32 %v4630, 1.442695
      %v4845 = vpow.pop %v4844
      %v4846 = vmul.f32 %v4632, 1.442695
      %v4847 = vpow.pop %v4846
      %v4848 = vmul.f32 %v4634, 1.442695
      %v4849 = vpow.pop %v4848
      %v4850 = vmul.f32 %v4636, 1.442695
      %v4851 = vpow.pop %v4850
      %v4852 = vmul.f32 %v4640, 1.442695
      %v4853 = vpow.pop %v4852
      %v4854 = vmul.f32 %v4642, 1.442695
      %v4855 = vpow.pop %v4854
      %v4856 = vmul.f32 %v4644, 1.442695
      %v4857 = vpow.pop %v4856
      %v4858 = vmul.f32 %v4646, 1.442695
      %v4859 = vpow.pop %v4858
      %v4860 = vmul.f32 %v4650, 1.442695
      %v4861 = vpow.pop %v4860
      %v4862 = vmul.f32 %v4652, 1.442695
      %v4863 = vpow.pop %v4862
      %v4864 = vmul.f32 %v4654, 1.442695
      %v4865 = vpow.pop %v4864
      %v4866 = vmul.f32 %v4656, 1.442695
      %v4867 = vpow.pop %v4866
      %v4868 = vmul.f32 %v4660, 1.442695
      %v4869 = vpow.pop %v4868
      %v4870 = vmul.f32 %v4662, 1.442695
      %v4871 = vpow.pop %v4870
      %v4872 = vmul.f32 %v4664, 1.442695
      %v4873 = vpow.pop %v4872
      %v4874 = vmul.f32 %v4666, 1.442695
      %v4875 = vpow.pop %v4874
      %v4876 = vmul.f32 %v4670, 1.442695
      %v4877 = vpow.pop %v4876
      %v4878 = vmul.f32 %v4672, 1.442695
      %v4879 = vpow.pop %v4878
      %v4880 = vmul.f32 %v4674, 1.442695
      %v4881 = vpow.pop %v4880
      %v4882 = vmul.f32 %v4676, 1.442695
      %v4883 = vpow.pop %v4882
      %v4884 = vmul.f32 %v4680, 1.442695
      %v4885 = vpow.pop %v4884
      %v4886 = vmul.f32 %v4682, 1.442695
      %v4887 = vpow.pop %v4886
      %v4888 = vmul.f32 %v4684, 1.442695
      %v4889 = vpow.pop %v4888
      %v4890 = vmul.f32 %v4686, 1.442695
      %v4891 = vpow.pop %v4890
      %v4892 = vmul.f32 %v4690, 1.442695
      %v4893 = vpow.pop %v4892
      %v4894 = vmul.f32 %v4692, 1.442695
      %v4895 = vpow.pop %v4894
      %v4896 = vmul.f32 %v4694, 1.442695
      %v4897 = vpow.pop %v4896
      %v4898 = vmul.f32 %v4696, 1.442695
      %v4899 = vpow.pop %v4898
      %v4900 = vmul.f32 %v4700, 1.442695
      %v4901 = vpow.pop %v4900
      %v4902 = vmul.f32 %v4702, 1.442695
      %v4903 = vpow.pop %v4902
      %v4904 = vmul.f32 %v4704, 1.442695
      %v4905 = vpow.pop %v4904
      %v4906 = vmul.f32 %v4706, 1.442695
      %v4907 = vpow.pop %v4906
      %v4908 = vmul.f32 %v4710, 1.442695
      %v4909 = vpow.pop %v4908
      %v4910 = vmul.f32 %v4712, 1.442695
      %v4911 = vpow.pop %v4910
      %v4912 = vmul.f32 %v4714, 1.442695
      %v4913 = vpow.pop %v4912
      %v4914 = vmul.f32 %v4716, 1.442695
      %v4915 = vpow.pop %v4914
      %v4916 = vmul.f32 %v4720, 1.442695
      %v4917 = vpow.pop %v4916
      %v4918 = vmul.f32 %v4722, 1.442695
      %v4919 = vpow.pop %v4918
      %v4920 = vmul.f32 %v4724, 1.442695
      %v4921 = vpow.pop %v4920
      %v4922 = vmul.f32 %v4726, 1.442695
      %v4923 = vpow.pop %v4922
      %v4924 = vmul.f32 %v4730, 1.442695
      %v4925 = vpow.pop %v4924
      %v4926 = vmul.f32 %v4732, 1.442695
      %v4927 = vpow.pop %v4926
      %v4928 = vmul.f32 %v4734, 1.442695
      %v4929 = vpow.pop %v4928
      %v4930 = vmul.f32 %v4736, 1.442695
      %v4931 = vpow.pop %v4930
      %v4932 = vmul.f32 %v4740, 1.442695
      %v4933 = vpow.pop %v4932
      %v4934 = vmul.f32 %v4742, 1.442695
      %v4935 = vpow.pop %v4934
      %v4936 = vmul.f32 %v4744, 1.442695
      %v4937 = vpow.pop %v4936
      %v4938 = vmul.f32 %v4746, 1.442695
      %v4939 = vpow.pop %v4938
      %v4940 = vsub.f32 %v4813, 1.0
      %v4941 = vsub.f32 %v4815, 1.0
      %v4942 = vsub.f32 %v4817, 1.0
      %v4943 = vsub.f32 %v4819, 1.0
      %v4944 = vsub.f32 %v4821, 1.0
      %v4945 = vsub.f32 %v4823, 1.0
      %v4946 = vsub.f32 %v4825, 1.0
      %v4947 = vsub.f32 %v4827, 1.0
      %v4948 = vsub.f32 %v4829, 1.0
      %v4949 = vsub.f32 %v4831, 1.0
      %v4950 = vsub.f32 %v4833, 1.0
      %v4951 = vsub.f32 %v4835, 1.0
      %v4952 = vsub.f32 %v4837, 1.0
      %v4953 = vsub.f32 %v4839, 1.0
      %v4954 = vsub.f32 %v4841, 1.0
      %v4955 = vsub.f32 %v4843, 1.0
      %v4956 = vsub.f32 %v4845, 1.0
      %v4957 = vsub.f32 %v4847, 1.0
      %v4958 = vsub.f32 %v4849, 1.0
      %v4959 = vsub.f32 %v4851, 1.0
      %v4960 = vsub.f32 %v4853, 1.0
      %v4961 = vsub.f32 %v4855, 1.0
      %v4962 = vsub.f32 %v4857, 1.0
      %v4963 = vsub.f32 %v4859, 1.0
      %v4964 = vsub.f32 %v4861, 1.0
      %v4965 = vsub.f32 %v4863, 1.0
      %v4966 = vsub.f32 %v4865, 1.0
      %v4967 = vsub.f32 %v4867, 1.0
      %v4968 = vsub.f32 %v4869, 1.0
      %v4969 = vsub.f32 %v4871, 1.0
      %v4970 = vsub.f32 %v4873, 1.0
      %v4971 = vsub.f32 %v4875, 1.0
      %v4972 = vsub.f32 %v4877, 1.0
      %v4973 = vsub.f32 %v4879, 1.0
      %v4974 = vsub.f32 %v4881, 1.0
      %v4975 = vsub.f32 %v4883, 1.0
      %v4976 = vsub.f32 %v4885, 1.0
      %v4977 = vsub.f32 %v4887, 1.0
      %v4978 = vsub.f32 %v4889, 1.0
      %v4979 = vsub.f32 %v4891, 1.0
      %v4980 = vsub.f32 %v4893, 1.0
      %v4981 = vsub.f32 %v4895, 1.0
      %v4982 = vsub.f32 %v4897, 1.0
      %v4983 = vsub.f32 %v4899, 1.0
      %v4984 = vsub.f32 %v4901, 1.0
      %v4985 = vsub.f32 %v4903, 1.0
      %v4986 = vsub.f32 %v4905, 1.0
      %v4987 = vsub.f32 %v4907, 1.0
      %v4988 = vsub.f32 %v4909, 1.0
      %v4989 = vsub.f32 %v4911, 1.0
      %v4990 = vsub.f32 %v4913, 1.0
      %v4991 = vsub.f32 %v4915, 1.0
      %v4992 = vsub.f32 %v4917, 1.0
      %v4993 = vsub.f32 %v4919, 1.0
      %v4994 = vsub.f32 %v4921, 1.0
      %v4995 = vsub.f32 %v4923, 1.0
      %v4996 = vsub.f32 %v4925, 1.0
      %v4997 = vsub.f32 %v4927, 1.0
      %v4998 = vsub.f32 %v4929, 1.0
      %v4999 = vsub.f32 %v4931, 1.0
      %v5000 = vsub.f32 %v4933, 1.0
      %v5001 = vsub.f32 %v4935, 1.0
      %v5002 = vsub.f32 %v4937, 1.0
      %v5003 = vsub.f32 %v4939, 1.0
      %v5004 = vsel %vm4748, %v4590, %v4940
      %v5005 = vsel %vm4749, %v4592, %v4941
      %v5006 = vsel %vm4750, %v4594, %v4942
      %v5007 = vsel %vm4751, %v4596, %v4943
      %v5008 = vsel %vm4752, %v4600, %v4944
      %v5009 = vsel %vm4753, %v4602, %v4945
      %v5010 = vsel %vm4754, %v4604, %v4946
      %v5011 = vsel %vm4755, %v4606, %v4947
      %v5012 = vsel %vm4756, %v4610, %v4948
      %v5013 = vsel %vm4757, %v4612, %v4949
      %v5014 = vsel %vm4758, %v4614, %v4950
      %v5015 = vsel %vm4759, %v4616, %v4951
      %v5016 = vsel %vm4760, %v4620, %v4952
      %v5017 = vsel %vm4761, %v4622, %v4953
      %v5018 = vsel %vm4762, %v4624, %v4954
      %v5019 = vsel %vm4763, %v4626, %v4955
      %v5020 = vsel %vm4764, %v4630, %v4956
      %v5021 = vsel %vm4765, %v4632, %v4957
      %v5022 = vsel %vm4766, %v4634, %v4958
      %v5023 = vsel %vm4767, %v4636, %v4959
      %v5024 = vsel %vm4768, %v4640, %v4960
      %v5025 = vsel %vm4769, %v4642, %v4961
      %v5026 = vsel %vm4770, %v4644, %v4962
      %v5027 = vsel %vm4771, %v4646, %v4963
      %v5028 = vsel %vm4772, %v4650, %v4964
      %v5029 = vsel %vm4773, %v4652, %v4965
      %v5030 = vsel %vm4774, %v4654, %v4966
      %v5031 = vsel %vm4775, %v4656, %v4967
      %v5032 = vsel %vm4776, %v4660, %v4968
      %v5033 = vsel %vm4777, %v4662, %v4969
      %v5034 = vsel %vm4778, %v4664, %v4970
      %v5035 = vsel %vm4779, %v4666, %v4971
      %v5036 = vsel %vm4780, %v4670, %v4972
      %v5037 = vsel %vm4781, %v4672, %v4973
      %v5038 = vsel %vm4782, %v4674, %v4974
      %v5039 = vsel %vm4783, %v4676, %v4975
      %v5040 = vsel %vm4784, %v4680, %v4976
      %v5041 = vsel %vm4785, %v4682, %v4977
      %v5042 = vsel %vm4786, %v4684, %v4978
      %v5043 = vsel %vm4787, %v4686, %v4979
      %v5044 = vsel %vm4788, %v4690, %v4980
      %v5045 = vsel %vm4789, %v4692, %v4981
      %v5046 = vsel %vm4790, %v4694, %v4982
      %v5047 = vsel %vm4791, %v4696, %v4983
      %v5048 = vsel %vm4792, %v4700, %v4984
      %v5049 = vsel %vm4793, %v4702, %v4985
      %v5050 = vsel %vm4794, %v4704, %v4986
      %v5051 = vsel %vm4795, %v4706, %v4987
      %v5052 = vsel %vm4796, %v4710, %v4988
      %v5053 = vsel %vm4797, %v4712, %v4989
      %v5054 = vsel %vm4798, %v4714, %v4990
      %v5055 = vsel %vm4799, %v4716, %v4991
      %v5056 = vsel %vm4800, %v4720, %v4992
      %v5057 = vsel %vm4801, %v4722, %v4993
      %v5058 = vsel %vm4802, %v4724, %v4994
      %v5059 = vsel %vm4803, %v4726, %v4995
      %v5060 = vsel %vm4804, %v4730, %v4996
      %v5061 = vsel %vm4805, %v4732, %v4997
      %v5062 = vsel %vm4806, %v4734, %v4998
      %v5063 = vsel %vm4807, %v4736, %v4999
      %v5064 = vsel %vm4808, %v4740, %v5000
      %v5065 = vsel %vm4809, %v4742, %v5001
      %v5066 = vsel %vm4810, %v4744, %v5002
      %v5067 = vsel %vm4811, %v4746, %v5003
      %v5068 = vpack.c.bf16 %v1875, %v1873
      %v5069 = vpack.c.bf16 %v1876, %v1874
      %v5070 = vpack.c.bf16 %v1879, %v1877
      %v5071 = vpack.c.bf16 %v1880, %v1878
      %v5072 = vpack.c.bf16 %v1883, %v1881
      %v5073 = vpack.c.bf16 %v1884, %v1882
      %v5074 = vpack.c.bf16 %v1887, %v1885
      %v5075 = vpack.c.bf16 %v1888, %v1886
      %v5076 = vpack.c.bf16 %v1891, %v1889
      %v5077 = vpack.c.bf16 %v1892, %v1890
      %v5078 = vpack.c.bf16 %v1895, %v1893
      %v5079 = vpack.c.bf16 %v1896, %v1894
      %v5080 = vpack.c.bf16 %v1899, %v1897
      %v5081 = vpack.c.bf16 %v1900, %v1898
      %v5082 = vpack.c.bf16 %v1903, %v1901
      %v5083 = vpack.c.bf16 %v1904, %v1902
      %v5084 = vpack.c.bf16 %v1907, %v1905
      %v5085 = vpack.c.bf16 %v1908, %v1906
      %v5086 = vpack.c.bf16 %v1911, %v1909
      %v5087 = vpack.c.bf16 %v1912, %v1910
      %v5088 = vpack.c.bf16 %v1915, %v1913
      %v5089 = vpack.c.bf16 %v1916, %v1914
      %v5090 = vpack.c.bf16 %v1919, %v1917
      %v5091 = vpack.c.bf16 %v1920, %v1918
      %v5092 = vpack.c.bf16 %v1923, %v1921
      %v5093 = vpack.c.bf16 %v1924, %v1922
      %v5094 = vpack.c.bf16 %v1927, %v1925
      %v5095 = vpack.c.bf16 %v1928, %v1926
      %v5096 = vpack.c.bf16 %v1931, %v1929
      %v5097 = vpack.c.bf16 %v1932, %v1930
      %v5098 = vpack.c.bf16 %v1935, %v1933
      %v5099 = vpack.c.bf16 %v1936, %v1934
      %s5100 = scalar_lea.vmem %s2, 1024
      %v5101 = vld [vmem:[%s5100] sm:$0xff]
      %v5102 = vld [vmem:[%s5100 + $0x8] sm:$0xff]
      %v5103 = vld [vmem:[%s5100 + $0x10] sm:$0xff]
      %v5104 = vld [vmem:[%s5100 + $0x18] sm:$0xff]
      %v5105 = vld [vmem:[%s5100 + $0x20] sm:$0xff]
      %v5106 = vld [vmem:[%s5100 + $0x28] sm:$0xff]
      %v5107 = vld [vmem:[%s5100 + $0x30] sm:$0xff]
      %v5108 = vld [vmem:[%s5100 + $0x38] sm:$0xff]
      %v5109 = vld [vmem:[%s5100 + $0x40] sm:$0xff]
      %v5110 = vld [vmem:[%s5100 + $0x48] sm:$0xff]
      %v5111 = vld [vmem:[%s5100 + $0x50] sm:$0xff]
      %v5112 = vld [vmem:[%s5100 + $0x58] sm:$0xff]
      %v5113 = vld [vmem:[%s5100 + $0x60] sm:$0xff]
      %v5114 = vld [vmem:[%s5100 + $0x68] sm:$0xff]
      %v5115 = vld [vmem:[%s5100 + $0x70] sm:$0xff]
      %v5116 = vld [vmem:[%s5100 + $0x78] sm:$0xff]
      %v5117 = vld [vmem:[%s5100 + $0x80] sm:$0xff]
      %v5118 = vld [vmem:[%s5100 + $0x88] sm:$0xff]
      %v5119 = vld [vmem:[%s5100 + $0x90] sm:$0xff]
      %v5120 = vld [vmem:[%s5100 + $0x98] sm:$0xff]
      %v5121 = vld [vmem:[%s5100 + $0xa0] sm:$0xff]
      %v5122 = vld [vmem:[%s5100 + $0xa8] sm:$0xff]
      %v5123 = vld [vmem:[%s5100 + $0xb0] sm:$0xff]
      %v5124 = vld [vmem:[%s5100 + $0xb8] sm:$0xff]
      %v5125 = vld [vmem:[%s5100 + $0xc0] sm:$0xff]
      %v5126 = vld [vmem:[%s5100 + $0xc8] sm:$0xff]
      %v5127 = vld [vmem:[%s5100 + $0xd0] sm:$0xff]
      %v5128 = vld [vmem:[%s5100 + $0xd8] sm:$0xff]
      %v5129 = vld [vmem:[%s5100 + $0xe0] sm:$0xff]
      %v5130 = vld [vmem:[%s5100 + $0xe8] sm:$0xff]
      %v5131 = vld [vmem:[%s5100 + $0xf0] sm:$0xff]
      %v5132 = vld [vmem:[%s5100 + $0xf8] sm:$0xff]
      %s5133 = scalar_lea.vmem %s4, 6
      %v5134 = vld [vmem:[%s5133] ss:$8 sm:$0x3]
      %v5136 = vlaneseq
      %v5137 = vshrl.u32 %v5136, 7
      %v5138 = vsub.s32 0, %v5137
      %v5139 = vrot.slane %v5134, %v5138
      %v5140 = vlaneseq
      %v5141 = vshrl.u32 %v5140, 7
      %v5142 = vsub.s32 1, %v5141
      %v5143 = vrot.slane %v5134, %v5142
      %v5178 = vunpack.c.l.b16 %v5101
      %v5179 = vunpack.c.h.b16 %v5101
      %v5180 = vunpack.c.l.b16 %v5102
      %v5181 = vunpack.c.h.b16 %v5102
      %v5182 = vunpack.c.l.b16 %v5103
      %v5183 = vunpack.c.h.b16 %v5103
      %v5184 = vunpack.c.l.b16 %v5104
      %v5185 = vunpack.c.h.b16 %v5104
      %v5186 = vunpack.c.l.b16 %v5105
      %v5187 = vunpack.c.h.b16 %v5105
      %v5188 = vunpack.c.l.b16 %v5106
      %v5189 = vunpack.c.h.b16 %v5106
      %v5190 = vunpack.c.l.b16 %v5107
      %v5191 = vunpack.c.h.b16 %v5107
      %v5192 = vunpack.c.l.b16 %v5108
      %v5193 = vunpack.c.h.b16 %v5108
      %v5194 = vunpack.c.l.b16 %v5109
      %v5195 = vunpack.c.h.b16 %v5109
      %v5196 = vunpack.c.l.b16 %v5110
      %v5197 = vunpack.c.h.b16 %v5110
      %v5198 = vunpack.c.l.b16 %v5111
      %v5199 = vunpack.c.h.b16 %v5111
      %v5200 = vunpack.c.l.b16 %v5112
      %v5201 = vunpack.c.h.b16 %v5112
      %v5202 = vunpack.c.l.b16 %v5113
      %v5203 = vunpack.c.h.b16 %v5113
      %v5204 = vunpack.c.l.b16 %v5114
      %v5205 = vunpack.c.h.b16 %v5114
      %v5206 = vunpack.c.l.b16 %v5115
      %v5207 = vunpack.c.h.b16 %v5115
      %v5208 = vunpack.c.l.b16 %v5116
      %v5209 = vunpack.c.h.b16 %v5116
      %v5210 = vunpack.c.l.b16 %v5117
      %v5211 = vunpack.c.h.b16 %v5117
      %v5212 = vunpack.c.l.b16 %v5118
      %v5213 = vunpack.c.h.b16 %v5118
      %v5214 = vunpack.c.l.b16 %v5119
      %v5215 = vunpack.c.h.b16 %v5119
      %v5216 = vunpack.c.l.b16 %v5120
      %v5217 = vunpack.c.h.b16 %v5120
      %v5218 = vunpack.c.l.b16 %v5121
      %v5219 = vunpack.c.h.b16 %v5121
      %v5220 = vunpack.c.l.b16 %v5122
      %v5221 = vunpack.c.h.b16 %v5122
      %v5222 = vunpack.c.l.b16 %v5123
      %v5223 = vunpack.c.h.b16 %v5123
      %v5224 = vunpack.c.l.b16 %v5124
      %v5225 = vunpack.c.h.b16 %v5124
      %v5226 = vunpack.c.l.b16 %v5125
      %v5227 = vunpack.c.h.b16 %v5125
      %v5228 = vunpack.c.l.b16 %v5126
      %v5229 = vunpack.c.h.b16 %v5126
      %v5230 = vunpack.c.l.b16 %v5127
      %v5231 = vunpack.c.h.b16 %v5127
      %v5232 = vunpack.c.l.b16 %v5128
      %v5233 = vunpack.c.h.b16 %v5128
      %v5234 = vunpack.c.l.b16 %v5129
      %v5235 = vunpack.c.h.b16 %v5129
      %v5236 = vunpack.c.l.b16 %v5130
      %v5237 = vunpack.c.h.b16 %v5130
      %v5238 = vunpack.c.l.b16 %v5131
      %v5239 = vunpack.c.h.b16 %v5131
      %v5240 = vunpack.c.l.b16 %v5132
      %v5241 = vunpack.c.h.b16 %v5132
      %v5242 = vpack.c.b16 %v5180, %v5178
      %v5243 = vpack.c.b16 %v5181, %v5179
      %v5244 = vpack.c.b16 %v5184, %v5182
      %v5245 = vpack.c.b16 %v5185, %v5183
      %v5246 = vpack.c.b16 %v5188, %v5186
      %v5247 = vpack.c.b16 %v5189, %v5187
      %v5248 = vpack.c.b16 %v5192, %v5190
      %v5249 = vpack.c.b16 %v5193, %v5191
      %v5250 = vpack.c.b16 %v5196, %v5194
      %v5251 = vpack.c.b16 %v5197, %v5195
      %v5252 = vpack.c.b16 %v5200, %v5198
      %v5253 = vpack.c.b16 %v5201, %v5199
      %v5254 = vpack.c.b16 %v5204, %v5202
      %v5255 = vpack.c.b16 %v5205, %v5203
      %v5256 = vpack.c.b16 %v5208, %v5206
      %v5257 = vpack.c.b16 %v5209, %v5207
      %v5258 = vpack.c.b16 %v5212, %v5210
      %v5259 = vpack.c.b16 %v5213, %v5211
      %v5260 = vpack.c.b16 %v5216, %v5214
      %v5261 = vpack.c.b16 %v5217, %v5215
      %v5262 = vpack.c.b16 %v5220, %v5218
      %v5263 = vpack.c.b16 %v5221, %v5219
      %v5264 = vpack.c.b16 %v5224, %v5222
      %v5265 = vpack.c.b16 %v5225, %v5223
      %v5266 = vpack.c.b16 %v5228, %v5226
      %v5267 = vpack.c.b16 %v5229, %v5227
      %v5268 = vpack.c.b16 %v5232, %v5230
      %v5269 = vpack.c.b16 %v5233, %v5231
      %v5270 = vpack.c.b16 %v5236, %v5234
      %v5271 = vpack.c.b16 %v5237, %v5235
      %v5272 = vpack.c.b16 %v5240, %v5238
      %v5273 = vpack.c.b16 %v5241, %v5239
      %5306 = vmatprep.subr.bf16.mxu0 %v5243
      %5307 = vmatpush1.bf16.msra.mxu0 %v5242
      %5308 = vmatprep.subr.bf16.mxu0 %v5245
      %5309 = vmatpush1.bf16.msra.mxu0 %v5244
      %5310 = vmatprep.subr.bf16.mxu0 %v5247
      %5311 = vmatpush1.bf16.msra.mxu0 %v5246
      %5312 = vmatprep.subr.bf16.mxu0 %v5249
      %5313 = vmatpush1.bf16.msra.mxu0 %v5248
      %5314 = vmatprep.subr.bf16.mxu0 %v5251
      %5315 = vmatpush1.bf16.msra.mxu0 %v5250
      %5316 = vmatprep.subr.bf16.mxu0 %v5253
      %5317 = vmatpush1.bf16.msra.mxu0 %v5252
      %5318 = vmatprep.subr.bf16.mxu0 %v5255
      %5319 = vmatpush1.bf16.msra.mxu0 %v5254
      %5320 = vmatprep.subr.bf16.mxu0 %v5257
      %5321 = vmatpush1.bf16.msra.mxu0 %v5256
      %5322 = vmatprep.subr.bf16.mxu0 %v5259
      %5323 = vmatpush1.bf16.msra.mxu0 %v5258
      %5324 = vmatprep.subr.bf16.mxu0 %v5261
      %5325 = vmatpush1.bf16.msra.mxu0 %v5260
      %5326 = vmatprep.subr.bf16.mxu0 %v5263
      %5327 = vmatpush1.bf16.msra.mxu0 %v5262
      %5328 = vmatprep.subr.bf16.mxu0 %v5265
      %5329 = vmatpush1.bf16.msra.mxu0 %v5264
      %5330 = vmatprep.subr.bf16.mxu0 %v5267
      %5331 = vmatpush1.bf16.msra.mxu0 %v5266
      %5332 = vmatprep.subr.bf16.mxu0 %v5269
      %5333 = vmatpush1.bf16.msra.mxu0 %v5268
      %5334 = vmatprep.subr.bf16.mxu0 %v5271
      %5335 = vmatpush1.bf16.msra.mxu0 %v5270
      %5336 = vmatprep.subr.bf16.mxu0 %v5273
      %5337 = vmatpush1.bf16.msra.mxu0 %v5272
      %5338 = vmatprep.mubr.bf16.mxu0 %v5069
      %5339 = vmatmul.mubr.bf16.gmra.mrb[0].mxu0 %v5068
      %v5340 = vpop.f32.mrb[0].mxu0
      %v5341 = vadd.f32 %v5139, %v5340
      %v5342 = vpop.f32.mrb[0].mxu0
      %v5343 = vadd.f32 %v5143, %v5342
      %v5344 = vpop.f32.mrb[0].mxu0
      %v5345 = vadd.f32 %v5139, %v5344
      %v5346 = vpop.f32.mrb[0].mxu0
      %v5347 = vadd.f32 %v5143, %v5346
      %5348 = vmatprep.mubr.bf16.mxu0 %v5071
      %5349 = vmatmul.mubr.bf16.gmra.mrb[0].mxu0 %v5070
      %v5350 = vpop.f32.mrb[0].mxu0
      %v5351 = vadd.f32 %v5139, %v5350
      %v5352 = vpop.f32.mrb[0].mxu0
      %v5353 = vadd.f32 %v5143, %v5352
      %v5354 = vpop.f32.mrb[0].mxu0
      %v5355 = vadd.f32 %v5139, %v5354
      %v5356 = vpop.f32.mrb[0].mxu0
      %v5357 = vadd.f32 %v5143, %v5356
      %5358 = vmatprep.mubr.bf16.mxu0 %v5073
      %5359 = vmatmul.mubr.bf16.gmra.mrb[0].mxu0 %v5072
      %v5360 = vpop.f32.mrb[0].mxu0
      %v5361 = vadd.f32 %v5139, %v5360
      %v5362 = vpop.f32.mrb[0].mxu0
      %v5363 = vadd.f32 %v5143, %v5362
      %v5364 = vpop.f32.mrb[0].mxu0
      %v5365 = vadd.f32 %v5139, %v5364
      %v5366 = vpop.f32.mrb[0].mxu0
      %v5367 = vadd.f32 %v5143, %v5366
      %5368 = vmatprep.mubr.bf16.mxu0 %v5075
      %5369 = vmatmul.mubr.bf16.gmra.mrb[0].mxu0 %v5074
      %v5370 = vpop.f32.mrb[0].mxu0
      %v5371 = vadd.f32 %v5139, %v5370
      %v5372 = vpop.f32.mrb[0].mxu0
      %v5373 = vadd.f32 %v5143, %v5372
      %v5374 = vpop.f32.mrb[0].mxu0
      %v5375 = vadd.f32 %v5139, %v5374
      %v5376 = vpop.f32.mrb[0].mxu0
      %v5377 = vadd.f32 %v5143, %v5376
      %5378 = vmatprep.mubr.bf16.mxu0 %v5077
      %5379 = vmatmul.mubr.bf16.gmra.mrb[0].mxu0 %v5076
      %v5380 = vpop.f32.mrb[0].mxu0
      %v5381 = vadd.f32 %v5139, %v5380
      %v5382 = vpop.f32.mrb[0].mxu0
      %v5383 = vadd.f32 %v5143, %v5382
      %v5384 = vpop.f32.mrb[0].mxu0
      %v5385 = vadd.f32 %v5139, %v5384
      %v5386 = vpop.f32.mrb[0].mxu0
      %v5387 = vadd.f32 %v5143, %v5386
      %5388 = vmatprep.mubr.bf16.mxu0 %v5079
      %5389 = vmatmul.mubr.bf16.gmra.mrb[0].mxu0 %v5078
      %v5390 = vpop.f32.mrb[0].mxu0
      %v5391 = vadd.f32 %v5139, %v5390
      %v5392 = vpop.f32.mrb[0].mxu0
      %v5393 = vadd.f32 %v5143, %v5392
      %v5394 = vpop.f32.mrb[0].mxu0
      %v5395 = vadd.f32 %v5139, %v5394
      %v5396 = vpop.f32.mrb[0].mxu0
      %v5397 = vadd.f32 %v5143, %v5396
      %5398 = vmatprep.mubr.bf16.mxu0 %v5081
      %5399 = vmatmul.mubr.bf16.gmra.mrb[0].mxu0 %v5080
      %v5400 = vpop.f32.mrb[0].mxu0
      %v5401 = vadd.f32 %v5139, %v5400
      %v5402 = vpop.f32.mrb[0].mxu0
      %v5403 = vadd.f32 %v5143, %v5402
      %v5404 = vpop.f32.mrb[0].mxu0
      %v5405 = vadd.f32 %v5139, %v5404
      %v5406 = vpop.f32.mrb[0].mxu0
      %v5407 = vadd.f32 %v5143, %v5406
      %5408 = vmatprep.mubr.bf16.mxu0 %v5083
      %5409 = vmatmul.mubr.bf16.gmra.mrb[0].mxu0 %v5082
      %v5410 = vpop.f32.mrb[0].mxu0
      %v5411 = vadd.f32 %v5139, %v5410
      %v5412 = vpop.f32.mrb[0].mxu0
      %v5413 = vadd.f32 %v5143, %v5412
      %v5414 = vpop.f32.mrb[0].mxu0
      %v5415 = vadd.f32 %v5139, %v5414
      %v5416 = vpop.f32.mrb[0].mxu0
      %v5417 = vadd.f32 %v5143, %v5416
      %5418 = vmatprep.mubr.bf16.mxu0 %v5085
      %5419 = vmatmul.mubr.bf16.gmra.mrb[0].mxu0 %v5084
      %v5420 = vpop.f32.mrb[0].mxu0
      %v5421 = vadd.f32 %v5139, %v5420
      %v5422 = vpop.f32.mrb[0].mxu0
      %v5423 = vadd.f32 %v5143, %v5422
      %v5424 = vpop.f32.mrb[0].mxu0
      %v5425 = vadd.f32 %v5139, %v5424
      %v5426 = vpop.f32.mrb[0].mxu0
      %v5427 = vadd.f32 %v5143, %v5426
      %5428 = vmatprep.mubr.bf16.mxu0 %v5087
      %5429 = vmatmul.mubr.bf16.gmra.mrb[0].mxu0 %v5086
      %v5430 = vpop.f32.mrb[0].mxu0
      %v5431 = vadd.f32 %v5139, %v5430
      %v5432 = vpop.f32.mrb[0].mxu0
      %v5433 = vadd.f32 %v5143, %v5432
      %v5434 = vpop.f32.mrb[0].mxu0
      %v5435 = vadd.f32 %v5139, %v5434
      %v5436 = vpop.f32.mrb[0].mxu0
      %v5437 = vadd.f32 %v5143, %v5436
      %5438 = vmatprep.mubr.bf16.mxu0 %v5089
      %5439 = vmatmul.mubr.bf16.gmra.mrb[0].mxu0 %v5088
      %v5440 = vpop.f32.mrb[0].mxu0
      %v5441 = vadd.f32 %v5139, %v5440
      %v5442 = vpop.f32.mrb[0].mxu0
      %v5443 = vadd.f32 %v5143, %v5442
      %v5444 = vpop.f32.mrb[0].mxu0
      %v5445 = vadd.f32 %v5139, %v5444
      %v5446 = vpop.f32.mrb[0].mxu0
      %v5447 = vadd.f32 %v5143, %v5446
      %5448 = vmatprep.mubr.bf16.mxu0 %v5091
      %5449 = vmatmul.mubr.bf16.gmra.mrb[0].mxu0 %v5090
      %v5450 = vpop.f32.mrb[0].mxu0
      %v5451 = vadd.f32 %v5139, %v5450
      %v5452 = vpop.f32.mrb[0].mxu0
      %v5453 = vadd.f32 %v5143, %v5452
      %v5454 = vpop.f32.mrb[0].mxu0
      %v5455 = vadd.f32 %v5139, %v5454
      %v5456 = vpop.f32.mrb[0].mxu0
      %v5457 = vadd.f32 %v5143, %v5456
      %5458 = vmatprep.mubr.bf16.mxu0 %v5093
      %5459 = vmatmul.mubr.bf16.gmra.mrb[0].mxu0 %v5092
      %v5460 = vpop.f32.mrb[0].mxu0
      %v5461 = vadd.f32 %v5139, %v5460
      %v5462 = vpop.f32.mrb[0].mxu0
      %v5463 = vadd.f32 %v5143, %v5462
      %v5464 = vpop.f32.mrb[0].mxu0
      %v5465 = vadd.f32 %v5139, %v5464
      %v5466 = vpop.f32.mrb[0].mxu0
      %v5467 = vadd.f32 %v5143, %v5466
      %5468 = vmatprep.mubr.bf16.mxu0 %v5095
      %5469 = vmatmul.mubr.bf16.gmra.mrb[0].mxu0 %v5094
      %v5470 = vpop.f32.mrb[0].mxu0
      %v5471 = vadd.f32 %v5139, %v5470
      %v5472 = vpop.f32.mrb[0].mxu0
      %v5473 = vadd.f32 %v5143, %v5472
      %v5474 = vpop.f32.mrb[0].mxu0
      %v5475 = vadd.f32 %v5139, %v5474
      %v5476 = vpop.f32.mrb[0].mxu0
      %v5477 = vadd.f32 %v5143, %v5476
      %5478 = vmatprep.mubr.bf16.mxu0 %v5097
      %5479 = vmatmul.mubr.bf16.gmra.mrb[0].mxu0 %v5096
      %v5480 = vpop.f32.mrb[0].mxu0
      %v5481 = vadd.f32 %v5139, %v5480
      %v5482 = vpop.f32.mrb[0].mxu0
      %v5483 = vadd.f32 %v5143, %v5482
      %v5484 = vpop.f32.mrb[0].mxu0
      %v5485 = vadd.f32 %v5139, %v5484
      %v5486 = vpop.f32.mrb[0].mxu0
      %v5487 = vadd.f32 %v5143, %v5486
      %5488 = vmatprep.mubr.bf16.mxu0 %v5099
      %5489 = vmatmul.mubr.bf16.gmra.mrb[0].mxu0 %v5098
      %v5490 = vpop.f32.mrb[0].mxu0
      %v5491 = vadd.f32 %v5139, %v5490
      %v5492 = vpop.f32.mrb[0].mxu0
      %v5493 = vadd.f32 %v5143, %v5492
      %v5494 = vpop.f32.mrb[0].mxu0
      %v5495 = vadd.f32 %v5139, %v5494
      %v5496 = vpop.f32.mrb[0].mxu0
      %v5497 = vadd.f32 %v5143, %v5496
      %5498 = vdwg.mxu0
      %vm5499 = vcmp.gt.f32.partialorder %v5341, 0.0
      %vm5500 = vcmp.gt.f32.partialorder %v5343, 0.0
      %vm5501 = vcmp.gt.f32.partialorder %v5345, 0.0
      %vm5502 = vcmp.gt.f32.partialorder %v5347, 0.0
      %vm5503 = vcmp.gt.f32.partialorder %v5351, 0.0
      %vm5504 = vcmp.gt.f32.partialorder %v5353, 0.0
      %vm5505 = vcmp.gt.f32.partialorder %v5355, 0.0
      %vm5506 = vcmp.gt.f32.partialorder %v5357, 0.0
      %vm5507 = vcmp.gt.f32.partialorder %v5361, 0.0
      %vm5508 = vcmp.gt.f32.partialorder %v5363, 0.0
      %vm5509 = vcmp.gt.f32.partialorder %v5365, 0.0
      %vm5510 = vcmp.gt.f32.partialorder %v5367, 0.0
      %vm5511 = vcmp.gt.f32.partialorder %v5371, 0.0
      %vm5512 = vcmp.gt.f32.partialorder %v5373, 0.0
      %vm5513 = vcmp.gt.f32.partialorder %v5375, 0.0
      %vm5514 = vcmp.gt.f32.partialorder %v5377, 0.0
      %vm5515 = vcmp.gt.f32.partialorder %v5381, 0.0
      %vm5516 = vcmp.gt.f32.partialorder %v5383, 0.0
      %vm5517 = vcmp.gt.f32.partialorder %v5385, 0.0
      %vm5518 = vcmp.gt.f32.partialorder %v5387, 0.0
      %vm5519 = vcmp.gt.f32.partialorder %v5391, 0.0
      %vm5520 = vcmp.gt.f32.partialorder %v5393, 0.0
      %vm5521 = vcmp.gt.f32.partialorder %v5395, 0.0
      %vm5522 = vcmp.gt.f32.partialorder %v5397, 0.0
      %vm5523 = vcmp.gt.f32.partialorder %v5401, 0.0
      %vm5524 = vcmp.gt.f32.partialorder %v5403, 0.0
      %vm5525 = vcmp.gt.f32.partialorder %v5405, 0.0
      %vm5526 = vcmp.gt.f32.partialorder %v5407, 0.0
      %vm5527 = vcmp.gt.f32.partialorder %v5411, 0.0
      %vm5528 = vcmp.gt.f32.partialorder %v5413, 0.0
      %vm5529 = vcmp.gt.f32.partialorder %v5415, 0.0
      %vm5530 = vcmp.gt.f32.partialorder %v5417, 0.0
      %vm5531 = vcmp.gt.f32.partialorder %v5421, 0.0
      %vm5532 = vcmp.gt.f32.partialorder %v5423, 0.0
      %vm5533 = vcmp.gt.f32.partialorder %v5425, 0.0
      %vm5534 = vcmp.gt.f32.partialorder %v5427, 0.0
      %vm5535 = vcmp.gt.f32.partialorder %v5431, 0.0
      %vm5536 = vcmp.gt.f32.partialorder %v5433, 0.0
      %vm5537 = vcmp.gt.f32.partialorder %v5435, 0.0
      %vm5538 = vcmp.gt.f32.partialorder %v5437, 0.0
      %vm5539 = vcmp.gt.f32.partialorder %v5441, 0.0
      %vm5540 = vcmp.gt.f32.partialorder %v5443, 0.0
      %vm5541 = vcmp.gt.f32.partialorder %v5445, 0.0
      %vm5542 = vcmp.gt.f32.partialorder %v5447, 0.0
      %vm5543 = vcmp.gt.f32.partialorder %v5451, 0.0
      %vm5544 = vcmp.gt.f32.partialorder %v5453, 0.0
      %vm5545 = vcmp.gt.f32.partialorder %v5455, 0.0
      %vm5546 = vcmp.gt.f32.partialorder %v5457, 0.0
      %vm5547 = vcmp.gt.f32.partialorder %v5461, 0.0
      %vm5548 = vcmp.gt.f32.partialorder %v5463, 0.0
      %vm5549 = vcmp.gt.f32.partialorder %v5465, 0.0
      %vm5550 = vcmp.gt.f32.partialorder %v5467, 0.0
      %vm5551 = vcmp.gt.f32.partialorder %v5471, 0.0
      %vm5552 = vcmp.gt.f32.partialorder %v5473, 0.0
      %vm5553 = vcmp.gt.f32.partialorder %v5475, 0.0
      %vm5554 = vcmp.gt.f32.partialorder %v5477, 0.0
      %vm5555 = vcmp.gt.f32.partialorder %v5481, 0.0
      %vm5556 = vcmp.gt.f32.partialorder %v5483, 0.0
      %vm5557 = vcmp.gt.f32.partialorder %v5485, 0.0
      %vm5558 = vcmp.gt.f32.partialorder %v5487, 0.0
      %vm5559 = vcmp.gt.f32.partialorder %v5491, 0.0
      %vm5560 = vcmp.gt.f32.partialorder %v5493, 0.0
      %vm5561 = vcmp.gt.f32.partialorder %v5495, 0.0
      %vm5562 = vcmp.gt.f32.partialorder %v5497, 0.0
      %v5563 = vmul.f32 %v5341, 1.442695
      %v5564 = vpow.pop %v5563
      %v5565 = vmul.f32 %v5343, 1.442695
      %v5566 = vpow.pop %v5565
      %v5567 = vmul.f32 %v5345, 1.442695
      %v5568 = vpow.pop %v5567
      %v5569 = vmul.f32 %v5347, 1.442695
      %v5570 = vpow.pop %v5569
      %v5571 = vmul.f32 %v5351, 1.442695
      %v5572 = vpow.pop %v5571
      %v5573 = vmul.f32 %v5353, 1.442695
      %v5574 = vpow.pop %v5573
      %v5575 = vmul.f32 %v5355, 1.442695
      %v5576 = vpow.pop %v5575
      %v5577 = vmul.f32 %v5357, 1.442695
      %v5578 = vpow.pop %v5577
      %v5579 = vmul.f32 %v5361, 1.442695
      %v5580 = vpow.pop %v5579
      %v5581 = vmul.f32 %v5363, 1.442695
      %v5582 = vpow.pop %v5581
      %v5583 = vmul.f32 %v5365, 1.442695
      %v5584 = vpow.pop %v5583
      %v5585 = vmul.f32 %v5367, 1.442695
      %v5586 = vpow.pop %v5585
      %v5587 = vmul.f32 %v5371, 1.442695
      %v5588 = vpow.pop %v5587
      %v5589 = vmul.f32 %v5373, 1.442695
      %v5590 = vpow.pop %v5589
      %v5591 = vmul.f32 %v5375, 1.442695
      %v5592 = vpow.pop %v5591
      %v5593 = vmul.f32 %v5377, 1.442695
      %v5594 = vpow.pop %v5593
      %v5595 = vmul.f32 %v5381, 1.442695
      %v5596 = vpow.pop %v5595
      %v5597 = vmul.f32 %v5383, 1.442695
      %v5598 = vpow.pop %v5597
      %v5599 = vmul.f32 %v5385, 1.442695
      %v5600 = vpow.pop %v5599
      %v5601 = vmul.f32 %v5387, 1.442695
      %v5602 = vpow.pop %v5601
      %v5603 = vmul.f32 %v5391, 1.442695
      %v5604 = vpow.pop %v5603
      %v5605 = vmul.f32 %v5393, 1.442695
      %v5606 = vpow.pop %v5605
      %v5607 = vmul.f32 %v5395, 1.442695
      %v5608 = vpow.pop %v5607
      %v5609 = vmul.f32 %v5397, 1.442695
      %v5610 = vpow.pop %v5609
      %v5611 = vmul.f32 %v5401, 1.442695
      %v5612 = vpow.pop %v5611
      %v5613 = vmul.f32 %v5403, 1.442695
      %v5614 = vpow.pop %v5613
      %v5615 = vmul.f32 %v5405, 1.442695
      %v5616 = vpow.pop %v5615
      %v5617 = vmul.f32 %v5407, 1.442695
      %v5618 = vpow.pop %v5617
      %v5619 = vmul.f32 %v5411, 1.442695
      %v5620 = vpow.pop %v5619
      %v5621 = vmul.f32 %v5413, 1.442695
      %v5622 = vpow.pop %v5621
      %v5623 = vmul.f32 %v5415, 1.442695
      %v5624 = vpow.pop %v5623
      %v5625 = vmul.f32 %v5417, 1.442695
      %v5626 = vpow.pop %v5625
      %v5627 = vmul.f32 %v5421, 1.442695
      %v5628 = vpow.pop %v5627
      %v5629 = vmul.f32 %v5423, 1.442695
      %v5630 = vpow.pop %v5629
      %v5631 = vmul.f32 %v5425, 1.442695
      %v5632 = vpow.pop %v5631
      %v5633 = vmul.f32 %v5427, 1.442695
      %v5634 = vpow.pop %v5633
      %v5635 = vmul.f32 %v5431, 1.442695
      %v5636 = vpow.pop %v5635
      %v5637 = vmul.f32 %v5433, 1.442695
      %v5638 = vpow.pop %v5637
      %v5639 = vmul.f32 %v5435, 1.442695
      %v5640 = vpow.pop %v5639
      %v5641 = vmul.f32 %v5437, 1.442695
      %v5642 = vpow.pop %v5641
      %v5643 = vmul.f32 %v5441, 1.442695
      %v5644 = vpow.pop %v5643
      %v5645 = vmul.f32 %v5443, 1.442695
      %v5646 = vpow.pop %v5645
      %v5647 = vmul.f32 %v5445, 1.442695
      %v5648 = vpow.pop %v5647
      %v5649 = vmul.f32 %v5447, 1.442695
      %v5650 = vpow.pop %v5649
      %v5651 = vmul.f32 %v5451, 1.442695
      %v5652 = vpow.pop %v5651
      %v5653 = vmul.f32 %v5453, 1.442695
      %v5654 = vpow.pop %v5653
      %v5655 = vmul.f32 %v5455, 1.442695
      %v5656 = vpow.pop %v5655
      %v5657 = vmul.f32 %v5457, 1.442695
      %v5658 = vpow.pop %v5657
      %v5659 = vmul.f32 %v5461, 1.442695
      %v5660 = vpow.pop %v5659
      %v5661 = vmul.f32 %v5463, 1.442695
      %v5662 = vpow.pop %v5661
      %v5663 = vmul.f32 %v5465, 1.442695
      %v5664 = vpow.pop %v5663
      %v5665 = vmul.f32 %v5467, 1.442695
      %v5666 = vpow.pop %v5665
      %v5667 = vmul.f32 %v5471, 1.442695
      %v5668 = vpow.pop %v5667
      %v5669 = vmul.f32 %v5473, 1.442695
      %v5670 = vpow.pop %v5669
      %v5671 = vmul.f32 %v5475, 1.442695
      %v5672 = vpow.pop %v5671
      %v5673 = vmul.f32 %v5477, 1.442695
      %v5674 = vpow.pop %v5673
      %v5675 = vmul.f32 %v5481, 1.442695
      %v5676 = vpow.pop %v5675
      %v5677 = vmul.f32 %v5483, 1.442695
      %v5678 = vpow.pop %v5677
      %v5679 = vmul.f32 %v5485, 1.442695
      %v5680 = vpow.pop %v5679
      %v5681 = vmul.f32 %v5487, 1.442695
      %v5682 = vpow.pop %v5681
      %v5683 = vmul.f32 %v5491, 1.442695
      %v5684 = vpow.pop %v5683
      %v5685 = vmul.f32 %v5493, 1.442695
      %v5686 = vpow.pop %v5685
      %v5687 = vmul.f32 %v5495, 1.442695
      %v5688 = vpow.pop %v5687
      %v5689 = vmul.f32 %v5497, 1.442695
      %v5690 = vpow.pop %v5689
      %v5691 = vsub.f32 %v5564, 1.0
      %v5692 = vsub.f32 %v5566, 1.0
      %v5693 = vsub.f32 %v5568, 1.0
      %v5694 = vsub.f32 %v5570, 1.0
      %v5695 = vsub.f32 %v5572, 1.0
      %v5696 = vsub.f32 %v5574, 1.0
      %v5697 = vsub.f32 %v5576, 1.0
      %v5698 = vsub.f32 %v5578, 1.0
      %v5699 = vsub.f32 %v5580, 1.0
      %v5700 = vsub.f32 %v5582, 1.0
      %v5701 = vsub.f32 %v5584, 1.0
      %v5702 = vsub.f32 %v5586, 1.0
      %v5703 = vsub.f32 %v5588, 1.0
      %v5704 = vsub.f32 %v5590, 1.0
      %v5705 = vsub.f32 %v5592, 1.0
      %v5706 = vsub.f32 %v5594, 1.0
      %v5707 = vsub.f32 %v5596, 1.0
      %v5708 = vsub.f32 %v5598, 1.0
      %v5709 = vsub.f32 %v5600, 1.0
      %v5710 = vsub.f32 %v5602, 1.0
      %v5711 = vsub.f32 %v5604, 1.0
      %v5712 = vsub.f32 %v5606, 1.0
      %v5713 = vsub.f32 %v5608, 1.0
      %v5714 = vsub.f32 %v5610, 1.0
      %v5715 = vsub.f32 %v5612, 1.0
      %v5716 = vsub.f32 %v5614, 1.0
      %v5717 = vsub.f32 %v5616, 1.0
      %v5718 = vsub.f32 %v5618, 1.0
      %v5719 = vsub.f32 %v5620, 1.0
      %v5720 = vsub.f32 %v5622, 1.0
      %v5721 = vsub.f32 %v5624, 1.0
      %v5722 = vsub.f32 %v5626, 1.0
      %v5723 = vsub.f32 %v5628, 1.0
      %v5724 = vsub.f32 %v5630, 1.0
      %v5725 = vsub.f32 %v5632, 1.0
      %v5726 = vsub.f32 %v5634, 1.0
      %v5727 = vsub.f32 %v5636, 1.0
      %v5728 = vsub.f32 %v5638, 1.0
      %v5729 = vsub.f32 %v5640, 1.0
      %v5730 = vsub.f32 %v5642, 1.0
      %v5731 = vsub.f32 %v5644, 1.0
      %v5732 = vsub.f32 %v5646, 1.0
      %v5733 = vsub.f32 %v5648, 1.0
      %v5734 = vsub.f32 %v5650, 1.0
      %v5735 = vsub.f32 %v5652, 1.0
      %v5736 = vsub.f32 %v5654, 1.0
      %v5737 = vsub.f32 %v5656, 1.0
      %v5738 = vsub.f32 %v5658, 1.0
      %v5739 = vsub.f32 %v5660, 1.0
      %v5740 = vsub.f32 %v5662, 1.0
      %v5741 = vsub.f32 %v5664, 1.0
      %v5742 = vsub.f32 %v5666, 1.0
      %v5743 = vsub.f32 %v5668, 1.0
      %v5744 = vsub.f32 %v5670, 1.0
      %v5745 = vsub.f32 %v5672, 1.0
      %v5746 = vsub.f32 %v5674, 1.0
      %v5747 = vsub.f32 %v5676, 1.0
      %v5748 = vsub.f32 %v5678, 1.0
      %v5749 = vsub.f32 %v5680, 1.0
      %v5750 = vsub.f32 %v5682, 1.0
      %v5751 = vsub.f32 %v5684, 1.0
      %v5752 = vsub.f32 %v5686, 1.0
      %v5753 = vsub.f32 %v5688, 1.0
      %v5754 = vsub.f32 %v5690, 1.0
      %v5755 = vsel %vm5499, %v5341, %v5691
      %v5756 = vsel %vm5500, %v5343, %v5692
      %v5757 = vsel %vm5501, %v5345, %v5693
      %v5758 = vsel %vm5502, %v5347, %v5694
      %v5759 = vsel %vm5503, %v5351, %v5695
      %v5760 = vsel %vm5504, %v5353, %v5696
      %v5761 = vsel %vm5505, %v5355, %v5697
      %v5762 = vsel %vm5506, %v5357, %v5698
      %v5763 = vsel %vm5507, %v5361, %v5699
      %v5764 = vsel %vm5508, %v5363, %v5700
      %v5765 = vsel %vm5509, %v5365, %v5701
      %v5766 = vsel %vm5510, %v5367, %v5702
      %v5767 = vsel %vm5511, %v5371, %v5703
      %v5768 = vsel %vm5512, %v5373, %v5704
      %v5769 = vsel %vm5513, %v5375, %v5705
      %v5770 = vsel %vm5514, %v5377, %v5706
      %v5771 = vsel %vm5515, %v5381, %v5707
      %v5772 = vsel %vm5516, %v5383, %v5708
      %v5773 = vsel %vm5517, %v5385, %v5709
      %v5774 = vsel %vm5518, %v5387, %v5710
      %v5775 = vsel %vm5519, %v5391, %v5711
      %v5776 = vsel %vm5520, %v5393, %v5712
      %v5777 = vsel %vm5521, %v5395, %v5713
      %v5778 = vsel %vm5522, %v5397, %v5714
      %v5779 = vsel %vm5523, %v5401, %v5715
      %v5780 = vsel %vm5524, %v5403, %v5716
      %v5781 = vsel %vm5525, %v5405, %v5717
      %v5782 = vsel %vm5526, %v5407, %v5718
      %v5783 = vsel %vm5527, %v5411, %v5719
      %v5784 = vsel %vm5528, %v5413, %v5720
      %v5785 = vsel %vm5529, %v5415, %v5721
      %v5786 = vsel %vm5530, %v5417, %v5722
      %v5787 = vsel %vm5531, %v5421, %v5723
      %v5788 = vsel %vm5532, %v5423, %v5724
      %v5789 = vsel %vm5533, %v5425, %v5725
      %v5790 = vsel %vm5534, %v5427, %v5726
      %v5791 = vsel %vm5535, %v5431, %v5727
      %v5792 = vsel %vm5536, %v5433, %v5728
      %v5793 = vsel %vm5537, %v5435, %v5729
      %v5794 = vsel %vm5538, %v5437, %v5730
      %v5795 = vsel %vm5539, %v5441, %v5731
      %v5796 = vsel %vm5540, %v5443, %v5732
      %v5797 = vsel %vm5541, %v5445, %v5733
      %v5798 = vsel %vm5542, %v5447, %v5734
      %v5799 = vsel %vm5543, %v5451, %v5735
      %v5800 = vsel %vm5544, %v5453, %v5736
      %v5801 = vsel %vm5545, %v5455, %v5737
      %v5802 = vsel %vm5546, %v5457, %v5738
      %v5803 = vsel %vm5547, %v5461, %v5739
      %v5804 = vsel %vm5548, %v5463, %v5740
      %v5805 = vsel %vm5549, %v5465, %v5741
      %v5806 = vsel %vm5550, %v5467, %v5742
      %v5807 = vsel %vm5551, %v5471, %v5743
      %v5808 = vsel %vm5552, %v5473, %v5744
      %v5809 = vsel %vm5553, %v5475, %v5745
      %v5810 = vsel %vm5554, %v5477, %v5746
      %v5811 = vsel %vm5555, %v5481, %v5747
      %v5812 = vsel %vm5556, %v5483, %v5748
      %v5813 = vsel %vm5557, %v5485, %v5749
      %v5814 = vsel %vm5558, %v5487, %v5750
      %v5815 = vsel %vm5559, %v5491, %v5751
      %v5816 = vsel %vm5560, %v5493, %v5752
      %v5817 = vsel %vm5561, %v5495, %v5753
      %v5818 = vsel %vm5562, %v5497, %v5754
      %v5819 = vpack.c.bf16 %v5757, %v5755
      %v5820 = vpack.c.bf16 %v5758, %v5756
      %v5821 = vpack.c.bf16 %v5761, %v5759
      %v5822 = vpack.c.bf16 %v5762, %v5760
      %v5823 = vpack.c.bf16 %v5765, %v5763
      %v5824 = vpack.c.bf16 %v5766, %v5764
      %v5825 = vpack.c.bf16 %v5769, %v5767
      %v5826 = vpack.c.bf16 %v5770, %v5768
      %v5827 = vpack.c.bf16 %v5773, %v5771
      %v5828 = vpack.c.bf16 %v5774, %v5772
      %v5829 = vpack.c.bf16 %v5777, %v5775
      %v5830 = vpack.c.bf16 %v5778, %v5776
      %v5831 = vpack.c.bf16 %v5781, %v5779
      %v5832 = vpack.c.bf16 %v5782, %v5780
      %v5833 = vpack.c.bf16 %v5785, %v5783
      %v5834 = vpack.c.bf16 %v5786, %v5784
      %v5835 = vpack.c.bf16 %v5789, %v5787
      %v5836 = vpack.c.bf16 %v5790, %v5788
      %v5837 = vpack.c.bf16 %v5793, %v5791
      %v5838 = vpack.c.bf16 %v5794, %v5792
      %v5839 = vpack.c.bf16 %v5797, %v5795
      %v5840 = vpack.c.bf16 %v5798, %v5796
      %v5841 = vpack.c.bf16 %v5801, %v5799
      %v5842 = vpack.c.bf16 %v5802, %v5800
      %v5843 = vpack.c.bf16 %v5805, %v5803
      %v5844 = vpack.c.bf16 %v5806, %v5804
      %v5845 = vpack.c.bf16 %v5809, %v5807
      %v5846 = vpack.c.bf16 %v5810, %v5808
      %v5847 = vpack.c.bf16 %v5813, %v5811
      %v5848 = vpack.c.bf16 %v5814, %v5812
      %v5849 = vpack.c.bf16 %v5817, %v5815
      %v5850 = vpack.c.bf16 %v5818, %v5816
      %s5851 = scalar_lea.vmem %s2, 1280
      %v5852 = vld [vmem:[%s5851] sm:$0xff]
      %v5853 = vld [vmem:[%s5851 + $0x8] sm:$0xff]
      %v5854 = vld [vmem:[%s5851 + $0x10] sm:$0xff]
      %v5855 = vld [vmem:[%s5851 + $0x18] sm:$0xff]
      %v5856 = vld [vmem:[%s5851 + $0x20] sm:$0xff]
      %v5857 = vld [vmem:[%s5851 + $0x28] sm:$0xff]
      %v5858 = vld [vmem:[%s5851 + $0x30] sm:$0xff]
      %v5859 = vld [vmem:[%s5851 + $0x38] sm:$0xff]
      %v5860 = vld [vmem:[%s5851 + $0x40] sm:$0xff]
      %v5861 = vld [vmem:[%s5851 + $0x48] sm:$0xff]
      %v5862 = vld [vmem:[%s5851 + $0x50] sm:$0xff]
      %v5863 = vld [vmem:[%s5851 + $0x58] sm:$0xff]
      %v5864 = vld [vmem:[%s5851 + $0x60] sm:$0xff]
      %v5865 = vld [vmem:[%s5851 + $0x68] sm:$0xff]
      %v5866 = vld [vmem:[%s5851 + $0x70] sm:$0xff]
      %v5867 = vld [vmem:[%s5851 + $0x78] sm:$0xff]
      %v5868 = vld [vmem:[%s5851 + $0x80] sm:$0xff]
      %v5869 = vld [vmem:[%s5851 + $0x88] sm:$0xff]
      %v5870 = vld [vmem:[%s5851 + $0x90] sm:$0xff]
      %v5871 = vld [vmem:[%s5851 + $0x98] sm:$0xff]
      %v5872 = vld [vmem:[%s5851 + $0xa0] sm:$0xff]
      %v5873 = vld [vmem:[%s5851 + $0xa8] sm:$0xff]
      %v5874 = vld [vmem:[%s5851 + $0xb0] sm:$0xff]
      %v5875 = vld [vmem:[%s5851 + $0xb8] sm:$0xff]
      %v5876 = vld [vmem:[%s5851 + $0xc0] sm:$0xff]
      %v5877 = vld [vmem:[%s5851 + $0xc8] sm:$0xff]
      %v5878 = vld [vmem:[%s5851 + $0xd0] sm:$0xff]
      %v5879 = vld [vmem:[%s5851 + $0xd8] sm:$0xff]
      %v5880 = vld [vmem:[%s5851 + $0xe0] sm:$0xff]
      %v5881 = vld [vmem:[%s5851 + $0xe8] sm:$0xff]
      %v5882 = vld [vmem:[%s5851 + $0xf0] sm:$0xff]
      %v5883 = vld [vmem:[%s5851 + $0xf8] sm:$0xff]
      %s5884 = scalar_lea.vmem %s4, 7
      %v5885 = vld [vmem:[%s5884] ss:$8 sm:$0x3]
      %v5887 = vlaneseq
      %v5888 = vshrl.u32 %v5887, 7
      %v5889 = vsub.s32 0, %v5888
      %v5890 = vrot.slane %v5885, %v5889
      %v5891 = vlaneseq
      %v5892 = vshrl.u32 %v5891, 7
      %v5893 = vsub.s32 1, %v5892
      %v5894 = vrot.slane %v5885, %v5893
      %v5929 = vunpack.c.l.b16 %v5852
      %v5930 = vunpack.c.h.b16 %v5852
      %v5931 = vunpack.c.l.b16 %v5853
      %v5932 = vunpack.c.h.b16 %v5853
      %v5933 = vunpack.c.l.b16 %v5854
      %v5934 = vunpack.c.h.b16 %v5854
      %v5935 = vunpack.c.l.b16 %v5855
      %v5936 = vunpack.c.h.b16 %v5855
      %v5937 = vunpack.c.l.b16 %v5856
      %v5938 = vunpack.c.h.b16 %v5856
      %v5939 = vunpack.c.l.b16 %v5857
      %v5940 = vunpack.c.h.b16 %v5857
      %v5941 = vunpack.c.l.b16 %v5858
      %v5942 = vunpack.c.h.b16 %v5858
      %v5943 = vunpack.c.l.b16 %v5859
      %v5944 = vunpack.c.h.b16 %v5859
      %v5945 = vunpack.c.l.b16 %v5860
      %v5946 = vunpack.c.h.b16 %v5860
      %v5947 = vunpack.c.l.b16 %v5861
      %v5948 = vunpack.c.h.b16 %v5861
      %v5949 = vunpack.c.l.b16 %v5862
      %v5950 = vunpack.c.h.b16 %v5862
      %v5951 = vunpack.c.l.b16 %v5863
      %v5952 = vunpack.c.h.b16 %v5863
      %v5953 = vunpack.c.l.b16 %v5864
      %v5954 = vunpack.c.h.b16 %v5864
      %v5955 = vunpack.c.l.b16 %v5865
      %v5956 = vunpack.c.h.b16 %v5865
      %v5957 = vunpack.c.l.b16 %v5866
      %v5958 = vunpack.c.h.b16 %v5866
      %v5959 = vunpack.c.l.b16 %v5867
      %v5960 = vunpack.c.h.b16 %v5867
      %v5961 = vunpack.c.l.b16 %v5868
      %v5962 = vunpack.c.h.b16 %v5868
      %v5963 = vunpack.c.l.b16 %v5869
      %v5964 = vunpack.c.h.b16 %v5869
      %v5965 = vunpack.c.l.b16 %v5870
      %v5966 = vunpack.c.h.b16 %v5870
      %v5967 = vunpack.c.l.b16 %v5871
      %v5968 = vunpack.c.h.b16 %v5871
      %v5969 = vunpack.c.l.b16 %v5872
      %v5970 = vunpack.c.h.b16 %v5872
      %v5971 = vunpack.c.l.b16 %v5873
      %v5972 = vunpack.c.h.b16 %v5873
      %v5973 = vunpack.c.l.b16 %v5874
      %v5974 = vunpack.c.h.b16 %v5874
      %v5975 = vunpack.c.l.b16 %v5875
      %v5976 = vunpack.c.h.b16 %v5875
      %v5977 = vunpack.c.l.b16 %v5876
      %v5978 = vunpack.c.h.b16 %v5876
      %v5979 = vunpack.c.l.b16 %v5877
      %v5980 = vunpack.c.h.b16 %v5877
      %v5981 = vunpack.c.l.b16 %v5878
      %v5982 = vunpack.c.h.b16 %v5878
      %v5983 = vunpack.c.l.b16 %v5879
      %v5984 = vunpack.c.h.b16 %v5879
      %v5985 = vunpack.c.l.b16 %v5880
      %v5986 = vunpack.c.h.b16 %v5880
      %v5987 = vunpack.c.l.b16 %v5881
      %v5988 = vunpack.c.h.b16 %v5881
      %v5989 = vunpack.c.l.b16 %v5882
      %v5990 = vunpack.c.h.b16 %v5882
      %v5991 = vunpack.c.l.b16 %v5883
      %v5992 = vunpack.c.h.b16 %v5883
      %v5993 = vpack.c.b16 %v5931, %v5929
      %v5994 = vpack.c.b16 %v5932, %v5930
      %v5995 = vpack.c.b16 %v5935, %v5933
      %v5996 = vpack.c.b16 %v5936, %v5934
      %v5997 = vpack.c.b16 %v5939, %v5937
      %v5998 = vpack.c.b16 %v5940, %v5938
      %v5999 = vpack.c.b16 %v5943, %v5941
      %v6000 = vpack.c.b16 %v5944, %v5942
      %v6001 = vpack.c.b16 %v5947, %v5945
      %v6002 = vpack.c.b16 %v5948, %v5946
      %v6003 = vpack.c.b16 %v5951, %v5949
      %v6004 = vpack.c.b16 %v5952, %v5950
      %v6005 = vpack.c.b16 %v5955, %v5953
      %v6006 = vpack.c.b16 %v5956, %v5954
      %v6007 = vpack.c.b16 %v5959, %v5957
      %v6008 = vpack.c.b16 %v5960, %v5958
      %v6009 = vpack.c.b16 %v5963, %v5961
      %v6010 = vpack.c.b16 %v5964, %v5962
      %v6011 = vpack.c.b16 %v5967, %v5965
      %v6012 = vpack.c.b16 %v5968, %v5966
      %v6013 = vpack.c.b16 %v5971, %v5969
      %v6014 = vpack.c.b16 %v5972, %v5970
      %v6015 = vpack.c.b16 %v5975, %v5973
      %v6016 = vpack.c.b16 %v5976, %v5974
      %v6017 = vpack.c.b16 %v5979, %v5977
      %v6018 = vpack.c.b16 %v5980, %v5978
      %v6019 = vpack.c.b16 %v5983, %v5981
      %v6020 = vpack.c.b16 %v5984, %v5982
      %v6021 = vpack.c.b16 %v5987, %v5985
      %v6022 = vpack.c.b16 %v5988, %v5986
      %v6023 = vpack.c.b16 %v5991, %v5989
      %v6024 = vpack.c.b16 %v5992, %v5990
      %6057 = vmatprep.subr.bf16.mxu0 %v5994
      %6058 = vmatpush1.bf16.msra.mxu0 %v5993
      %6059 = vmatprep.subr.bf16.mxu0 %v5996
      %6060 = vmatpush1.bf16.msra.mxu0 %v5995
      %6061 = vmatprep.subr.bf16.mxu0 %v5998
      %6062 = vmatpush1.bf16.msra.mxu0 %v5997
      %6063 = vmatprep.subr.bf16.mxu0 %v6000
      %6064 = vmatpush1.bf16.msra.mxu0 %v5999
      %6065 = vmatprep.subr.bf16.mxu0 %v6002
      %6066 = vmatpush1.bf16.msra.mxu0 %v6001
      %6067 = vmatprep.subr.bf16.mxu0 %v6004
      %6068 = vmatpush1.bf16.msra.mxu0 %v6003
      %6069 = vmatprep.subr.bf16.mxu0 %v6006
      %6070 = vmatpush1.bf16.msra.mxu0 %v6005
      %6071 = vmatprep.subr.bf16.mxu0 %v6008
      %6072 = vmatpush1.bf16.msra.mxu0 %v6007
      %6073 = vmatprep.subr.bf16.mxu0 %v6010
      %6074 = vmatpush1.bf16.msra.mxu0 %v6009
      %6075 = vmatprep.subr.bf16.mxu0 %v6012
      %6076 = vmatpush1.bf16.msra.mxu0 %v6011
      %6077 = vmatprep.subr.bf16.mxu0 %v6014
      %6078 = vmatpush1.bf16.msra.mxu0 %v6013
      %6079 = vmatprep.subr.bf16.mxu0 %v6016
      %6080 = vmatpush1.bf16.msra.mxu0 %v6015
      %6081 = vmatprep.subr.bf16.mxu0 %v6018
      %6082 = vmatpush1.bf16.msra.mxu0 %v6017
      %6083 = vmatprep.subr.bf16.mxu0 %v6020
      %6084 = vmatpush1.bf16.msra.mxu0 %v6019
      %6085 = vmatprep.subr.bf16.mxu0 %v6022
      %6086 = vmatpush1.bf16.msra.mxu0 %v6021
      %6087 = vmatprep.subr.bf16.mxu0 %v6024
      %6088 = vmatpush1.bf16.msra.mxu0 %v6023
      %6089 = vmatprep.mubr.bf16.mxu0 %v5820
      %6090 = vmatmul.mubr.bf16.gmra.mrb[0].mxu0 %v5819
      %v6091 = vpop.f32.mrb[0].mxu0
      %v6092 = vadd.f32 %v5890, %v6091
      %v6093 = vpop.f32.mrb[0].mxu0
      %v6094 = vadd.f32 %v5894, %v6093
      %v6095 = vpop.f32.mrb[0].mxu0
      %v6096 = vadd.f32 %v5890, %v6095
      %v6097 = vpop.f32.mrb[0].mxu0
      %v6098 = vadd.f32 %v5894, %v6097
      %6099 = vmatprep.mubr.bf16.mxu0 %v5822
      %6100 = vmatmul.mubr.bf16.gmra.mrb[0].mxu0 %v5821
      %v6101 = vpop.f32.mrb[0].mxu0
      %v6102 = vadd.f32 %v5890, %v6101
      %v6103 = vpop.f32.mrb[0].mxu0
      %v6104 = vadd.f32 %v5894, %v6103
      %v6105 = vpop.f32.mrb[0].mxu0
      %v6106 = vadd.f32 %v5890, %v6105
      %v6107 = vpop.f32.mrb[0].mxu0
      %v6108 = vadd.f32 %v5894, %v6107
      %6109 = vmatprep.mubr.bf16.mxu0 %v5824
      %6110 = vmatmul.mubr.bf16.gmra.mrb[0].mxu0 %v5823
      %v6111 = vpop.f32.mrb[0].mxu0
      %v6112 = vadd.f32 %v5890, %v6111
      %v6113 = vpop.f32.mrb[0].mxu0
      %v6114 = vadd.f32 %v5894, %v6113
      %v6115 = vpop.f32.mrb[0].mxu0
      %v6116 = vadd.f32 %v5890, %v6115
      %v6117 = vpop.f32.mrb[0].mxu0
      %v6118 = vadd.f32 %v5894, %v6117
      %6119 = vmatprep.mubr.bf16.mxu0 %v5826
      %6120 = vmatmul.mubr.bf16.gmra.mrb[0].mxu0 %v5825
      %v6121 = vpop.f32.mrb[0].mxu0
      %v6122 = vadd.f32 %v5890, %v6121
      %v6123 = vpop.f32.mrb[0].mxu0
      %v6124 = vadd.f32 %v5894, %v6123
      %v6125 = vpop.f32.mrb[0].mxu0
      %v6126 = vadd.f32 %v5890, %v6125
      %v6127 = vpop.f32.mrb[0].mxu0
      %v6128 = vadd.f32 %v5894, %v6127
      %6129 = vmatprep.mubr.bf16.mxu0 %v5828
      %6130 = vmatmul.mubr.bf16.gmra.mrb[0].mxu0 %v5827
      %v6131 = vpop.f32.mrb[0].mxu0
      %v6132 = vadd.f32 %v5890, %v6131
      %v6133 = vpop.f32.mrb[0].mxu0
      %v6134 = vadd.f32 %v5894, %v6133
      %v6135 = vpop.f32.mrb[0].mxu0
      %v6136 = vadd.f32 %v5890, %v6135
      %v6137 = vpop.f32.mrb[0].mxu0
      %v6138 = vadd.f32 %v5894, %v6137
      %6139 = vmatprep.mubr.bf16.mxu0 %v5830
      %6140 = vmatmul.mubr.bf16.gmra.mrb[0].mxu0 %v5829
      %v6141 = vpop.f32.mrb[0].mxu0
      %v6142 = vadd.f32 %v5890, %v6141
      %v6143 = vpop.f32.mrb[0].mxu0
      %v6144 = vadd.f32 %v5894, %v6143
      %v6145 = vpop.f32.mrb[0].mxu0
      %v6146 = vadd.f32 %v5890, %v6145
      %v6147 = vpop.f32.mrb[0].mxu0
      %v6148 = vadd.f32 %v5894, %v6147
      %6149 = vmatprep.mubr.bf16.mxu0 %v5832
      %6150 = vmatmul.mubr.bf16.gmra.mrb[0].mxu0 %v5831
      %v6151 = vpop.f32.mrb[0].mxu0
      %v6152 = vadd.f32 %v5890, %v6151
      %v6153 = vpop.f32.mrb[0].mxu0
      %v6154 = vadd.f32 %v5894, %v6153
      %v6155 = vpop.f32.mrb[0].mxu0
      %v6156 = vadd.f32 %v5890, %v6155
      %v6157 = vpop.f32.mrb[0].mxu0
      %v6158 = vadd.f32 %v5894, %v6157
      %6159 = vmatprep.mubr.bf16.mxu0 %v5834
      %6160 = vmatmul.mubr.bf16.gmra.mrb[0].mxu0 %v5833
      %v6161 = vpop.f32.mrb[0].mxu0
      %v6162 = vadd.f32 %v5890, %v6161
      %v6163 = vpop.f32.mrb[0].mxu0
      %v6164 = vadd.f32 %v5894, %v6163
      %v6165 = vpop.f32.mrb[0].mxu0
      %v6166 = vadd.f32 %v5890, %v6165
      %v6167 = vpop.f32.mrb[0].mxu0
      %v6168 = vadd.f32 %v5894, %v6167
      %6169 = vmatprep.mubr.bf16.mxu0 %v5836
      %6170 = vmatmul.mubr.bf16.gmra.mrb[0].mxu0 %v5835
      %v6171 = vpop.f32.mrb[0].mxu0
      %v6172 = vadd.f32 %v5890, %v6171
      %v6173 = vpop.f32.mrb[0].mxu0
      %v6174 = vadd.f32 %v5894, %v6173
      %v6175 = vpop.f32.mrb[0].mxu0
      %v6176 = vadd.f32 %v5890, %v6175
      %v6177 = vpop.f32.mrb[0].mxu0
      %v6178 = vadd.f32 %v5894, %v6177
      %6179 = vmatprep.mubr.bf16.mxu0 %v5838
      %6180 = vmatmul.mubr.bf16.gmra.mrb[0].mxu0 %v5837
      %v6181 = vpop.f32.mrb[0].mxu0
      %v6182 = vadd.f32 %v5890, %v6181
      %v6183 = vpop.f32.mrb[0].mxu0
      %v6184 = vadd.f32 %v5894, %v6183
      %v6185 = vpop.f32.mrb[0].mxu0
      %v6186 = vadd.f32 %v5890, %v6185
      %v6187 = vpop.f32.mrb[0].mxu0
      %v6188 = vadd.f32 %v5894, %v6187
      %6189 = vmatprep.mubr.bf16.mxu0 %v5840
      %6190 = vmatmul.mubr.bf16.gmra.mrb[0].mxu0 %v5839
      %v6191 = vpop.f32.mrb[0].mxu0
      %v6192 = vadd.f32 %v5890, %v6191
      %v6193 = vpop.f32.mrb[0].mxu0
      %v6194 = vadd.f32 %v5894, %v6193
      %v6195 = vpop.f32.mrb[0].mxu0
      %v6196 = vadd.f32 %v5890, %v6195
      %v6197 = vpop.f32.mrb[0].mxu0
      %v6198 = vadd.f32 %v5894, %v6197
      %6199 = vmatprep.mubr.bf16.mxu0 %v5842
      %6200 = vmatmul.mubr.bf16.gmra.mrb[0].mxu0 %v5841
      %v6201 = vpop.f32.mrb[0].mxu0
      %v6202 = vadd.f32 %v5890, %v6201
      %v6203 = vpop.f32.mrb[0].mxu0
      %v6204 = vadd.f32 %v5894, %v6203
      %v6205 = vpop.f32.mrb[0].mxu0
      %v6206 = vadd.f32 %v5890, %v6205
      %v6207 = vpop.f32.mrb[0].mxu0
      %v6208 = vadd.f32 %v5894, %v6207
      %6209 = vmatprep.mubr.bf16.mxu0 %v5844
      %6210 = vmatmul.mubr.bf16.gmra.mrb[0].mxu0 %v5843
      %v6211 = vpop.f32.mrb[0].mxu0
      %v6212 = vadd.f32 %v5890, %v6211
      %v6213 = vpop.f32.mrb[0].mxu0
      %v6214 = vadd.f32 %v5894, %v6213
      %v6215 = vpop.f32.mrb[0].mxu0
      %v6216 = vadd.f32 %v5890, %v6215
      %v6217 = vpop.f32.mrb[0].mxu0
      %v6218 = vadd.f32 %v5894, %v6217
      %6219 = vmatprep.mubr.bf16.mxu0 %v5846
      %6220 = vmatmul.mubr.bf16.gmra.mrb[0].mxu0 %v5845
      %v6221 = vpop.f32.mrb[0].mxu0
      %v6222 = vadd.f32 %v5890, %v6221
      %v6223 = vpop.f32.mrb[0].mxu0
      %v6224 = vadd.f32 %v5894, %v6223
      %v6225 = vpop.f32.mrb[0].mxu0
      %v6226 = vadd.f32 %v5890, %v6225
      %v6227 = vpop.f32.mrb[0].mxu0
      %v6228 = vadd.f32 %v5894, %v6227
      %6229 = vmatprep.mubr.bf16.mxu0 %v5848
      %6230 = vmatmul.mubr.bf16.gmra.mrb[0].mxu0 %v5847
      %v6231 = vpop.f32.mrb[0].mxu0
      %v6232 = vadd.f32 %v5890, %v6231
      %v6233 = vpop.f32.mrb[0].mxu0
      %v6234 = vadd.f32 %v5894, %v6233
      %v6235 = vpop.f32.mrb[0].mxu0
      %v6236 = vadd.f32 %v5890, %v6235
      %v6237 = vpop.f32.mrb[0].mxu0
      %v6238 = vadd.f32 %v5894, %v6237
      %6239 = vmatprep.mubr.bf16.mxu0 %v5850
      %6240 = vmatmul.mubr.bf16.gmra.mrb[0].mxu0 %v5849
      %v6241 = vpop.f32.mrb[0].mxu0
      %v6242 = vadd.f32 %v5890, %v6241
      %v6243 = vpop.f32.mrb[0].mxu0
      %v6244 = vadd.f32 %v5894, %v6243
      %v6245 = vpop.f32.mrb[0].mxu0
      %v6246 = vadd.f32 %v5890, %v6245
      %v6247 = vpop.f32.mrb[0].mxu0
      %v6248 = vadd.f32 %v5894, %v6247
      %6249 = vdwg.mxu0
      %vm6250 = vcmp.gt.f32.partialorder %v6092, 0.0
      %vm6251 = vcmp.gt.f32.partialorder %v6094, 0.0
      %vm6252 = vcmp.gt.f32.partialorder %v6096, 0.0
      %vm6253 = vcmp.gt.f32.partialorder %v6098, 0.0
      %vm6254 = vcmp.gt.f32.partialorder %v6102, 0.0
      %vm6255 = vcmp.gt.f32.partialorder %v6104, 0.0
      %vm6256 = vcmp.gt.f32.partialorder %v6106, 0.0
      %vm6257 = vcmp.gt.f32.partialorder %v6108, 0.0
      %vm6258 = vcmp.gt.f32.partialorder %v6112, 0.0
      %vm6259 = vcmp.gt.f32.partialorder %v6114, 0.0
      %vm6260 = vcmp.gt.f32.partialorder %v6116, 0.0
      %vm6261 = vcmp.gt.f32.partialorder %v6118, 0.0
      %vm6262 = vcmp.gt.f32.partialorder %v6122, 0.0
      %vm6263 = vcmp.gt.f32.partialorder %v6124, 0.0
      %vm6264 = vcmp.gt.f32.partialorder %v6126, 0.0
      %vm6265 = vcmp.gt.f32.partialorder %v6128, 0.0
      %vm6266 = vcmp.gt.f32.partialorder %v6132, 0.0
      %vm6267 = vcmp.gt.f32.partialorder %v6134, 0.0
      %vm6268 = vcmp.gt.f32.partialorder %v6136, 0.0
      %vm6269 = vcmp.gt.f32.partialorder %v6138, 0.0
      %vm6270 = vcmp.gt.f32.partialorder %v6142, 0.0
      %vm6271 = vcmp.gt.f32.partialorder %v6144, 0.0
      %vm6272 = vcmp.gt.f32.partialorder %v6146, 0.0
      %vm6273 = vcmp.gt.f32.partialorder %v6148, 0.0
      %vm6274 = vcmp.gt.f32.partialorder %v6152, 0.0
      %vm6275 = vcmp.gt.f32.partialorder %v6154, 0.0
      %vm6276 = vcmp.gt.f32.partialorder %v6156, 0.0
      %vm6277 = vcmp.gt.f32.partialorder %v6158, 0.0
      %vm6278 = vcmp.gt.f32.partialorder %v6162, 0.0
      %vm6279 = vcmp.gt.f32.partialorder %v6164, 0.0
      %vm6280 = vcmp.gt.f32.partialorder %v6166, 0.0
      %vm6281 = vcmp.gt.f32.partialorder %v6168, 0.0
      %vm6282 = vcmp.gt.f32.partialorder %v6172, 0.0
      %vm6283 = vcmp.gt.f32.partialorder %v6174, 0.0
      %vm6284 = vcmp.gt.f32.partialorder %v6176, 0.0
      %vm6285 = vcmp.gt.f32.partialorder %v6178, 0.0
      %vm6286 = vcmp.gt.f32.partialorder %v6182, 0.0
      %vm6287 = vcmp.gt.f32.partialorder %v6184, 0.0
      %vm6288 = vcmp.gt.f32.partialorder %v6186, 0.0
      %vm6289 = vcmp.gt.f32.partialorder %v6188, 0.0
      %vm6290 = vcmp.gt.f32.partialorder %v6192, 0.0
      %vm6291 = vcmp.gt.f32.partialorder %v6194, 0.0
      %vm6292 = vcmp.gt.f32.partialorder %v6196, 0.0
      %vm6293 = vcmp.gt.f32.partialorder %v6198, 0.0
      %vm6294 = vcmp.gt.f32.partialorder %v6202, 0.0
      %vm6295 = vcmp.gt.f32.partialorder %v6204, 0.0
      %vm6296 = vcmp.gt.f32.partialorder %v6206, 0.0
      %vm6297 = vcmp.gt.f32.partialorder %v6208, 0.0
      %vm6298 = vcmp.gt.f32.partialorder %v6212, 0.0
      %vm6299 = vcmp.gt.f32.partialorder %v6214, 0.0
      %vm6300 = vcmp.gt.f32.partialorder %v6216, 0.0
      %vm6301 = vcmp.gt.f32.partialorder %v6218, 0.0
      %vm6302 = vcmp.gt.f32.partialorder %v6222, 0.0
      %vm6303 = vcmp.gt.f32.partialorder %v6224, 0.0
      %vm6304 = vcmp.gt.f32.partialorder %v6226, 0.0
      %vm6305 = vcmp.gt.f32.partialorder %v6228, 0.0
      %vm6306 = vcmp.gt.f32.partialorder %v6232, 0.0
      %vm6307 = vcmp.gt.f32.partialorder %v6234, 0.0
      %vm6308 = vcmp.gt.f32.partialorder %v6236, 0.0
      %vm6309 = vcmp.gt.f32.partialorder %v6238, 0.0
      %vm6310 = vcmp.gt.f32.partialorder %v6242, 0.0
      %vm6311 = vcmp.gt.f32.partialorder %v6244, 0.0
      %vm6312 = vcmp.gt.f32.partialorder %v6246, 0.0
      %vm6313 = vcmp.gt.f32.partialorder %v6248, 0.0
      %v6314 = vmul.f32 %v6092, 1.442695
      %v6315 = vpow.pop %v6314
      %v6316 = vmul.f32 %v6094, 1.442695
      %v6317 = vpow.pop %v6316
      %v6318 = vmul.f32 %v6096, 1.442695
      %v6319 = vpow.pop %v6318
      %v6320 = vmul.f32 %v6098, 1.442695
      %v6321 = vpow.pop %v6320
      %v6322 = vmul.f32 %v6102, 1.442695
      %v6323 = vpow.pop %v6322
      %v6324 = vmul.f32 %v6104, 1.442695
      %v6325 = vpow.pop %v6324
      %v6326 = vmul.f32 %v6106, 1.442695
      %v6327 = vpow.pop %v6326
      %v6328 = vmul.f32 %v6108, 1.442695
      %v6329 = vpow.pop %v6328
      %v6330 = vmul.f32 %v6112, 1.442695
      %v6331 = vpow.pop %v6330
      %v6332 = vmul.f32 %v6114, 1.442695
      %v6333 = vpow.pop %v6332
      %v6334 = vmul.f32 %v6116, 1.442695
      %v6335 = vpow.pop %v6334
      %v6336 = vmul.f32 %v6118, 1.442695
      %v6337 = vpow.pop %v6336
      %v6338 = vmul.f32 %v6122, 1.442695
      %v6339 = vpow.pop %v6338
      %v6340 = vmul.f32 %v6124, 1.442695
      %v6341 = vpow.pop %v6340
      %v6342 = vmul.f32 %v6126, 1.442695
      %v6343 = vpow.pop %v6342
      %v6344 = vmul.f32 %v6128, 1.442695
      %v6345 = vpow.pop %v6344
      %v6346 = vmul.f32 %v6132, 1.442695
      %v6347 = vpow.pop %v6346
      %v6348 = vmul.f32 %v6134, 1.442695
      %v6349 = vpow.pop %v6348
      %v6350 = vmul.f32 %v6136, 1.442695
      %v6351 = vpow.pop %v6350
      %v6352 = vmul.f32 %v6138, 1.442695
      %v6353 = vpow.pop %v6352
      %v6354 = vmul.f32 %v6142, 1.442695
      %v6355 = vpow.pop %v6354
      %v6356 = vmul.f32 %v6144, 1.442695
      %v6357 = vpow.pop %v6356
      %v6358 = vmul.f32 %v6146, 1.442695
      %v6359 = vpow.pop %v6358
      %v6360 = vmul.f32 %v6148, 1.442695
      %v6361 = vpow.pop %v6360
      %v6362 = vmul.f32 %v6152, 1.442695
      %v6363 = vpow.pop %v6362
      %v6364 = vmul.f32 %v6154, 1.442695
      %v6365 = vpow.pop %v6364
      %v6366 = vmul.f32 %v6156, 1.442695
      %v6367 = vpow.pop %v6366
      %v6368 = vmul.f32 %v6158, 1.442695
      %v6369 = vpow.pop %v6368
      %v6370 = vmul.f32 %v6162, 1.442695
      %v6371 = vpow.pop %v6370
      %v6372 = vmul.f32 %v6164, 1.442695
      %v6373 = vpow.pop %v6372
      %v6374 = vmul.f32 %v6166, 1.442695
      %v6375 = vpow.pop %v6374
      %v6376 = vmul.f32 %v6168, 1.442695
      %v6377 = vpow.pop %v6376
      %v6378 = vmul.f32 %v6172, 1.442695
      %v6379 = vpow.pop %v6378
      %v6380 = vmul.f32 %v6174, 1.442695
      %v6381 = vpow.pop %v6380
      %v6382 = vmul.f32 %v6176, 1.442695
      %v6383 = vpow.pop %v6382
      %v6384 = vmul.f32 %v6178, 1.442695
      %v6385 = vpow.pop %v6384
      %v6386 = vmul.f32 %v6182, 1.442695
      %v6387 = vpow.pop %v6386
      %v6388 = vmul.f32 %v6184, 1.442695
      %v6389 = vpow.pop %v6388
      %v6390 = vmul.f32 %v6186, 1.442695
      %v6391 = vpow.pop %v6390
      %v6392 = vmul.f32 %v6188, 1.442695
      %v6393 = vpow.pop %v6392
      %v6394 = vmul.f32 %v6192, 1.442695
      %v6395 = vpow.pop %v6394
      %v6396 = vmul.f32 %v6194, 1.442695
      %v6397 = vpow.pop %v6396
      %v6398 = vmul.f32 %v6196, 1.442695
      %v6399 = vpow.pop %v6398
      %v6400 = vmul.f32 %v6198, 1.442695
      %v6401 = vpow.pop %v6400
      %v6402 = vmul.f32 %v6202, 1.442695
      %v6403 = vpow.pop %v6402
      %v6404 = vmul.f32 %v6204, 1.442695
      %v6405 = vpow.pop %v6404
      %v6406 = vmul.f32 %v6206, 1.442695
      %v6407 = vpow.pop %v6406
      %v6408 = vmul.f32 %v6208, 1.442695
      %v6409 = vpow.pop %v6408
      %v6410 = vmul.f32 %v6212, 1.442695
      %v6411 = vpow.pop %v6410
      %v6412 = vmul.f32 %v6214, 1.442695
      %v6413 = vpow.pop %v6412
      %v6414 = vmul.f32 %v6216, 1.442695
      %v6415 = vpow.pop %v6414
      %v6416 = vmul.f32 %v6218, 1.442695
      %v6417 = vpow.pop %v6416
      %v6418 = vmul.f32 %v6222, 1.442695
      %v6419 = vpow.pop %v6418
      %v6420 = vmul.f32 %v6224, 1.442695
      %v6421 = vpow.pop %v6420
      %v6422 = vmul.f32 %v6226, 1.442695
      %v6423 = vpow.pop %v6422
      %v6424 = vmul.f32 %v6228, 1.442695
      %v6425 = vpow.pop %v6424
      %v6426 = vmul.f32 %v6232, 1.442695
      %v6427 = vpow.pop %v6426
      %v6428 = vmul.f32 %v6234, 1.442695
      %v6429 = vpow.pop %v6428
      %v6430 = vmul.f32 %v6236, 1.442695
      %v6431 = vpow.pop %v6430
      %v6432 = vmul.f32 %v6238, 1.442695
      %v6433 = vpow.pop %v6432
      %v6434 = vmul.f32 %v6242, 1.442695
      %v6435 = vpow.pop %v6434
      %v6436 = vmul.f32 %v6244, 1.442695
      %v6437 = vpow.pop %v6436
      %v6438 = vmul.f32 %v6246, 1.442695
      %v6439 = vpow.pop %v6438
      %v6440 = vmul.f32 %v6248, 1.442695
      %v6441 = vpow.pop %v6440
      %v6442 = vsub.f32 %v6315, 1.0
      %v6443 = vsub.f32 %v6317, 1.0
      %v6444 = vsub.f32 %v6319, 1.0
      %v6445 = vsub.f32 %v6321, 1.0
      %v6446 = vsub.f32 %v6323, 1.0
      %v6447 = vsub.f32 %v6325, 1.0
      %v6448 = vsub.f32 %v6327, 1.0
      %v6449 = vsub.f32 %v6329, 1.0
      %v6450 = vsub.f32 %v6331, 1.0
      %v6451 = vsub.f32 %v6333, 1.0
      %v6452 = vsub.f32 %v6335, 1.0
      %v6453 = vsub.f32 %v6337, 1.0
      %v6454 = vsub.f32 %v6339, 1.0
      %v6455 = vsub.f32 %v6341, 1.0
      %v6456 = vsub.f32 %v6343, 1.0
      %v6457 = vsub.f32 %v6345, 1.0
      %v6458 = vsub.f32 %v6347, 1.0
      %v6459 = vsub.f32 %v6349, 1.0
      %v6460 = vsub.f32 %v6351, 1.0
      %v6461 = vsub.f32 %v6353, 1.0
      %v6462 = vsub.f32 %v6355, 1.0
      %v6463 = vsub.f32 %v6357, 1.0
      %v6464 = vsub.f32 %v6359, 1.0
      %v6465 = vsub.f32 %v6361, 1.0
      %v6466 = vsub.f32 %v6363, 1.0
      %v6467 = vsub.f32 %v6365, 1.0
      %v6468 = vsub.f32 %v6367, 1.0
      %v6469 = vsub.f32 %v6369, 1.0
      %v6470 = vsub.f32 %v6371, 1.0
      %v6471 = vsub.f32 %v6373, 1.0
      %v6472 = vsub.f32 %v6375, 1.0
      %v6473 = vsub.f32 %v6377, 1.0
      %v6474 = vsub.f32 %v6379, 1.0
      %v6475 = vsub.f32 %v6381, 1.0
      %v6476 = vsub.f32 %v6383, 1.0
      %v6477 = vsub.f32 %v6385, 1.0
      %v6478 = vsub.f32 %v6387, 1.0
      %v6479 = vsub.f32 %v6389, 1.0
      %v6480 = vsub.f32 %v6391, 1.0
      %v6481 = vsub.f32 %v6393, 1.0
      %v6482 = vsub.f32 %v6395, 1.0
      %v6483 = vsub.f32 %v6397, 1.0
      %v6484 = vsub.f32 %v6399, 1.0
      %v6485 = vsub.f32 %v6401, 1.0
      %v6486 = vsub.f32 %v6403, 1.0
      %v6487 = vsub.f32 %v6405, 1.0
      %v6488 = vsub.f32 %v6407, 1.0
      %v6489 = vsub.f32 %v6409, 1.0
      %v6490 = vsub.f32 %v6411, 1.0
      %v6491 = vsub.f32 %v6413, 1.0
      %v6492 = vsub.f32 %v6415, 1.0
      %v6493 = vsub.f32 %v6417, 1.0
      %v6494 = vsub.f32 %v6419, 1.0
      %v6495 = vsub.f32 %v6421, 1.0
      %v6496 = vsub.f32 %v6423, 1.0
      %v6497 = vsub.f32 %v6425, 1.0
      %v6498 = vsub.f32 %v6427, 1.0
      %v6499 = vsub.f32 %v6429, 1.0
      %v6500 = vsub.f32 %v6431, 1.0
      %v6501 = vsub.f32 %v6433, 1.0
      %v6502 = vsub.f32 %v6435, 1.0
      %v6503 = vsub.f32 %v6437, 1.0
      %v6504 = vsub.f32 %v6439, 1.0
      %v6505 = vsub.f32 %v6441, 1.0
      %v6506 = vsel %vm6250, %v6092, %v6442
      %v6507 = vsel %vm6251, %v6094, %v6443
      %v6508 = vsel %vm6252, %v6096, %v6444
      %v6509 = vsel %vm6253, %v6098, %v6445
      %v6510 = vsel %vm6254, %v6102, %v6446
      %v6511 = vsel %vm6255, %v6104, %v6447
      %v6512 = vsel %vm6256, %v6106, %v6448
      %v6513 = vsel %vm6257, %v6108, %v6449
      %v6514 = vsel %vm6258, %v6112, %v6450
      %v6515 = vsel %vm6259, %v6114, %v6451
      %v6516 = vsel %vm6260, %v6116, %v6452
      %v6517 = vsel %vm6261, %v6118, %v6453
      %v6518 = vsel %vm6262, %v6122, %v6454
      %v6519 = vsel %vm6263, %v6124, %v6455
      %v6520 = vsel %vm6264, %v6126, %v6456
      %v6521 = vsel %vm6265, %v6128, %v6457
      %v6522 = vsel %vm6266, %v6132, %v6458
      %v6523 = vsel %vm6267, %v6134, %v6459
      %v6524 = vsel %vm6268, %v6136, %v6460
      %v6525 = vsel %vm6269, %v6138, %v6461
      %v6526 = vsel %vm6270, %v6142, %v6462
      %v6527 = vsel %vm6271, %v6144, %v6463
      %v6528 = vsel %vm6272, %v6146, %v6464
      %v6529 = vsel %vm6273, %v6148, %v6465
      %v6530 = vsel %vm6274, %v6152, %v6466
      %v6531 = vsel %vm6275, %v6154, %v6467
      %v6532 = vsel %vm6276, %v6156, %v6468
      %v6533 = vsel %vm6277, %v6158, %v6469
      %v6534 = vsel %vm6278, %v6162, %v6470
      %v6535 = vsel %vm6279, %v6164, %v6471
      %v6536 = vsel %vm6280, %v6166, %v6472
      %v6537 = vsel %vm6281, %v6168, %v6473
      %v6538 = vsel %vm6282, %v6172, %v6474
      %v6539 = vsel %vm6283, %v6174, %v6475
      %v6540 = vsel %vm6284, %v6176, %v6476
      %v6541 = vsel %vm6285, %v6178, %v6477
      %v6542 = vsel %vm6286, %v6182, %v6478
      %v6543 = vsel %vm6287, %v6184, %v6479
      %v6544 = vsel %vm6288, %v6186, %v6480
      %v6545 = vsel %vm6289, %v6188, %v6481
      %v6546 = vsel %vm6290, %v6192, %v6482
      %v6547 = vsel %vm6291, %v6194, %v6483
      %v6548 = vsel %vm6292, %v6196, %v6484
      %v6549 = vsel %vm6293, %v6198, %v6485
      %v6550 = vsel %vm6294, %v6202, %v6486
      %v6551 = vsel %vm6295, %v6204, %v6487
      %v6552 = vsel %vm6296, %v6206, %v6488
      %v6553 = vsel %vm6297, %v6208, %v6489
      %v6554 = vsel %vm6298, %v6212, %v6490
      %v6555 = vsel %vm6299, %v6214, %v6491
      %v6556 = vsel %vm6300, %v6216, %v6492
      %v6557 = vsel %vm6301, %v6218, %v6493
      %v6558 = vsel %vm6302, %v6222, %v6494
      %v6559 = vsel %vm6303, %v6224, %v6495
      %v6560 = vsel %vm6304, %v6226, %v6496
      %v6561 = vsel %vm6305, %v6228, %v6497
      %v6562 = vsel %vm6306, %v6232, %v6498
      %v6563 = vsel %vm6307, %v6234, %v6499
      %v6564 = vsel %vm6308, %v6236, %v6500
      %v6565 = vsel %vm6309, %v6238, %v6501
      %v6566 = vsel %vm6310, %v6242, %v6502
      %v6567 = vsel %vm6311, %v6244, %v6503
      %v6568 = vsel %vm6312, %v6246, %v6504
      %v6569 = vsel %vm6313, %v6248, %v6505
      %v6570 = vpack.c.bf16 %v5006, %v5004
      %v6571 = vpack.c.bf16 %v5007, %v5005
      %v6572 = vpack.c.bf16 %v5010, %v5008
      %v6573 = vpack.c.bf16 %v5011, %v5009
      %v6574 = vpack.c.bf16 %v5014, %v5012
      %v6575 = vpack.c.bf16 %v5015, %v5013
      %v6576 = vpack.c.bf16 %v5018, %v5016
      %v6577 = vpack.c.bf16 %v5019, %v5017
      %v6578 = vpack.c.bf16 %v5022, %v5020
      %v6579 = vpack.c.bf16 %v5023, %v5021
      %v6580 = vpack.c.bf16 %v5026, %v5024
      %v6581 = vpack.c.bf16 %v5027, %v5025
      %v6582 = vpack.c.bf16 %v5030, %v5028
      %v6583 = vpack.c.bf16 %v5031, %v5029
      %v6584 = vpack.c.bf16 %v5034, %v5032
      %v6585 = vpack.c.bf16 %v5035, %v5033
      %v6586 = vpack.c.bf16 %v5038, %v5036
      %v6587 = vpack.c.bf16 %v5039, %v5037
      %v6588 = vpack.c.bf16 %v5042, %v5040
      %v6589 = vpack.c.bf16 %v5043, %v5041
      %v6590 = vpack.c.bf16 %v5046, %v5044
      %v6591 = vpack.c.bf16 %v5047, %v5045
      %v6592 = vpack.c.bf16 %v5050, %v5048
      %v6593 = vpack.c.bf16 %v5051, %v5049
      %v6594 = vpack.c.bf16 %v5054, %v5052
      %v6595 = vpack.c.bf16 %v5055, %v5053
      %v6596 = vpack.c.bf16 %v5058, %v5056
      %v6597 = vpack.c.bf16 %v5059, %v5057
      %v6598 = vpack.c.bf16 %v5062, %v5060
      %v6599 = vpack.c.bf16 %v5063, %v5061
      %v6600 = vpack.c.bf16 %v5066, %v5064
      %v6601 = vpack.c.bf16 %v5067, %v5065
      %v6602 = vld [vmem:[%s3] sm:$0xf]
      %v6603 = vld [vmem:[%s3 + $0x4] sm:$0xf]
      %v6604 = vld [vmem:[%s3 + $0x8] sm:$0xf]
      %v6605 = vld [vmem:[%s3 + $0xc] sm:$0xf]
      %v6606 = vld [vmem:[%s3 + $0x10] sm:$0xf]
      %v6607 = vld [vmem:[%s3 + $0x14] sm:$0xf]
      %v6608 = vld [vmem:[%s3 + $0x18] sm:$0xf]
      %v6609 = vld [vmem:[%s3 + $0x1c] sm:$0xf]
      %v6610 = vld [vmem:[%s3 + $0x20] sm:$0xf]
      %v6611 = vld [vmem:[%s3 + $0x24] sm:$0xf]
      %v6612 = vld [vmem:[%s3 + $0x28] sm:$0xf]
      %v6613 = vld [vmem:[%s3 + $0x2c] sm:$0xf]
      %v6614 = vld [vmem:[%s3 + $0x30] sm:$0xf]
      %v6615 = vld [vmem:[%s3 + $0x34] sm:$0xf]
      %v6616 = vld [vmem:[%s3 + $0x38] sm:$0xf]
      %v6617 = vld [vmem:[%s3 + $0x3c] sm:$0xf]
      %v6618 = vld [vmem:[%s3 + $0x40] sm:$0xf]
      %v6619 = vld [vmem:[%s3 + $0x44] sm:$0xf]
      %v6620 = vld [vmem:[%s3 + $0x48] sm:$0xf]
      %v6621 = vld [vmem:[%s3 + $0x4c] sm:$0xf]
      %v6622 = vld [vmem:[%s3 + $0x50] sm:$0xf]
      %v6623 = vld [vmem:[%s3 + $0x54] sm:$0xf]
      %v6624 = vld [vmem:[%s3 + $0x58] sm:$0xf]
      %v6625 = vld [vmem:[%s3 + $0x5c] sm:$0xf]
      %v6626 = vld [vmem:[%s3 + $0x60] sm:$0xf]
      %v6627 = vld [vmem:[%s3 + $0x64] sm:$0xf]
      %v6628 = vld [vmem:[%s3 + $0x68] sm:$0xf]
      %v6629 = vld [vmem:[%s3 + $0x6c] sm:$0xf]
      %v6630 = vld [vmem:[%s3 + $0x70] sm:$0xf]
      %v6631 = vld [vmem:[%s3 + $0x74] sm:$0xf]
      %v6632 = vld [vmem:[%s3 + $0x78] sm:$0xf]
      %v6633 = vld [vmem:[%s3 + $0x7c] sm:$0xf]
      %v6634 = vpack.c.bf16 %v6508, %v6506
      %v6635 = vpack.c.bf16 %v6509, %v6507
      %v6636 = vpack.c.bf16 %v6512, %v6510
      %v6637 = vpack.c.bf16 %v6513, %v6511
      %v6638 = vpack.c.bf16 %v6516, %v6514
      %v6639 = vpack.c.bf16 %v6517, %v6515
      %v6640 = vpack.c.bf16 %v6520, %v6518
      %v6641 = vpack.c.bf16 %v6521, %v6519
      %v6642 = vpack.c.bf16 %v6524, %v6522
      %v6643 = vpack.c.bf16 %v6525, %v6523
      %v6644 = vpack.c.bf16 %v6528, %v6526
      %v6645 = vpack.c.bf16 %v6529, %v6527
      %v6646 = vpack.c.bf16 %v6532, %v6530
      %v6647 = vpack.c.bf16 %v6533, %v6531
      %v6648 = vpack.c.bf16 %v6536, %v6534
      %v6649 = vpack.c.bf16 %v6537, %v6535
      %v6650 = vpack.c.bf16 %v6540, %v6538
      %v6651 = vpack.c.bf16 %v6541, %v6539
      %v6652 = vpack.c.bf16 %v6544, %v6542
      %v6653 = vpack.c.bf16 %v6545, %v6543
      %v6654 = vpack.c.bf16 %v6548, %v6546
      %v6655 = vpack.c.bf16 %v6549, %v6547
      %v6656 = vpack.c.bf16 %v6552, %v6550
      %v6657 = vpack.c.bf16 %v6553, %v6551
      %v6658 = vpack.c.bf16 %v6556, %v6554
      %v6659 = vpack.c.bf16 %v6557, %v6555
      %v6660 = vpack.c.bf16 %v6560, %v6558
      %v6661 = vpack.c.bf16 %v6561, %v6559
      %v6662 = vpack.c.bf16 %v6564, %v6562
      %v6663 = vpack.c.bf16 %v6565, %v6563
      %v6664 = vpack.c.bf16 %v6568, %v6566
      %v6665 = vpack.c.bf16 %v6569, %v6567
      %s6666 = scalar_lea.vmem %s3, 128
      %v6667 = vld [vmem:[%s6666] sm:$0xf]
      %v6668 = vld [vmem:[%s6666 + $0x4] sm:$0xf]
      %v6669 = vld [vmem:[%s6666 + $0x8] sm:$0xf]
      %v6670 = vld [vmem:[%s6666 + $0xc] sm:$0xf]
      %v6671 = vld [vmem:[%s6666 + $0x10] sm:$0xf]
      %v6672 = vld [vmem:[%s6666 + $0x14] sm:$0xf]
      %v6673 = vld [vmem:[%s6666 + $0x18] sm:$0xf]
      %v6674 = vld [vmem:[%s6666 + $0x1c] sm:$0xf]
      %v6675 = vld [vmem:[%s6666 + $0x20] sm:$0xf]
      %v6676 = vld [vmem:[%s6666 + $0x24] sm:$0xf]
      %v6677 = vld [vmem:[%s6666 + $0x28] sm:$0xf]
      %v6678 = vld [vmem:[%s6666 + $0x2c] sm:$0xf]
      %v6679 = vld [vmem:[%s6666 + $0x30] sm:$0xf]
      %v6680 = vld [vmem:[%s6666 + $0x34] sm:$0xf]
      %v6681 = vld [vmem:[%s6666 + $0x38] sm:$0xf]
      %v6682 = vld [vmem:[%s6666 + $0x3c] sm:$0xf]
      %v6683 = vld [vmem:[%s6666 + $0x40] sm:$0xf]
      %v6684 = vld [vmem:[%s6666 + $0x44] sm:$0xf]
      %v6685 = vld [vmem:[%s6666 + $0x48] sm:$0xf]
      %v6686 = vld [vmem:[%s6666 + $0x4c] sm:$0xf]
      %v6687 = vld [vmem:[%s6666 + $0x50] sm:$0xf]
      %v6688 = vld [vmem:[%s6666 + $0x54] sm:$0xf]
      %v6689 = vld [vmem:[%s6666 + $0x58] sm:$0xf]
      %v6690 = vld [vmem:[%s6666 + $0x5c] sm:$0xf]
      %v6691 = vld [vmem:[%s6666 + $0x60] sm:$0xf]
      %v6692 = vld [vmem:[%s6666 + $0x64] sm:$0xf]
      %v6693 = vld [vmem:[%s6666 + $0x68] sm:$0xf]
      %v6694 = vld [vmem:[%s6666 + $0x6c] sm:$0xf]
      %v6695 = vld [vmem:[%s6666 + $0x70] sm:$0xf]
      %v6696 = vld [vmem:[%s6666 + $0x74] sm:$0xf]
      %v6697 = vld [vmem:[%s6666 + $0x78] sm:$0xf]
      %v6698 = vld [vmem:[%s6666 + $0x7c] sm:$0xf]
      %v6731 = vunpack.c.l.b16 %v6667
      %v6732 = vunpack.c.l.b16 %v6668
      %v6733 = vunpack.c.l.b16 %v6669
      %v6734 = vunpack.c.l.b16 %v6670
      %v6735 = vunpack.c.l.b16 %v6671
      %v6736 = vunpack.c.l.b16 %v6672
      %v6737 = vunpack.c.l.b16 %v6673
      %v6738 = vunpack.c.l.b16 %v6674
      %v6739 = vunpack.c.l.b16 %v6675
      %v6740 = vunpack.c.l.b16 %v6676
      %v6741 = vunpack.c.l.b16 %v6677
      %v6742 = vunpack.c.l.b16 %v6678
      %v6743 = vunpack.c.l.b16 %v6679
      %v6744 = vunpack.c.l.b16 %v6680
      %v6745 = vunpack.c.l.b16 %v6681
      %v6746 = vunpack.c.l.b16 %v6682
      %v6747 = vunpack.c.l.b16 %v6683
      %v6748 = vunpack.c.l.b16 %v6684
      %v6749 = vunpack.c.l.b16 %v6685
      %v6750 = vunpack.c.l.b16 %v6686
      %v6751 = vunpack.c.l.b16 %v6687
      %v6752 = vunpack.c.l.b16 %v6688
      %v6753 = vunpack.c.l.b16 %v6689
      %v6754 = vunpack.c.l.b16 %v6690
      %v6755 = vunpack.c.l.b16 %v6691
      %v6756 = vunpack.c.l.b16 %v6692
      %v6757 = vunpack.c.l.b16 %v6693
      %v6758 = vunpack.c.l.b16 %v6694
      %v6759 = vunpack.c.l.b16 %v6695
      %v6760 = vunpack.c.l.b16 %v6696
      %v6761 = vunpack.c.l.b16 %v6697
      %v6762 = vunpack.c.l.b16 %v6698
      %v6763 = vpack.c.b16 %v6732, %v6731
      %v6764 = vpack.c.b16 %v6734, %v6733
      %v6765 = vpack.c.b16 %v6736, %v6735
      %v6766 = vpack.c.b16 %v6738, %v6737
      %v6767 = vpack.c.b16 %v6740, %v6739
      %v6768 = vpack.c.b16 %v6742, %v6741
      %v6769 = vpack.c.b16 %v6744, %v6743
      %v6770 = vpack.c.b16 %v6746, %v6745
      %v6771 = vpack.c.b16 %v6748, %v6747
      %v6772 = vpack.c.b16 %v6750, %v6749
      %v6773 = vpack.c.b16 %v6752, %v6751
      %v6774 = vpack.c.b16 %v6754, %v6753
      %v6775 = vpack.c.b16 %v6756, %v6755
      %v6776 = vpack.c.b16 %v6758, %v6757
      %v6777 = vpack.c.b16 %v6760, %v6759
      %v6778 = vpack.c.b16 %v6762, %v6761
      %6795 = vmatprep.subr.bf16.mxu0 0
      %6796 = vmatpush1.bf16.msra.mxu0 %v6763
      %6797 = vmatprep.subr.bf16.mxu0 0
      %6798 = vmatpush1.bf16.msra.mxu0 %v6764
      %6799 = vmatprep.subr.bf16.mxu0 0
      %6800 = vmatpush1.bf16.msra.mxu0 %v6765
      %6801 = vmatprep.subr.bf16.mxu0 0
      %6802 = vmatpush1.bf16.msra.mxu0 %v6766
      %6803 = vmatprep.subr.bf16.mxu0 0
      %6804 = vmatpush1.bf16.msra.mxu0 %v6767
      %6805 = vmatprep.subr.bf16.mxu0 0
      %6806 = vmatpush1.bf16.msra.mxu0 %v6768
      %6807 = vmatprep.subr.bf16.mxu0 0
      %6808 = vmatpush1.bf16.msra.mxu0 %v6769
      %6809 = vmatprep.subr.bf16.mxu0 0
      %6810 = vmatpush1.bf16.msra.mxu0 %v6770
      %6811 = vmatprep.subr.bf16.mxu0 0
      %6812 = vmatpush1.bf16.msra.mxu0 %v6771
      %6813 = vmatprep.subr.bf16.mxu0 0
      %6814 = vmatpush1.bf16.msra.mxu0 %v6772
      %6815 = vmatprep.subr.bf16.mxu0 0
      %6816 = vmatpush1.bf16.msra.mxu0 %v6773
      %6817 = vmatprep.subr.bf16.mxu0 0
      %6818 = vmatpush1.bf16.msra.mxu0 %v6774
      %6819 = vmatprep.subr.bf16.mxu0 0
      %6820 = vmatpush1.bf16.msra.mxu0 %v6775
      %6821 = vmatprep.subr.bf16.mxu0 0
      %6822 = vmatpush1.bf16.msra.mxu0 %v6776
      %6823 = vmatprep.subr.bf16.mxu0 0
      %6824 = vmatpush1.bf16.msra.mxu0 %v6777
      %6825 = vmatprep.subr.bf16.mxu0 0
      %6826 = vmatpush1.bf16.msra.mxu0 %v6778
      %6827 = vmatprep.mubr.bf16.mxu0 %v6635
      %6828 = vmatmul.mubr.bf16.gmra.mrb[0].mxu0 %v6634
      %v6829 = vpop.f32.mrb[0].mxu0
      %v6830 = vadd.f32 0.0, %v6829
      %v6831 = vpop.f32.mrb[0].mxu0
      %v6832 = vpop.f32.mrb[0].mxu0
      %v6833 = vadd.f32 0.0, %v6832
      %v6834 = vpop.f32.mrb[0].mxu0
      %6835 = vmatprep.mubr.bf16.mxu0 %v6637
      %6836 = vmatmul.mubr.bf16.gmra.mrb[0].mxu0 %v6636
      %v6837 = vpop.f32.mrb[0].mxu0
      %v6838 = vadd.f32 0.0, %v6837
      %v6839 = vpop.f32.mrb[0].mxu0
      %v6840 = vpop.f32.mrb[0].mxu0
      %v6841 = vadd.f32 0.0, %v6840
      %v6842 = vpop.f32.mrb[0].mxu0
      %6843 = vmatprep.mubr.bf16.mxu0 %v6639
      %6844 = vmatmul.mubr.bf16.gmra.mrb[0].mxu0 %v6638
      %v6845 = vpop.f32.mrb[0].mxu0
      %v6846 = vadd.f32 0.0, %v6845
      %v6847 = vpop.f32.mrb[0].mxu0
      %v6848 = vpop.f32.mrb[0].mxu0
      %v6849 = vadd.f32 0.0, %v6848
      %v6850 = vpop.f32.mrb[0].mxu0
      %6851 = vmatprep.mubr.bf16.mxu0 %v6641
      %6852 = vmatmul.mubr.bf16.gmra.mrb[0].mxu0 %v6640
      %v6853 = vpop.f32.mrb[0].mxu0
      %v6854 = vadd.f32 0.0, %v6853
      %v6855 = vpop.f32.mrb[0].mxu0
      %v6856 = vpop.f32.mrb[0].mxu0
      %v6857 = vadd.f32 0.0, %v6856
      %v6858 = vpop.f32.mrb[0].mxu0
      %6859 = vmatprep.mubr.bf16.mxu0 %v6643
      %6860 = vmatmul.mubr.bf16.gmra.mrb[0].mxu0 %v6642
      %v6861 = vpop.f32.mrb[0].mxu0
      %v6862 = vadd.f32 0.0, %v6861
      %v6863 = vpop.f32.mrb[0].mxu0
      %v6864 = vpop.f32.mrb[0].mxu0
      %v6865 = vadd.f32 0.0, %v6864
      %v6866 = vpop.f32.mrb[0].mxu0
      %6867 = vmatprep.mubr.bf16.mxu0 %v6645
      %6868 = vmatmul.mubr.bf16.gmra.mrb[0].mxu0 %v6644
      %v6869 = vpop.f32.mrb[0].mxu0
      %v6870 = vadd.f32 0.0, %v6869
      %v6871 = vpop.f32.mrb[0].mxu0
      %v6872 = vpop.f32.mrb[0].mxu0
      %v6873 = vadd.f32 0.0, %v6872
      %v6874 = vpop.f32.mrb[0].mxu0
      %6875 = vmatprep.mubr.bf16.mxu0 %v6647
      %6876 = vmatmul.mubr.bf16.gmra.mrb[0].mxu0 %v6646
      %v6877 = vpop.f32.mrb[0].mxu0
      %v6878 = vadd.f32 0.0, %v6877
      %v6879 = vpop.f32.mrb[0].mxu0
      %v6880 = vpop.f32.mrb[0].mxu0
      %v6881 = vadd.f32 0.0, %v6880
      %v6882 = vpop.f32.mrb[0].mxu0
      %6883 = vmatprep.mubr.bf16.mxu0 %v6649
      %6884 = vmatmul.mubr.bf16.gmra.mrb[0].mxu0 %v6648
      %v6885 = vpop.f32.mrb[0].mxu0
      %v6886 = vadd.f32 0.0, %v6885
      %v6887 = vpop.f32.mrb[0].mxu0
      %v6888 = vpop.f32.mrb[0].mxu0
      %v6889 = vadd.f32 0.0, %v6888
      %v6890 = vpop.f32.mrb[0].mxu0
      %6891 = vmatprep.mubr.bf16.mxu0 %v6651
      %6892 = vmatmul.mubr.bf16.gmra.mrb[0].mxu0 %v6650
      %v6893 = vpop.f32.mrb[0].mxu0
      %v6894 = vadd.f32 0.0, %v6893
      %v6895 = vpop.f32.mrb[0].mxu0
      %v6896 = vpop.f32.mrb[0].mxu0
      %v6897 = vadd.f32 0.0, %v6896
      %v6898 = vpop.f32.mrb[0].mxu0
      %6899 = vmatprep.mubr.bf16.mxu0 %v6653
      %6900 = vmatmul.mubr.bf16.gmra.mrb[0].mxu0 %v6652
      %v6901 = vpop.f32.mrb[0].mxu0
      %v6902 = vadd.f32 0.0, %v6901
      %v6903 = vpop.f32.mrb[0].mxu0
      %v6904 = vpop.f32.mrb[0].mxu0
      %v6905 = vadd.f32 0.0, %v6904
      %v6906 = vpop.f32.mrb[0].mxu0
      %6907 = vmatprep.mubr.bf16.mxu0 %v6655
      %6908 = vmatmul.mubr.bf16.gmra.mrb[0].mxu0 %v6654
      %v6909 = vpop.f32.mrb[0].mxu0
      %v6910 = vadd.f32 0.0, %v6909
      %v6911 = vpop.f32.mrb[0].mxu0
      %v6912 = vpop.f32.mrb[0].mxu0
      %v6913 = vadd.f32 0.0, %v6912
      %v6914 = vpop.f32.mrb[0].mxu0
      %6915 = vmatprep.mubr.bf16.mxu0 %v6657
      %6916 = vmatmul.mubr.bf16.gmra.mrb[0].mxu0 %v6656
      %v6917 = vpop.f32.mrb[0].mxu0
      %v6918 = vadd.f32 0.0, %v6917
      %v6919 = vpop.f32.mrb[0].mxu0
      %v6920 = vpop.f32.mrb[0].mxu0
      %v6921 = vadd.f32 0.0, %v6920
      %v6922 = vpop.f32.mrb[0].mxu0
      %6923 = vmatprep.mubr.bf16.mxu0 %v6659
      %6924 = vmatmul.mubr.bf16.gmra.mrb[0].mxu0 %v6658
      %v6925 = vpop.f32.mrb[0].mxu0
      %v6926 = vadd.f32 0.0, %v6925
      %v6927 = vpop.f32.mrb[0].mxu0
      %v6928 = vpop.f32.mrb[0].mxu0
      %v6929 = vadd.f32 0.0, %v6928
      %v6930 = vpop.f32.mrb[0].mxu0
      %6931 = vmatprep.mubr.bf16.mxu0 %v6661
      %6932 = vmatmul.mubr.bf16.gmra.mrb[0].mxu0 %v6660
      %v6933 = vpop.f32.mrb[0].mxu0
      %v6934 = vadd.f32 0.0, %v6933
      %v6935 = vpop.f32.mrb[0].mxu0
      %v6936 = vpop.f32.mrb[0].mxu0
      %v6937 = vadd.f32 0.0, %v6936
      %v6938 = vpop.f32.mrb[0].mxu0
      %6939 = vmatprep.mubr.bf16.mxu0 %v6663
      %6940 = vmatmul.mubr.bf16.gmra.mrb[0].mxu0 %v6662
      %v6941 = vpop.f32.mrb[0].mxu0
      %v6942 = vadd.f32 0.0, %v6941
      %v6943 = vpop.f32.mrb[0].mxu0
      %v6944 = vpop.f32.mrb[0].mxu0
      %v6945 = vadd.f32 0.0, %v6944
      %v6946 = vpop.f32.mrb[0].mxu0
      %6947 = vmatprep.mubr.bf16.mxu0 %v6665
      %6948 = vmatmul.mubr.bf16.gmra.mrb[0].mxu0 %v6664
      %v6949 = vpop.f32.mrb[0].mxu0
      %v6950 = vadd.f32 0.0, %v6949
      %v6951 = vpop.f32.mrb[0].mxu0
      %v6952 = vpop.f32.mrb[0].mxu0
      %v6953 = vadd.f32 0.0, %v6952
      %v6954 = vpop.f32.mrb[0].mxu0
      %6955 = vdwg.mxu0
      %v6988 = vunpack.c.l.b16 %v6602
      %v6989 = vunpack.c.l.b16 %v6603
      %v6990 = vunpack.c.l.b16 %v6604
      %v6991 = vunpack.c.l.b16 %v6605
      %v6992 = vunpack.c.l.b16 %v6606
      %v6993 = vunpack.c.l.b16 %v6607
      %v6994 = vunpack.c.l.b16 %v6608
      %v6995 = vunpack.c.l.b16 %v6609
      %v6996 = vunpack.c.l.b16 %v6610
      %v6997 = vunpack.c.l.b16 %v6611
      %v6998 = vunpack.c.l.b16 %v6612
      %v6999 = vunpack.c.l.b16 %v6613
      %v7000 = vunpack.c.l.b16 %v6614
      %v7001 = vunpack.c.l.b16 %v6615
      %v7002 = vunpack.c.l.b16 %v6616
      %v7003 = vunpack.c.l.b16 %v6617
      %v7004 = vunpack.c.l.b16 %v6618
      %v7005 = vunpack.c.l.b16 %v6619
      %v7006 = vunpack.c.l.b16 %v6620
      %v7007 = vunpack.c.l.b16 %v6621
      %v7008 = vunpack.c.l.b16 %v6622
      %v7009 = vunpack.c.l.b16 %v6623
      %v7010 = vunpack.c.l.b16 %v6624
      %v7011 = vunpack.c.l.b16 %v6625
      %v7012 = vunpack.c.l.b16 %v6626
      %v7013 = vunpack.c.l.b16 %v6627
      %v7014 = vunpack.c.l.b16 %v6628
      %v7015 = vunpack.c.l.b16 %v6629
      %v7016 = vunpack.c.l.b16 %v6630
      %v7017 = vunpack.c.l.b16 %v6631
      %v7018 = vunpack.c.l.b16 %v6632
      %v7019 = vunpack.c.l.b16 %v6633
      %v7020 = vpack.c.b16 %v6989, %v6988
      %v7021 = vpack.c.b16 %v6991, %v6990
      %v7022 = vpack.c.b16 %v6993, %v6992
      %v7023 = vpack.c.b16 %v6995, %v6994
      %v7024 = vpack.c.b16 %v6997, %v6996
      %v7025 = vpack.c.b16 %v6999, %v6998
      %v7026 = vpack.c.b16 %v7001, %v7000
      %v7027 = vpack.c.b16 %v7003, %v7002
      %v7028 = vpack.c.b16 %v7005, %v7004
      %v7029 = vpack.c.b16 %v7007, %v7006
      %v7030 = vpack.c.b16 %v7009, %v7008
      %v7031 = vpack.c.b16 %v7011, %v7010
      %v7032 = vpack.c.b16 %v7013, %v7012
      %v7033 = vpack.c.b16 %v7015, %v7014
      %v7034 = vpack.c.b16 %v7017, %v7016
      %v7035 = vpack.c.b16 %v7019, %v7018
      %7052 = vmatprep.subr.bf16.mxu0 0
      %7053 = vmatpush1.bf16.msra.mxu0 %v7020
      %7054 = vmatprep.subr.bf16.mxu0 0
      %7055 = vmatpush1.bf16.msra.mxu0 %v7021
      %7056 = vmatprep.subr.bf16.mxu0 0
      %7057 = vmatpush1.bf16.msra.mxu0 %v7022
      %7058 = vmatprep.subr.bf16.mxu0 0
      %7059 = vmatpush1.bf16.msra.mxu0 %v7023
      %7060 = vmatprep.subr.bf16.mxu0 0
      %7061 = vmatpush1.bf16.msra.mxu0 %v7024
      %7062 = vmatprep.subr.bf16.mxu0 0
      %7063 = vmatpush1.bf16.msra.mxu0 %v7025
      %7064 = vmatprep.subr.bf16.mxu0 0
      %7065 = vmatpush1.bf16.msra.mxu0 %v7026
      %7066 = vmatprep.subr.bf16.mxu0 0
      %7067 = vmatpush1.bf16.msra.mxu0 %v7027
      %7068 = vmatprep.subr.bf16.mxu0 0
      %7069 = vmatpush1.bf16.msra.mxu0 %v7028
      %7070 = vmatprep.subr.bf16.mxu0 0
      %7071 = vmatpush1.bf16.msra.mxu0 %v7029
      %7072 = vmatprep.subr.bf16.mxu0 0
      %7073 = vmatpush1.bf16.msra.mxu0 %v7030
      %7074 = vmatprep.subr.bf16.mxu0 0
      %7075 = vmatpush1.bf16.msra.mxu0 %v7031
      %7076 = vmatprep.subr.bf16.mxu0 0
      %7077 = vmatpush1.bf16.msra.mxu0 %v7032
      %7078 = vmatprep.subr.bf16.mxu0 0
      %7079 = vmatpush1.bf16.msra.mxu0 %v7033
      %7080 = vmatprep.subr.bf16.mxu0 0
      %7081 = vmatpush1.bf16.msra.mxu0 %v7034
      %7082 = vmatprep.subr.bf16.mxu0 0
      %7083 = vmatpush1.bf16.msra.mxu0 %v7035
      %7084 = vmatprep.mubr.bf16.mxu0 %v6571
      %7085 = vmatmul.mubr.bf16.gmra.mrb[0].mxu0 %v6570
      %v7086 = vpop.f32.mrb[0].mxu0
      %v7087 = vadd.f32 %v6830, %v7086
      %v7088 = vpop.f32.mrb[0].mxu0
      %v7089 = vpop.f32.mrb[0].mxu0
      %v7090 = vadd.f32 %v6833, %v7089
      %v7091 = vpop.f32.mrb[0].mxu0
      %7092 = vmatprep.mubr.bf16.mxu0 %v6573
      %7093 = vmatmul.mubr.bf16.gmra.mrb[0].mxu0 %v6572
      %v7094 = vpop.f32.mrb[0].mxu0
      %v7095 = vadd.f32 %v6838, %v7094
      %v7096 = vpop.f32.mrb[0].mxu0
      %v7097 = vpop.f32.mrb[0].mxu0
      %v7098 = vadd.f32 %v6841, %v7097
      %v7099 = vpop.f32.mrb[0].mxu0
      %7100 = vmatprep.mubr.bf16.mxu0 %v6575
      %7101 = vmatmul.mubr.bf16.gmra.mrb[0].mxu0 %v6574
      %v7102 = vpop.f32.mrb[0].mxu0
      %v7103 = vadd.f32 %v6846, %v7102
      %v7104 = vpop.f32.mrb[0].mxu0
      %v7105 = vpop.f32.mrb[0].mxu0
      %v7106 = vadd.f32 %v6849, %v7105
      %v7107 = vpop.f32.mrb[0].mxu0
      %7108 = vmatprep.mubr.bf16.mxu0 %v6577
      %7109 = vmatmul.mubr.bf16.gmra.mrb[0].mxu0 %v6576
      %v7110 = vpop.f32.mrb[0].mxu0
      %v7111 = vadd.f32 %v6854, %v7110
      %v7112 = vpop.f32.mrb[0].mxu0
      %v7113 = vpop.f32.mrb[0].mxu0
      %v7114 = vadd.f32 %v6857, %v7113
      %v7115 = vpop.f32.mrb[0].mxu0
      %7116 = vmatprep.mubr.bf16.mxu0 %v6579
      %7117 = vmatmul.mubr.bf16.gmra.mrb[0].mxu0 %v6578
      %v7118 = vpop.f32.mrb[0].mxu0
      %v7119 = vadd.f32 %v6862, %v7118
      %v7120 = vpop.f32.mrb[0].mxu0
      %v7121 = vpop.f32.mrb[0].mxu0
      %v7122 = vadd.f32 %v6865, %v7121
      %v7123 = vpop.f32.mrb[0].mxu0
      %7124 = vmatprep.mubr.bf16.mxu0 %v6581
      %7125 = vmatmul.mubr.bf16.gmra.mrb[0].mxu0 %v6580
      %v7126 = vpop.f32.mrb[0].mxu0
      %v7127 = vadd.f32 %v6870, %v7126
      %v7128 = vpop.f32.mrb[0].mxu0
      %v7129 = vpop.f32.mrb[0].mxu0
      %v7130 = vadd.f32 %v6873, %v7129
      %v7131 = vpop.f32.mrb[0].mxu0
      %7132 = vmatprep.mubr.bf16.mxu0 %v6583
      %7133 = vmatmul.mubr.bf16.gmra.mrb[0].mxu0 %v6582
      %v7134 = vpop.f32.mrb[0].mxu0
      %v7135 = vadd.f32 %v6878, %v7134
      %v7136 = vpop.f32.mrb[0].mxu0
      %v7137 = vpop.f32.mrb[0].mxu0
      %v7138 = vadd.f32 %v6881, %v7137
      %v7139 = vpop.f32.mrb[0].mxu0
      %7140 = vmatprep.mubr.bf16.mxu0 %v6585
      %7141 = vmatmul.mubr.bf16.gmra.mrb[0].mxu0 %v6584
      %v7142 = vpop.f32.mrb[0].mxu0
      %v7143 = vadd.f32 %v6886, %v7142
      %v7144 = vpop.f32.mrb[0].mxu0
      %v7145 = vpop.f32.mrb[0].mxu0
      %v7146 = vadd.f32 %v6889, %v7145
      %v7147 = vpop.f32.mrb[0].mxu0
      %7148 = vmatprep.mubr.bf16.mxu0 %v6587
      %7149 = vmatmul.mubr.bf16.gmra.mrb[0].mxu0 %v6586
      %v7150 = vpop.f32.mrb[0].mxu0
      %v7151 = vadd.f32 %v6894, %v7150
      %v7152 = vpop.f32.mrb[0].mxu0
      %v7153 = vpop.f32.mrb[0].mxu0
      %v7154 = vadd.f32 %v6897, %v7153
      %v7155 = vpop.f32.mrb[0].mxu0
      %7156 = vmatprep.mubr.bf16.mxu0 %v6589
      %7157 = vmatmul.mubr.bf16.gmra.mrb[0].mxu0 %v6588
      %v7158 = vpop.f32.mrb[0].mxu0
      %v7159 = vadd.f32 %v6902, %v7158
      %v7160 = vpop.f32.mrb[0].mxu0
      %v7161 = vpop.f32.mrb[0].mxu0
      %v7162 = vadd.f32 %v6905, %v7161
      %v7163 = vpop.f32.mrb[0].mxu0
      %7164 = vmatprep.mubr.bf16.mxu0 %v6591
      %7165 = vmatmul.mubr.bf16.gmra.mrb[0].mxu0 %v6590
      %v7166 = vpop.f32.mrb[0].mxu0
      %v7167 = vadd.f32 %v6910, %v7166
      %v7168 = vpop.f32.mrb[0].mxu0
      %v7169 = vpop.f32.mrb[0].mxu0
      %v7170 = vadd.f32 %v6913, %v7169
      %v7171 = vpop.f32.mrb[0].mxu0
      %7172 = vmatprep.mubr.bf16.mxu0 %v6593
      %7173 = vmatmul.mubr.bf16.gmra.mrb[0].mxu0 %v6592
      %v7174 = vpop.f32.mrb[0].mxu0
      %v7175 = vadd.f32 %v6918, %v7174
      %v7176 = vpop.f32.mrb[0].mxu0
      %v7177 = vpop.f32.mrb[0].mxu0
      %v7178 = vadd.f32 %v6921, %v7177
      %v7179 = vpop.f32.mrb[0].mxu0
      %7180 = vmatprep.mubr.bf16.mxu0 %v6595
      %7181 = vmatmul.mubr.bf16.gmra.mrb[0].mxu0 %v6594
      %v7182 = vpop.f32.mrb[0].mxu0
      %v7183 = vadd.f32 %v6926, %v7182
      %v7184 = vpop.f32.mrb[0].mxu0
      %v7185 = vpop.f32.mrb[0].mxu0
      %v7186 = vadd.f32 %v6929, %v7185
      %v7187 = vpop.f32.mrb[0].mxu0
      %7188 = vmatprep.mubr.bf16.mxu0 %v6597
      %7189 = vmatmul.mubr.bf16.gmra.mrb[0].mxu0 %v6596
      %v7190 = vpop.f32.mrb[0].mxu0
      %v7191 = vadd.f32 %v6934, %v7190
      %v7192 = vpop.f32.mrb[0].mxu0
      %v7193 = vpop.f32.mrb[0].mxu0
      %v7194 = vadd.f32 %v6937, %v7193
      %v7195 = vpop.f32.mrb[0].mxu0
      %7196 = vmatprep.mubr.bf16.mxu0 %v6599
      %7197 = vmatmul.mubr.bf16.gmra.mrb[0].mxu0 %v6598
      %v7198 = vpop.f32.mrb[0].mxu0
      %v7199 = vadd.f32 %v6942, %v7198
      %v7200 = vpop.f32.mrb[0].mxu0
      %v7201 = vpop.f32.mrb[0].mxu0
      %v7202 = vadd.f32 %v6945, %v7201
      %v7203 = vpop.f32.mrb[0].mxu0
      %7204 = vmatprep.mubr.bf16.mxu0 %v6601
      %7205 = vmatmul.mubr.bf16.gmra.mrb[0].mxu0 %v6600
      %v7206 = vpop.f32.mrb[0].mxu0
      %v7207 = vadd.f32 %v6950, %v7206
      %v7208 = vpop.f32.mrb[0].mxu0
      %v7209 = vpop.f32.mrb[0].mxu0
      %v7210 = vadd.f32 %v6953, %v7209
      %v7211 = vpop.f32.mrb[0].mxu0
      %7212 = vdwg.mxu0
      %v7213 = vld [vmem:[%s4 + $0x10] ss:$0 sm:$0xff]
      %v7214 = vadd.f32 %v7087, %v7213
      %v7215 = vadd.f32 %v7090, %v7213
      %v7216 = vadd.f32 %v7095, %v7213
      %v7217 = vadd.f32 %v7098, %v7213
      %v7218 = vadd.f32 %v7103, %v7213
      %v7219 = vadd.f32 %v7106, %v7213
      %v7220 = vadd.f32 %v7111, %v7213
      %v7221 = vadd.f32 %v7114, %v7213
      %v7222 = vadd.f32 %v7119, %v7213
      %v7223 = vadd.f32 %v7122, %v7213
      %v7224 = vadd.f32 %v7127, %v7213
      %v7225 = vadd.f32 %v7130, %v7213
      %v7226 = vadd.f32 %v7135, %v7213
      %v7227 = vadd.f32 %v7138, %v7213
      %v7228 = vadd.f32 %v7143, %v7213
      %v7229 = vadd.f32 %v7146, %v7213
      %v7230 = vadd.f32 %v7151, %v7213
      %v7231 = vadd.f32 %v7154, %v7213
      %v7232 = vadd.f32 %v7159, %v7213
      %v7233 = vadd.f32 %v7162, %v7213
      %v7234 = vadd.f32 %v7167, %v7213
      %v7235 = vadd.f32 %v7170, %v7213
      %v7236 = vadd.f32 %v7175, %v7213
      %v7237 = vadd.f32 %v7178, %v7213
      %v7238 = vadd.f32 %v7183, %v7213
      %v7239 = vadd.f32 %v7186, %v7213
      %v7240 = vadd.f32 %v7191, %v7213
      %v7241 = vadd.f32 %v7194, %v7213
      %v7242 = vadd.f32 %v7199, %v7213
      %v7243 = vadd.f32 %v7202, %v7213
      %v7244 = vadd.f32 %v7207, %v7213
      %v7245 = vadd.f32 %v7210, %v7213
      %7246 = vst [vmem:[%s226] sm:$0xff] %v7214
      %7247 = vst [vmem:[%s226 + $0x8] sm:$0xff] %v7215
      %7248 = vst [vmem:[%s226 + $0x10] sm:$0xff] %v7216
      %7249 = vst [vmem:[%s226 + $0x18] sm:$0xff] %v7217
      %7250 = vst [vmem:[%s226 + $0x20] sm:$0xff] %v7218
      %7251 = vst [vmem:[%s226 + $0x28] sm:$0xff] %v7219
      %7252 = vst [vmem:[%s226 + $0x30] sm:$0xff] %v7220
      %7253 = vst [vmem:[%s226 + $0x38] sm:$0xff] %v7221
      %7254 = vst [vmem:[%s226 + $0x40] sm:$0xff] %v7222
      %7255 = vst [vmem:[%s226 + $0x48] sm:$0xff] %v7223
      %7256 = vst [vmem:[%s226 + $0x50] sm:$0xff] %v7224
      %7257 = vst [vmem:[%s226 + $0x58] sm:$0xff] %v7225
      %7258 = vst [vmem:[%s226 + $0x60] sm:$0xff] %v7226
      %7259 = vst [vmem:[%s226 + $0x68] sm:$0xff] %v7227
      %7260 = vst [vmem:[%s226 + $0x70] sm:$0xff] %v7228
      %7261 = vst [vmem:[%s226 + $0x78] sm:$0xff] %v7229
      %7262 = vst [vmem:[%s226 + $0x80] sm:$0xff] %v7230
      %7263 = vst [vmem:[%s226 + $0x88] sm:$0xff] %v7231
      %7264 = vst [vmem:[%s226 + $0x90] sm:$0xff] %v7232
      %7265 = vst [vmem:[%s226 + $0x98] sm:$0xff] %v7233
      %7266 = vst [vmem:[%s226 + $0xa0] sm:$0xff] %v7234
      %7267 = vst [vmem:[%s226 + $0xa8] sm:$0xff] %v7235
      %7268 = vst [vmem:[%s226 + $0xb0] sm:$0xff] %v7236
      %7269 = vst [vmem:[%s226 + $0xb8] sm:$0xff] %v7237
      %7270 = vst [vmem:[%s226 + $0xc0] sm:$0xff] %v7238
      %7271 = vst [vmem:[%s226 + $0xc8] sm:$0xff] %v7239
      %7272 = vst [vmem:[%s226 + $0xd0] sm:$0xff] %v7240
      %7273 = vst [vmem:[%s226 + $0xd8] sm:$0xff] %v7241
      %7274 = vst [vmem:[%s226 + $0xe0] sm:$0xff] %v7242
      %7275 = vst [vmem:[%s226 + $0xe8] sm:$0xff] %v7243
      %7276 = vst [vmem:[%s226 + $0xf0] sm:$0xff] %v7244
      %7277 = vst [vmem:[%s226 + $0xf8] sm:$0xff] %v7245
      %s7278 = smul.u32 32, %s16
      %p7279 = scmp.lt.s32.totalorder %s7278, 63
      %s7280 = scalar_select %p7279, %s7278, 63
      %s7281 = smul.addr %s7280, 8
      %s7282 = scalar_lea.vmem %s5, %s7281
      // Predicated region
      $region41: #{act_and_evaluate.1} parent=39 // pred_check
        %p7283 = pneg %p144
      $region42: #{act_and_evaluate.1} parent=39 // pred_check_branch
        %7285 = sbr.rel (%p7283) target = $region44
      $region43: #{act_and_evaluate.1} parent=39 // pred_region
        %s7286 = smul.u32 32, %s16
      $region44: #{act_and_evaluate.1} parent=39 // pred_fallthru
        _
    $region40: #{act_and_evaluate.1} parent=5 // pred_fallthru
      _
    %p7287 = scmp.le.s32.totalorder 2, %s11
    // Predicated region
    $region45: #{act_and_evaluate.1} parent=5 // pred_check
      %p7288 = pneg %p7287
    $region46: #{act_and_evaluate.1} parent=5 // pred_check_branch
      %7290 = sbr.rel (%p7288) target = $region48
    $region47: #{act_and_evaluate.1} parent=5 // pred_region
      %s7291 = ssub.s32 %s11, 2
      // Predicated region
      $region49: #{act_and_evaluate.1} parent=47 // pred_check
        %p7292 = pneg %p150
      $region50: #{act_and_evaluate.1} parent=47 // pred_check_branch
        %7294 = sbr.rel (%p7292) target = $region52
      $region51: #{act_and_evaluate.1} parent=47 // pred_region
        %s7295 = smul.u32 32, %s17
        %p7296 = scmp.lt.s32.totalorder %s7295, 63
        %s7297 = scalar_select %p7296, %s7295, 63
        %s7298 = smul.addr %s7297, 8
        %s7299 = scalar_lea.vmem %s5, %s7298
      $region52: #{act_and_evaluate.1} parent=47 // pred_fallthru
        _
    $region48: #{act_and_evaluate.1} parent=5 // pred_fallthru
      _
  $region6: #{act_and_evaluate.1} parent=0 // loop_footer
    %s15 = sadd.s32 1, %s11
  $region7: #{act_and_evaluate.1} parent=0 // loop_footer_branch
    %10 = sbr.rel target = $region3
  $region8: #{act_and_evaluate.1} parent=0 // loop_exit
    _

</llo_original>
